<compile_context>
chip_gen: v7x
topology: tpu7x:2x2x1
jax: 0.10.0
libtpu: 0.0.40
codegen_flags: <defaults>
</compile_context>

<pallas_src>
import functools

import jax
import jax.numpy as jnp
from jax import lax
from jax.experimental import pallas as pl
from jax.experimental.pallas import tpu as pltpu


# ----------------------------------------------------------------------------
# Fused forward kernel: one grid step == one image, everything stays in VMEM.
# ----------------------------------------------------------------------------
def _row_select(n_out, n_in, parity):
    """(n_out, n_in) f32 0/1 matrix with S[p, 2p+parity] = 1 (built in-kernel)."""
    r = lax.broadcasted_iota(jnp.int32, (n_out, n_in), 0)
    c = lax.broadcasted_iota(jnp.int32, (n_out, n_in), 1)
    return jnp.where(c == 2 * r + parity, 1.0, 0.0).astype(jnp.float32)


def _flmodel_kernel(x_ref, w1t_ref, b1_ref, w2t_ref, b2_ref,
                    wfc1_ref, bfc1_ref, wfc2_ref, bfc2_ref, out_ref):
    f32 = jnp.float32
    x = x_ref[0]                                          # (28, 28)

    # ---- conv1 (+ fused width max-pool via even/odd Toeplitz weight banks) --
    a_even = jnp.zeros((24, 384), f32)                    # cols = q*32 + c_out
    a_odd = jnp.zeros((24, 384), f32)
    for di in range(5):                                   # kernel row offset
        lhs = x[di:di + 24, :]                            # (24, 28)
        a_even = a_even + jnp.dot(lhs, w1t_ref[0, di], preferred_element_type=f32)
        a_odd = a_odd + jnp.dot(lhs, w1t_ref[1, di], preferred_element_type=f32)
    m1 = jnp.maximum(a_even, a_odd)                       # width-pooled (24, 384)

    # height max-pool of conv1 rows: 0/1 selection matmuls + elementwise max.
    r_e = jnp.dot(_row_select(12, 24, 0), m1, preferred_element_type=f32)
    r_o = jnp.dot(_row_select(12, 24, 1), m1, preferred_element_type=f32)
    x1 = jnp.maximum(jnp.maximum(r_e, r_o) + b1_ref[...], 0.0)   # (12, 384)

    # ---- conv2 (+ fused width max-pool) ------------------------------------
    c_even = jnp.zeros((8, 256), f32)                     # cols = q2*64 + c_out
    c_odd = jnp.zeros((8, 256), f32)
    for di in range(5):
        lhs = x1[di:di + 8, :]                            # (8, 384)
        c_even = c_even + jnp.dot(lhs, w2t_ref[0, di], preferred_element_type=f32)
        c_odd = c_odd + jnp.dot(lhs, w2t_ref[1, di], preferred_element_type=f32)
    m2 = jnp.maximum(c_even, c_odd)                       # (8, 256)

    p_e = jnp.dot(_row_select(4, 8, 0), m2, preferred_element_type=f32)
    p_o = jnp.dot(_row_select(4, 8, 1), m2, preferred_element_type=f32)
    p2 = jnp.maximum(jnp.maximum(p_e, p_o) + b2_ref[...], 0.0)   # (4, 256)

    # ---- fc1 + relu + fc2 (flatten absorbed into fc1 weight permutation) ----
    y1 = bfc1_ref[...]                                    # (1, 20)
    for h in range(4):
        y1 = y1 + jnp.dot(p2[h:h + 1, :], wfc1_ref[h], preferred_element_type=f32)
    y1 = jnp.maximum(y1, 0.0)
    out = jnp.dot(y1, wfc2_ref[...], preferred_element_type=f32) + bfc2_ref[...]
    out_ref[0, :, :] = out.astype(out_ref.dtype)          # lane-dense (1, 128) store


# ----------------------------------------------------------------------------
# One-time host-side weight repacking (PyTorch layout -> kernel layout).
# ----------------------------------------------------------------------------
def _conv1_toeplitz(w1):
    """(2, 5, 28, 384): [out-col parity, kernel row, input col, q*32 + c_out]."""
    w = w1[:, 0]                                          # (32, 5, 5)  [co, di, dj]
    iw = jnp.arange(28)
    q = jnp.arange(12)
    banks = []
    for cp in range(2):
        per_di = []
        for di in range(5):
            dj = iw[:, None] - (2 * q[None, :] + cp)      # (28, 12)
            valid = (dj >= 0) & (dj < 5)
            g = w[:, di, :][:, jnp.clip(dj, 0, 4)]        # (32, 28, 12)
            g = jnp.where(valid[None], g, 0.0)
            per_di.append(jnp.transpose(g, (1, 2, 0)).reshape(28, 384))
        banks.append(jnp.stack(per_di))
    return jnp.stack(banks)


def _conv2_toeplitz(w2):
    """(2, 5, 384, 256): [out-col parity, kernel row, iw*32 + c_in, q2*64 + c_out]."""
    iw = jnp.arange(12)
    q = jnp.arange(4)
    banks = []
    for cp in range(2):
        per_di = []
        for di in range(5):
            dj = iw[:, None] - (2 * q[None, :] + cp)      # (12, 4)
            valid = (dj >= 0) & (dj < 5)
            g = w2[:, :, di, :][:, :, jnp.clip(dj, 0, 4)]  # (64, 32, 12, 4)
            g = jnp.where(valid[None, None], g, 0.0)
            per_di.append(jnp.transpose(g, (2, 1, 3, 0)).reshape(384, 256))
        banks.append(jnp.stack(per_di))
    return jnp.stack(banks)


def prepare_params(params, num_classes):
    assert num_classes <= 128
    f32 = jnp.float32
    w1t = _conv1_toeplitz(params["conv1_w"].astype(f32))
    w2t = _conv2_toeplitz(params["conv2_w"].astype(f32))
    b1t = jnp.tile(params["conv1_b"], 12).reshape(1, 384).astype(f32)
    b2t = jnp.tile(params["conv2_b"], 4).reshape(1, 256).astype(f32)
    # torch.flatten of NCHW uses (c, h, w) order; kernel uses (h, w*64 + c).
    wfc1 = params["fc1_w"].reshape(20, 64, 4, 4)          # (k, c, h, w)
    wfc1 = jnp.transpose(wfc1, (2, 3, 1, 0)).reshape(4, 256, 20).astype(f32)
    bfc1 = params["fc1_b"].reshape(1, 20).astype(f32)
    wfc2 = jnp.zeros((20, 128), f32).at[:, :num_classes].set(params["fc2_w"].T)
    bfc2 = jnp.zeros((1, 128), f32).at[0, :num_classes].set(params["fc2_b"])
    return dict(w1t=w1t, b1t=b1t, w2t=w2t, b2t=b2t,
                wfc1=wfc1, bfc1=bfc1, wfc2=wfc2, bfc2=bfc2)


# ----------------------------------------------------------------------------
# Public forward: one pallas_call for the whole network.
# ----------------------------------------------------------------------------
def fl_model_forward(x_nchw, kp, num_classes):
    B = x_nchw.shape[0]
    assert x_nchw.shape[1:] == (1, 28, 28), x_nchw.shape   # fc1 expects 64*4*4
    x2d = x_nchw.reshape(B, 28, 28).astype(jnp.float32)
    out = pl.pallas_call(
        _flmodel_kernel,
        out_shape=jax.ShapeDtypeStruct((B, 1, 128), jnp.float32),
        grid=(B,),
        in_specs=[
            pl.BlockSpec((1, 28, 28), lambda b: (b, 0, 0)),          # image
            pl.BlockSpec((2, 5, 28, 384), lambda b: (0, 0, 0, 0)),   # conv1 Toeplitz
            pl.BlockSpec((1, 384), lambda b: (0, 0)),                # conv1 bias (tiled)
            pl.BlockSpec((2, 5, 384, 256), lambda b: (0, 0, 0, 0)),  # conv2 Toeplitz
            pl.BlockSpec((1, 256), lambda b: (0, 0)),                # conv2 bias (tiled)
            pl.BlockSpec((4, 256, 20), lambda b: (0, 0, 0)),         # fc1 weight (h, w*64+c, k)
            pl.BlockSpec((1, 20), lambda b: (0, 0)),                 # fc1 bias
            pl.BlockSpec((20, 128), lambda b: (0, 0)),               # fc2 weight (padded)
            pl.BlockSpec((1, 128), lambda b: (0, 0)),                # fc2 bias (padded)
        ],
        out_specs=pl.BlockSpec((1, 1, 128), lambda b: (b, 0, 0)),
        compiler_params=pltpu.CompilerParams(
            dimension_semantics=("parallel",),
            vmem_limit_bytes=32 * 1024 * 1024),
    )(x2d, kp["w1t"], kp["b1t"], kp["w2t"], kp["b2t"],
      kp["wfc1"], kp["bfc1"], kp["wfc2"], kp["bfc2"])
    return out[:, 0, :num_classes]


# ----------------------------------------------------------------------------
# Pure-JAX reference (correctness self-check) and torch-like init.
# ----------------------------------------------------------------------------
def reference_forward(x_nchw, params):
    prec = lax.Precision.HIGHEST

    def conv_relu(x, w, b):
        y = lax.conv_general_dilated(
            x, w, window_strides=(1, 1), padding="VALID",
            dimension_numbers=("NCHW", "OIHW", "NCHW"), precision=prec)
        return jax.nn.relu(y + b[None, :, None, None])

    def pool(x):
        return lax.reduce_window(x, -jnp.inf, lax.max,
                                 (1, 1, 2, 2), (1, 1, 2, 2), "VALID")

    x = pool(conv_relu(x_nchw, params["conv1_w"], params["conv1_b"]))
    x = pool(conv_relu(x, params["conv2_w"], params["conv2_b"]))
    x = x.reshape(x.shape[0], -1)
    x = jax.nn.relu(jnp.dot(x, params["fc1_w"].T, precision=prec) + params["fc1_b"])
    return jnp.dot(x, params["fc2_w"].T, precision=prec) + params["fc2_b"]


def init_params(key, num_classes=10):
    ks = jax.random.split(key, 8)

    def u(k, shape, fan_in):
        bound = float(fan_in) ** -0.5
        return jax.random.uniform(k, shape, jnp.float32, -bound, bound)

    return {
        "conv1_w": u(ks[0], (32, 1, 5, 5), 1 * 5 * 5),
        "conv1_b": u(ks[1], (32,), 1 * 5 * 5),
        "conv2_w": u(ks[2], (64, 32, 5, 5), 32 * 5 * 5),
        "conv2_b": u(ks[3], (64,), 32 * 5 * 5),
        "fc1_w": u(ks[4], (20, 1024), 1024),
        "fc1_b": u(ks[5], (20,), 1024),
        "fc2_w": u(ks[6], (num_classes, 20), 20),
        "fc2_b": u(ks[7], (num_classes,), 20),
    }


if __name__ == "__main__":
    num_classes = 10
    key = jax.random.PRNGKey(0)
    kx, kp = jax.random.split(key)
    # fc1 expects 1024 = 64*4*4 features => input must be (B, 1, 28, 28)
    x = jax.random.normal(kx, (2, 1, 28, 28), jnp.float32)
    params = init_params(kp, num_classes=num_classes)

    kparams = prepare_params(params, num_classes)          # one-time weight repack
    fwd = jax.jit(functools.partial(fl_model_forward, num_classes=num_classes))

    out = jax.block_until_ready(fwd(x, kparams))
    assert out.shape == (2, num_classes), out.shape

    ref = reference_forward(x, params)
    if not bool(jnp.allclose(out, ref, atol=2e-3, rtol=2e-3)):
        max_err = float(jnp.max(jnp.abs(out - ref)))
        raise AssertionError(f"Pallas output mismatch, max abs err {max_err}")

    print("KERNEL_OK")
</pallas_src>

<mosaic_0001>
module attributes {stable_mosaic.version = 11 : i64} {
  func.func @_flmodel_kernel(%arg0: i32, %arg1: memref<1x28x28xf32, #tpu.memory_space<vmem>>, %arg2: memref<2x5x28x384xf32, #tpu.memory_space<vmem>>, %arg3: memref<1x384xf32, #tpu.memory_space<vmem>>, %arg4: memref<2x5x384x256xf32, #tpu.memory_space<vmem>>, %arg5: memref<1x256xf32, #tpu.memory_space<vmem>>, %arg6: memref<4x256x20xf32, #tpu.memory_space<vmem>>, %arg7: memref<1x20xf32, #tpu.memory_space<vmem>>, %arg8: memref<20x128xf32, #tpu.memory_space<vmem>>, %arg9: memref<1x128xf32, #tpu.memory_space<vmem>>, %arg10: memref<1x1x128xf32, #tpu.memory_space<vmem>>) attributes {dimension_semantics = [#tpu.dimension_semantics<parallel>], iteration_bounds = array<i64: 2>, scalar_prefetch = 0 : i64, scratch_operands = 0 : i64, tpu.core_type = #tpu.core_type<tc>, window_params = [{transform_indices = @transform_0, window_bounds = array<i64: 1, 28, 28>}, {pipeline_mode = #tpu.pipeline_mode<synchronous>, transform_indices = @transform_1, window_bounds = array<i64: 2, 5, 28, 384>}, {pipeline_mode = #tpu.pipeline_mode<synchronous>, transform_indices = @transform_2, window_bounds = array<i64: 1, 384>}, {pipeline_mode = #tpu.pipeline_mode<synchronous>, transform_indices = @transform_3, window_bounds = array<i64: 2, 5, 384, 256>}, {pipeline_mode = #tpu.pipeline_mode<synchronous>, transform_indices = @transform_4, window_bounds = array<i64: 1, 256>}, {pipeline_mode = #tpu.pipeline_mode<synchronous>, transform_indices = @transform_5, window_bounds = array<i64: 4, 256, 20>}, {pipeline_mode = #tpu.pipeline_mode<synchronous>, transform_indices = @transform_6, window_bounds = array<i64: 1, 20>}, {pipeline_mode = #tpu.pipeline_mode<synchronous>, transform_indices = @transform_7, window_bounds = array<i64: 20, 128>}, {pipeline_mode = #tpu.pipeline_mode<synchronous>, transform_indices = @transform_8, window_bounds = array<i64: 1, 128>}, {transform_indices = @transform_9, window_bounds = array<i64: 1, 1, 128>}]} {
    %c0 = arith.constant 0 : index
    %c0_0 = arith.constant 0 : index
    %c0_1 = arith.constant 0 : index
    %0 = vector.load %arg1[%c0, %c0_0, %c0_1] : memref<1x28x28xf32, #tpu.memory_space<vmem>>, vector<1x28x28xf32>
    %1 = vector.shape_cast %0 : vector<1x28x28xf32> to vector<28x28xf32>
    %cst = arith.constant 0.000000e+00 : f32
    %2 = vector.broadcast %cst : f32 to vector<24x384xf32>
    %cst_2 = arith.constant 0.000000e+00 : f32
    %3 = vector.broadcast %cst_2 : f32 to vector<24x384xf32>
    %4 = vector.extract_strided_slice %1 {offsets = [0, 0], sizes = [24, 28], strides = [1, 1]} : vector<28x28xf32> to vector<24x28xf32>
    %c0_3 = arith.constant 0 : index
    %c0_4 = arith.constant 0 : index
    %c0_5 = arith.constant 0 : index
    %c0_6 = arith.constant 0 : index
    %5 = vector.load %arg2[%c0_3, %c0_4, %c0_5, %c0_6] : memref<2x5x28x384xf32, #tpu.memory_space<vmem>>, vector<1x1x28x384xf32>
    %6 = vector.shape_cast %5 : vector<1x1x28x384xf32> to vector<28x384xf32>
    %cst_7 = arith.constant dense<0.000000e+00> : vector<24x384xf32>
    %7 = tpu.matmul %4, %6, %cst_7 {dimension_numbers = #tpu.dot_dimension_numbers<[1], [0], [0], [1], [0, 0, 1, 1], [], []>} : vector<24x28xf32>, vector<28x384xf32>, vector<24x384xf32> -> vector<24x384xf32>
    %8 = arith.addf %2, %7 : vector<24x384xf32>
    %c1 = arith.constant 1 : index
    %c0_8 = arith.constant 0 : index
    %c0_9 = arith.constant 0 : index
    %c0_10 = arith.constant 0 : index
    %9 = vector.load %arg2[%c1, %c0_8, %c0_9, %c0_10] : memref<2x5x28x384xf32, #tpu.memory_space<vmem>>, vector<1x1x28x384xf32>
    %10 = vector.shape_cast %9 : vector<1x1x28x384xf32> to vector<28x384xf32>
    %cst_11 = arith.constant dense<0.000000e+00> : vector<24x384xf32>
    %11 = tpu.matmul %4, %10, %cst_11 {dimension_numbers = #tpu.dot_dimension_numbers<[1], [0], [0], [1], [0, 0, 1, 1], [], []>} : vector<24x28xf32>, vector<28x384xf32>, vector<24x384xf32> -> vector<24x384xf32>
    %12 = arith.addf %3, %11 : vector<24x384xf32>
    %13 = vector.extract_strided_slice %1 {offsets = [1, 0], sizes = [24, 28], strides = [1, 1]} : vector<28x28xf32> to vector<24x28xf32>
    %c0_12 = arith.constant 0 : index
    %c1_13 = arith.constant 1 : index
    %c0_14 = arith.constant 0 : index
    %c0_15 = arith.constant 0 : index
    %14 = vector.load %arg2[%c0_12, %c1_13, %c0_14, %c0_15] : memref<2x5x28x384xf32, #tpu.memory_space<vmem>>, vector<1x1x28x384xf32>
    %15 = vector.shape_cast %14 : vector<1x1x28x384xf32> to vector<28x384xf32>
    %cst_16 = arith.constant dense<0.000000e+00> : vector<24x384xf32>
    %16 = tpu.matmul %13, %15, %cst_16 {dimension_numbers = #tpu.dot_dimension_numbers<[1], [0], [0], [1], [0, 0, 1, 1], [], []>} : vector<24x28xf32>, vector<28x384xf32>, vector<24x384xf32> -> vector<24x384xf32>
    %17 = arith.addf %8, %16 : vector<24x384xf32>
    %c1_17 = arith.constant 1 : index
    %c1_18 = arith.constant 1 : index
    %c0_19 = arith.constant 0 : index
    %c0_20 = arith.constant 0 : index
    %18 = vector.load %arg2[%c1_17, %c1_18, %c0_19, %c0_20] : memref<2x5x28x384xf32, #tpu.memory_space<vmem>>, vector<1x1x28x384xf32>
    %19 = vector.shape_cast %18 : vector<1x1x28x384xf32> to vector<28x384xf32>
    %cst_21 = arith.constant dense<0.000000e+00> : vector<24x384xf32>
    %20 = tpu.matmul %13, %19, %cst_21 {dimension_numbers = #tpu.dot_dimension_numbers<[1], [0], [0], [1], [0, 0, 1, 1], [], []>} : vector<24x28xf32>, vector<28x384xf32>, vector<24x384xf32> -> vector<24x384xf32>
    %21 = arith.addf %12, %20 : vector<24x384xf32>
    %22 = vector.extract_strided_slice %1 {offsets = [2, 0], sizes = [24, 28], strides = [1, 1]} : vector<28x28xf32> to vector<24x28xf32>
    %c0_22 = arith.constant 0 : index
    %c2 = arith.constant 2 : index
    %c0_23 = arith.constant 0 : index
    %c0_24 = arith.constant 0 : index
    %23 = vector.load %arg2[%c0_22, %c2, %c0_23, %c0_24] : memref<2x5x28x384xf32, #tpu.memory_space<vmem>>, vector<1x1x28x384xf32>
    %24 = vector.shape_cast %23 : vector<1x1x28x384xf32> to vector<28x384xf32>
    %cst_25 = arith.constant dense<0.000000e+00> : vector<24x384xf32>
    %25 = tpu.matmul %22, %24, %cst_25 {dimension_numbers = #tpu.dot_dimension_numbers<[1], [0], [0], [1], [0, 0, 1, 1], [], []>} : vector<24x28xf32>, vector<28x384xf32>, vector<24x384xf32> -> vector<24x384xf32>
    %26 = arith.addf %17, %25 : vector<24x384xf32>
    %c1_26 = arith.constant 1 : index
    %c2_27 = arith.constant 2 : index
    %c0_28 = arith.constant 0 : index
    %c0_29 = arith.constant 0 : index
    %27 = vector.load %arg2[%c1_26, %c2_27, %c0_28, %c0_29] : memref<2x5x28x384xf32, #tpu.memory_space<vmem>>, vector<1x1x28x384xf32>
    %28 = vector.shape_cast %27 : vector<1x1x28x384xf32> to vector<28x384xf32>
    %cst_30 = arith.constant dense<0.000000e+00> : vector<24x384xf32>
    %29 = tpu.matmul %22, %28, %cst_30 {dimension_numbers = #tpu.dot_dimension_numbers<[1], [0], [0], [1], [0, 0, 1, 1], [], []>} : vector<24x28xf32>, vector<28x384xf32>, vector<24x384xf32> -> vector<24x384xf32>
    %30 = arith.addf %21, %29 : vector<24x384xf32>
    %31 = vector.extract_strided_slice %1 {offsets = [3, 0], sizes = [24, 28], strides = [1, 1]} : vector<28x28xf32> to vector<24x28xf32>
    %c0_31 = arith.constant 0 : index
    %c3 = arith.constant 3 : index
    %c0_32 = arith.constant 0 : index
    %c0_33 = arith.constant 0 : index
    %32 = vector.load %arg2[%c0_31, %c3, %c0_32, %c0_33] : memref<2x5x28x384xf32, #tpu.memory_space<vmem>>, vector<1x1x28x384xf32>
    %33 = vector.shape_cast %32 : vector<1x1x28x384xf32> to vector<28x384xf32>
    %cst_34 = arith.constant dense<0.000000e+00> : vector<24x384xf32>
    %34 = tpu.matmul %31, %33, %cst_34 {dimension_numbers = #tpu.dot_dimension_numbers<[1], [0], [0], [1], [0, 0, 1, 1], [], []>} : vector<24x28xf32>, vector<28x384xf32>, vector<24x384xf32> -> vector<24x384xf32>
    %35 = arith.addf %26, %34 : vector<24x384xf32>
    %c1_35 = arith.constant 1 : index
    %c3_36 = arith.constant 3 : index
    %c0_37 = arith.constant 0 : index
    %c0_38 = arith.constant 0 : index
    %36 = vector.load %arg2[%c1_35, %c3_36, %c0_37, %c0_38] : memref<2x5x28x384xf32, #tpu.memory_space<vmem>>, vector<1x1x28x384xf32>
    %37 = vector.shape_cast %36 : vector<1x1x28x384xf32> to vector<28x384xf32>
    %cst_39 = arith.constant dense<0.000000e+00> : vector<24x384xf32>
    %38 = tpu.matmul %31, %37, %cst_39 {dimension_numbers = #tpu.dot_dimension_numbers<[1], [0], [0], [1], [0, 0, 1, 1], [], []>} : vector<24x28xf32>, vector<28x384xf32>, vector<24x384xf32> -> vector<24x384xf32>
    %39 = arith.addf %30, %38 : vector<24x384xf32>
    %40 = vector.extract_strided_slice %1 {offsets = [4, 0], sizes = [24, 28], strides = [1, 1]} : vector<28x28xf32> to vector<24x28xf32>
    %c0_40 = arith.constant 0 : index
    %c4 = arith.constant 4 : index
    %c0_41 = arith.constant 0 : index
    %c0_42 = arith.constant 0 : index
    %41 = vector.load %arg2[%c0_40, %c4, %c0_41, %c0_42] : memref<2x5x28x384xf32, #tpu.memory_space<vmem>>, vector<1x1x28x384xf32>
    %42 = vector.shape_cast %41 : vector<1x1x28x384xf32> to vector<28x384xf32>
    %cst_43 = arith.constant dense<0.000000e+00> : vector<24x384xf32>
    %43 = tpu.matmul %40, %42, %cst_43 {dimension_numbers = #tpu.dot_dimension_numbers<[1], [0], [0], [1], [0, 0, 1, 1], [], []>} : vector<24x28xf32>, vector<28x384xf32>, vector<24x384xf32> -> vector<24x384xf32>
    %44 = arith.addf %35, %43 : vector<24x384xf32>
    %c1_44 = arith.constant 1 : index
    %c4_45 = arith.constant 4 : index
    %c0_46 = arith.constant 0 : index
    %c0_47 = arith.constant 0 : index
    %45 = vector.load %arg2[%c1_44, %c4_45, %c0_46, %c0_47] : memref<2x5x28x384xf32, #tpu.memory_space<vmem>>, vector<1x1x28x384xf32>
    %46 = vector.shape_cast %45 : vector<1x1x28x384xf32> to vector<28x384xf32>
    %cst_48 = arith.constant dense<0.000000e+00> : vector<24x384xf32>
    %47 = tpu.matmul %40, %46, %cst_48 {dimension_numbers = #tpu.dot_dimension_numbers<[1], [0], [0], [1], [0, 0, 1, 1], [], []>} : vector<24x28xf32>, vector<28x384xf32>, vector<24x384xf32> -> vector<24x384xf32>
    %48 = arith.addf %39, %47 : vector<24x384xf32>
    %49 = arith.maximumf %44, %48 : vector<24x384xf32>
    %50 = tpu.iota {dimensions = array<i32: 0>} : vector<12x24xi32>
    %51 = tpu.iota {dimensions = array<i32: 1>} : vector<12x24xi32>
    %c2_i32 = arith.constant 2 : i32
    %52 = vector.broadcast %c2_i32 : i32 to vector<12x24xi32>
    %53 = arith.muli %52, %50 : vector<12x24xi32>
    %c0_i32 = arith.constant 0 : i32
    %54 = vector.broadcast %c0_i32 : i32 to vector<12x24xi32>
    %55 = arith.addi %53, %54 : vector<12x24xi32>
    %56 = arith.cmpi eq, %51, %55 : vector<12x24xi32>
    %cst_49 = arith.constant 1.000000e+00 : f32
    %cst_50 = arith.constant 0.000000e+00 : f32
    %57 = vector.broadcast %cst_49 : f32 to vector<12x24xf32>
    %58 = vector.broadcast %cst_50 : f32 to vector<12x24xf32>
    %59 = arith.select %56, %57, %58 : vector<12x24xi1>, vector<12x24xf32>
    %cst_51 = arith.constant dense<0.000000e+00> : vector<12x384xf32>
    %60 = tpu.matmul %59, %49, %cst_51 {dimension_numbers = #tpu.dot_dimension_numbers<[1], [0], [0], [1], [0, 0, 1, 1], [], []>} : vector<12x24xf32>, vector<24x384xf32>, vector<12x384xf32> -> vector<12x384xf32>
    %61 = tpu.iota {dimensions = array<i32: 0>} : vector<12x24xi32>
    %62 = tpu.iota {dimensions = array<i32: 1>} : vector<12x24xi32>
    %c2_i32_52 = arith.constant 2 : i32
    %63 = vector.broadcast %c2_i32_52 : i32 to vector<12x24xi32>
    %64 = arith.muli %63, %61 : vector<12x24xi32>
    %c1_i32 = arith.constant 1 : i32
    %65 = vector.broadcast %c1_i32 : i32 to vector<12x24xi32>
    %66 = arith.addi %64, %65 : vector<12x24xi32>
    %67 = arith.cmpi eq, %62, %66 : vector<12x24xi32>
    %cst_53 = arith.constant 1.000000e+00 : f32
    %cst_54 = arith.constant 0.000000e+00 : f32
    %68 = vector.broadcast %cst_53 : f32 to vector<12x24xf32>
    %69 = vector.broadcast %cst_54 : f32 to vector<12x24xf32>
    %70 = arith.select %67, %68, %69 : vector<12x24xi1>, vector<12x24xf32>
    %cst_55 = arith.constant dense<0.000000e+00> : vector<12x384xf32>
    %71 = tpu.matmul %70, %49, %cst_55 {dimension_numbers = #tpu.dot_dimension_numbers<[1], [0], [0], [1], [0, 0, 1, 1], [], []>} : vector<12x24xf32>, vector<24x384xf32>, vector<12x384xf32> -> vector<12x384xf32>
    %72 = arith.maximumf %60, %71 : vector<12x384xf32>
    %c0_56 = arith.constant 0 : index
    %c0_57 = arith.constant 0 : index
    %73 = vector.load %arg3[%c0_56, %c0_57] : memref<1x384xf32, #tpu.memory_space<vmem>>, vector<1x384xf32>
    %74 = vector.broadcast %73 : vector<1x384xf32> to vector<12x384xf32>
    %75 = arith.addf %72, %74 : vector<12x384xf32>
    %cst_58 = arith.constant 0.000000e+00 : f32
    %76 = vector.broadcast %cst_58 : f32 to vector<12x384xf32>
    %77 = arith.maximumf %75, %76 : vector<12x384xf32>
    %cst_59 = arith.constant 0.000000e+00 : f32
    %78 = vector.broadcast %cst_59 : f32 to vector<8x256xf32>
    %cst_60 = arith.constant 0.000000e+00 : f32
    %79 = vector.broadcast %cst_60 : f32 to vector<8x256xf32>
    %80 = vector.extract_strided_slice %77 {offsets = [0, 0], sizes = [8, 384], strides = [1, 1]} : vector<12x384xf32> to vector<8x384xf32>
    %c0_61 = arith.constant 0 : index
    %c0_62 = arith.constant 0 : index
    %c0_63 = arith.constant 0 : index
    %c0_64 = arith.constant 0 : index
    %81 = vector.load %arg4[%c0_61, %c0_62, %c0_63, %c0_64] : memref<2x5x384x256xf32, #tpu.memory_space<vmem>>, vector<1x1x384x256xf32>
    %82 = vector.shape_cast %81 : vector<1x1x384x256xf32> to vector<384x256xf32>
    %cst_65 = arith.constant dense<0.000000e+00> : vector<8x256xf32>
    %83 = tpu.matmul %80, %82, %cst_65 {dimension_numbers = #tpu.dot_dimension_numbers<[1], [0], [0], [1], [0, 0, 1, 1], [], []>} : vector<8x384xf32>, vector<384x256xf32>, vector<8x256xf32> -> vector<8x256xf32>
    %84 = arith.addf %78, %83 : vector<8x256xf32>
    %c1_66 = arith.constant 1 : index
    %c0_67 = arith.constant 0 : index
    %c0_68 = arith.constant 0 : index
    %c0_69 = arith.constant 0 : index
    %85 = vector.load %arg4[%c1_66, %c0_67, %c0_68, %c0_69] : memref<2x5x384x256xf32, #tpu.memory_space<vmem>>, vector<1x1x384x256xf32>
    %86 = vector.shape_cast %85 : vector<1x1x384x256xf32> to vector<384x256xf32>
    %cst_70 = arith.constant dense<0.000000e+00> : vector<8x256xf32>
    %87 = tpu.matmul %80, %86, %cst_70 {dimension_numbers = #tpu.dot_dimension_numbers<[1], [0], [0], [1], [0, 0, 1, 1], [], []>} : vector<8x384xf32>, vector<384x256xf32>, vector<8x256xf32> -> vector<8x256xf32>
    %88 = arith.addf %79, %87 : vector<8x256xf32>
    %89 = vector.extract_strided_slice %77 {offsets = [1, 0], sizes = [8, 384], strides = [1, 1]} : vector<12x384xf32> to vector<8x384xf32>
    %c0_71 = arith.constant 0 : index
    %c1_72 = arith.constant 1 : index
    %c0_73 = arith.constant 0 : index
    %c0_74 = arith.constant 0 : index
    %90 = vector.load %arg4[%c0_71, %c1_72, %c0_73, %c0_74] : memref<2x5x384x256xf32, #tpu.memory_space<vmem>>, vector<1x1x384x256xf32>
    %91 = vector.shape_cast %90 : vector<1x1x384x256xf32> to vector<384x256xf32>
    %cst_75 = arith.constant dense<0.000000e+00> : vector<8x256xf32>
    %92 = tpu.matmul %89, %91, %cst_75 {dimension_numbers = #tpu.dot_dimension_numbers<[1], [0], [0], [1], [0, 0, 1, 1], [], []>} : vector<8x384xf32>, vector<384x256xf32>, vector<8x256xf32> -> vector<8x256xf32>
    %93 = arith.addf %84, %92 : vector<8x256xf32>
    %c1_76 = arith.constant 1 : index
    %c1_77 = arith.constant 1 : index
    %c0_78 = arith.constant 0 : index
    %c0_79 = arith.constant 0 : index
    %94 = vector.load %arg4[%c1_76, %c1_77, %c0_78, %c0_79] : memref<2x5x384x256xf32, #tpu.memory_space<vmem>>, vector<1x1x384x256xf32>
    %95 = vector.shape_cast %94 : vector<1x1x384x256xf32> to vector<384x256xf32>
    %cst_80 = arith.constant dense<0.000000e+00> : vector<8x256xf32>
    %96 = tpu.matmul %89, %95, %cst_80 {dimension_numbers = #tpu.dot_dimension_numbers<[1], [0], [0], [1], [0, 0, 1, 1], [], []>} : vector<8x384xf32>, vector<384x256xf32>, vector<8x256xf32> -> vector<8x256xf32>
    %97 = arith.addf %88, %96 : vector<8x256xf32>
    %98 = vector.extract_strided_slice %77 {offsets = [2, 0], sizes = [8, 384], strides = [1, 1]} : vector<12x384xf32> to vector<8x384xf32>
    %c0_81 = arith.constant 0 : index
    %c2_82 = arith.constant 2 : index
    %c0_83 = arith.constant 0 : index
    %c0_84 = arith.constant 0 : index
    %99 = vector.load %arg4[%c0_81, %c2_82, %c0_83, %c0_84] : memref<2x5x384x256xf32, #tpu.memory_space<vmem>>, vector<1x1x384x256xf32>
    %100 = vector.shape_cast %99 : vector<1x1x384x256xf32> to vector<384x256xf32>
    %cst_85 = arith.constant dense<0.000000e+00> : vector<8x256xf32>
    %101 = tpu.matmul %98, %100, %cst_85 {dimension_numbers = #tpu.dot_dimension_numbers<[1], [0], [0], [1], [0, 0, 1, 1], [], []>} : vector<8x384xf32>, vector<384x256xf32>, vector<8x256xf32> -> vector<8x256xf32>
    %102 = arith.addf %93, %101 : vector<8x256xf32>
    %c1_86 = arith.constant 1 : index
    %c2_87 = arith.constant 2 : index
    %c0_88 = arith.constant 0 : index
    %c0_89 = arith.constant 0 : index
    %103 = vector.load %arg4[%c1_86, %c2_87, %c0_88, %c0_89] : memref<2x5x384x256xf32, #tpu.memory_space<vmem>>, vector<1x1x384x256xf32>
    %104 = vector.shape_cast %103 : vector<1x1x384x256xf32> to vector<384x256xf32>
    %cst_90 = arith.constant dense<0.000000e+00> : vector<8x256xf32>
    %105 = tpu.matmul %98, %104, %cst_90 {dimension_numbers = #tpu.dot_dimension_numbers<[1], [0], [0], [1], [0, 0, 1, 1], [], []>} : vector<8x384xf32>, vector<384x256xf32>, vector<8x256xf32> -> vector<8x256xf32>
    %106 = arith.addf %97, %105 : vector<8x256xf32>
    %107 = vector.extract_strided_slice %77 {offsets = [3, 0], sizes = [8, 384], strides = [1, 1]} : vector<12x384xf32> to vector<8x384xf32>
    %c0_91 = arith.constant 0 : index
    %c3_92 = arith.constant 3 : index
    %c0_93 = arith.constant 0 : index
    %c0_94 = arith.constant 0 : index
    %108 = vector.load %arg4[%c0_91, %c3_92, %c0_93, %c0_94] : memref<2x5x384x256xf32, #tpu.memory_space<vmem>>, vector<1x1x384x256xf32>
    %109 = vector.shape_cast %108 : vector<1x1x384x256xf32> to vector<384x256xf32>
    %cst_95 = arith.constant dense<0.000000e+00> : vector<8x256xf32>
    %110 = tpu.matmul %107, %109, %cst_95 {dimension_numbers = #tpu.dot_dimension_numbers<[1], [0], [0], [1], [0, 0, 1, 1], [], []>} : vector<8x384xf32>, vector<384x256xf32>, vector<8x256xf32> -> vector<8x256xf32>
    %111 = arith.addf %102, %110 : vector<8x256xf32>
    %c1_96 = arith.constant 1 : index
    %c3_97 = arith.constant 3 : index
    %c0_98 = arith.constant 0 : index
    %c0_99 = arith.constant 0 : index
    %112 = vector.load %arg4[%c1_96, %c3_97, %c0_98, %c0_99] : memref<2x5x384x256xf32, #tpu.memory_space<vmem>>, vector<1x1x384x256xf32>
    %113 = vector.shape_cast %112 : vector<1x1x384x256xf32> to vector<384x256xf32>
    %cst_100 = arith.constant dense<0.000000e+00> : vector<8x256xf32>
    %114 = tpu.matmul %107, %113, %cst_100 {dimension_numbers = #tpu.dot_dimension_numbers<[1], [0], [0], [1], [0, 0, 1, 1], [], []>} : vector<8x384xf32>, vector<384x256xf32>, vector<8x256xf32> -> vector<8x256xf32>
    %115 = arith.addf %106, %114 : vector<8x256xf32>
    %116 = vector.extract_strided_slice %77 {offsets = [4, 0], sizes = [8, 384], strides = [1, 1]} : vector<12x384xf32> to vector<8x384xf32>
    %c0_101 = arith.constant 0 : index
    %c4_102 = arith.constant 4 : index
    %c0_103 = arith.constant 0 : index
    %c0_104 = arith.constant 0 : index
    %117 = vector.load %arg4[%c0_101, %c4_102, %c0_103, %c0_104] : memref<2x5x384x256xf32, #tpu.memory_space<vmem>>, vector<1x1x384x256xf32>
    %118 = vector.shape_cast %117 : vector<1x1x384x256xf32> to vector<384x256xf32>
    %cst_105 = arith.constant dense<0.000000e+00> : vector<8x256xf32>
    %119 = tpu.matmul %116, %118, %cst_105 {dimension_numbers = #tpu.dot_dimension_numbers<[1], [0], [0], [1], [0, 0, 1, 1], [], []>} : vector<8x384xf32>, vector<384x256xf32>, vector<8x256xf32> -> vector<8x256xf32>
    %120 = arith.addf %111, %119 : vector<8x256xf32>
    %c1_106 = arith.constant 1 : index
    %c4_107 = arith.constant 4 : index
    %c0_108 = arith.constant 0 : index
    %c0_109 = arith.constant 0 : index
    %121 = vector.load %arg4[%c1_106, %c4_107, %c0_108, %c0_109] : memref<2x5x384x256xf32, #tpu.memory_space<vmem>>, vector<1x1x384x256xf32>
    %122 = vector.shape_cast %121 : vector<1x1x384x256xf32> to vector<384x256xf32>
    %cst_110 = arith.constant dense<0.000000e+00> : vector<8x256xf32>
    %123 = tpu.matmul %116, %122, %cst_110 {dimension_numbers = #tpu.dot_dimension_numbers<[1], [0], [0], [1], [0, 0, 1, 1], [], []>} : vector<8x384xf32>, vector<384x256xf32>, vector<8x256xf32> -> vector<8x256xf32>
    %124 = arith.addf %115, %123 : vector<8x256xf32>
    %125 = arith.maximumf %120, %124 : vector<8x256xf32>
    %126 = tpu.iota {dimensions = array<i32: 0>} : vector<4x8xi32>
    %127 = tpu.iota {dimensions = array<i32: 1>} : vector<4x8xi32>
    %c2_i32_111 = arith.constant 2 : i32
    %128 = vector.broadcast %c2_i32_111 : i32 to vector<4x8xi32>
    %129 = arith.muli %128, %126 : vector<4x8xi32>
    %c0_i32_112 = arith.constant 0 : i32
    %130 = vector.broadcast %c0_i32_112 : i32 to vector<4x8xi32>
    %131 = arith.addi %129, %130 : vector<4x8xi32>
    %132 = arith.cmpi eq, %127, %131 : vector<4x8xi32>
    %cst_113 = arith.constant 1.000000e+00 : f32
    %cst_114 = arith.constant 0.000000e+00 : f32
    %133 = vector.broadcast %cst_113 : f32 to vector<4x8xf32>
    %134 = vector.broadcast %cst_114 : f32 to vector<4x8xf32>
    %135 = arith.select %132, %133, %134 : vector<4x8xi1>, vector<4x8xf32>
    %cst_115 = arith.constant dense<0.000000e+00> : vector<4x256xf32>
    %136 = tpu.matmul %135, %125, %cst_115 {dimension_numbers = #tpu.dot_dimension_numbers<[1], [0], [0], [1], [0, 0, 1, 1], [], []>} : vector<4x8xf32>, vector<8x256xf32>, vector<4x256xf32> -> vector<4x256xf32>
    %137 = tpu.iota {dimensions = array<i32: 0>} : vector<4x8xi32>
    %138 = tpu.iota {dimensions = array<i32: 1>} : vector<4x8xi32>
    %c2_i32_116 = arith.constant 2 : i32
    %139 = vector.broadcast %c2_i32_116 : i32 to vector<4x8xi32>
    %140 = arith.muli %139, %137 : vector<4x8xi32>
    %c1_i32_117 = arith.constant 1 : i32
    %141 = vector.broadcast %c1_i32_117 : i32 to vector<4x8xi32>
    %142 = arith.addi %140, %141 : vector<4x8xi32>
    %143 = arith.cmpi eq, %138, %142 : vector<4x8xi32>
    %cst_118 = arith.constant 1.000000e+00 : f32
    %cst_119 = arith.constant 0.000000e+00 : f32
    %144 = vector.broadcast %cst_118 : f32 to vector<4x8xf32>
    %145 = vector.broadcast %cst_119 : f32 to vector<4x8xf32>
    %146 = arith.select %143, %144, %145 : vector<4x8xi1>, vector<4x8xf32>
    %cst_120 = arith.constant dense<0.000000e+00> : vector<4x256xf32>
    %147 = tpu.matmul %146, %125, %cst_120 {dimension_numbers = #tpu.dot_dimension_numbers<[1], [0], [0], [1], [0, 0, 1, 1], [], []>} : vector<4x8xf32>, vector<8x256xf32>, vector<4x256xf32> -> vector<4x256xf32>
    %148 = arith.maximumf %136, %147 : vector<4x256xf32>
    %c0_121 = arith.constant 0 : index
    %c0_122 = arith.constant 0 : index
    %149 = vector.load %arg5[%c0_121, %c0_122] : memref<1x256xf32, #tpu.memory_space<vmem>>, vector<1x256xf32>
    %150 = vector.broadcast %149 : vector<1x256xf32> to vector<4x256xf32>
    %151 = arith.addf %148, %150 : vector<4x256xf32>
    %cst_123 = arith.constant 0.000000e+00 : f32
    %152 = vector.broadcast %cst_123 : f32 to vector<4x256xf32>
    %153 = arith.maximumf %151, %152 : vector<4x256xf32>
    %c0_124 = arith.constant 0 : index
    %c0_125 = arith.constant 0 : index
    %154 = vector.load %arg7[%c0_124, %c0_125] : memref<1x20xf32, #tpu.memory_space<vmem>>, vector<1x20xf32>
    %155 = vector.extract_strided_slice %153 {offsets = [0, 0], sizes = [1, 256], strides = [1, 1]} : vector<4x256xf32> to vector<1x256xf32>
    %c0_126 = arith.constant 0 : index
    %c0_127 = arith.constant 0 : index
    %c0_128 = arith.constant 0 : index
    %156 = vector.load %arg6[%c0_126, %c0_127, %c0_128] : memref<4x256x20xf32, #tpu.memory_space<vmem>>, vector<1x256x20xf32>
    %157 = vector.shape_cast %156 : vector<1x256x20xf32> to vector<256x20xf32>
    %cst_129 = arith.constant dense<0.000000e+00> : vector<1x20xf32>
    %158 = tpu.matmul %155, %157, %cst_129 {dimension_numbers = #tpu.dot_dimension_numbers<[1], [0], [0], [1], [0, 0, 1, 1], [], []>} : vector<1x256xf32>, vector<256x20xf32>, vector<1x20xf32> -> vector<1x20xf32>
    %159 = arith.addf %154, %158 : vector<1x20xf32>
    %160 = vector.extract_strided_slice %153 {offsets = [1, 0], sizes = [1, 256], strides = [1, 1]} : vector<4x256xf32> to vector<1x256xf32>
    %c1_130 = arith.constant 1 : index
    %c0_131 = arith.constant 0 : index
    %c0_132 = arith.constant 0 : index
    %161 = vector.load %arg6[%c1_130, %c0_131, %c0_132] : memref<4x256x20xf32, #tpu.memory_space<vmem>>, vector<1x256x20xf32>
    %162 = vector.shape_cast %161 : vector<1x256x20xf32> to vector<256x20xf32>
    %cst_133 = arith.constant dense<0.000000e+00> : vector<1x20xf32>
    %163 = tpu.matmul %160, %162, %cst_133 {dimension_numbers = #tpu.dot_dimension_numbers<[1], [0], [0], [1], [0, 0, 1, 1], [], []>} : vector<1x256xf32>, vector<256x20xf32>, vector<1x20xf32> -> vector<1x20xf32>
    %164 = arith.addf %159, %163 : vector<1x20xf32>
    %165 = vector.extract_strided_slice %153 {offsets = [2, 0], sizes = [1, 256], strides = [1, 1]} : vector<4x256xf32> to vector<1x256xf32>
    %c2_134 = arith.constant 2 : index
    %c0_135 = arith.constant 0 : index
    %c0_136 = arith.constant 0 : index
    %166 = vector.load %arg6[%c2_134, %c0_135, %c0_136] : memref<4x256x20xf32, #tpu.memory_space<vmem>>, vector<1x256x20xf32>
    %167 = vector.shape_cast %166 : vector<1x256x20xf32> to vector<256x20xf32>
    %cst_137 = arith.constant dense<0.000000e+00> : vector<1x20xf32>
    %168 = tpu.matmul %165, %167, %cst_137 {dimension_numbers = #tpu.dot_dimension_numbers<[1], [0], [0], [1], [0, 0, 1, 1], [], []>} : vector<1x256xf32>, vector<256x20xf32>, vector<1x20xf32> -> vector<1x20xf32>
    %169 = arith.addf %164, %168 : vector<1x20xf32>
    %170 = vector.extract_strided_slice %153 {offsets = [3, 0], sizes = [1, 256], strides = [1, 1]} : vector<4x256xf32> to vector<1x256xf32>
    %c3_138 = arith.constant 3 : index
    %c0_139 = arith.constant 0 : index
    %c0_140 = arith.constant 0 : index
    %171 = vector.load %arg6[%c3_138, %c0_139, %c0_140] : memref<4x256x20xf32, #tpu.memory_space<vmem>>, vector<1x256x20xf32>
    %172 = vector.shape_cast %171 : vector<1x256x20xf32> to vector<256x20xf32>
    %cst_141 = arith.constant dense<0.000000e+00> : vector<1x20xf32>
    %173 = tpu.matmul %170, %172, %cst_141 {dimension_numbers = #tpu.dot_dimension_numbers<[1], [0], [0], [1], [0, 0, 1, 1], [], []>} : vector<1x256xf32>, vector<256x20xf32>, vector<1x20xf32> -> vector<1x20xf32>
    %174 = arith.addf %169, %173 : vector<1x20xf32>
    %cst_142 = arith.constant 0.000000e+00 : f32
    %175 = vector.broadcast %cst_142 : f32 to vector<1x20xf32>
    %176 = arith.maximumf %174, %175 : vector<1x20xf32>
    %c0_143 = arith.constant 0 : index
    %c0_144 = arith.constant 0 : index
    %177 = vector.load %arg8[%c0_143, %c0_144] : memref<20x128xf32, #tpu.memory_space<vmem>>, vector<20x128xf32>
    %cst_145 = arith.constant dense<0.000000e+00> : vector<1x128xf32>
    %178 = tpu.matmul %176, %177, %cst_145 {dimension_numbers = #tpu.dot_dimension_numbers<[1], [0], [0], [1], [0, 0, 1, 1], [], []>} : vector<1x20xf32>, vector<20x128xf32>, vector<1x128xf32> -> vector<1x128xf32>
    %c0_146 = arith.constant 0 : index
    %c0_147 = arith.constant 0 : index
    %179 = vector.load %arg9[%c0_146, %c0_147] : memref<1x128xf32, #tpu.memory_space<vmem>>, vector<1x128xf32>
    %180 = arith.addf %178, %179 : vector<1x128xf32>
    %c0_148 = arith.constant 0 : index
    %c0_149 = arith.constant 0 : index
    %c0_150 = arith.constant 0 : index
    %181 = vector.load %arg10[%c0_148, %c0_149, %c0_150] : memref<1x1x128xf32, #tpu.memory_space<vmem>>, vector<1x1x128xf32>
    %182 = vector.shape_cast %181 : vector<1x1x128xf32> to vector<1x128xf32>
    %183 = vector.shape_cast %180 : vector<1x128xf32> to vector<1x1x128xf32>
    tpu.vector_store %arg10[%c0_148, %c0_149, %c0_150], %183 {strides = array<i32>} : memref<1x1x128xf32, #tpu.memory_space<vmem>>, vector<1x1x128xf32>,
    return
  }
  func.func @transform_0(%arg0: i32) -> (i32, i32, i32) {
    %c0_i32 = arith.constant 0 : i32
    %c0_i32_0 = arith.constant 0 : i32
    %c0_i32_1 = arith.constant 0 : i32
    return %arg0, %c0_i32, %c0_i32_0 : i32, i32, i32
  }
  func.func @transform_1(%arg0: i32) -> (i32, i32, i32, i32) {
    %c0_i32 = arith.constant 0 : i32
    %c0_i32_0 = arith.constant 0 : i32
    %c0_i32_1 = arith.constant 0 : i32
    %c0_i32_2 = arith.constant 0 : i32
    %c0_i32_3 = arith.constant 0 : i32
    return %c0_i32, %c0_i32_0, %c0_i32_1, %c0_i32_2 : i32, i32, i32, i32
  }
  func.func @transform_2(%arg0: i32) -> (i32, i32) {
    %c0_i32 = arith.constant 0 : i32
    %c0_i32_0 = arith.constant 0 : i32
    %c0_i32_1 = arith.constant 0 : i32
    return %c0_i32, %c0_i32_0 : i32, i32
  }
  func.func @transform_3(%arg0: i32) -> (i32, i32, i32, i32) {
    %c0_i32 = arith.constant 0 : i32
    %c0_i32_0 = arith.constant 0 : i32
    %c0_i32_1 = arith.constant 0 : i32
    %c0_i32_2 = arith.constant 0 : i32
    %c0_i32_3 = arith.constant 0 : i32
    return %c0_i32, %c0_i32_0, %c0_i32_1, %c0_i32_2 : i32, i32, i32, i32
  }
  func.func @transform_4(%arg0: i32) -> (i32, i32) {
    %c0_i32 = arith.constant 0 : i32
    %c0_i32_0 = arith.constant 0 : i32
    %c0_i32_1 = arith.constant 0 : i32
    return %c0_i32, %c0_i32_0 : i32, i32
  }
  func.func @transform_5(%arg0: i32) -> (i32, i32, i32) {
    %c0_i32 = arith.constant 0 : i32
    %c0_i32_0 = arith.constant 0 : i32
    %c0_i32_1 = arith.constant 0 : i32
    %c0_i32_2 = arith.constant 0 : i32
    return %c0_i32, %c0_i32_0, %c0_i32_1 : i32, i32, i32
  }
  func.func @transform_6(%arg0: i32) -> (i32, i32) {
    %c0_i32 = arith.constant 0 : i32
    %c0_i32_0 = arith.constant 0 : i32
    %c0_i32_1 = arith.constant 0 : i32
    return %c0_i32, %c0_i32_0 : i32, i32
  }
  func.func @transform_7(%arg0: i32) -> (i32, i32) {
    %c0_i32 = arith.constant 0 : i32
    %c0_i32_0 = arith.constant 0 : i32
    %c0_i32_1 = arith.constant 0 : i32
    return %c0_i32, %c0_i32_0 : i32, i32
  }
  func.func @transform_8(%arg0: i32) -> (i32, i32) {
    %c0_i32 = arith.constant 0 : i32
    %c0_i32_0 = arith.constant 0 : i32
    %c0_i32_1 = arith.constant 0 : i32
    return %c0_i32, %c0_i32_0 : i32, i32
  }
  func.func @transform_9(%arg0: i32) -> (i32, i32, i32) {
    %c0_i32 = arith.constant 0 : i32
    %c0_i32_0 = arith.constant 0 : i32
    %c0_i32_1 = arith.constant 0 : i32
    return %arg0, %c0_i32, %c0_i32_0 : i32, i32, i32
  }
}

</mosaic_0001>

<llo_original>
// kernel: fl_model_forward.1
$region0: #{fl_model_forward.1}
  #allocation0 [shape = 'u32[]', space=smem, size = 0x4, offset = 0x4, fixed_abs, tag = 'smem constant byte address 0x4 - core index']
  #allocation1 [shape = 'u32[144,128]{1,0:T(1,128)}', space=vmem, size = 0x12000, scoped, tag = 'internal scratch']
  %s0 = inlined_call_operand.vmem [shape: f32[2,28,28], index: 0, kind: input, shape index: {}]
  %s1 = inlined_call_operand.vmem [shape: f32[2,5,28,384], index: 1, kind: input, shape index: {}]
  %s2 = inlined_call_operand.hbm [shape: f32[1,384], index: 2, kind: input, shape index: {}]
  %s3 = inlined_call_operand.hbm [shape: f32[2,5,384,256], index: 3, kind: input, shape index: {}]
  %s4 = inlined_call_operand.hbm [shape: f32[1,256], index: 4, kind: input, shape index: {}]
  %s5 = inlined_call_operand.vmem [shape: f32[4,256,20], index: 5, kind: input, shape index: {}]
  %s6 = inlined_call_operand.hbm [shape: f32[1,20], index: 6, kind: input, shape index: {}]
  %s7 = inlined_call_operand.hbm [shape: f32[20,128], index: 7, kind: input, shape index: {}]
  %s8 = inlined_call_operand.hbm [shape: f32[1,128], index: 8, kind: input, shape index: {}]
  %s9 = inlined_call_operand.hbm [shape: f32[2,1,128], index: 9, kind: output, shape index: {}]
  %s10 = sld [smem:[#allocation0]]
  $region93: #{fl_model_forward.1} parent=0
    _
  %s12 = ssub.s32 1, %s10
  %s13 = scalar_select 0, %s12, %s10
  $region1: #{fl_model_forward.1} parent=0
    #allocation2 [shape = 'u8[1536]{0}', space=vmem, size = 0x800, scoped, tag = 'input window, operand 2, single buffered']
    #allocation3 [shape = 's32[2]{0}', space=sflag, size = 0x8, scoped, tag = 'scoped memory for fl_model_forward.1']
    #allocation4 [shape = 's32[2]{0}', space=sflag, size = 0x8, scoped, tag = 'scoped memory for fl_model_forward.1']
    #allocation5 [shape = 'u8[3932160]{0}', space=vmem, size = 0x3c0000, scoped, tag = 'input window, operand 3, single buffered']
    #allocation6 [shape = 's32[1]{0}', space=sflag, size = 0x4, scoped, tag = 'scoped memory for fl_model_forward.1']
    #allocation7 [shape = 'u8[1024]{0}', space=vmem, size = 0x400, scoped, tag = 'input window, operand 4, single buffered']
    #allocation8 [shape = 'u8[512]{0}', space=vmem, size = 0x400, scoped, tag = 'input window, operand 6, single buffered']
    #allocation9 [shape = 's32[1]{0}', space=sflag, size = 0x4, scoped, tag = 'scoped memory for fl_model_forward.1']
    #allocation10 [shape = 'u8[12288]{0}', space=vmem, size = 0x3000, scoped, tag = 'input window, operand 7, single buffered']
    #allocation11 [shape = 'u8[512]{0}', space=vmem, size = 0x400, scoped, tag = 'input window, operand 8, single buffered']
    #allocation12 [shape = 's32[1]{0}', space=sflag, size = 0x4, scoped, tag = 'scoped memory for fl_model_forward.1']
    #allocation13 [shape = 'u8[1024]{0}', space=vmem, size = 0x400, scoped, tag = 'output window, operand 0']
    %14 = vsyncpa [#allocation3], 0
    %15 = vsyncpa [#allocation6], 0
    %16 = vsyncpa [#allocation9], 0
    %17 = vsyncpa [#allocation12], 0
    %18 = vsyncpa [#allocation4], 0
    %s19 = scalar_lea.sflag [#allocation4], 1
    %20 = vsyncpa %s19, 0
    loop: start=0, step=1, limit=4
    $region2: #{fl_model_forward.1} parent=1 // loop_pre_header
      _
    $region3: #{fl_model_forward.1} parent=1 // loop_header
      %s22 = sphi 0, %s26
      %p23 = scmp.ge.s32.totalorder %s22, 4
      %s32 = sphi 0, %s34
      %s35 = sphi 0, %s32
      %s36 = sphi 0, %s35
      %s52 = sphi 0, %s36
      %s56 = sphi 0, %s56
      %s58 = sphi 0, %s56
      %s59 = sphi 0, %s58
      %s73 = sphi 0, %s59
      %s77 = sphi 0, %s77
      %s79 = sphi 0, %s77
      %s80 = sphi 0, %s79
      %s94 = sphi 0, %s80
      %s98 = sphi 0, %s98
      %s100 = sphi 0, %s98
      %s101 = sphi 0, %s100
      %s115 = sphi 0, %s101
      %s119 = sphi 0, %s119
      %s121 = sphi 0, %s119
      %s122 = sphi 0, %s121
      %s136 = sphi 0, %s122
      %s140 = sphi 0, %s140
      %s142 = sphi 0, %s140
      %s143 = sphi 0, %s142
      %s157 = sphi 0, %s143
      %s161 = sphi 0, %s161
      %s163 = sphi 0, %s161
      %s164 = sphi 0, %s163
      %s178 = sphi 0, %s164
      %s182 = sphi 0, %s182
      %s184 = sphi 0, %s182
      %s185 = sphi 0, %s184
      %s199 = sphi 0, %s185
      %s203 = sphi 0, %s203
      %s205 = sphi 0, %s203
      %s206 = sphi 0, %s205
      %s220 = sphi 0, %s206
      %s226 = sphi 0, %s228
      %s229 = sphi 0, %s226
      %s230 = sphi 0, %s229
      %s246 = sphi 0, %s230
    $region4: #{fl_model_forward.1} parent=1 // loop_header_branch
      %25 = sbr.rel (%p23) target = $region8
    $region5: #{fl_model_forward.1} parent=1 // loop_body
      %s27 = ssub.s32 %s22, 1
      %s28 = ssub.s32 %s22, 2
      %s29 = sadd.s32 %s22, 1
      %s30 = ssub.s32 %s22, %s29
      %p31 = scmp.eq.s32.totalorder %s30, 0
      %s33 = sadd.s32 %s32, 1
      %s34 = scalar_select %p31, %s32, %s33
      %p37 = pneg %p31
      %p38 = scmp.eq.s32.totalorder %s22, 1
      %p39 = por %p37, %p38
      %p40 = scmp.ne.s32.totalorder %s32, %s35
      %p41 = scmp.eq.s32.totalorder %s22, 0
      %p42 = por %p40, %p41
      %p43 = scmp.ne.s32.totalorder %s32, %s35
      %p44 = scmp.eq.s32.totalorder %s27, 1
      %p45 = por %p43, %p44
      %p46 = scmp.ne.s32.totalorder %s35, %s36
      %p47 = scmp.eq.s32.totalorder %s27, 0
      %p48 = por %p46, %p47
      %p49 = scmp.ne.s32.totalorder %s35, %s36
      %p50 = scmp.eq.s32.totalorder %s28, 1
      %p51 = por %p49, %p50
      %p53 = scmp.ne.s32.totalorder %s36, %s52
      %p54 = scmp.eq.s32.totalorder %s28, 0
      %p55 = por %p53, %p54
      %s57 = sadd.s32 %s56, 1
      %p60 = scmp.eq.s32.totalorder %s22, 1
      %p61 = scmp.ne.s32.totalorder %s56, %s58
      %p62 = scmp.eq.s32.totalorder %s22, 0
      %p63 = por %p61, %p62
      %p64 = scmp.ne.s32.totalorder %s56, %s58
      %p65 = scmp.eq.s32.totalorder %s27, 1
      %p66 = por %p64, %p65
      %p67 = scmp.ne.s32.totalorder %s58, %s59
      %p68 = scmp.eq.s32.totalorder %s27, 0
      %p69 = por %p67, %p68
      %p70 = scmp.ne.s32.totalorder %s58, %s59
      %p71 = scmp.eq.s32.totalorder %s28, 1
      %p72 = por %p70, %p71
      %p74 = scmp.ne.s32.totalorder %s59, %s73
      %p75 = scmp.eq.s32.totalorder %s28, 0
      %p76 = por %p74, %p75
      %s78 = sadd.s32 %s77, 1
      %p81 = scmp.eq.s32.totalorder %s22, 1
      %p82 = scmp.ne.s32.totalorder %s77, %s79
      %p83 = scmp.eq.s32.totalorder %s22, 0
      %p84 = por %p82, %p83
      %p85 = scmp.ne.s32.totalorder %s77, %s79
      %p86 = scmp.eq.s32.totalorder %s27, 1
      %p87 = por %p85, %p86
      %p88 = scmp.ne.s32.totalorder %s79, %s80
      %p89 = scmp.eq.s32.totalorder %s27, 0
      %p90 = por %p88, %p89
      %p91 = scmp.ne.s32.totalorder %s79, %s80
      %p92 = scmp.eq.s32.totalorder %s28, 1
      %p93 = por %p91, %p92
      %p95 = scmp.ne.s32.totalorder %s80, %s94
      %p96 = scmp.eq.s32.totalorder %s28, 0
      %p97 = por %p95, %p96
      %s99 = sadd.s32 %s98, 1
      %p102 = scmp.eq.s32.totalorder %s22, 1
      %p103 = scmp.ne.s32.totalorder %s98, %s100
      %p104 = scmp.eq.s32.totalorder %s22, 0
      %p105 = por %p103, %p104
      %p106 = scmp.ne.s32.totalorder %s98, %s100
      %p107 = scmp.eq.s32.totalorder %s27, 1
      %p108 = por %p106, %p107
      %p109 = scmp.ne.s32.totalorder %s100, %s101
      %p110 = scmp.eq.s32.totalorder %s27, 0
      %p111 = por %p109, %p110
      %p112 = scmp.ne.s32.totalorder %s100, %s101
      %p113 = scmp.eq.s32.totalorder %s28, 1
      %p114 = por %p112, %p113
      %p116 = scmp.ne.s32.totalorder %s101, %s115
      %p117 = scmp.eq.s32.totalorder %s28, 0
      %p118 = por %p116, %p117
      %s120 = sadd.s32 %s119, 1
      %p123 = scmp.eq.s32.totalorder %s22, 1
      %p124 = scmp.ne.s32.totalorder %s119, %s121
      %p125 = scmp.eq.s32.totalorder %s22, 0
      %p126 = por %p124, %p125
      %p127 = scmp.ne.s32.totalorder %s119, %s121
      %p128 = scmp.eq.s32.totalorder %s27, 1
      %p129 = por %p127, %p128
      %p130 = scmp.ne.s32.totalorder %s121, %s122
      %p131 = scmp.eq.s32.totalorder %s27, 0
      %p132 = por %p130, %p131
      %p133 = scmp.ne.s32.totalorder %s121, %s122
      %p134 = scmp.eq.s32.totalorder %s28, 1
      %p135 = por %p133, %p134
      %p137 = scmp.ne.s32.totalorder %s122, %s136
      %p138 = scmp.eq.s32.totalorder %s28, 0
      %p139 = por %p137, %p138
      %s141 = sadd.s32 %s140, 1
      %p144 = scmp.eq.s32.totalorder %s22, 1
      %p145 = scmp.ne.s32.totalorder %s140, %s142
      %p146 = scmp.eq.s32.totalorder %s22, 0
      %p147 = por %p145, %p146
      %p148 = scmp.ne.s32.totalorder %s140, %s142
      %p149 = scmp.eq.s32.totalorder %s27, 1
      %p150 = por %p148, %p149
      %p151 = scmp.ne.s32.totalorder %s142, %s143
      %p152 = scmp.eq.s32.totalorder %s27, 0
      %p153 = por %p151, %p152
      %p154 = scmp.ne.s32.totalorder %s142, %s143
      %p155 = scmp.eq.s32.totalorder %s28, 1
      %p156 = por %p154, %p155
      %p158 = scmp.ne.s32.totalorder %s143, %s157
      %p159 = scmp.eq.s32.totalorder %s28, 0
      %p160 = por %p158, %p159
      %s162 = sadd.s32 %s161, 1
      %p165 = scmp.eq.s32.totalorder %s22, 1
      %p166 = scmp.ne.s32.totalorder %s161, %s163
      %p167 = scmp.eq.s32.totalorder %s22, 0
      %p168 = por %p166, %p167
      %p169 = scmp.ne.s32.totalorder %s161, %s163
      %p170 = scmp.eq.s32.totalorder %s27, 1
      %p171 = por %p169, %p170
      %p172 = scmp.ne.s32.totalorder %s163, %s164
      %p173 = scmp.eq.s32.totalorder %s27, 0
      %p174 = por %p172, %p173
      %p175 = scmp.ne.s32.totalorder %s163, %s164
      %p176 = scmp.eq.s32.totalorder %s28, 1
      %p177 = por %p175, %p176
      %p179 = scmp.ne.s32.totalorder %s164, %s178
      %p180 = scmp.eq.s32.totalorder %s28, 0
      %p181 = por %p179, %p180
      %s183 = sadd.s32 %s182, 1
      %p186 = scmp.eq.s32.totalorder %s22, 1
      %p187 = scmp.ne.s32.totalorder %s182, %s184
      %p188 = scmp.eq.s32.totalorder %s22, 0
      %p189 = por %p187, %p188
      %p190 = scmp.ne.s32.totalorder %s182, %s184
      %p191 = scmp.eq.s32.totalorder %s27, 1
      %p192 = por %p190, %p191
      %p193 = scmp.ne.s32.totalorder %s184, %s185
      %p194 = scmp.eq.s32.totalorder %s27, 0
      %p195 = por %p193, %p194
      %p196 = scmp.ne.s32.totalorder %s184, %s185
      %p197 = scmp.eq.s32.totalorder %s28, 1
      %p198 = por %p196, %p197
      %p200 = scmp.ne.s32.totalorder %s185, %s199
      %p201 = scmp.eq.s32.totalorder %s28, 0
      %p202 = por %p200, %p201
      %s204 = sadd.s32 %s203, 1
      %p207 = scmp.eq.s32.totalorder %s22, 1
      %p208 = scmp.ne.s32.totalorder %s203, %s205
      %p209 = scmp.eq.s32.totalorder %s22, 0
      %p210 = por %p208, %p209
      %p211 = scmp.ne.s32.totalorder %s203, %s205
      %p212 = scmp.eq.s32.totalorder %s27, 1
      %p213 = por %p211, %p212
      %p214 = scmp.ne.s32.totalorder %s205, %s206
      %p215 = scmp.eq.s32.totalorder %s27, 0
      %p216 = por %p214, %p215
      %p217 = scmp.ne.s32.totalorder %s205, %s206
      %p218 = scmp.eq.s32.totalorder %s28, 1
      %p219 = por %p217, %p218
      %p221 = scmp.ne.s32.totalorder %s206, %s220
      %p222 = scmp.eq.s32.totalorder %s28, 0
      %p223 = por %p221, %p222
      %s224 = ssub.s32 %s22, %s29
      %p225 = scmp.eq.s32.totalorder %s224, 0
      %s227 = sadd.s32 %s226, 1
      %s228 = scalar_select %p225, %s226, %s227
      %p231 = pneg %p225
      %p232 = scmp.eq.s32.totalorder %s22, 1
      %p233 = por %p231, %p232
      %p234 = scmp.ne.s32.totalorder %s226, %s229
      %p235 = scmp.eq.s32.totalorder %s22, 0
      %p236 = por %p234, %p235
      %p237 = scmp.ne.s32.totalorder %s226, %s229
      %p238 = scmp.eq.s32.totalorder %s27, 1
      %p239 = por %p237, %p238
      %p240 = scmp.ne.s32.totalorder %s229, %s230
      %p241 = scmp.eq.s32.totalorder %s27, 0
      %p242 = por %p240, %p241
      %p243 = scmp.ne.s32.totalorder %s229, %s230
      %p244 = scmp.eq.s32.totalorder %s28, 1
      %p245 = por %p243, %p244
      %p247 = scmp.ne.s32.totalorder %s230, %s246
      %p248 = scmp.eq.s32.totalorder %s28, 0
      %p249 = por %p247, %p248
      %p250 = scmp.le.s32.totalorder 1, %s22
      %p251 = scmp.lt.s32.totalorder %s22, 3
      %p252 = pnand %p250, %p251
      %p253 = pneg %p252
      // Predicated region
      $region9: #{fl_model_forward.1} parent=5 // pred_check
        _
      $region10: #{fl_model_forward.1} parent=5 // pred_check_branch
        %255 = sbr.rel (%p252) target = $region12
      $region11: #{fl_model_forward.1} parent=5 // pred_region
        %s256 = ssub.s32 %s22, 1
        // Predicated region
        $region13: #{fl_model_forward.1} parent=11 // pred_check
          %p257 = pneg %p69
        $region14: #{fl_model_forward.1} parent=11 // pred_check_branch
          %259 = sbr.rel (%p257) target = $region16
        $region15: #{fl_model_forward.1} parent=11 // pred_region
          _
        $region16: #{fl_model_forward.1} parent=11 // pred_fallthru
          _
        // Predicated region
        $region17: #{fl_model_forward.1} parent=11 // pred_check
          %p260 = pneg %p90
        $region18: #{fl_model_forward.1} parent=11 // pred_check_branch
          %262 = sbr.rel (%p260) target = $region20
        $region19: #{fl_model_forward.1} parent=11 // pred_region
          %s264 = ssub.s32 48, 48
          %265 = vsyncadd [#allocation3], %s264
          %s267 = sshll.u32 [#allocation2], 4
          %s268 = int_to_ptr.vmem [resolvable:$true] %s267
          %270 = dma.hbm_to_vmem [thread:$0]  %s2, 48, %s268, [#allocation3]
        $region20: #{fl_model_forward.1} parent=11 // pred_fallthru
          _
        // Predicated region
        $region21: #{fl_model_forward.1} parent=11 // pred_check
          %p271 = pneg %p111
        $region22: #{fl_model_forward.1} parent=11 // pred_check_branch
          %273 = sbr.rel (%p271) target = $region24
        $region23: #{fl_model_forward.1} parent=11 // pred_region
          %s275 = ssub.s32 122880, 122880
          %276 = vsyncadd [#allocation6], %s275
          %s277 = sshll.u32 [#allocation5], 4
          %s278 = int_to_ptr.vmem [resolvable:$true] %s277
          %283 = dma.hbm_to_vmem [thread:$0]  %s3, 122880, %s278, [#allocation6], 256, 256, 16
        $region24: #{fl_model_forward.1} parent=11 // pred_fallthru
          _
        // Predicated region
        $region25: #{fl_model_forward.1} parent=11 // pred_check
          %p284 = pneg %p132
        $region26: #{fl_model_forward.1} parent=11 // pred_check_branch
          %286 = sbr.rel (%p284) target = $region28
        $region27: #{fl_model_forward.1} parent=11 // pred_region
          %s288 = ssub.s32 32, 32
          %289 = vsyncadd [#allocation6], %s288
          %s291 = sshll.u32 [#allocation7], 4
          %s292 = int_to_ptr.vmem [resolvable:$true] %s291
          %294 = dma.hbm_to_vmem [thread:$0]  %s4, 32, %s292, [#allocation6]
        $region28: #{fl_model_forward.1} parent=11 // pred_fallthru
          _
        // Predicated region
        $region29: #{fl_model_forward.1} parent=11 // pred_check
          %p295 = pneg %p153
        $region30: #{fl_model_forward.1} parent=11 // pred_check_branch
          %297 = sbr.rel (%p295) target = $region32
        $region31: #{fl_model_forward.1} parent=11 // pred_region
          _
        $region32: #{fl_model_forward.1} parent=11 // pred_fallthru
          _
        // Predicated region
        $region33: #{fl_model_forward.1} parent=11 // pred_check
          %p298 = pneg %p174
        $region34: #{fl_model_forward.1} parent=11 // pred_check_branch
          %300 = sbr.rel (%p298) target = $region36
        $region35: #{fl_model_forward.1} parent=11 // pred_region
          %s302 = ssub.s32 16, 16
          %303 = vsyncadd [#allocation9], %s302
          %s305 = sshll.u32 [#allocation8], 4
          %s306 = int_to_ptr.vmem [resolvable:$true] %s305
          %308 = dma.hbm_to_vmem [thread:$0]  %s6, 16, %s306, [#allocation9]
        $region36: #{fl_model_forward.1} parent=11 // pred_fallthru
          _
        // Predicated region
        $region37: #{fl_model_forward.1} parent=11 // pred_check
          %p309 = pneg %p195
        $region38: #{fl_model_forward.1} parent=11 // pred_check_branch
          %311 = sbr.rel (%p309) target = $region40
        $region39: #{fl_model_forward.1} parent=11 // pred_region
          %s313 = ssub.s32 384, 384
          %314 = vsyncadd [#allocation9], %s313
          %s315 = sshll.u32 [#allocation10], 4
          %s316 = int_to_ptr.vmem [resolvable:$true] %s315
          %321 = dma.hbm_to_vmem [thread:$0]  %s7, 384, %s316, [#allocation9], 128, 128, 8
        $region40: #{fl_model_forward.1} parent=11 // pred_fallthru
          _
        // Predicated region
        $region41: #{fl_model_forward.1} parent=11 // pred_check
          %p322 = pneg %p216
        $region42: #{fl_model_forward.1} parent=11 // pred_check_branch
          %324 = sbr.rel (%p322) target = $region44
        $region43: #{fl_model_forward.1} parent=11 // pred_region
          %s326 = ssub.s32 16, 16
          %327 = vsyncadd [#allocation12], %s326
          %s329 = sshll.u32 [#allocation11], 4
          %s330 = int_to_ptr.vmem [resolvable:$true] %s329
          %332 = dma.hbm_to_vmem [thread:$0]  %s8, 16, %s330, [#allocation12]
        $region44: #{fl_model_forward.1} parent=11 // pred_fallthru
          _
      $region12: #{fl_model_forward.1} parent=5 // pred_fallthru
        _
      %p333 = scmp.lt.s32.totalorder %s22, 2
      // Predicated region
      $region45: #{fl_model_forward.1} parent=5 // pred_check
        %p334 = pneg %p333
      $region46: #{fl_model_forward.1} parent=5 // pred_check_branch
        %336 = sbr.rel (%p334) target = $region48
      $region47: #{fl_model_forward.1} parent=5 // pred_region
        // Predicated region
        $region49: #{fl_model_forward.1} parent=47 // pred_check
          %p337 = pneg %p42
        $region50: #{fl_model_forward.1} parent=47 // pred_check_branch
          %339 = sbr.rel (%p337) target = $region52
        $region51: #{fl_model_forward.1} parent=47 // pred_region
          %p340 = scmp.lt.s32.totalorder %s22, 1
          %s341 = scalar_select %p340, %s22, 1
          %s342 = smul.addr %s341, 4
          %s343 = smul.addr %s342, 8
          %s344 = scalar_lea.vmem %s0, %s343
        $region52: #{fl_model_forward.1} parent=47 // pred_fallthru
          _
      $region48: #{fl_model_forward.1} parent=5 // pred_fallthru
        _
      %p345 = scmp.le.s32.totalorder 1, %s22
      %p346 = scmp.lt.s32.totalorder %s22, 3
      %p347 = pnand %p345, %p346
      %p348 = pneg %p347
      // Predicated region
      $region53: #{fl_model_forward.1} parent=5 // pred_check
        _
      $region54: #{fl_model_forward.1} parent=5 // pred_check_branch
        %350 = sbr.rel (%p347) target = $region56
      $region55: #{fl_model_forward.1} parent=5 // pred_region
        %s351 = ssub.s32 %s22, 1
        // Predicated region
        $region57: #{fl_model_forward.1} parent=55 // pred_check
          %p352 = pneg %p90
        $region58: #{fl_model_forward.1} parent=55 // pred_check_branch
          %354 = sbr.rel (%p352) target = $region60
        $region59: #{fl_model_forward.1} parent=55 // pred_region
          %355 = dma.done [#allocation3], 48
        $region60: #{fl_model_forward.1} parent=55 // pred_fallthru
          _
        // Predicated region
        $region61: #{fl_model_forward.1} parent=55 // pred_check
          %p356 = pneg %p111
        $region62: #{fl_model_forward.1} parent=55 // pred_check_branch
          %358 = sbr.rel (%p356) target = $region64
        $region63: #{fl_model_forward.1} parent=55 // pred_region
          %359 = dma.done [#allocation6], 122880
        $region64: #{fl_model_forward.1} parent=55 // pred_fallthru
          _
        // Predicated region
        $region65: #{fl_model_forward.1} parent=55 // pred_check
          %p360 = pneg %p132
        $region66: #{fl_model_forward.1} parent=55 // pred_check_branch
          %362 = sbr.rel (%p360) target = $region68
        $region67: #{fl_model_forward.1} parent=55 // pred_region
          %363 = dma.done [#allocation6], 32
        $region68: #{fl_model_forward.1} parent=55 // pred_fallthru
          _
        // Predicated region
        $region69: #{fl_model_forward.1} parent=55 // pred_check
          %p364 = pneg %p174
        $region70: #{fl_model_forward.1} parent=55 // pred_check_branch
          %366 = sbr.rel (%p364) target = $region72
        $region71: #{fl_model_forward.1} parent=55 // pred_region
          %367 = dma.done [#allocation9], 16
        $region72: #{fl_model_forward.1} parent=55 // pred_fallthru
          _
        // Predicated region
        $region73: #{fl_model_forward.1} parent=55 // pred_check
          %p368 = pneg %p195
        $region74: #{fl_model_forward.1} parent=55 // pred_check_branch
          %370 = sbr.rel (%p368) target = $region76
        $region75: #{fl_model_forward.1} parent=55 // pred_region
          %371 = dma.done [#allocation9], 384
        $region76: #{fl_model_forward.1} parent=55 // pred_fallthru
          _
        // Predicated region
        $region77: #{fl_model_forward.1} parent=55 // pred_check
          %p372 = pneg %p216
        $region78: #{fl_model_forward.1} parent=55 // pred_check_branch
          %374 = sbr.rel (%p372) target = $region80
        $region79: #{fl_model_forward.1} parent=55 // pred_region
          %375 = dma.done [#allocation12], 16
        $region80: #{fl_model_forward.1} parent=55 // pred_fallthru
          _
        %p376 = scmp.lt.s32.totalorder %s27, 1
        %s377 = scalar_select %p376, %s27, 1
        %s378 = smul.addr %s377, 4
        %s379 = smul.addr %s378, 8
        %s380 = scalar_lea.vmem %s0, %s379
        %p381 = pneg %p48
        %p382 = pneg %p45
        %p383 = pneg %p69
        %p384 = pneg %p66
        %p385 = pneg %p90
        %p386 = pneg %p87
        %p387 = pneg %p111
        %p388 = pneg %p108
        %p389 = pneg %p132
        %p390 = pneg %p129
        %p391 = pneg %p153
        %p392 = pneg %p150
        %p393 = pneg %p174
        %p394 = pneg %p171
        %p395 = pneg %p195
        %p396 = pneg %p192
        %p397 = pneg %p216
        %p398 = pneg %p213
        %p399 = pneg %p242
        %p400 = pneg %p239
        %s401 = sand.u32 %s229, 1
        %s402 = scalar_lea.sflag [#allocation4], %s401
        %s403 = sand.u32 %s229, 1
        %s404 = scalar_lea.vmem [#allocation13], %s403
        %p405 = scmp.lt.s32.totalorder %s27, 1
        %s406 = scalar_select %p405, %s27, 1
        %s407 = smul.addr %s406, 4
        %s408 = smul.addr %s407, 8
        %s409 = scalar_lea.vmem %s0, %s408
        %v410 = vld [vmem:[%s409] sm:$0xff]
        %v411 = vld [vmem:[%s409 + $0x8] sm:$0xff]
        %v412 = vld [vmem:[%s409 + $0x10] sm:$0xff]
        %v413 = vld [vmem:[%s409 + $0x18] sm:$0xf]
        %v414 = vld [vmem:[%s1] sm:$0xff]
        %v415 = vld [vmem:[%s1 + $0x8] sm:$0xff]
        %v416 = vld [vmem:[%s1 + $0x10] sm:$0xff]
        %v417 = vld [vmem:[%s1 + $0x18] sm:$0xff]
        %v418 = vld [vmem:[%s1 + $0x20] sm:$0xff]
        %v419 = vld [vmem:[%s1 + $0x28] sm:$0xff]
        %v420 = vld [vmem:[%s1 + $0x30] sm:$0xff]
        %v421 = vld [vmem:[%s1 + $0x38] sm:$0xff]
        %v422 = vld [vmem:[%s1 + $0x40] sm:$0xff]
        %v423 = vld [vmem:[%s1 + $0x48] sm:$0xf]
        %v424 = vld [vmem:[%s1 + $0x50] sm:$0xf]
        %v425 = vld [vmem:[%s1 + $0x58] sm:$0xf]
        %s426 = scalar_lea.vmem %s1, 480
        %v427 = vld [vmem:[%s426] sm:$0xff]
        %v428 = vld [vmem:[%s426 + $0x8] sm:$0xff]
        %v429 = vld [vmem:[%s426 + $0x10] sm:$0xff]
        %v430 = vld [vmem:[%s426 + $0x18] sm:$0xff]
        %v431 = vld [vmem:[%s426 + $0x20] sm:$0xff]
        %v432 = vld [vmem:[%s426 + $0x28] sm:$0xff]
        %v433 = vld [vmem:[%s426 + $0x30] sm:$0xff]
        %v434 = vld [vmem:[%s426 + $0x38] sm:$0xff]
        %v435 = vld [vmem:[%s426 + $0x40] sm:$0xff]
        %v436 = vld [vmem:[%s426 + $0x48] sm:$0xf]
        %v437 = vld [vmem:[%s426 + $0x50] sm:$0xf]
        %v438 = vld [vmem:[%s426 + $0x58] sm:$0xf]
        %s439 = scalar_lea.vmem %s1, 96
        %v440 = vld [vmem:[%s439] sm:$0xff]
        %v441 = vld [vmem:[%s439 + $0x8] sm:$0xff]
        %v442 = vld [vmem:[%s439 + $0x10] sm:$0xff]
        %v443 = vld [vmem:[%s439 + $0x18] sm:$0xff]
        %v444 = vld [vmem:[%s439 + $0x20] sm:$0xff]
        %v445 = vld [vmem:[%s439 + $0x28] sm:$0xff]
        %v446 = vld [vmem:[%s439 + $0x30] sm:$0xff]
        %v447 = vld [vmem:[%s439 + $0x38] sm:$0xff]
        %v448 = vld [vmem:[%s439 + $0x40] sm:$0xff]
        %v449 = vld [vmem:[%s439 + $0x48] sm:$0xf]
        %v450 = vld [vmem:[%s439 + $0x50] sm:$0xf]
        %v451 = vld [vmem:[%s439 + $0x58] sm:$0xf]
        %vm456 = vcmask 1046528
        %v457 = vrot.slane %v410, 1
        %v458 = vrot.slane %v411, 1
        %v459 = vsel %vm456, %v457, %v458
        %v460 = vrot.slane %v412, 1
        %v461 = vsel %vm456, %v458, %v460
        %v462 = vrot.slane %v413, 1
        %v463 = vsel %vm456, %v460, %v462
        %vm464 = vcmask 228352
        %v465 = vsel %vm464, %v459, 0
        %v467 = vsel %vm464, %v461, 0
        %v469 = vsel %vm464, %v463, 0
        %vm471 = vcmask 1043456
        %v473 = vsel %vm471, %v449, 0
        %v476 = vsel %vm471, %v450, 0
        %v479 = vsel %vm471, %v451, 0
        %481 = vmatprep.subr.mxu0 %v441
        %482 = vmatpush1.msra.mxu0 %v440
        %483 = vmatprep.subr.mxu0 %v444
        %484 = vmatpush1.msra.mxu0 %v443
        %485 = vmatprep.subr.mxu0 %v447
        %486 = vmatpush1.msra.mxu0 %v446
        %487 = vmatprep.subr.mxu0 %v476
        %488 = vmatpush1.msra.mxu0 %v473
        %489 = vmatprep.subr.mxu0 0.0
        %490 = vmatpush1.msra.mxu0 0.0
        %491 = vmatprep.subr.mxu0 0.0
        %492 = vmatpush1.msra.mxu0 0.0
        %493 = vmatprep.subr.mxu0 0.0
        %494 = vmatpush1.msra.mxu0 0.0
        %495 = vmatprep.subr.mxu0 0.0
        %496 = vmatpush1.msra.mxu0 0.0
        %497 = vmatprep.subr.mxu0 0.0
        %498 = vmatpush1.msra.mxu0 0.0
        %499 = vmatprep.subr.mxu0 0.0
        %500 = vmatpush1.msra.mxu0 0.0
        %501 = vmatprep.subr.mxu0 0.0
        %502 = vmatpush1.msra.mxu0 0.0
        %503 = vmatprep.subr.mxu0 0.0
        %504 = vmatpush1.msra.mxu0 0.0
        %505 = vmatprep.subr.mxu0 0.0
        %506 = vmatpush1.msra.mxu0 0.0
        %507 = vmatprep.subr.mxu0 0.0
        %508 = vmatpush1.msra.mxu0 0.0
        %509 = vmatprep.subr.mxu0 0.0
        %510 = vmatpush1.msra.mxu0 0.0
        %511 = vmatprep.subr.mxu0 0.0
        %512 = vmatpush1.msra.mxu0 0.0
        %513 = vmatprep.subr.mxu0 0.0
        %514 = vmatpush1.msra.mxu0 0.0
        %515 = vmatprep.subr.mxu0 0.0
        %516 = vmatpush1.msra.mxu0 0.0
        %517 = vmatprep.subr.mxu0 0.0
        %518 = vmatpush1.msra.mxu0 0.0
        %519 = vmatprep.subr.mxu0 0.0
        %520 = vmatpush1.msra.mxu0 0.0
        %521 = vmatprep.subr.mxu0 0.0
        %522 = vmatpush1.msra.mxu0 0.0
        %523 = vmatprep.subr.mxu0 0.0
        %524 = vmatpush1.msra.mxu0 0.0
        %525 = vmatprep.subr.mxu0 0.0
        %526 = vmatpush1.msra.mxu0 0.0
        %527 = vmatprep.subr.mxu0 0.0
        %528 = vmatpush1.msra.mxu0 0.0
        %529 = vmatprep.subr.mxu0 0.0
        %530 = vmatpush1.msra.mxu0 0.0
        %531 = vmatprep.subr.mxu0 0.0
        %532 = vmatpush1.msra.mxu0 0.0
        %533 = vmatprep.subr.mxu0 0.0
        %534 = vmatpush1.msra.mxu0 0.0
        %535 = vmatprep.subr.mxu0 0.0
        %536 = vmatpush1.msra.mxu0 0.0
        %537 = vmatprep.subr.mxu0 0.0
        %538 = vmatpush1.msra.mxu0 0.0
        %539 = vmatprep.subr.mxu0 0.0
        %540 = vmatpush1.msra.mxu0 0.0
        %541 = vmatprep.subr.mxu0 0.0
        %542 = vmatpush1.msra.mxu0 0.0
        %543 = vmatprep.subr.mxu0 0.0
        %544 = vmatpush1.msra.mxu0 0.0
        %545 = vmatprep.mubr.f32.mxu0 0.0
        %546 = vmatmul.mubr.f32.gmra.mrb[0].mxu0 %v465
        %v547 = vpop.f32.mrb[0].mxu0
        %v548 = vadd.f32 0.0, %v547
        %v549 = vpop.f32.mrb[0].mxu0
        %v550 = vadd.f32 0.0, %v549
        %551 = vmatprep.mubr.f32.mxu0 0.0
        %552 = vmatmul.mubr.f32.gmra.mrb[0].mxu0 %v467
        %v553 = vpop.f32.mrb[0].mxu0
        %v554 = vadd.f32 0.0, %v553
        %v555 = vpop.f32.mrb[0].mxu0
        %v556 = vadd.f32 0.0, %v555
        %557 = vmatprep.mubr.f32.mxu0 0.0
        %558 = vmatmul.mubr.f32.gmra.mrb[0].mxu0 %v469
        %v559 = vpop.f32.mrb[0].mxu0
        %v560 = vadd.f32 0.0, %v559
        %v561 = vpop.f32.mrb[0].mxu0
        %v562 = vadd.f32 0.0, %v561
        %563 = vdwg.mxu0
        %564 = vmatprep.subr.mxu0 0.0
        %565 = vmatpush1.msra.mxu0 %v442
        %566 = vmatprep.subr.mxu0 0.0
        %567 = vmatpush1.msra.mxu0 %v445
        %568 = vmatprep.subr.mxu0 0.0
        %569 = vmatpush1.msra.mxu0 %v448
        %570 = vmatprep.subr.mxu0 0.0
        %571 = vmatpush1.msra.mxu0 %v479
        %572 = vmatprep.subr.mxu0 0.0
        %573 = vmatpush1.msra.mxu0 0.0
        %574 = vmatprep.subr.mxu0 0.0
        %575 = vmatpush1.msra.mxu0 0.0
        %576 = vmatprep.subr.mxu0 0.0
        %577 = vmatpush1.msra.mxu0 0.0
        %578 = vmatprep.subr.mxu0 0.0
        %579 = vmatpush1.msra.mxu0 0.0
        %580 = vmatprep.subr.mxu0 0.0
        %581 = vmatpush1.msra.mxu0 0.0
        %582 = vmatprep.subr.mxu0 0.0
        %583 = vmatpush1.msra.mxu0 0.0
        %584 = vmatprep.subr.mxu0 0.0
        %585 = vmatpush1.msra.mxu0 0.0
        %586 = vmatprep.subr.mxu0 0.0
        %587 = vmatpush1.msra.mxu0 0.0
        %588 = vmatprep.subr.mxu0 0.0
        %589 = vmatpush1.msra.mxu0 0.0
        %590 = vmatprep.subr.mxu0 0.0
        %591 = vmatpush1.msra.mxu0 0.0
        %592 = vmatprep.subr.mxu0 0.0
        %593 = vmatpush1.msra.mxu0 0.0
        %594 = vmatprep.subr.mxu0 0.0
        %595 = vmatpush1.msra.mxu0 0.0
        %596 = vmatprep.subr.mxu0 0.0
        %597 = vmatpush1.msra.mxu0 0.0
        %598 = vmatprep.subr.mxu0 0.0
        %599 = vmatpush1.msra.mxu0 0.0
        %600 = vmatprep.subr.mxu0 0.0
        %601 = vmatpush1.msra.mxu0 0.0
        %602 = vmatprep.subr.mxu0 0.0
        %603 = vmatpush1.msra.mxu0 0.0
        %604 = vmatprep.subr.mxu0 0.0
        %605 = vmatpush1.msra.mxu0 0.0
        %606 = vmatprep.subr.mxu0 0.0
        %607 = vmatpush1.msra.mxu0 0.0
        %608 = vmatprep.subr.mxu0 0.0
        %609 = vmatpush1.msra.mxu0 0.0
        %610 = vmatprep.subr.mxu0 0.0
        %611 = vmatpush1.msra.mxu0 0.0
        %612 = vmatprep.subr.mxu0 0.0
        %613 = vmatpush1.msra.mxu0 0.0
        %614 = vmatprep.subr.mxu0 0.0
        %615 = vmatpush1.msra.mxu0 0.0
        %616 = vmatprep.subr.mxu0 0.0
        %617 = vmatpush1.msra.mxu0 0.0
        %618 = vmatprep.subr.mxu0 0.0
        %619 = vmatpush1.msra.mxu0 0.0
        %620 = vmatprep.subr.mxu0 0.0
        %621 = vmatpush1.msra.mxu0 0.0
        %622 = vmatprep.subr.mxu0 0.0
        %623 = vmatpush1.msra.mxu0 0.0
        %624 = vmatprep.subr.mxu0 0.0
        %625 = vmatpush1.msra.mxu0 0.0
        %626 = vmatprep.subr.mxu0 0.0
        %627 = vmatpush1.msra.mxu0 0.0
        %628 = vmatprep.mubr.f32.mxu0 0.0
        %629 = vmatmul.mubr.f32.gmra.mrb[0].mxu0 %v465
        %v630 = vpop.f32.mrb[0].mxu0
        %v631 = vadd.f32 0.0, %v630
        %v632 = vpop.f32.mrb[0].mxu0
        %633 = vmatprep.mubr.f32.mxu0 0.0
        %634 = vmatmul.mubr.f32.gmra.mrb[0].mxu0 %v467
        %v635 = vpop.f32.mrb[0].mxu0
        %v636 = vadd.f32 0.0, %v635
        %v637 = vpop.f32.mrb[0].mxu0
        %638 = vmatprep.mubr.f32.mxu0 0.0
        %639 = vmatmul.mubr.f32.gmra.mrb[0].mxu0 %v469
        %v640 = vpop.f32.mrb[0].mxu0
        %v641 = vadd.f32 0.0, %v640
        %v642 = vpop.f32.mrb[0].mxu0
        %643 = vdwg.mxu0
        %v644 = vsel %vm464, %v410, 0
        %v646 = vsel %vm464, %v411, 0
        %v648 = vsel %vm464, %v412, 0
        %v651 = vsel %vm471, %v423, 0
        %v654 = vsel %vm471, %v424, 0
        %v657 = vsel %vm471, %v425, 0
        %659 = vmatprep.subr.mxu0 %v415
        %660 = vmatpush1.msra.mxu0 %v414
        %661 = vmatprep.subr.mxu0 %v418
        %662 = vmatpush1.msra.mxu0 %v417
        %663 = vmatprep.subr.mxu0 %v421
        %664 = vmatpush1.msra.mxu0 %v420
        %665 = vmatprep.subr.mxu0 %v654
        %666 = vmatpush1.msra.mxu0 %v651
        %667 = vmatprep.subr.mxu0 0.0
        %668 = vmatpush1.msra.mxu0 0.0
        %669 = vmatprep.subr.mxu0 0.0
        %670 = vmatpush1.msra.mxu0 0.0
        %671 = vmatprep.subr.mxu0 0.0
        %672 = vmatpush1.msra.mxu0 0.0
        %673 = vmatprep.subr.mxu0 0.0
        %674 = vmatpush1.msra.mxu0 0.0
        %675 = vmatprep.subr.mxu0 0.0
        %676 = vmatpush1.msra.mxu0 0.0
        %677 = vmatprep.subr.mxu0 0.0
        %678 = vmatpush1.msra.mxu0 0.0
        %679 = vmatprep.subr.mxu0 0.0
        %680 = vmatpush1.msra.mxu0 0.0
        %681 = vmatprep.subr.mxu0 0.0
        %682 = vmatpush1.msra.mxu0 0.0
        %683 = vmatprep.subr.mxu0 0.0
        %684 = vmatpush1.msra.mxu0 0.0
        %685 = vmatprep.subr.mxu0 0.0
        %686 = vmatpush1.msra.mxu0 0.0
        %687 = vmatprep.subr.mxu0 0.0
        %688 = vmatpush1.msra.mxu0 0.0
        %689 = vmatprep.subr.mxu0 0.0
        %690 = vmatpush1.msra.mxu0 0.0
        %691 = vmatprep.subr.mxu0 0.0
        %692 = vmatpush1.msra.mxu0 0.0
        %693 = vmatprep.subr.mxu0 0.0
        %694 = vmatpush1.msra.mxu0 0.0
        %695 = vmatprep.subr.mxu0 0.0
        %696 = vmatpush1.msra.mxu0 0.0
        %697 = vmatprep.subr.mxu0 0.0
        %698 = vmatpush1.msra.mxu0 0.0
        %699 = vmatprep.subr.mxu0 0.0
        %700 = vmatpush1.msra.mxu0 0.0
        %701 = vmatprep.subr.mxu0 0.0
        %702 = vmatpush1.msra.mxu0 0.0
        %703 = vmatprep.subr.mxu0 0.0
        %704 = vmatpush1.msra.mxu0 0.0
        %705 = vmatprep.subr.mxu0 0.0
        %706 = vmatpush1.msra.mxu0 0.0
        %707 = vmatprep.subr.mxu0 0.0
        %708 = vmatpush1.msra.mxu0 0.0
        %709 = vmatprep.subr.mxu0 0.0
        %710 = vmatpush1.msra.mxu0 0.0
        %711 = vmatprep.subr.mxu0 0.0
        %712 = vmatpush1.msra.mxu0 0.0
        %713 = vmatprep.subr.mxu0 0.0
        %714 = vmatpush1.msra.mxu0 0.0
        %715 = vmatprep.subr.mxu0 0.0
        %716 = vmatpush1.msra.mxu0 0.0
        %717 = vmatprep.subr.mxu0 0.0
        %718 = vmatpush1.msra.mxu0 0.0
        %719 = vmatprep.subr.mxu0 0.0
        %720 = vmatpush1.msra.mxu0 0.0
        %721 = vmatprep.subr.mxu0 0.0
        %722 = vmatpush1.msra.mxu0 0.0
        %723 = vmatprep.mubr.f32.mxu0 0.0
        %724 = vmatmul.mubr.f32.gmra.mrb[0].mxu0 %v644
        %v725 = vpop.f32.mrb[0].mxu0
        %v726 = vadd.f32 %v548, %v725
        %v727 = vpop.f32.mrb[0].mxu0
        %v728 = vadd.f32 %v550, %v727
        %729 = vmatprep.mubr.f32.mxu0 0.0
        %730 = vmatmul.mubr.f32.gmra.mrb[0].mxu0 %v646
        %v731 = vpop.f32.mrb[0].mxu0
        %v732 = vadd.f32 %v554, %v731
        %v733 = vpop.f32.mrb[0].mxu0
        %v734 = vadd.f32 %v556, %v733
        %735 = vmatprep.mubr.f32.mxu0 0.0
        %736 = vmatmul.mubr.f32.gmra.mrb[0].mxu0 %v648
        %v737 = vpop.f32.mrb[0].mxu0
        %v738 = vadd.f32 %v560, %v737
        %v739 = vpop.f32.mrb[0].mxu0
        %v740 = vadd.f32 %v562, %v739
        %741 = vdwg.mxu0
        %742 = vmatprep.subr.mxu0 0.0
        %743 = vmatpush1.msra.mxu0 %v416
        %744 = vmatprep.subr.mxu0 0.0
        %745 = vmatpush1.msra.mxu0 %v419
        %746 = vmatprep.subr.mxu0 0.0
        %747 = vmatpush1.msra.mxu0 %v422
        %748 = vmatprep.subr.mxu0 0.0
        %749 = vmatpush1.msra.mxu0 %v657
        %750 = vmatprep.subr.mxu0 0.0
        %751 = vmatpush1.msra.mxu0 0.0
        %752 = vmatprep.subr.mxu0 0.0
        %753 = vmatpush1.msra.mxu0 0.0
        %754 = vmatprep.subr.mxu0 0.0
        %755 = vmatpush1.msra.mxu0 0.0
        %756 = vmatprep.subr.mxu0 0.0
        %757 = vmatpush1.msra.mxu0 0.0
        %758 = vmatprep.subr.mxu0 0.0
        %759 = vmatpush1.msra.mxu0 0.0
        %760 = vmatprep.subr.mxu0 0.0
        %761 = vmatpush1.msra.mxu0 0.0
        %762 = vmatprep.subr.mxu0 0.0
        %763 = vmatpush1.msra.mxu0 0.0
        %764 = vmatprep.subr.mxu0 0.0
        %765 = vmatpush1.msra.mxu0 0.0
        %766 = vmatprep.subr.mxu0 0.0
        %767 = vmatpush1.msra.mxu0 0.0
        %768 = vmatprep.subr.mxu0 0.0
        %769 = vmatpush1.msra.mxu0 0.0
        %770 = vmatprep.subr.mxu0 0.0
        %771 = vmatpush1.msra.mxu0 0.0
        %772 = vmatprep.subr.mxu0 0.0
        %773 = vmatpush1.msra.mxu0 0.0
        %774 = vmatprep.subr.mxu0 0.0
        %775 = vmatpush1.msra.mxu0 0.0
        %776 = vmatprep.subr.mxu0 0.0
        %777 = vmatpush1.msra.mxu0 0.0
        %778 = vmatprep.subr.mxu0 0.0
        %779 = vmatpush1.msra.mxu0 0.0
        %780 = vmatprep.subr.mxu0 0.0
        %781 = vmatpush1.msra.mxu0 0.0
        %782 = vmatprep.subr.mxu0 0.0
        %783 = vmatpush1.msra.mxu0 0.0
        %784 = vmatprep.subr.mxu0 0.0
        %785 = vmatpush1.msra.mxu0 0.0
        %786 = vmatprep.subr.mxu0 0.0
        %787 = vmatpush1.msra.mxu0 0.0
        %788 = vmatprep.subr.mxu0 0.0
        %789 = vmatpush1.msra.mxu0 0.0
        %790 = vmatprep.subr.mxu0 0.0
        %791 = vmatpush1.msra.mxu0 0.0
        %792 = vmatprep.subr.mxu0 0.0
        %793 = vmatpush1.msra.mxu0 0.0
        %794 = vmatprep.subr.mxu0 0.0
        %795 = vmatpush1.msra.mxu0 0.0
        %796 = vmatprep.subr.mxu0 0.0
        %797 = vmatpush1.msra.mxu0 0.0
        %798 = vmatprep.subr.mxu0 0.0
        %799 = vmatpush1.msra.mxu0 0.0
        %800 = vmatprep.subr.mxu0 0.0
        %801 = vmatpush1.msra.mxu0 0.0
        %802 = vmatprep.subr.mxu0 0.0
        %803 = vmatpush1.msra.mxu0 0.0
        %804 = vmatprep.subr.mxu0 0.0
        %805 = vmatpush1.msra.mxu0 0.0
        %806 = vmatprep.mubr.f32.mxu0 0.0
        %807 = vmatmul.mubr.f32.gmra.mrb[0].mxu0 %v644
        %v808 = vpop.f32.mrb[0].mxu0
        %v809 = vadd.f32 %v631, %v808
        %v810 = vpop.f32.mrb[0].mxu0
        %811 = vmatprep.mubr.f32.mxu0 0.0
        %812 = vmatmul.mubr.f32.gmra.mrb[0].mxu0 %v646
        %v813 = vpop.f32.mrb[0].mxu0
        %v814 = vadd.f32 %v636, %v813
        %v815 = vpop.f32.mrb[0].mxu0
        %816 = vmatprep.mubr.f32.mxu0 0.0
        %817 = vmatmul.mubr.f32.gmra.mrb[0].mxu0 %v648
        %v818 = vpop.f32.mrb[0].mxu0
        %v819 = vadd.f32 %v641, %v818
        %v820 = vpop.f32.mrb[0].mxu0
        %821 = vdwg.mxu0
        %s822 = scalar_lea.vmem %s1, 576
        %v823 = vld [vmem:[%s822] sm:$0xff]
        %v824 = vld [vmem:[%s822 + $0x8] sm:$0xff]
        %v825 = vld [vmem:[%s822 + $0x10] sm:$0xff]
        %v826 = vld [vmem:[%s822 + $0x18] sm:$0xff]
        %v827 = vld [vmem:[%s822 + $0x20] sm:$0xff]
        %v828 = vld [vmem:[%s822 + $0x28] sm:$0xff]
        %v829 = vld [vmem:[%s822 + $0x30] sm:$0xff]
        %v830 = vld [vmem:[%s822 + $0x38] sm:$0xff]
        %v831 = vld [vmem:[%s822 + $0x40] sm:$0xff]
        %v832 = vld [vmem:[%s822 + $0x48] sm:$0xf]
        %v833 = vld [vmem:[%s822 + $0x50] sm:$0xf]
        %v834 = vld [vmem:[%s822 + $0x58] sm:$0xf]
        %v836 = vsel %vm471, %v832, 0
        %v839 = vsel %vm471, %v833, 0
        %v842 = vsel %vm471, %v834, 0
        %844 = vmatprep.subr.mxu0 %v824
        %845 = vmatpush1.msra.mxu0 %v823
        %846 = vmatprep.subr.mxu0 %v827
        %847 = vmatpush1.msra.mxu0 %v826
        %848 = vmatprep.subr.mxu0 %v830
        %849 = vmatpush1.msra.mxu0 %v829
        %850 = vmatprep.subr.mxu0 %v839
        %851 = vmatpush1.msra.mxu0 %v836
        %852 = vmatprep.subr.mxu0 0.0
        %853 = vmatpush1.msra.mxu0 0.0
        %854 = vmatprep.subr.mxu0 0.0
        %855 = vmatpush1.msra.mxu0 0.0
        %856 = vmatprep.subr.mxu0 0.0
        %857 = vmatpush1.msra.mxu0 0.0
        %858 = vmatprep.subr.mxu0 0.0
        %859 = vmatpush1.msra.mxu0 0.0
        %860 = vmatprep.subr.mxu0 0.0
        %861 = vmatpush1.msra.mxu0 0.0
        %862 = vmatprep.subr.mxu0 0.0
        %863 = vmatpush1.msra.mxu0 0.0
        %864 = vmatprep.subr.mxu0 0.0
        %865 = vmatpush1.msra.mxu0 0.0
        %866 = vmatprep.subr.mxu0 0.0
        %867 = vmatpush1.msra.mxu0 0.0
        %868 = vmatprep.subr.mxu0 0.0
        %869 = vmatpush1.msra.mxu0 0.0
        %870 = vmatprep.subr.mxu0 0.0
        %871 = vmatpush1.msra.mxu0 0.0
        %872 = vmatprep.subr.mxu0 0.0
        %873 = vmatpush1.msra.mxu0 0.0
        %874 = vmatprep.subr.mxu0 0.0
        %875 = vmatpush1.msra.mxu0 0.0
        %876 = vmatprep.subr.mxu0 0.0
        %877 = vmatpush1.msra.mxu0 0.0
        %878 = vmatprep.subr.mxu0 0.0
        %879 = vmatpush1.msra.mxu0 0.0
        %880 = vmatprep.subr.mxu0 0.0
        %881 = vmatpush1.msra.mxu0 0.0
        %882 = vmatprep.subr.mxu0 0.0
        %883 = vmatpush1.msra.mxu0 0.0
        %884 = vmatprep.subr.mxu0 0.0
        %885 = vmatpush1.msra.mxu0 0.0
        %886 = vmatprep.subr.mxu0 0.0
        %887 = vmatpush1.msra.mxu0 0.0
        %888 = vmatprep.subr.mxu0 0.0
        %889 = vmatpush1.msra.mxu0 0.0
        %890 = vmatprep.subr.mxu0 0.0
        %891 = vmatpush1.msra.mxu0 0.0
        %892 = vmatprep.subr.mxu0 0.0
        %893 = vmatpush1.msra.mxu0 0.0
        %894 = vmatprep.subr.mxu0 0.0
        %895 = vmatpush1.msra.mxu0 0.0
        %896 = vmatprep.subr.mxu0 0.0
        %897 = vmatpush1.msra.mxu0 0.0
        %898 = vmatprep.subr.mxu0 0.0
        %899 = vmatpush1.msra.mxu0 0.0
        %900 = vmatprep.subr.mxu0 0.0
        %901 = vmatpush1.msra.mxu0 0.0
        %902 = vmatprep.subr.mxu0 0.0
        %903 = vmatpush1.msra.mxu0 0.0
        %904 = vmatprep.subr.mxu0 0.0
        %905 = vmatpush1.msra.mxu0 0.0
        %906 = vmatprep.subr.mxu0 0.0
        %907 = vmatpush1.msra.mxu0 0.0
        %908 = vmatprep.mubr.f32.mxu0 0.0
        %909 = vmatmul.mubr.f32.gmra.mrb[0].mxu0 %v465
        %v910 = vpop.f32.mrb[0].mxu0
        %v911 = vadd.f32 0.0, %v910
        %v912 = vpop.f32.mrb[0].mxu0
        %v913 = vadd.f32 0.0, %v912
        %914 = vmatprep.mubr.f32.mxu0 0.0
        %915 = vmatmul.mubr.f32.gmra.mrb[0].mxu0 %v467
        %v916 = vpop.f32.mrb[0].mxu0
        %v917 = vadd.f32 0.0, %v916
        %v918 = vpop.f32.mrb[0].mxu0
        %v919 = vadd.f32 0.0, %v918
        %920 = vmatprep.mubr.f32.mxu0 0.0
        %921 = vmatmul.mubr.f32.gmra.mrb[0].mxu0 %v469
        %v922 = vpop.f32.mrb[0].mxu0
        %v923 = vadd.f32 0.0, %v922
        %v924 = vpop.f32.mrb[0].mxu0
        %v925 = vadd.f32 0.0, %v924
        %926 = vdwg.mxu0
        %927 = vmatprep.subr.mxu0 0.0
        %928 = vmatpush1.msra.mxu0 %v825
        %929 = vmatprep.subr.mxu0 0.0
        %930 = vmatpush1.msra.mxu0 %v828
        %931 = vmatprep.subr.mxu0 0.0
        %932 = vmatpush1.msra.mxu0 %v831
        %933 = vmatprep.subr.mxu0 0.0
        %934 = vmatpush1.msra.mxu0 %v842
        %935 = vmatprep.subr.mxu0 0.0
        %936 = vmatpush1.msra.mxu0 0.0
        %937 = vmatprep.subr.mxu0 0.0
        %938 = vmatpush1.msra.mxu0 0.0
        %939 = vmatprep.subr.mxu0 0.0
        %940 = vmatpush1.msra.mxu0 0.0
        %941 = vmatprep.subr.mxu0 0.0
        %942 = vmatpush1.msra.mxu0 0.0
        %943 = vmatprep.subr.mxu0 0.0
        %944 = vmatpush1.msra.mxu0 0.0
        %945 = vmatprep.subr.mxu0 0.0
        %946 = vmatpush1.msra.mxu0 0.0
        %947 = vmatprep.subr.mxu0 0.0
        %948 = vmatpush1.msra.mxu0 0.0
        %949 = vmatprep.subr.mxu0 0.0
        %950 = vmatpush1.msra.mxu0 0.0
        %951 = vmatprep.subr.mxu0 0.0
        %952 = vmatpush1.msra.mxu0 0.0
        %953 = vmatprep.subr.mxu0 0.0
        %954 = vmatpush1.msra.mxu0 0.0
        %955 = vmatprep.subr.mxu0 0.0
        %956 = vmatpush1.msra.mxu0 0.0
        %957 = vmatprep.subr.mxu0 0.0
        %958 = vmatpush1.msra.mxu0 0.0
        %959 = vmatprep.subr.mxu0 0.0
        %960 = vmatpush1.msra.mxu0 0.0
        %961 = vmatprep.subr.mxu0 0.0
        %962 = vmatpush1.msra.mxu0 0.0
        %963 = vmatprep.subr.mxu0 0.0
        %964 = vmatpush1.msra.mxu0 0.0
        %965 = vmatprep.subr.mxu0 0.0
        %966 = vmatpush1.msra.mxu0 0.0
        %967 = vmatprep.subr.mxu0 0.0
        %968 = vmatpush1.msra.mxu0 0.0
        %969 = vmatprep.subr.mxu0 0.0
        %970 = vmatpush1.msra.mxu0 0.0
        %971 = vmatprep.subr.mxu0 0.0
        %972 = vmatpush1.msra.mxu0 0.0
        %973 = vmatprep.subr.mxu0 0.0
        %974 = vmatpush1.msra.mxu0 0.0
        %975 = vmatprep.subr.mxu0 0.0
        %976 = vmatpush1.msra.mxu0 0.0
        %977 = vmatprep.subr.mxu0 0.0
        %978 = vmatpush1.msra.mxu0 0.0
        %979 = vmatprep.subr.mxu0 0.0
        %980 = vmatpush1.msra.mxu0 0.0
        %981 = vmatprep.subr.mxu0 0.0
        %982 = vmatpush1.msra.mxu0 0.0
        %983 = vmatprep.subr.mxu0 0.0
        %984 = vmatpush1.msra.mxu0 0.0
        %985 = vmatprep.subr.mxu0 0.0
        %986 = vmatpush1.msra.mxu0 0.0
        %987 = vmatprep.subr.mxu0 0.0
        %988 = vmatpush1.msra.mxu0 0.0
        %989 = vmatprep.subr.mxu0 0.0
        %990 = vmatpush1.msra.mxu0 0.0
        %991 = vmatprep.mubr.f32.mxu0 0.0
        %992 = vmatmul.mubr.f32.gmra.mrb[0].mxu0 %v465
        %v993 = vpop.f32.mrb[0].mxu0
        %v994 = vadd.f32 0.0, %v993
        %v995 = vpop.f32.mrb[0].mxu0
        %996 = vmatprep.mubr.f32.mxu0 0.0
        %997 = vmatmul.mubr.f32.gmra.mrb[0].mxu0 %v467
        %v998 = vpop.f32.mrb[0].mxu0
        %v999 = vadd.f32 0.0, %v998
        %v1000 = vpop.f32.mrb[0].mxu0
        %1001 = vmatprep.mubr.f32.mxu0 0.0
        %1002 = vmatmul.mubr.f32.gmra.mrb[0].mxu0 %v469
        %v1003 = vpop.f32.mrb[0].mxu0
        %v1004 = vadd.f32 0.0, %v1003
        %v1005 = vpop.f32.mrb[0].mxu0
        %1006 = vdwg.mxu0
        %v1008 = vsel %vm471, %v436, 0
        %v1011 = vsel %vm471, %v437, 0
        %v1014 = vsel %vm471, %v438, 0
        %1016 = vmatprep.subr.mxu0 %v428
        %1017 = vmatpush1.msra.mxu0 %v427
        %1018 = vmatprep.subr.mxu0 %v431
        %1019 = vmatpush1.msra.mxu0 %v430
        %1020 = vmatprep.subr.mxu0 %v434
        %1021 = vmatpush1.msra.mxu0 %v433
        %1022 = vmatprep.subr.mxu0 %v1011
        %1023 = vmatpush1.msra.mxu0 %v1008
        %1024 = vmatprep.subr.mxu0 0.0
        %1025 = vmatpush1.msra.mxu0 0.0
        %1026 = vmatprep.subr.mxu0 0.0
        %1027 = vmatpush1.msra.mxu0 0.0
        %1028 = vmatprep.subr.mxu0 0.0
        %1029 = vmatpush1.msra.mxu0 0.0
        %1030 = vmatprep.subr.mxu0 0.0
        %1031 = vmatpush1.msra.mxu0 0.0
        %1032 = vmatprep.subr.mxu0 0.0
        %1033 = vmatpush1.msra.mxu0 0.0
        %1034 = vmatprep.subr.mxu0 0.0
        %1035 = vmatpush1.msra.mxu0 0.0
        %1036 = vmatprep.subr.mxu0 0.0
        %1037 = vmatpush1.msra.mxu0 0.0
        %1038 = vmatprep.subr.mxu0 0.0
        %1039 = vmatpush1.msra.mxu0 0.0
        %1040 = vmatprep.subr.mxu0 0.0
        %1041 = vmatpush1.msra.mxu0 0.0
        %1042 = vmatprep.subr.mxu0 0.0
        %1043 = vmatpush1.msra.mxu0 0.0
        %1044 = vmatprep.subr.mxu0 0.0
        %1045 = vmatpush1.msra.mxu0 0.0
        %1046 = vmatprep.subr.mxu0 0.0
        %1047 = vmatpush1.msra.mxu0 0.0
        %1048 = vmatprep.subr.mxu0 0.0
        %1049 = vmatpush1.msra.mxu0 0.0
        %1050 = vmatprep.subr.mxu0 0.0
        %1051 = vmatpush1.msra.mxu0 0.0
        %1052 = vmatprep.subr.mxu0 0.0
        %1053 = vmatpush1.msra.mxu0 0.0
        %1054 = vmatprep.subr.mxu0 0.0
        %1055 = vmatpush1.msra.mxu0 0.0
        %1056 = vmatprep.subr.mxu0 0.0
        %1057 = vmatpush1.msra.mxu0 0.0
        %1058 = vmatprep.subr.mxu0 0.0
        %1059 = vmatpush1.msra.mxu0 0.0
        %1060 = vmatprep.subr.mxu0 0.0
        %1061 = vmatpush1.msra.mxu0 0.0
        %1062 = vmatprep.subr.mxu0 0.0
        %1063 = vmatpush1.msra.mxu0 0.0
        %1064 = vmatprep.subr.mxu0 0.0
        %1065 = vmatpush1.msra.mxu0 0.0
        %1066 = vmatprep.subr.mxu0 0.0
        %1067 = vmatpush1.msra.mxu0 0.0
        %1068 = vmatprep.subr.mxu0 0.0
        %1069 = vmatpush1.msra.mxu0 0.0
        %1070 = vmatprep.subr.mxu0 0.0
        %1071 = vmatpush1.msra.mxu0 0.0
        %1072 = vmatprep.subr.mxu0 0.0
        %1073 = vmatpush1.msra.mxu0 0.0
        %1074 = vmatprep.subr.mxu0 0.0
        %1075 = vmatpush1.msra.mxu0 0.0
        %1076 = vmatprep.subr.mxu0 0.0
        %1077 = vmatpush1.msra.mxu0 0.0
        %1078 = vmatprep.subr.mxu0 0.0
        %1079 = vmatpush1.msra.mxu0 0.0
        %1080 = vmatprep.mubr.f32.mxu0 0.0
        %1081 = vmatmul.mubr.f32.gmra.mrb[0].mxu0 %v644
        %v1082 = vpop.f32.mrb[0].mxu0
        %v1083 = vadd.f32 %v911, %v1082
        %v1084 = vpop.f32.mrb[0].mxu0
        %v1085 = vadd.f32 %v913, %v1084
        %1086 = vmatprep.mubr.f32.mxu0 0.0
        %1087 = vmatmul.mubr.f32.gmra.mrb[0].mxu0 %v646
        %v1088 = vpop.f32.mrb[0].mxu0
        %v1089 = vadd.f32 %v917, %v1088
        %v1090 = vpop.f32.mrb[0].mxu0
        %v1091 = vadd.f32 %v919, %v1090
        %1092 = vmatprep.mubr.f32.mxu0 0.0
        %1093 = vmatmul.mubr.f32.gmra.mrb[0].mxu0 %v648
        %v1094 = vpop.f32.mrb[0].mxu0
        %v1095 = vadd.f32 %v923, %v1094
        %v1096 = vpop.f32.mrb[0].mxu0
        %v1097 = vadd.f32 %v925, %v1096
        %1098 = vdwg.mxu0
        %1099 = vmatprep.subr.mxu0 0.0
        %1100 = vmatpush1.msra.mxu0 %v429
        %1101 = vmatprep.subr.mxu0 0.0
        %1102 = vmatpush1.msra.mxu0 %v432
        %1103 = vmatprep.subr.mxu0 0.0
        %1104 = vmatpush1.msra.mxu0 %v435
        %1105 = vmatprep.subr.mxu0 0.0
        %1106 = vmatpush1.msra.mxu0 %v1014
        %1107 = vmatprep.subr.mxu0 0.0
        %1108 = vmatpush1.msra.mxu0 0.0
        %1109 = vmatprep.subr.mxu0 0.0
        %1110 = vmatpush1.msra.mxu0 0.0
        %1111 = vmatprep.subr.mxu0 0.0
        %1112 = vmatpush1.msra.mxu0 0.0
        %1113 = vmatprep.subr.mxu0 0.0
        %1114 = vmatpush1.msra.mxu0 0.0
        %1115 = vmatprep.subr.mxu0 0.0
        %1116 = vmatpush1.msra.mxu0 0.0
        %1117 = vmatprep.subr.mxu0 0.0
        %1118 = vmatpush1.msra.mxu0 0.0
        %1119 = vmatprep.subr.mxu0 0.0
        %1120 = vmatpush1.msra.mxu0 0.0
        %1121 = vmatprep.subr.mxu0 0.0
        %1122 = vmatpush1.msra.mxu0 0.0
        %1123 = vmatprep.subr.mxu0 0.0
        %1124 = vmatpush1.msra.mxu0 0.0
        %1125 = vmatprep.subr.mxu0 0.0
        %1126 = vmatpush1.msra.mxu0 0.0
        %1127 = vmatprep.subr.mxu0 0.0
        %1128 = vmatpush1.msra.mxu0 0.0
        %1129 = vmatprep.subr.mxu0 0.0
        %1130 = vmatpush1.msra.mxu0 0.0
        %1131 = vmatprep.subr.mxu0 0.0
        %1132 = vmatpush1.msra.mxu0 0.0
        %1133 = vmatprep.subr.mxu0 0.0
        %1134 = vmatpush1.msra.mxu0 0.0
        %1135 = vmatprep.subr.mxu0 0.0
        %1136 = vmatpush1.msra.mxu0 0.0
        %1137 = vmatprep.subr.mxu0 0.0
        %1138 = vmatpush1.msra.mxu0 0.0
        %1139 = vmatprep.subr.mxu0 0.0
        %1140 = vmatpush1.msra.mxu0 0.0
        %1141 = vmatprep.subr.mxu0 0.0
        %1142 = vmatpush1.msra.mxu0 0.0
        %1143 = vmatprep.subr.mxu0 0.0
        %1144 = vmatpush1.msra.mxu0 0.0
        %1145 = vmatprep.subr.mxu0 0.0
        %1146 = vmatpush1.msra.mxu0 0.0
        %1147 = vmatprep.subr.mxu0 0.0
        %1148 = vmatpush1.msra.mxu0 0.0
        %1149 = vmatprep.subr.mxu0 0.0
        %1150 = vmatpush1.msra.mxu0 0.0
        %1151 = vmatprep.subr.mxu0 0.0
        %1152 = vmatpush1.msra.mxu0 0.0
        %1153 = vmatprep.subr.mxu0 0.0
        %1154 = vmatpush1.msra.mxu0 0.0
        %1155 = vmatprep.subr.mxu0 0.0
        %1156 = vmatpush1.msra.mxu0 0.0
        %1157 = vmatprep.subr.mxu0 0.0
        %1158 = vmatpush1.msra.mxu0 0.0
        %1159 = vmatprep.subr.mxu0 0.0
        %1160 = vmatpush1.msra.mxu0 0.0
        %1161 = vmatprep.subr.mxu0 0.0
        %1162 = vmatpush1.msra.mxu0 0.0
        %1163 = vmatprep.mubr.f32.mxu0 0.0
        %1164 = vmatmul.mubr.f32.gmra.mrb[0].mxu0 %v644
        %v1165 = vpop.f32.mrb[0].mxu0
        %v1166 = vadd.f32 %v994, %v1165
        %v1167 = vpop.f32.mrb[0].mxu0
        %1168 = vmatprep.mubr.f32.mxu0 0.0
        %1169 = vmatmul.mubr.f32.gmra.mrb[0].mxu0 %v646
        %v1170 = vpop.f32.mrb[0].mxu0
        %v1171 = vadd.f32 %v999, %v1170
        %v1172 = vpop.f32.mrb[0].mxu0
        %1173 = vmatprep.mubr.f32.mxu0 0.0
        %1174 = vmatmul.mubr.f32.gmra.mrb[0].mxu0 %v648
        %v1175 = vpop.f32.mrb[0].mxu0
        %v1176 = vadd.f32 %v1004, %v1175
        %v1177 = vpop.f32.mrb[0].mxu0
        %1178 = vdwg.mxu0
        %s1179 = scalar_lea.vmem %s1, 192
        %v1180 = vld [vmem:[%s1179] sm:$0xff]
        %v1181 = vld [vmem:[%s1179 + $0x8] sm:$0xff]
        %v1182 = vld [vmem:[%s1179 + $0x10] sm:$0xff]
        %v1183 = vld [vmem:[%s1179 + $0x18] sm:$0xff]
        %v1184 = vld [vmem:[%s1179 + $0x20] sm:$0xff]
        %v1185 = vld [vmem:[%s1179 + $0x28] sm:$0xff]
        %v1186 = vld [vmem:[%s1179 + $0x30] sm:$0xff]
        %v1187 = vld [vmem:[%s1179 + $0x38] sm:$0xff]
        %v1188 = vld [vmem:[%s1179 + $0x40] sm:$0xff]
        %v1189 = vld [vmem:[%s1179 + $0x48] sm:$0xf]
        %v1190 = vld [vmem:[%s1179 + $0x50] sm:$0xf]
        %v1191 = vld [vmem:[%s1179 + $0x58] sm:$0xf]
        %vm1192 = vcmask 1045504
        %v1193 = vrot.slane %v410, 2
        %v1194 = vrot.slane %v411, 2
        %v1195 = vsel %vm1192, %v1193, %v1194
        %v1196 = vrot.slane %v412, 2
        %v1197 = vsel %vm1192, %v1194, %v1196
        %v1198 = vrot.slane %v413, 2
        %v1199 = vsel %vm1192, %v1196, %v1198
        %v1200 = vsel %vm464, %v1195, 0
        %v1202 = vsel %vm464, %v1197, 0
        %v1204 = vsel %vm464, %v1199, 0
        %v1207 = vsel %vm471, %v1189, 0
        %v1210 = vsel %vm471, %v1190, 0
        %v1213 = vsel %vm471, %v1191, 0
        %1215 = vmatprep.subr.mxu0 %v1181
        %1216 = vmatpush1.msra.mxu0 %v1180
        %1217 = vmatprep.subr.mxu0 %v1184
        %1218 = vmatpush1.msra.mxu0 %v1183
        %1219 = vmatprep.subr.mxu0 %v1187
        %1220 = vmatpush1.msra.mxu0 %v1186
        %1221 = vmatprep.subr.mxu0 %v1210
        %1222 = vmatpush1.msra.mxu0 %v1207
        %1223 = vmatprep.subr.mxu0 0.0
        %1224 = vmatpush1.msra.mxu0 0.0
        %1225 = vmatprep.subr.mxu0 0.0
        %1226 = vmatpush1.msra.mxu0 0.0
        %1227 = vmatprep.subr.mxu0 0.0
        %1228 = vmatpush1.msra.mxu0 0.0
        %1229 = vmatprep.subr.mxu0 0.0
        %1230 = vmatpush1.msra.mxu0 0.0
        %1231 = vmatprep.subr.mxu0 0.0
        %1232 = vmatpush1.msra.mxu0 0.0
        %1233 = vmatprep.subr.mxu0 0.0
        %1234 = vmatpush1.msra.mxu0 0.0
        %1235 = vmatprep.subr.mxu0 0.0
        %1236 = vmatpush1.msra.mxu0 0.0
        %1237 = vmatprep.subr.mxu0 0.0
        %1238 = vmatpush1.msra.mxu0 0.0
        %1239 = vmatprep.subr.mxu0 0.0
        %1240 = vmatpush1.msra.mxu0 0.0
        %1241 = vmatprep.subr.mxu0 0.0
        %1242 = vmatpush1.msra.mxu0 0.0
        %1243 = vmatprep.subr.mxu0 0.0
        %1244 = vmatpush1.msra.mxu0 0.0
        %1245 = vmatprep.subr.mxu0 0.0
        %1246 = vmatpush1.msra.mxu0 0.0
        %1247 = vmatprep.subr.mxu0 0.0
        %1248 = vmatpush1.msra.mxu0 0.0
        %1249 = vmatprep.subr.mxu0 0.0
        %1250 = vmatpush1.msra.mxu0 0.0
        %1251 = vmatprep.subr.mxu0 0.0
        %1252 = vmatpush1.msra.mxu0 0.0
        %1253 = vmatprep.subr.mxu0 0.0
        %1254 = vmatpush1.msra.mxu0 0.0
        %1255 = vmatprep.subr.mxu0 0.0
        %1256 = vmatpush1.msra.mxu0 0.0
        %1257 = vmatprep.subr.mxu0 0.0
        %1258 = vmatpush1.msra.mxu0 0.0
        %1259 = vmatprep.subr.mxu0 0.0
        %1260 = vmatpush1.msra.mxu0 0.0
        %1261 = vmatprep.subr.mxu0 0.0
        %1262 = vmatpush1.msra.mxu0 0.0
        %1263 = vmatprep.subr.mxu0 0.0
        %1264 = vmatpush1.msra.mxu0 0.0
        %1265 = vmatprep.subr.mxu0 0.0
        %1266 = vmatpush1.msra.mxu0 0.0
        %1267 = vmatprep.subr.mxu0 0.0
        %1268 = vmatpush1.msra.mxu0 0.0
        %1269 = vmatprep.subr.mxu0 0.0
        %1270 = vmatpush1.msra.mxu0 0.0
        %1271 = vmatprep.subr.mxu0 0.0
        %1272 = vmatpush1.msra.mxu0 0.0
        %1273 = vmatprep.subr.mxu0 0.0
        %1274 = vmatpush1.msra.mxu0 0.0
        %1275 = vmatprep.subr.mxu0 0.0
        %1276 = vmatpush1.msra.mxu0 0.0
        %1277 = vmatprep.subr.mxu0 0.0
        %1278 = vmatpush1.msra.mxu0 0.0
        %1279 = vmatprep.mubr.f32.mxu0 0.0
        %1280 = vmatmul.mubr.f32.gmra.mrb[0].mxu0 %v1200
        %v1281 = vpop.f32.mrb[0].mxu0
        %v1282 = vadd.f32 0.0, %v1281
        %v1283 = vpop.f32.mrb[0].mxu0
        %v1284 = vadd.f32 0.0, %v1283
        %1285 = vmatprep.mubr.f32.mxu0 0.0
        %1286 = vmatmul.mubr.f32.gmra.mrb[0].mxu0 %v1202
        %v1287 = vpop.f32.mrb[0].mxu0
        %v1288 = vadd.f32 0.0, %v1287
        %v1289 = vpop.f32.mrb[0].mxu0
        %v1290 = vadd.f32 0.0, %v1289
        %1291 = vmatprep.mubr.f32.mxu0 0.0
        %1292 = vmatmul.mubr.f32.gmra.mrb[0].mxu0 %v1204
        %v1293 = vpop.f32.mrb[0].mxu0
        %v1294 = vadd.f32 0.0, %v1293
        %v1295 = vpop.f32.mrb[0].mxu0
        %v1296 = vadd.f32 0.0, %v1295
        %1297 = vdwg.mxu0
        %1298 = vmatprep.subr.mxu0 0.0
        %1299 = vmatpush1.msra.mxu0 %v1182
        %1300 = vmatprep.subr.mxu0 0.0
        %1301 = vmatpush1.msra.mxu0 %v1185
        %1302 = vmatprep.subr.mxu0 0.0
        %1303 = vmatpush1.msra.mxu0 %v1188
        %1304 = vmatprep.subr.mxu0 0.0
        %1305 = vmatpush1.msra.mxu0 %v1213
        %1306 = vmatprep.subr.mxu0 0.0
        %1307 = vmatpush1.msra.mxu0 0.0
        %1308 = vmatprep.subr.mxu0 0.0
        %1309 = vmatpush1.msra.mxu0 0.0
        %1310 = vmatprep.subr.mxu0 0.0
        %1311 = vmatpush1.msra.mxu0 0.0
        %1312 = vmatprep.subr.mxu0 0.0
        %1313 = vmatpush1.msra.mxu0 0.0
        %1314 = vmatprep.subr.mxu0 0.0
        %1315 = vmatpush1.msra.mxu0 0.0
        %1316 = vmatprep.subr.mxu0 0.0
        %1317 = vmatpush1.msra.mxu0 0.0
        %1318 = vmatprep.subr.mxu0 0.0
        %1319 = vmatpush1.msra.mxu0 0.0
        %1320 = vmatprep.subr.mxu0 0.0
        %1321 = vmatpush1.msra.mxu0 0.0
        %1322 = vmatprep.subr.mxu0 0.0
        %1323 = vmatpush1.msra.mxu0 0.0
        %1324 = vmatprep.subr.mxu0 0.0
        %1325 = vmatpush1.msra.mxu0 0.0
        %1326 = vmatprep.subr.mxu0 0.0
        %1327 = vmatpush1.msra.mxu0 0.0
        %1328 = vmatprep.subr.mxu0 0.0
        %1329 = vmatpush1.msra.mxu0 0.0
        %1330 = vmatprep.subr.mxu0 0.0
        %1331 = vmatpush1.msra.mxu0 0.0
        %1332 = vmatprep.subr.mxu0 0.0
        %1333 = vmatpush1.msra.mxu0 0.0
        %1334 = vmatprep.subr.mxu0 0.0
        %1335 = vmatpush1.msra.mxu0 0.0
        %1336 = vmatprep.subr.mxu0 0.0
        %1337 = vmatpush1.msra.mxu0 0.0
        %1338 = vmatprep.subr.mxu0 0.0
        %1339 = vmatpush1.msra.mxu0 0.0
        %1340 = vmatprep.subr.mxu0 0.0
        %1341 = vmatpush1.msra.mxu0 0.0
        %1342 = vmatprep.subr.mxu0 0.0
        %1343 = vmatpush1.msra.mxu0 0.0
        %1344 = vmatprep.subr.mxu0 0.0
        %1345 = vmatpush1.msra.mxu0 0.0
        %1346 = vmatprep.subr.mxu0 0.0
        %1347 = vmatpush1.msra.mxu0 0.0
        %1348 = vmatprep.subr.mxu0 0.0
        %1349 = vmatpush1.msra.mxu0 0.0
        %1350 = vmatprep.subr.mxu0 0.0
        %1351 = vmatpush1.msra.mxu0 0.0
        %1352 = vmatprep.subr.mxu0 0.0
        %1353 = vmatpush1.msra.mxu0 0.0
        %1354 = vmatprep.subr.mxu0 0.0
        %1355 = vmatpush1.msra.mxu0 0.0
        %1356 = vmatprep.subr.mxu0 0.0
        %1357 = vmatpush1.msra.mxu0 0.0
        %1358 = vmatprep.subr.mxu0 0.0
        %1359 = vmatpush1.msra.mxu0 0.0
        %1360 = vmatprep.subr.mxu0 0.0
        %1361 = vmatpush1.msra.mxu0 0.0
        %1362 = vmatprep.mubr.f32.mxu0 0.0
        %1363 = vmatmul.mubr.f32.gmra.mrb[0].mxu0 %v1200
        %v1364 = vpop.f32.mrb[0].mxu0
        %v1365 = vadd.f32 0.0, %v1364
        %v1366 = vpop.f32.mrb[0].mxu0
        %1367 = vmatprep.mubr.f32.mxu0 0.0
        %1368 = vmatmul.mubr.f32.gmra.mrb[0].mxu0 %v1202
        %v1369 = vpop.f32.mrb[0].mxu0
        %v1370 = vadd.f32 0.0, %v1369
        %v1371 = vpop.f32.mrb[0].mxu0
        %1372 = vmatprep.mubr.f32.mxu0 0.0
        %1373 = vmatmul.mubr.f32.gmra.mrb[0].mxu0 %v1204
        %v1374 = vpop.f32.mrb[0].mxu0
        %v1375 = vadd.f32 0.0, %v1374
        %v1376 = vpop.f32.mrb[0].mxu0
        %1377 = vdwg.mxu0
        %v1378 = vadd.f32 %v726, %v1282
        %v1379 = vadd.f32 %v728, %v1284
        %v1380 = vadd.f32 %v809, %v1365
        %v1381 = vadd.f32 %v732, %v1288
        %v1382 = vadd.f32 %v734, %v1290
        %v1383 = vadd.f32 %v814, %v1370
        %v1384 = vadd.f32 %v738, %v1294
        %v1385 = vadd.f32 %v740, %v1296
        %v1386 = vadd.f32 %v819, %v1375
        %s1387 = scalar_lea.vmem %s1, 672
        %v1388 = vld [vmem:[%s1387] sm:$0xff]
        %v1389 = vld [vmem:[%s1387 + $0x8] sm:$0xff]
        %v1390 = vld [vmem:[%s1387 + $0x10] sm:$0xff]
        %v1391 = vld [vmem:[%s1387 + $0x18] sm:$0xff]
        %v1392 = vld [vmem:[%s1387 + $0x20] sm:$0xff]
        %v1393 = vld [vmem:[%s1387 + $0x28] sm:$0xff]
        %v1394 = vld [vmem:[%s1387 + $0x30] sm:$0xff]
        %v1395 = vld [vmem:[%s1387 + $0x38] sm:$0xff]
        %v1396 = vld [vmem:[%s1387 + $0x40] sm:$0xff]
        %v1397 = vld [vmem:[%s1387 + $0x48] sm:$0xf]
        %v1398 = vld [vmem:[%s1387 + $0x50] sm:$0xf]
        %v1399 = vld [vmem:[%s1387 + $0x58] sm:$0xf]
        %v1401 = vsel %vm471, %v1397, 0
        %v1404 = vsel %vm471, %v1398, 0
        %v1407 = vsel %vm471, %v1399, 0
        %1409 = vmatprep.subr.mxu0 %v1389
        %1410 = vmatpush1.msra.mxu0 %v1388
        %1411 = vmatprep.subr.mxu0 %v1392
        %1412 = vmatpush1.msra.mxu0 %v1391
        %1413 = vmatprep.subr.mxu0 %v1395
        %1414 = vmatpush1.msra.mxu0 %v1394
        %1415 = vmatprep.subr.mxu0 %v1404
        %1416 = vmatpush1.msra.mxu0 %v1401
        %1417 = vmatprep.subr.mxu0 0.0
        %1418 = vmatpush1.msra.mxu0 0.0
        %1419 = vmatprep.subr.mxu0 0.0
        %1420 = vmatpush1.msra.mxu0 0.0
        %1421 = vmatprep.subr.mxu0 0.0
        %1422 = vmatpush1.msra.mxu0 0.0
        %1423 = vmatprep.subr.mxu0 0.0
        %1424 = vmatpush1.msra.mxu0 0.0
        %1425 = vmatprep.subr.mxu0 0.0
        %1426 = vmatpush1.msra.mxu0 0.0
        %1427 = vmatprep.subr.mxu0 0.0
        %1428 = vmatpush1.msra.mxu0 0.0
        %1429 = vmatprep.subr.mxu0 0.0
        %1430 = vmatpush1.msra.mxu0 0.0
        %1431 = vmatprep.subr.mxu0 0.0
        %1432 = vmatpush1.msra.mxu0 0.0
        %1433 = vmatprep.subr.mxu0 0.0
        %1434 = vmatpush1.msra.mxu0 0.0
        %1435 = vmatprep.subr.mxu0 0.0
        %1436 = vmatpush1.msra.mxu0 0.0
        %1437 = vmatprep.subr.mxu0 0.0
        %1438 = vmatpush1.msra.mxu0 0.0
        %1439 = vmatprep.subr.mxu0 0.0
        %1440 = vmatpush1.msra.mxu0 0.0
        %1441 = vmatprep.subr.mxu0 0.0
        %1442 = vmatpush1.msra.mxu0 0.0
        %1443 = vmatprep.subr.mxu0 0.0
        %1444 = vmatpush1.msra.mxu0 0.0
        %1445 = vmatprep.subr.mxu0 0.0
        %1446 = vmatpush1.msra.mxu0 0.0
        %1447 = vmatprep.subr.mxu0 0.0
        %1448 = vmatpush1.msra.mxu0 0.0
        %1449 = vmatprep.subr.mxu0 0.0
        %1450 = vmatpush1.msra.mxu0 0.0
        %1451 = vmatprep.subr.mxu0 0.0
        %1452 = vmatpush1.msra.mxu0 0.0
        %1453 = vmatprep.subr.mxu0 0.0
        %1454 = vmatpush1.msra.mxu0 0.0
        %1455 = vmatprep.subr.mxu0 0.0
        %1456 = vmatpush1.msra.mxu0 0.0
        %1457 = vmatprep.subr.mxu0 0.0
        %1458 = vmatpush1.msra.mxu0 0.0
        %1459 = vmatprep.subr.mxu0 0.0
        %1460 = vmatpush1.msra.mxu0 0.0
        %1461 = vmatprep.subr.mxu0 0.0
        %1462 = vmatpush1.msra.mxu0 0.0
        %1463 = vmatprep.subr.mxu0 0.0
        %1464 = vmatpush1.msra.mxu0 0.0
        %1465 = vmatprep.subr.mxu0 0.0
        %1466 = vmatpush1.msra.mxu0 0.0
        %1467 = vmatprep.subr.mxu0 0.0
        %1468 = vmatpush1.msra.mxu0 0.0
        %1469 = vmatprep.subr.mxu0 0.0
        %1470 = vmatpush1.msra.mxu0 0.0
        %1471 = vmatprep.subr.mxu0 0.0
        %1472 = vmatpush1.msra.mxu0 0.0
        %1473 = vmatprep.mubr.f32.mxu0 0.0
        %1474 = vmatmul.mubr.f32.gmra.mrb[0].mxu0 %v1200
        %v1475 = vpop.f32.mrb[0].mxu0
        %v1476 = vadd.f32 0.0, %v1475
        %v1477 = vpop.f32.mrb[0].mxu0
        %v1478 = vadd.f32 0.0, %v1477
        %1479 = vmatprep.mubr.f32.mxu0 0.0
        %1480 = vmatmul.mubr.f32.gmra.mrb[0].mxu0 %v1202
        %v1481 = vpop.f32.mrb[0].mxu0
        %v1482 = vadd.f32 0.0, %v1481
        %v1483 = vpop.f32.mrb[0].mxu0
        %v1484 = vadd.f32 0.0, %v1483
        %1485 = vmatprep.mubr.f32.mxu0 0.0
        %1486 = vmatmul.mubr.f32.gmra.mrb[0].mxu0 %v1204
        %v1487 = vpop.f32.mrb[0].mxu0
        %v1488 = vadd.f32 0.0, %v1487
        %v1489 = vpop.f32.mrb[0].mxu0
        %v1490 = vadd.f32 0.0, %v1489
        %1491 = vdwg.mxu0
        %1492 = vmatprep.subr.mxu0 0.0
        %1493 = vmatpush1.msra.mxu0 %v1390
        %1494 = vmatprep.subr.mxu0 0.0
        %1495 = vmatpush1.msra.mxu0 %v1393
        %1496 = vmatprep.subr.mxu0 0.0
        %1497 = vmatpush1.msra.mxu0 %v1396
        %1498 = vmatprep.subr.mxu0 0.0
        %1499 = vmatpush1.msra.mxu0 %v1407
        %1500 = vmatprep.subr.mxu0 0.0
        %1501 = vmatpush1.msra.mxu0 0.0
        %1502 = vmatprep.subr.mxu0 0.0
        %1503 = vmatpush1.msra.mxu0 0.0
        %1504 = vmatprep.subr.mxu0 0.0
        %1505 = vmatpush1.msra.mxu0 0.0
        %1506 = vmatprep.subr.mxu0 0.0
        %1507 = vmatpush1.msra.mxu0 0.0
        %1508 = vmatprep.subr.mxu0 0.0
        %1509 = vmatpush1.msra.mxu0 0.0
        %1510 = vmatprep.subr.mxu0 0.0
        %1511 = vmatpush1.msra.mxu0 0.0
        %1512 = vmatprep.subr.mxu0 0.0
        %1513 = vmatpush1.msra.mxu0 0.0
        %1514 = vmatprep.subr.mxu0 0.0
        %1515 = vmatpush1.msra.mxu0 0.0
        %1516 = vmatprep.subr.mxu0 0.0
        %1517 = vmatpush1.msra.mxu0 0.0
        %1518 = vmatprep.subr.mxu0 0.0
        %1519 = vmatpush1.msra.mxu0 0.0
        %1520 = vmatprep.subr.mxu0 0.0
        %1521 = vmatpush1.msra.mxu0 0.0
        %1522 = vmatprep.subr.mxu0 0.0
        %1523 = vmatpush1.msra.mxu0 0.0
        %1524 = vmatprep.subr.mxu0 0.0
        %1525 = vmatpush1.msra.mxu0 0.0
        %1526 = vmatprep.subr.mxu0 0.0
        %1527 = vmatpush1.msra.mxu0 0.0
        %1528 = vmatprep.subr.mxu0 0.0
        %1529 = vmatpush1.msra.mxu0 0.0
        %1530 = vmatprep.subr.mxu0 0.0
        %1531 = vmatpush1.msra.mxu0 0.0
        %1532 = vmatprep.subr.mxu0 0.0
        %1533 = vmatpush1.msra.mxu0 0.0
        %1534 = vmatprep.subr.mxu0 0.0
        %1535 = vmatpush1.msra.mxu0 0.0
        %1536 = vmatprep.subr.mxu0 0.0
        %1537 = vmatpush1.msra.mxu0 0.0
        %1538 = vmatprep.subr.mxu0 0.0
        %1539 = vmatpush1.msra.mxu0 0.0
        %1540 = vmatprep.subr.mxu0 0.0
        %1541 = vmatpush1.msra.mxu0 0.0
        %1542 = vmatprep.subr.mxu0 0.0
        %1543 = vmatpush1.msra.mxu0 0.0
        %1544 = vmatprep.subr.mxu0 0.0
        %1545 = vmatpush1.msra.mxu0 0.0
        %1546 = vmatprep.subr.mxu0 0.0
        %1547 = vmatpush1.msra.mxu0 0.0
        %1548 = vmatprep.subr.mxu0 0.0
        %1549 = vmatpush1.msra.mxu0 0.0
        %1550 = vmatprep.subr.mxu0 0.0
        %1551 = vmatpush1.msra.mxu0 0.0
        %1552 = vmatprep.subr.mxu0 0.0
        %1553 = vmatpush1.msra.mxu0 0.0
        %1554 = vmatprep.subr.mxu0 0.0
        %1555 = vmatpush1.msra.mxu0 0.0
        %1556 = vmatprep.mubr.f32.mxu0 0.0
        %1557 = vmatmul.mubr.f32.gmra.mrb[0].mxu0 %v1200
        %v1558 = vpop.f32.mrb[0].mxu0
        %v1559 = vadd.f32 0.0, %v1558
        %v1560 = vpop.f32.mrb[0].mxu0
        %1561 = vmatprep.mubr.f32.mxu0 0.0
        %1562 = vmatmul.mubr.f32.gmra.mrb[0].mxu0 %v1202
        %v1563 = vpop.f32.mrb[0].mxu0
        %v1564 = vadd.f32 0.0, %v1563
        %v1565 = vpop.f32.mrb[0].mxu0
        %1566 = vmatprep.mubr.f32.mxu0 0.0
        %1567 = vmatmul.mubr.f32.gmra.mrb[0].mxu0 %v1204
        %v1568 = vpop.f32.mrb[0].mxu0
        %v1569 = vadd.f32 0.0, %v1568
        %v1570 = vpop.f32.mrb[0].mxu0
        %1571 = vdwg.mxu0
        %v1572 = vadd.f32 %v1083, %v1476
        %v1573 = vadd.f32 %v1085, %v1478
        %v1574 = vadd.f32 %v1166, %v1559
        %v1575 = vadd.f32 %v1089, %v1482
        %v1576 = vadd.f32 %v1091, %v1484
        %v1577 = vadd.f32 %v1171, %v1564
        %v1578 = vadd.f32 %v1095, %v1488
        %v1579 = vadd.f32 %v1097, %v1490
        %v1580 = vadd.f32 %v1176, %v1569
        %s1581 = scalar_lea.vmem %s1, 288
        %v1582 = vld [vmem:[%s1581] sm:$0xff]
        %v1583 = vld [vmem:[%s1581 + $0x8] sm:$0xff]
        %v1584 = vld [vmem:[%s1581 + $0x10] sm:$0xff]
        %v1585 = vld [vmem:[%s1581 + $0x18] sm:$0xff]
        %v1586 = vld [vmem:[%s1581 + $0x20] sm:$0xff]
        %v1587 = vld [vmem:[%s1581 + $0x28] sm:$0xff]
        %v1588 = vld [vmem:[%s1581 + $0x30] sm:$0xff]
        %v1589 = vld [vmem:[%s1581 + $0x38] sm:$0xff]
        %v1590 = vld [vmem:[%s1581 + $0x40] sm:$0xff]
        %v1591 = vld [vmem:[%s1581 + $0x48] sm:$0xf]
        %v1592 = vld [vmem:[%s1581 + $0x50] sm:$0xf]
        %v1593 = vld [vmem:[%s1581 + $0x58] sm:$0xf]
        %vm1594 = vcmask 1044480
        %v1595 = vrot.slane %v410, 3
        %v1596 = vrot.slane %v411, 3
        %v1597 = vsel %vm1594, %v1595, %v1596
        %v1598 = vrot.slane %v412, 3
        %v1599 = vsel %vm1594, %v1596, %v1598
        %v1600 = vrot.slane %v413, 3
        %v1601 = vsel %vm1594, %v1598, %v1600
        %v1602 = vsel %vm464, %v1597, 0
        %v1604 = vsel %vm464, %v1599, 0
        %v1606 = vsel %vm464, %v1601, 0
        %v1609 = vsel %vm471, %v1591, 0
        %v1612 = vsel %vm471, %v1592, 0
        %v1615 = vsel %vm471, %v1593, 0
        %1617 = vmatprep.subr.mxu0 %v1583
        %1618 = vmatpush1.msra.mxu0 %v1582
        %1619 = vmatprep.subr.mxu0 %v1586
        %1620 = vmatpush1.msra.mxu0 %v1585
        %1621 = vmatprep.subr.mxu0 %v1589
        %1622 = vmatpush1.msra.mxu0 %v1588
        %1623 = vmatprep.subr.mxu0 %v1612
        %1624 = vmatpush1.msra.mxu0 %v1609
        %1625 = vmatprep.subr.mxu0 0.0
        %1626 = vmatpush1.msra.mxu0 0.0
        %1627 = vmatprep.subr.mxu0 0.0
        %1628 = vmatpush1.msra.mxu0 0.0
        %1629 = vmatprep.subr.mxu0 0.0
        %1630 = vmatpush1.msra.mxu0 0.0
        %1631 = vmatprep.subr.mxu0 0.0
        %1632 = vmatpush1.msra.mxu0 0.0
        %1633 = vmatprep.subr.mxu0 0.0
        %1634 = vmatpush1.msra.mxu0 0.0
        %1635 = vmatprep.subr.mxu0 0.0
        %1636 = vmatpush1.msra.mxu0 0.0
        %1637 = vmatprep.subr.mxu0 0.0
        %1638 = vmatpush1.msra.mxu0 0.0
        %1639 = vmatprep.subr.mxu0 0.0
        %1640 = vmatpush1.msra.mxu0 0.0
        %1641 = vmatprep.subr.mxu0 0.0
        %1642 = vmatpush1.msra.mxu0 0.0
        %1643 = vmatprep.subr.mxu0 0.0
        %1644 = vmatpush1.msra.mxu0 0.0
        %1645 = vmatprep.subr.mxu0 0.0
        %1646 = vmatpush1.msra.mxu0 0.0
        %1647 = vmatprep.subr.mxu0 0.0
        %1648 = vmatpush1.msra.mxu0 0.0
        %1649 = vmatprep.subr.mxu0 0.0
        %1650 = vmatpush1.msra.mxu0 0.0
        %1651 = vmatprep.subr.mxu0 0.0
        %1652 = vmatpush1.msra.mxu0 0.0
        %1653 = vmatprep.subr.mxu0 0.0
        %1654 = vmatpush1.msra.mxu0 0.0
        %1655 = vmatprep.subr.mxu0 0.0
        %1656 = vmatpush1.msra.mxu0 0.0
        %1657 = vmatprep.subr.mxu0 0.0
        %1658 = vmatpush1.msra.mxu0 0.0
        %1659 = vmatprep.subr.mxu0 0.0
        %1660 = vmatpush1.msra.mxu0 0.0
        %1661 = vmatprep.subr.mxu0 0.0
        %1662 = vmatpush1.msra.mxu0 0.0
        %1663 = vmatprep.subr.mxu0 0.0
        %1664 = vmatpush1.msra.mxu0 0.0
        %1665 = vmatprep.subr.mxu0 0.0
        %1666 = vmatpush1.msra.mxu0 0.0
        %1667 = vmatprep.subr.mxu0 0.0
        %1668 = vmatpush1.msra.mxu0 0.0
        %1669 = vmatprep.subr.mxu0 0.0
        %1670 = vmatpush1.msra.mxu0 0.0
        %1671 = vmatprep.subr.mxu0 0.0
        %1672 = vmatpush1.msra.mxu0 0.0
        %1673 = vmatprep.subr.mxu0 0.0
        %1674 = vmatpush1.msra.mxu0 0.0
        %1675 = vmatprep.subr.mxu0 0.0
        %1676 = vmatpush1.msra.mxu0 0.0
        %1677 = vmatprep.subr.mxu0 0.0
        %1678 = vmatpush1.msra.mxu0 0.0
        %1679 = vmatprep.subr.mxu0 0.0
        %1680 = vmatpush1.msra.mxu0 0.0
        %1681 = vmatprep.mubr.f32.mxu0 0.0
        %1682 = vmatmul.mubr.f32.gmra.mrb[0].mxu0 %v1602
        %v1683 = vpop.f32.mrb[0].mxu0
        %v1684 = vadd.f32 0.0, %v1683
        %v1685 = vpop.f32.mrb[0].mxu0
        %v1686 = vadd.f32 0.0, %v1685
        %1687 = vmatprep.mubr.f32.mxu0 0.0
        %1688 = vmatmul.mubr.f32.gmra.mrb[0].mxu0 %v1604
        %v1689 = vpop.f32.mrb[0].mxu0
        %v1690 = vadd.f32 0.0, %v1689
        %v1691 = vpop.f32.mrb[0].mxu0
        %v1692 = vadd.f32 0.0, %v1691
        %1693 = vmatprep.mubr.f32.mxu0 0.0
        %1694 = vmatmul.mubr.f32.gmra.mrb[0].mxu0 %v1606
        %v1695 = vpop.f32.mrb[0].mxu0
        %v1696 = vadd.f32 0.0, %v1695
        %v1697 = vpop.f32.mrb[0].mxu0
        %v1698 = vadd.f32 0.0, %v1697
        %1699 = vdwg.mxu0
        %1700 = vmatprep.subr.mxu0 0.0
        %1701 = vmatpush1.msra.mxu0 %v1584
        %1702 = vmatprep.subr.mxu0 0.0
        %1703 = vmatpush1.msra.mxu0 %v1587
        %1704 = vmatprep.subr.mxu0 0.0
        %1705 = vmatpush1.msra.mxu0 %v1590
        %1706 = vmatprep.subr.mxu0 0.0
        %1707 = vmatpush1.msra.mxu0 %v1615
        %1708 = vmatprep.subr.mxu0 0.0
        %1709 = vmatpush1.msra.mxu0 0.0
        %1710 = vmatprep.subr.mxu0 0.0
        %1711 = vmatpush1.msra.mxu0 0.0
        %1712 = vmatprep.subr.mxu0 0.0
        %1713 = vmatpush1.msra.mxu0 0.0
        %1714 = vmatprep.subr.mxu0 0.0
        %1715 = vmatpush1.msra.mxu0 0.0
        %1716 = vmatprep.subr.mxu0 0.0
        %1717 = vmatpush1.msra.mxu0 0.0
        %1718 = vmatprep.subr.mxu0 0.0
        %1719 = vmatpush1.msra.mxu0 0.0
        %1720 = vmatprep.subr.mxu0 0.0
        %1721 = vmatpush1.msra.mxu0 0.0
        %1722 = vmatprep.subr.mxu0 0.0
        %1723 = vmatpush1.msra.mxu0 0.0
        %1724 = vmatprep.subr.mxu0 0.0
        %1725 = vmatpush1.msra.mxu0 0.0
        %1726 = vmatprep.subr.mxu0 0.0
        %1727 = vmatpush1.msra.mxu0 0.0
        %1728 = vmatprep.subr.mxu0 0.0
        %1729 = vmatpush1.msra.mxu0 0.0
        %1730 = vmatprep.subr.mxu0 0.0
        %1731 = vmatpush1.msra.mxu0 0.0
        %1732 = vmatprep.subr.mxu0 0.0
        %1733 = vmatpush1.msra.mxu0 0.0
        %1734 = vmatprep.subr.mxu0 0.0
        %1735 = vmatpush1.msra.mxu0 0.0
        %1736 = vmatprep.subr.mxu0 0.0
        %1737 = vmatpush1.msra.mxu0 0.0
        %1738 = vmatprep.subr.mxu0 0.0
        %1739 = vmatpush1.msra.mxu0 0.0
        %1740 = vmatprep.subr.mxu0 0.0
        %1741 = vmatpush1.msra.mxu0 0.0
        %1742 = vmatprep.subr.mxu0 0.0
        %1743 = vmatpush1.msra.mxu0 0.0
        %1744 = vmatprep.subr.mxu0 0.0
        %1745 = vmatpush1.msra.mxu0 0.0
        %1746 = vmatprep.subr.mxu0 0.0
        %1747 = vmatpush1.msra.mxu0 0.0
        %1748 = vmatprep.subr.mxu0 0.0
        %1749 = vmatpush1.msra.mxu0 0.0
        %1750 = vmatprep.subr.mxu0 0.0
        %1751 = vmatpush1.msra.mxu0 0.0
        %1752 = vmatprep.subr.mxu0 0.0
        %1753 = vmatpush1.msra.mxu0 0.0
        %1754 = vmatprep.subr.mxu0 0.0
        %1755 = vmatpush1.msra.mxu0 0.0
        %1756 = vmatprep.subr.mxu0 0.0
        %1757 = vmatpush1.msra.mxu0 0.0
        %1758 = vmatprep.subr.mxu0 0.0
        %1759 = vmatpush1.msra.mxu0 0.0
        %1760 = vmatprep.subr.mxu0 0.0
        %1761 = vmatpush1.msra.mxu0 0.0
        %1762 = vmatprep.subr.mxu0 0.0
        %1763 = vmatpush1.msra.mxu0 0.0
        %1764 = vmatprep.mubr.f32.mxu0 0.0
        %1765 = vmatmul.mubr.f32.gmra.mrb[0].mxu0 %v1602
        %v1766 = vpop.f32.mrb[0].mxu0
        %v1767 = vadd.f32 0.0, %v1766
        %v1768 = vpop.f32.mrb[0].mxu0
        %1769 = vmatprep.mubr.f32.mxu0 0.0
        %1770 = vmatmul.mubr.f32.gmra.mrb[0].mxu0 %v1604
        %v1771 = vpop.f32.mrb[0].mxu0
        %v1772 = vadd.f32 0.0, %v1771
        %v1773 = vpop.f32.mrb[0].mxu0
        %1774 = vmatprep.mubr.f32.mxu0 0.0
        %1775 = vmatmul.mubr.f32.gmra.mrb[0].mxu0 %v1606
        %v1776 = vpop.f32.mrb[0].mxu0
        %v1777 = vadd.f32 0.0, %v1776
        %v1778 = vpop.f32.mrb[0].mxu0
        %1779 = vdwg.mxu0
        %v1780 = vadd.f32 %v1378, %v1684
        %v1781 = vadd.f32 %v1379, %v1686
        %v1782 = vadd.f32 %v1380, %v1767
        %v1783 = vadd.f32 %v1381, %v1690
        %v1784 = vadd.f32 %v1382, %v1692
        %v1785 = vadd.f32 %v1383, %v1772
        %v1786 = vadd.f32 %v1384, %v1696
        %v1787 = vadd.f32 %v1385, %v1698
        %v1788 = vadd.f32 %v1386, %v1777
        %s1789 = scalar_lea.vmem %s1, 768
        %v1790 = vld [vmem:[%s1789] sm:$0xff]
        %v1791 = vld [vmem:[%s1789 + $0x8] sm:$0xff]
        %v1792 = vld [vmem:[%s1789 + $0x10] sm:$0xff]
        %v1793 = vld [vmem:[%s1789 + $0x18] sm:$0xff]
        %v1794 = vld [vmem:[%s1789 + $0x20] sm:$0xff]
        %v1795 = vld [vmem:[%s1789 + $0x28] sm:$0xff]
        %v1796 = vld [vmem:[%s1789 + $0x30] sm:$0xff]
        %v1797 = vld [vmem:[%s1789 + $0x38] sm:$0xff]
        %v1798 = vld [vmem:[%s1789 + $0x40] sm:$0xff]
        %v1799 = vld [vmem:[%s1789 + $0x48] sm:$0xf]
        %v1800 = vld [vmem:[%s1789 + $0x50] sm:$0xf]
        %v1801 = vld [vmem:[%s1789 + $0x58] sm:$0xf]
        %v1803 = vsel %vm471, %v1799, 0
        %v1806 = vsel %vm471, %v1800, 0
        %v1809 = vsel %vm471, %v1801, 0
        %1811 = vmatprep.subr.mxu0 %v1791
        %1812 = vmatpush1.msra.mxu0 %v1790
        %1813 = vmatprep.subr.mxu0 %v1794
        %1814 = vmatpush1.msra.mxu0 %v1793
        %1815 = vmatprep.subr.mxu0 %v1797
        %1816 = vmatpush1.msra.mxu0 %v1796
        %1817 = vmatprep.subr.mxu0 %v1806
        %1818 = vmatpush1.msra.mxu0 %v1803
        %1819 = vmatprep.subr.mxu0 0.0
        %1820 = vmatpush1.msra.mxu0 0.0
        %1821 = vmatprep.subr.mxu0 0.0
        %1822 = vmatpush1.msra.mxu0 0.0
        %1823 = vmatprep.subr.mxu0 0.0
        %1824 = vmatpush1.msra.mxu0 0.0
        %1825 = vmatprep.subr.mxu0 0.0
        %1826 = vmatpush1.msra.mxu0 0.0
        %1827 = vmatprep.subr.mxu0 0.0
        %1828 = vmatpush1.msra.mxu0 0.0
        %1829 = vmatprep.subr.mxu0 0.0
        %1830 = vmatpush1.msra.mxu0 0.0
        %1831 = vmatprep.subr.mxu0 0.0
        %1832 = vmatpush1.msra.mxu0 0.0
        %1833 = vmatprep.subr.mxu0 0.0
        %1834 = vmatpush1.msra.mxu0 0.0
        %1835 = vmatprep.subr.mxu0 0.0
        %1836 = vmatpush1.msra.mxu0 0.0
        %1837 = vmatprep.subr.mxu0 0.0
        %1838 = vmatpush1.msra.mxu0 0.0
        %1839 = vmatprep.subr.mxu0 0.0
        %1840 = vmatpush1.msra.mxu0 0.0
        %1841 = vmatprep.subr.mxu0 0.0
        %1842 = vmatpush1.msra.mxu0 0.0
        %1843 = vmatprep.subr.mxu0 0.0
        %1844 = vmatpush1.msra.mxu0 0.0
        %1845 = vmatprep.subr.mxu0 0.0
        %1846 = vmatpush1.msra.mxu0 0.0
        %1847 = vmatprep.subr.mxu0 0.0
        %1848 = vmatpush1.msra.mxu0 0.0
        %1849 = vmatprep.subr.mxu0 0.0
        %1850 = vmatpush1.msra.mxu0 0.0
        %1851 = vmatprep.subr.mxu0 0.0
        %1852 = vmatpush1.msra.mxu0 0.0
        %1853 = vmatprep.subr.mxu0 0.0
        %1854 = vmatpush1.msra.mxu0 0.0
        %1855 = vmatprep.subr.mxu0 0.0
        %1856 = vmatpush1.msra.mxu0 0.0
        %1857 = vmatprep.subr.mxu0 0.0
        %1858 = vmatpush1.msra.mxu0 0.0
        %1859 = vmatprep.subr.mxu0 0.0
        %1860 = vmatpush1.msra.mxu0 0.0
        %1861 = vmatprep.subr.mxu0 0.0
        %1862 = vmatpush1.msra.mxu0 0.0
        %1863 = vmatprep.subr.mxu0 0.0
        %1864 = vmatpush1.msra.mxu0 0.0
        %1865 = vmatprep.subr.mxu0 0.0
        %1866 = vmatpush1.msra.mxu0 0.0
        %1867 = vmatprep.subr.mxu0 0.0
        %1868 = vmatpush1.msra.mxu0 0.0
        %1869 = vmatprep.subr.mxu0 0.0
        %1870 = vmatpush1.msra.mxu0 0.0
        %1871 = vmatprep.subr.mxu0 0.0
        %1872 = vmatpush1.msra.mxu0 0.0
        %1873 = vmatprep.subr.mxu0 0.0
        %1874 = vmatpush1.msra.mxu0 0.0
        %1875 = vmatprep.mubr.f32.mxu0 0.0
        %1876 = vmatmul.mubr.f32.gmra.mrb[0].mxu0 %v1602
        %v1877 = vpop.f32.mrb[0].mxu0
        %v1878 = vadd.f32 0.0, %v1877
        %v1879 = vpop.f32.mrb[0].mxu0
        %v1880 = vadd.f32 0.0, %v1879
        %1881 = vmatprep.mubr.f32.mxu0 0.0
        %1882 = vmatmul.mubr.f32.gmra.mrb[0].mxu0 %v1604
        %v1883 = vpop.f32.mrb[0].mxu0
        %v1884 = vadd.f32 0.0, %v1883
        %v1885 = vpop.f32.mrb[0].mxu0
        %v1886 = vadd.f32 0.0, %v1885
        %1887 = vmatprep.mubr.f32.mxu0 0.0
        %1888 = vmatmul.mubr.f32.gmra.mrb[0].mxu0 %v1606
        %v1889 = vpop.f32.mrb[0].mxu0
        %v1890 = vadd.f32 0.0, %v1889
        %v1891 = vpop.f32.mrb[0].mxu0
        %v1892 = vadd.f32 0.0, %v1891
        %1893 = vdwg.mxu0
        %1894 = vmatprep.subr.mxu0 0.0
        %1895 = vmatpush1.msra.mxu0 %v1792
        %1896 = vmatprep.subr.mxu0 0.0
        %1897 = vmatpush1.msra.mxu0 %v1795
        %1898 = vmatprep.subr.mxu0 0.0
        %1899 = vmatpush1.msra.mxu0 %v1798
        %1900 = vmatprep.subr.mxu0 0.0
        %1901 = vmatpush1.msra.mxu0 %v1809
        %1902 = vmatprep.subr.mxu0 0.0
        %1903 = vmatpush1.msra.mxu0 0.0
        %1904 = vmatprep.subr.mxu0 0.0
        %1905 = vmatpush1.msra.mxu0 0.0
        %1906 = vmatprep.subr.mxu0 0.0
        %1907 = vmatpush1.msra.mxu0 0.0
        %1908 = vmatprep.subr.mxu0 0.0
        %1909 = vmatpush1.msra.mxu0 0.0
        %1910 = vmatprep.subr.mxu0 0.0
        %1911 = vmatpush1.msra.mxu0 0.0
        %1912 = vmatprep.subr.mxu0 0.0
        %1913 = vmatpush1.msra.mxu0 0.0
        %1914 = vmatprep.subr.mxu0 0.0
        %1915 = vmatpush1.msra.mxu0 0.0
        %1916 = vmatprep.subr.mxu0 0.0
        %1917 = vmatpush1.msra.mxu0 0.0
        %1918 = vmatprep.subr.mxu0 0.0
        %1919 = vmatpush1.msra.mxu0 0.0
        %1920 = vmatprep.subr.mxu0 0.0
        %1921 = vmatpush1.msra.mxu0 0.0
        %1922 = vmatprep.subr.mxu0 0.0
        %1923 = vmatpush1.msra.mxu0 0.0
        %1924 = vmatprep.subr.mxu0 0.0
        %1925 = vmatpush1.msra.mxu0 0.0
        %1926 = vmatprep.subr.mxu0 0.0
        %1927 = vmatpush1.msra.mxu0 0.0
        %1928 = vmatprep.subr.mxu0 0.0
        %1929 = vmatpush1.msra.mxu0 0.0
        %1930 = vmatprep.subr.mxu0 0.0
        %1931 = vmatpush1.msra.mxu0 0.0
        %1932 = vmatprep.subr.mxu0 0.0
        %1933 = vmatpush1.msra.mxu0 0.0
        %1934 = vmatprep.subr.mxu0 0.0
        %1935 = vmatpush1.msra.mxu0 0.0
        %1936 = vmatprep.subr.mxu0 0.0
        %1937 = vmatpush1.msra.mxu0 0.0
        %1938 = vmatprep.subr.mxu0 0.0
        %1939 = vmatpush1.msra.mxu0 0.0
        %1940 = vmatprep.subr.mxu0 0.0
        %1941 = vmatpush1.msra.mxu0 0.0
        %1942 = vmatprep.subr.mxu0 0.0
        %1943 = vmatpush1.msra.mxu0 0.0
        %1944 = vmatprep.subr.mxu0 0.0
        %1945 = vmatpush1.msra.mxu0 0.0
        %1946 = vmatprep.subr.mxu0 0.0
        %1947 = vmatpush1.msra.mxu0 0.0
        %1948 = vmatprep.subr.mxu0 0.0
        %1949 = vmatpush1.msra.mxu0 0.0
        %1950 = vmatprep.subr.mxu0 0.0
        %1951 = vmatpush1.msra.mxu0 0.0
        %1952 = vmatprep.subr.mxu0 0.0
        %1953 = vmatpush1.msra.mxu0 0.0
        %1954 = vmatprep.subr.mxu0 0.0
        %1955 = vmatpush1.msra.mxu0 0.0
        %1956 = vmatprep.subr.mxu0 0.0
        %1957 = vmatpush1.msra.mxu0 0.0
        %1958 = vmatprep.mubr.f32.mxu0 0.0
        %1959 = vmatmul.mubr.f32.gmra.mrb[0].mxu0 %v1602
        %v1960 = vpop.f32.mrb[0].mxu0
        %v1961 = vadd.f32 0.0, %v1960
        %v1962 = vpop.f32.mrb[0].mxu0
        %1963 = vmatprep.mubr.f32.mxu0 0.0
        %1964 = vmatmul.mubr.f32.gmra.mrb[0].mxu0 %v1604
        %v1965 = vpop.f32.mrb[0].mxu0
        %v1966 = vadd.f32 0.0, %v1965
        %v1967 = vpop.f32.mrb[0].mxu0
        %1968 = vmatprep.mubr.f32.mxu0 0.0
        %1969 = vmatmul.mubr.f32.gmra.mrb[0].mxu0 %v1606
        %v1970 = vpop.f32.mrb[0].mxu0
        %v1971 = vadd.f32 0.0, %v1970
        %v1972 = vpop.f32.mrb[0].mxu0
        %1973 = vdwg.mxu0
        %v1974 = vadd.f32 %v1572, %v1878
        %v1975 = vadd.f32 %v1573, %v1880
        %v1976 = vadd.f32 %v1574, %v1961
        %v1977 = vadd.f32 %v1575, %v1884
        %v1978 = vadd.f32 %v1576, %v1886
        %v1979 = vadd.f32 %v1577, %v1966
        %v1980 = vadd.f32 %v1578, %v1890
        %v1981 = vadd.f32 %v1579, %v1892
        %v1982 = vadd.f32 %v1580, %v1971
        %s1983 = scalar_lea.vmem %s1, 384
        %v1984 = vld [vmem:[%s1983] sm:$0xff]
        %v1985 = vld [vmem:[%s1983 + $0x8] sm:$0xff]
        %v1986 = vld [vmem:[%s1983 + $0x10] sm:$0xff]
        %v1987 = vld [vmem:[%s1983 + $0x18] sm:$0xff]
        %v1988 = vld [vmem:[%s1983 + $0x20] sm:$0xff]
        %v1989 = vld [vmem:[%s1983 + $0x28] sm:$0xff]
        %v1990 = vld [vmem:[%s1983 + $0x30] sm:$0xff]
        %v1991 = vld [vmem:[%s1983 + $0x38] sm:$0xff]
        %v1992 = vld [vmem:[%s1983 + $0x40] sm:$0xff]
        %v1993 = vld [vmem:[%s1983 + $0x48] sm:$0xf]
        %v1994 = vld [vmem:[%s1983 + $0x50] sm:$0xf]
        %v1995 = vld [vmem:[%s1983 + $0x58] sm:$0xf]
        %v1996 = vrot.slane %v410, 4
        %v1997 = vrot.slane %v411, 4
        %v1998 = vsel %vm471, %v1996, %v1997
        %v1999 = vrot.slane %v412, 4
        %v2000 = vsel %vm471, %v1997, %v1999
        %v2001 = vrot.slane %v413, 4
        %v2002 = vsel %vm471, %v1999, %v2001
        %v2003 = vsel %vm464, %v1998, 0
        %v2005 = vsel %vm464, %v2000, 0
        %v2007 = vsel %vm464, %v2002, 0
        %v2010 = vsel %vm471, %v1993, 0
        %v2013 = vsel %vm471, %v1994, 0
        %v2016 = vsel %vm471, %v1995, 0
        %2018 = vmatprep.subr.mxu0 %v1985
        %2019 = vmatpush1.msra.mxu0 %v1984
        %2020 = vmatprep.subr.mxu0 %v1988
        %2021 = vmatpush1.msra.mxu0 %v1987
        %2022 = vmatprep.subr.mxu0 %v1991
        %2023 = vmatpush1.msra.mxu0 %v1990
        %2024 = vmatprep.subr.mxu0 %v2013
        %2025 = vmatpush1.msra.mxu0 %v2010
        %2026 = vmatprep.subr.mxu0 0.0
        %2027 = vmatpush1.msra.mxu0 0.0
        %2028 = vmatprep.subr.mxu0 0.0
        %2029 = vmatpush1.msra.mxu0 0.0
        %2030 = vmatprep.subr.mxu0 0.0
        %2031 = vmatpush1.msra.mxu0 0.0
        %2032 = vmatprep.subr.mxu0 0.0
        %2033 = vmatpush1.msra.mxu0 0.0
        %2034 = vmatprep.subr.mxu0 0.0
        %2035 = vmatpush1.msra.mxu0 0.0
        %2036 = vmatprep.subr.mxu0 0.0
        %2037 = vmatpush1.msra.mxu0 0.0
        %2038 = vmatprep.subr.mxu0 0.0
        %2039 = vmatpush1.msra.mxu0 0.0
        %2040 = vmatprep.subr.mxu0 0.0
        %2041 = vmatpush1.msra.mxu0 0.0
        %2042 = vmatprep.subr.mxu0 0.0
        %2043 = vmatpush1.msra.mxu0 0.0
        %2044 = vmatprep.subr.mxu0 0.0
        %2045 = vmatpush1.msra.mxu0 0.0
        %2046 = vmatprep.subr.mxu0 0.0
        %2047 = vmatpush1.msra.mxu0 0.0
        %2048 = vmatprep.subr.mxu0 0.0
        %2049 = vmatpush1.msra.mxu0 0.0
        %2050 = vmatprep.subr.mxu0 0.0
        %2051 = vmatpush1.msra.mxu0 0.0
        %2052 = vmatprep.subr.mxu0 0.0
        %2053 = vmatpush1.msra.mxu0 0.0
        %2054 = vmatprep.subr.mxu0 0.0
        %2055 = vmatpush1.msra.mxu0 0.0
        %2056 = vmatprep.subr.mxu0 0.0
        %2057 = vmatpush1.msra.mxu0 0.0
        %2058 = vmatprep.subr.mxu0 0.0
        %2059 = vmatpush1.msra.mxu0 0.0
        %2060 = vmatprep.subr.mxu0 0.0
        %2061 = vmatpush1.msra.mxu0 0.0
        %2062 = vmatprep.subr.mxu0 0.0
        %2063 = vmatpush1.msra.mxu0 0.0
        %2064 = vmatprep.subr.mxu0 0.0
        %2065 = vmatpush1.msra.mxu0 0.0
        %2066 = vmatprep.subr.mxu0 0.0
        %2067 = vmatpush1.msra.mxu0 0.0
        %2068 = vmatprep.subr.mxu0 0.0
        %2069 = vmatpush1.msra.mxu0 0.0
        %2070 = vmatprep.subr.mxu0 0.0
        %2071 = vmatpush1.msra.mxu0 0.0
        %2072 = vmatprep.subr.mxu0 0.0
        %2073 = vmatpush1.msra.mxu0 0.0
        %2074 = vmatprep.subr.mxu0 0.0
        %2075 = vmatpush1.msra.mxu0 0.0
        %2076 = vmatprep.subr.mxu0 0.0
        %2077 = vmatpush1.msra.mxu0 0.0
        %2078 = vmatprep.subr.mxu0 0.0
        %2079 = vmatpush1.msra.mxu0 0.0
        %2080 = vmatprep.subr.mxu0 0.0
        %2081 = vmatpush1.msra.mxu0 0.0
        %2082 = vmatprep.mubr.f32.mxu0 0.0
        %2083 = vmatmul.mubr.f32.gmra.mrb[0].mxu0 %v2003
        %v2084 = vpop.f32.mrb[0].mxu0
        %v2085 = vadd.f32 0.0, %v2084
        %v2086 = vpop.f32.mrb[0].mxu0
        %v2087 = vadd.f32 0.0, %v2086
        %2088 = vmatprep.mubr.f32.mxu0 0.0
        %2089 = vmatmul.mubr.f32.gmra.mrb[0].mxu0 %v2005
        %v2090 = vpop.f32.mrb[0].mxu0
        %v2091 = vadd.f32 0.0, %v2090
        %v2092 = vpop.f32.mrb[0].mxu0
        %v2093 = vadd.f32 0.0, %v2092
        %2094 = vmatprep.mubr.f32.mxu0 0.0
        %2095 = vmatmul.mubr.f32.gmra.mrb[0].mxu0 %v2007
        %v2096 = vpop.f32.mrb[0].mxu0
        %v2097 = vadd.f32 0.0, %v2096
        %v2098 = vpop.f32.mrb[0].mxu0
        %v2099 = vadd.f32 0.0, %v2098
        %2100 = vdwg.mxu0
        %2101 = vmatprep.subr.mxu0 0.0
        %2102 = vmatpush1.msra.mxu0 %v1986
        %2103 = vmatprep.subr.mxu0 0.0
        %2104 = vmatpush1.msra.mxu0 %v1989
        %2105 = vmatprep.subr.mxu0 0.0
        %2106 = vmatpush1.msra.mxu0 %v1992
        %2107 = vmatprep.subr.mxu0 0.0
        %2108 = vmatpush1.msra.mxu0 %v2016
        %2109 = vmatprep.subr.mxu0 0.0
        %2110 = vmatpush1.msra.mxu0 0.0
        %2111 = vmatprep.subr.mxu0 0.0
        %2112 = vmatpush1.msra.mxu0 0.0
        %2113 = vmatprep.subr.mxu0 0.0
        %2114 = vmatpush1.msra.mxu0 0.0
        %2115 = vmatprep.subr.mxu0 0.0
        %2116 = vmatpush1.msra.mxu0 0.0
        %2117 = vmatprep.subr.mxu0 0.0
        %2118 = vmatpush1.msra.mxu0 0.0
        %2119 = vmatprep.subr.mxu0 0.0
        %2120 = vmatpush1.msra.mxu0 0.0
        %2121 = vmatprep.subr.mxu0 0.0
        %2122 = vmatpush1.msra.mxu0 0.0
        %2123 = vmatprep.subr.mxu0 0.0
        %2124 = vmatpush1.msra.mxu0 0.0
        %2125 = vmatprep.subr.mxu0 0.0
        %2126 = vmatpush1.msra.mxu0 0.0
        %2127 = vmatprep.subr.mxu0 0.0
        %2128 = vmatpush1.msra.mxu0 0.0
        %2129 = vmatprep.subr.mxu0 0.0
        %2130 = vmatpush1.msra.mxu0 0.0
        %2131 = vmatprep.subr.mxu0 0.0
        %2132 = vmatpush1.msra.mxu0 0.0
        %2133 = vmatprep.subr.mxu0 0.0
        %2134 = vmatpush1.msra.mxu0 0.0
        %2135 = vmatprep.subr.mxu0 0.0
        %2136 = vmatpush1.msra.mxu0 0.0
        %2137 = vmatprep.subr.mxu0 0.0
        %2138 = vmatpush1.msra.mxu0 0.0
        %2139 = vmatprep.subr.mxu0 0.0
        %2140 = vmatpush1.msra.mxu0 0.0
        %2141 = vmatprep.subr.mxu0 0.0
        %2142 = vmatpush1.msra.mxu0 0.0
        %2143 = vmatprep.subr.mxu0 0.0
        %2144 = vmatpush1.msra.mxu0 0.0
        %2145 = vmatprep.subr.mxu0 0.0
        %2146 = vmatpush1.msra.mxu0 0.0
        %2147 = vmatprep.subr.mxu0 0.0
        %2148 = vmatpush1.msra.mxu0 0.0
        %2149 = vmatprep.subr.mxu0 0.0
        %2150 = vmatpush1.msra.mxu0 0.0
        %2151 = vmatprep.subr.mxu0 0.0
        %2152 = vmatpush1.msra.mxu0 0.0
        %2153 = vmatprep.subr.mxu0 0.0
        %2154 = vmatpush1.msra.mxu0 0.0
        %2155 = vmatprep.subr.mxu0 0.0
        %2156 = vmatpush1.msra.mxu0 0.0
        %2157 = vmatprep.subr.mxu0 0.0
        %2158 = vmatpush1.msra.mxu0 0.0
        %2159 = vmatprep.subr.mxu0 0.0
        %2160 = vmatpush1.msra.mxu0 0.0
        %2161 = vmatprep.subr.mxu0 0.0
        %2162 = vmatpush1.msra.mxu0 0.0
        %2163 = vmatprep.subr.mxu0 0.0
        %2164 = vmatpush1.msra.mxu0 0.0
        %2165 = vmatprep.mubr.f32.mxu0 0.0
        %2166 = vmatmul.mubr.f32.gmra.mrb[0].mxu0 %v2003
        %v2167 = vpop.f32.mrb[0].mxu0
        %v2168 = vadd.f32 0.0, %v2167
        %v2169 = vpop.f32.mrb[0].mxu0
        %2170 = vmatprep.mubr.f32.mxu0 0.0
        %2171 = vmatmul.mubr.f32.gmra.mrb[0].mxu0 %v2005
        %v2172 = vpop.f32.mrb[0].mxu0
        %v2173 = vadd.f32 0.0, %v2172
        %v2174 = vpop.f32.mrb[0].mxu0
        %2175 = vmatprep.mubr.f32.mxu0 0.0
        %2176 = vmatmul.mubr.f32.gmra.mrb[0].mxu0 %v2007
        %v2177 = vpop.f32.mrb[0].mxu0
        %v2178 = vadd.f32 0.0, %v2177
        %v2179 = vpop.f32.mrb[0].mxu0
        %2180 = vdwg.mxu0
        %v2181 = vadd.f32 %v1780, %v2085
        %v2182 = vadd.f32 %v1781, %v2087
        %v2183 = vadd.f32 %v1782, %v2168
        %v2184 = vadd.f32 %v1783, %v2091
        %v2185 = vadd.f32 %v1784, %v2093
        %v2186 = vadd.f32 %v1785, %v2173
        %v2187 = vadd.f32 %v1786, %v2097
        %v2188 = vadd.f32 %v1787, %v2099
        %v2189 = vadd.f32 %v1788, %v2178
        %s2190 = scalar_lea.vmem %s1, 864
        %v2191 = vld [vmem:[%s2190] sm:$0xff]
        %v2192 = vld [vmem:[%s2190 + $0x8] sm:$0xff]
        %v2193 = vld [vmem:[%s2190 + $0x10] sm:$0xff]
        %v2194 = vld [vmem:[%s2190 + $0x18] sm:$0xff]
        %v2195 = vld [vmem:[%s2190 + $0x20] sm:$0xff]
        %v2196 = vld [vmem:[%s2190 + $0x28] sm:$0xff]
        %v2197 = vld [vmem:[%s2190 + $0x30] sm:$0xff]
        %v2198 = vld [vmem:[%s2190 + $0x38] sm:$0xff]
        %v2199 = vld [vmem:[%s2190 + $0x40] sm:$0xff]
        %v2200 = vld [vmem:[%s2190 + $0x48] sm:$0xf]
        %v2201 = vld [vmem:[%s2190 + $0x50] sm:$0xf]
        %v2202 = vld [vmem:[%s2190 + $0x58] sm:$0xf]
        %v2204 = vsel %vm471, %v2200, 0
        %v2207 = vsel %vm471, %v2201, 0
        %v2210 = vsel %vm471, %v2202, 0
        %2212 = vmatprep.subr.mxu0 %v2192
        %2213 = vmatpush1.msra.mxu0 %v2191
        %2214 = vmatprep.subr.mxu0 %v2195
        %2215 = vmatpush1.msra.mxu0 %v2194
        %2216 = vmatprep.subr.mxu0 %v2198
        %2217 = vmatpush1.msra.mxu0 %v2197
        %2218 = vmatprep.subr.mxu0 %v2207
        %2219 = vmatpush1.msra.mxu0 %v2204
        %2220 = vmatprep.subr.mxu0 0.0
        %2221 = vmatpush1.msra.mxu0 0.0
        %2222 = vmatprep.subr.mxu0 0.0
        %2223 = vmatpush1.msra.mxu0 0.0
        %2224 = vmatprep.subr.mxu0 0.0
        %2225 = vmatpush1.msra.mxu0 0.0
        %2226 = vmatprep.subr.mxu0 0.0
        %2227 = vmatpush1.msra.mxu0 0.0
        %2228 = vmatprep.subr.mxu0 0.0
        %2229 = vmatpush1.msra.mxu0 0.0
        %2230 = vmatprep.subr.mxu0 0.0
        %2231 = vmatpush1.msra.mxu0 0.0
        %2232 = vmatprep.subr.mxu0 0.0
        %2233 = vmatpush1.msra.mxu0 0.0
        %2234 = vmatprep.subr.mxu0 0.0
        %2235 = vmatpush1.msra.mxu0 0.0
        %2236 = vmatprep.subr.mxu0 0.0
        %2237 = vmatpush1.msra.mxu0 0.0
        %2238 = vmatprep.subr.mxu0 0.0
        %2239 = vmatpush1.msra.mxu0 0.0
        %2240 = vmatprep.subr.mxu0 0.0
        %2241 = vmatpush1.msra.mxu0 0.0
        %2242 = vmatprep.subr.mxu0 0.0
        %2243 = vmatpush1.msra.mxu0 0.0
        %2244 = vmatprep.subr.mxu0 0.0
        %2245 = vmatpush1.msra.mxu0 0.0
        %2246 = vmatprep.subr.mxu0 0.0
        %2247 = vmatpush1.msra.mxu0 0.0
        %2248 = vmatprep.subr.mxu0 0.0
        %2249 = vmatpush1.msra.mxu0 0.0
        %2250 = vmatprep.subr.mxu0 0.0
        %2251 = vmatpush1.msra.mxu0 0.0
        %2252 = vmatprep.subr.mxu0 0.0
        %2253 = vmatpush1.msra.mxu0 0.0
        %2254 = vmatprep.subr.mxu0 0.0
        %2255 = vmatpush1.msra.mxu0 0.0
        %2256 = vmatprep.subr.mxu0 0.0
        %2257 = vmatpush1.msra.mxu0 0.0
        %2258 = vmatprep.subr.mxu0 0.0
        %2259 = vmatpush1.msra.mxu0 0.0
        %2260 = vmatprep.subr.mxu0 0.0
        %2261 = vmatpush1.msra.mxu0 0.0
        %2262 = vmatprep.subr.mxu0 0.0
        %2263 = vmatpush1.msra.mxu0 0.0
        %2264 = vmatprep.subr.mxu0 0.0
        %2265 = vmatpush1.msra.mxu0 0.0
        %2266 = vmatprep.subr.mxu0 0.0
        %2267 = vmatpush1.msra.mxu0 0.0
        %2268 = vmatprep.subr.mxu0 0.0
        %2269 = vmatpush1.msra.mxu0 0.0
        %2270 = vmatprep.subr.mxu0 0.0
        %2271 = vmatpush1.msra.mxu0 0.0
        %2272 = vmatprep.subr.mxu0 0.0
        %2273 = vmatpush1.msra.mxu0 0.0
        %2274 = vmatprep.subr.mxu0 0.0
        %2275 = vmatpush1.msra.mxu0 0.0
        %2276 = vmatprep.mubr.f32.mxu0 0.0
        %2277 = vmatmul.mubr.f32.gmra.mrb[0].mxu0 %v2003
        %v2278 = vpop.f32.mrb[0].mxu0
        %v2279 = vadd.f32 0.0, %v2278
        %v2280 = vpop.f32.mrb[0].mxu0
        %v2281 = vadd.f32 0.0, %v2280
        %2282 = vmatprep.mubr.f32.mxu0 0.0
        %2283 = vmatmul.mubr.f32.gmra.mrb[0].mxu0 %v2005
        %v2284 = vpop.f32.mrb[0].mxu0
        %v2285 = vadd.f32 0.0, %v2284
        %v2286 = vpop.f32.mrb[0].mxu0
        %v2287 = vadd.f32 0.0, %v2286
        %2288 = vmatprep.mubr.f32.mxu0 0.0
        %2289 = vmatmul.mubr.f32.gmra.mrb[0].mxu0 %v2007
        %v2290 = vpop.f32.mrb[0].mxu0
        %v2291 = vadd.f32 0.0, %v2290
        %v2292 = vpop.f32.mrb[0].mxu0
        %v2293 = vadd.f32 0.0, %v2292
        %2294 = vdwg.mxu0
        %2295 = vmatprep.subr.mxu0 0.0
        %2296 = vmatpush1.msra.mxu0 %v2193
        %2297 = vmatprep.subr.mxu0 0.0
        %2298 = vmatpush1.msra.mxu0 %v2196
        %2299 = vmatprep.subr.mxu0 0.0
        %2300 = vmatpush1.msra.mxu0 %v2199
        %2301 = vmatprep.subr.mxu0 0.0
        %2302 = vmatpush1.msra.mxu0 %v2210
        %2303 = vmatprep.subr.mxu0 0.0
        %2304 = vmatpush1.msra.mxu0 0.0
        %2305 = vmatprep.subr.mxu0 0.0
        %2306 = vmatpush1.msra.mxu0 0.0
        %2307 = vmatprep.subr.mxu0 0.0
        %2308 = vmatpush1.msra.mxu0 0.0
        %2309 = vmatprep.subr.mxu0 0.0
        %2310 = vmatpush1.msra.mxu0 0.0
        %2311 = vmatprep.subr.mxu0 0.0
        %2312 = vmatpush1.msra.mxu0 0.0
        %2313 = vmatprep.subr.mxu0 0.0
        %2314 = vmatpush1.msra.mxu0 0.0
        %2315 = vmatprep.subr.mxu0 0.0
        %2316 = vmatpush1.msra.mxu0 0.0
        %2317 = vmatprep.subr.mxu0 0.0
        %2318 = vmatpush1.msra.mxu0 0.0
        %2319 = vmatprep.subr.mxu0 0.0
        %2320 = vmatpush1.msra.mxu0 0.0
        %2321 = vmatprep.subr.mxu0 0.0
        %2322 = vmatpush1.msra.mxu0 0.0
        %2323 = vmatprep.subr.mxu0 0.0
        %2324 = vmatpush1.msra.mxu0 0.0
        %2325 = vmatprep.subr.mxu0 0.0
        %2326 = vmatpush1.msra.mxu0 0.0
        %2327 = vmatprep.subr.mxu0 0.0
        %2328 = vmatpush1.msra.mxu0 0.0
        %2329 = vmatprep.subr.mxu0 0.0
        %2330 = vmatpush1.msra.mxu0 0.0
        %2331 = vmatprep.subr.mxu0 0.0
        %2332 = vmatpush1.msra.mxu0 0.0
        %2333 = vmatprep.subr.mxu0 0.0
        %2334 = vmatpush1.msra.mxu0 0.0
        %2335 = vmatprep.subr.mxu0 0.0
        %2336 = vmatpush1.msra.mxu0 0.0
        %2337 = vmatprep.subr.mxu0 0.0
        %2338 = vmatpush1.msra.mxu0 0.0
        %2339 = vmatprep.subr.mxu0 0.0
        %2340 = vmatpush1.msra.mxu0 0.0
        %2341 = vmatprep.subr.mxu0 0.0
        %2342 = vmatpush1.msra.mxu0 0.0
        %2343 = vmatprep.subr.mxu0 0.0
        %2344 = vmatpush1.msra.mxu0 0.0
        %2345 = vmatprep.subr.mxu0 0.0
        %2346 = vmatpush1.msra.mxu0 0.0
        %2347 = vmatprep.subr.mxu0 0.0
        %2348 = vmatpush1.msra.mxu0 0.0
        %2349 = vmatprep.subr.mxu0 0.0
        %2350 = vmatpush1.msra.mxu0 0.0
        %2351 = vmatprep.subr.mxu0 0.0
        %2352 = vmatpush1.msra.mxu0 0.0
        %2353 = vmatprep.subr.mxu0 0.0
        %2354 = vmatpush1.msra.mxu0 0.0
        %2355 = vmatprep.subr.mxu0 0.0
        %2356 = vmatpush1.msra.mxu0 0.0
        %2357 = vmatprep.subr.mxu0 0.0
        %2358 = vmatpush1.msra.mxu0 0.0
        %2359 = vmatprep.mubr.f32.mxu0 0.0
        %2360 = vmatmul.mubr.f32.gmra.mrb[0].mxu0 %v2003
        %v2361 = vpop.f32.mrb[0].mxu0
        %v2362 = vadd.f32 0.0, %v2361
        %v2363 = vpop.f32.mrb[0].mxu0
        %2364 = vmatprep.mubr.f32.mxu0 0.0
        %2365 = vmatmul.mubr.f32.gmra.mrb[0].mxu0 %v2005
        %v2366 = vpop.f32.mrb[0].mxu0
        %v2367 = vadd.f32 0.0, %v2366
        %v2368 = vpop.f32.mrb[0].mxu0
        %2369 = vmatprep.mubr.f32.mxu0 0.0
        %2370 = vmatmul.mubr.f32.gmra.mrb[0].mxu0 %v2007
        %v2371 = vpop.f32.mrb[0].mxu0
        %v2372 = vadd.f32 0.0, %v2371
        %v2373 = vpop.f32.mrb[0].mxu0
        %2374 = vdwg.mxu0
        %v2375 = vadd.f32 %v1974, %v2279
        %v2376 = vadd.f32 %v1975, %v2281
        %v2377 = vadd.f32 %v1976, %v2362
        %v2378 = vadd.f32 %v1977, %v2285
        %v2379 = vadd.f32 %v1978, %v2287
        %v2380 = vadd.f32 %v1979, %v2367
        %v2381 = vadd.f32 %v1980, %v2291
        %v2382 = vadd.f32 %v1981, %v2293
        %v2383 = vadd.f32 %v1982, %v2372
        %v2384 = vmax.f32 %v2181, %v2375
        %v2385 = vmax.f32 %v2182, %v2376
        %v2386 = vmax.f32 %v2183, %v2377
        %v2387 = vmax.f32 %v2184, %v2378
        %v2388 = vmax.f32 %v2185, %v2379
        %v2389 = vmax.f32 %v2186, %v2380
        %v2390 = vmax.f32 %v2187, %v2381
        %v2391 = vmax.f32 %v2188, %v2382
        %v2392 = vmax.f32 %v2189, %v2383
        %v2393 = vlaneseq
        %v2394 = vshrl.u32 %v2393, 7
        %v2395 = vadd.s32 %v2394, 8
        %v2396 = vlaneseq
        %v2397 = vand.u32 %v2396, 127
        %v2398 = vmul.u32 %v2394, 2
        %v2399 = vmul.u32 %v2395, 2
        %vm2400 = vcmp.eq.s32.totalorder %v2397, %v2398
        %vm2401 = vcmp.eq.s32.totalorder %v2397, %v2399
        %v2402 = vsel %vm2400, 1.0, 0.0
        %v2403 = vsel %vm2401, 1.0, 0.0
        %vm2404 = vcmask 195584
        %v2406 = vsel %vm2404, %v2402, 0
        %v2409 = vsel %vm2404, %v2403, 0
        %2411 = vmatprep.subr.mxu0 %v2385
        %2412 = vmatpush1.msra.mxu0 %v2384
        %2413 = vmatprep.subr.mxu0 %v2388
        %2414 = vmatpush1.msra.mxu0 %v2387
        %2415 = vmatprep.subr.mxu0 %v2391
        %2416 = vmatpush1.msra.mxu0 %v2390
        %2417 = vmatprep.subr.mxu0 0.0
        %2418 = vmatpush1.msra.mxu0 0.0
        %2419 = vmatprep.subr.mxu0 0.0
        %2420 = vmatpush1.msra.mxu0 0.0
        %2421 = vmatprep.subr.mxu0 0.0
        %2422 = vmatpush1.msra.mxu0 0.0
        %2423 = vmatprep.subr.mxu0 0.0
        %2424 = vmatpush1.msra.mxu0 0.0
        %2425 = vmatprep.subr.mxu0 0.0
        %2426 = vmatpush1.msra.mxu0 0.0
        %2427 = vmatprep.subr.mxu0 0.0
        %2428 = vmatpush1.msra.mxu0 0.0
        %2429 = vmatprep.subr.mxu0 0.0
        %2430 = vmatpush1.msra.mxu0 0.0
        %2431 = vmatprep.subr.mxu0 0.0
        %2432 = vmatpush1.msra.mxu0 0.0
        %2433 = vmatprep.subr.mxu0 0.0
        %2434 = vmatpush1.msra.mxu0 0.0
        %2435 = vmatprep.subr.mxu0 0.0
        %2436 = vmatpush1.msra.mxu0 0.0
        %2437 = vmatprep.subr.mxu0 0.0
        %2438 = vmatpush1.msra.mxu0 0.0
        %2439 = vmatprep.subr.mxu0 0.0
        %2440 = vmatpush1.msra.mxu0 0.0
        %2441 = vmatprep.subr.mxu0 0.0
        %2442 = vmatpush1.msra.mxu0 0.0
        %2443 = vmatprep.subr.mxu0 0.0
        %2444 = vmatpush1.msra.mxu0 0.0
        %2445 = vmatprep.subr.mxu0 0.0
        %2446 = vmatpush1.msra.mxu0 0.0
        %2447 = vmatprep.subr.mxu0 0.0
        %2448 = vmatpush1.msra.mxu0 0.0
        %2449 = vmatprep.subr.mxu0 0.0
        %2450 = vmatpush1.msra.mxu0 0.0
        %2451 = vmatprep.subr.mxu0 0.0
        %2452 = vmatpush1.msra.mxu0 0.0
        %2453 = vmatprep.subr.mxu0 0.0
        %2454 = vmatpush1.msra.mxu0 0.0
        %2455 = vmatprep.subr.mxu0 0.0
        %2456 = vmatpush1.msra.mxu0 0.0
        %2457 = vmatprep.subr.mxu0 0.0
        %2458 = vmatpush1.msra.mxu0 0.0
        %2459 = vmatprep.subr.mxu0 0.0
        %2460 = vmatpush1.msra.mxu0 0.0
        %2461 = vmatprep.subr.mxu0 0.0
        %2462 = vmatpush1.msra.mxu0 0.0
        %2463 = vmatprep.subr.mxu0 0.0
        %2464 = vmatpush1.msra.mxu0 0.0
        %2465 = vmatprep.subr.mxu0 0.0
        %2466 = vmatpush1.msra.mxu0 0.0
        %2467 = vmatprep.subr.mxu0 0.0
        %2468 = vmatpush1.msra.mxu0 0.0
        %2469 = vmatprep.subr.mxu0 0.0
        %2470 = vmatpush1.msra.mxu0 0.0
        %2471 = vmatprep.subr.mxu0 0.0
        %2472 = vmatpush1.msra.mxu0 0.0
        %2473 = vmatprep.subr.mxu0 0.0
        %2474 = vmatpush1.msra.mxu0 0.0
        %2475 = vmatprep.mubr.f32.mxu0 0.0
        %2476 = vmatmul.mubr.f32.gmra.mrb[0].mxu0 %v2406
        %v2477 = vpop.f32.mrb[0].mxu0
        %v2478 = vadd.f32 0.0, %v2477
        %v2479 = vpop.f32.mrb[0].mxu0
        %v2480 = vadd.f32 0.0, %v2479
        %2481 = vmatprep.mubr.f32.mxu0 0.0
        %2482 = vmatmul.mubr.f32.gmra.mrb[0].mxu0 %v2409
        %v2483 = vpop.f32.mrb[0].mxu0
        %v2484 = vadd.f32 0.0, %v2483
        %v2485 = vpop.f32.mrb[0].mxu0
        %v2486 = vadd.f32 0.0, %v2485
        %2487 = vdwg.mxu0
        %2488 = vmatprep.subr.mxu0 0.0
        %2489 = vmatpush1.msra.mxu0 %v2386
        %2490 = vmatprep.subr.mxu0 0.0
        %2491 = vmatpush1.msra.mxu0 %v2389
        %2492 = vmatprep.subr.mxu0 0.0
        %2493 = vmatpush1.msra.mxu0 %v2392
        %2494 = vmatprep.subr.mxu0 0.0
        %2495 = vmatpush1.msra.mxu0 0.0
        %2496 = vmatprep.subr.mxu0 0.0
        %2497 = vmatpush1.msra.mxu0 0.0
        %2498 = vmatprep.subr.mxu0 0.0
        %2499 = vmatpush1.msra.mxu0 0.0
        %2500 = vmatprep.subr.mxu0 0.0
        %2501 = vmatpush1.msra.mxu0 0.0
        %2502 = vmatprep.subr.mxu0 0.0
        %2503 = vmatpush1.msra.mxu0 0.0
        %2504 = vmatprep.subr.mxu0 0.0
        %2505 = vmatpush1.msra.mxu0 0.0
        %2506 = vmatprep.subr.mxu0 0.0
        %2507 = vmatpush1.msra.mxu0 0.0
        %2508 = vmatprep.subr.mxu0 0.0
        %2509 = vmatpush1.msra.mxu0 0.0
        %2510 = vmatprep.subr.mxu0 0.0
        %2511 = vmatpush1.msra.mxu0 0.0
        %2512 = vmatprep.subr.mxu0 0.0
        %2513 = vmatpush1.msra.mxu0 0.0
        %2514 = vmatprep.subr.mxu0 0.0
        %2515 = vmatpush1.msra.mxu0 0.0
        %2516 = vmatprep.subr.mxu0 0.0
        %2517 = vmatpush1.msra.mxu0 0.0
        %2518 = vmatprep.subr.mxu0 0.0
        %2519 = vmatpush1.msra.mxu0 0.0
        %2520 = vmatprep.subr.mxu0 0.0
        %2521 = vmatpush1.msra.mxu0 0.0
        %2522 = vmatprep.subr.mxu0 0.0
        %2523 = vmatpush1.msra.mxu0 0.0
        %2524 = vmatprep.subr.mxu0 0.0
        %2525 = vmatpush1.msra.mxu0 0.0
        %2526 = vmatprep.subr.mxu0 0.0
        %2527 = vmatpush1.msra.mxu0 0.0
        %2528 = vmatprep.subr.mxu0 0.0
        %2529 = vmatpush1.msra.mxu0 0.0
        %2530 = vmatprep.subr.mxu0 0.0
        %2531 = vmatpush1.msra.mxu0 0.0
        %2532 = vmatprep.subr.mxu0 0.0
        %2533 = vmatpush1.msra.mxu0 0.0
        %2534 = vmatprep.subr.mxu0 0.0
        %2535 = vmatpush1.msra.mxu0 0.0
        %2536 = vmatprep.subr.mxu0 0.0
        %2537 = vmatpush1.msra.mxu0 0.0
        %2538 = vmatprep.subr.mxu0 0.0
        %2539 = vmatpush1.msra.mxu0 0.0
        %2540 = vmatprep.subr.mxu0 0.0
        %2541 = vmatpush1.msra.mxu0 0.0
        %2542 = vmatprep.subr.mxu0 0.0
        %2543 = vmatpush1.msra.mxu0 0.0
        %2544 = vmatprep.subr.mxu0 0.0
        %2545 = vmatpush1.msra.mxu0 0.0
        %2546 = vmatprep.subr.mxu0 0.0
        %2547 = vmatpush1.msra.mxu0 0.0
        %2548 = vmatprep.subr.mxu0 0.0
        %2549 = vmatpush1.msra.mxu0 0.0
        %2550 = vmatprep.subr.mxu0 0.0
        %2551 = vmatpush1.msra.mxu0 0.0
        %2552 = vmatprep.mubr.f32.mxu0 0.0
        %2553 = vmatmul.mubr.f32.gmra.mrb[0].mxu0 %v2406
        %v2554 = vpop.f32.mrb[0].mxu0
        %v2555 = vadd.f32 0.0, %v2554
        %v2556 = vpop.f32.mrb[0].mxu0
        %2557 = vmatprep.mubr.f32.mxu0 0.0
        %2558 = vmatmul.mubr.f32.gmra.mrb[0].mxu0 %v2409
        %v2559 = vpop.f32.mrb[0].mxu0
        %v2560 = vadd.f32 0.0, %v2559
        %v2561 = vpop.f32.mrb[0].mxu0
        %2562 = vdwg.mxu0
        %v2563 = vadd.s32 %v2398, 1
        %v2564 = vadd.s32 %v2399, 1
        %vm2565 = vcmp.eq.s32.totalorder %v2397, %v2563
        %vm2566 = vcmp.eq.s32.totalorder %v2397, %v2564
        %v2567 = vsel %vm2565, 1.0, 0.0
        %v2568 = vsel %vm2566, 1.0, 0.0
        %v2570 = vsel %vm2404, %v2567, 0
        %v2573 = vsel %vm2404, %v2568, 0
        %2575 = vmatprep.subr.mxu0 %v2385
        %2576 = vmatpush1.msra.mxu0 %v2384
        %2577 = vmatprep.subr.mxu0 %v2388
        %2578 = vmatpush1.msra.mxu0 %v2387
        %2579 = vmatprep.subr.mxu0 %v2391
        %2580 = vmatpush1.msra.mxu0 %v2390
        %2581 = vmatprep.subr.mxu0 0.0
        %2582 = vmatpush1.msra.mxu0 0.0
        %2583 = vmatprep.subr.mxu0 0.0
        %2584 = vmatpush1.msra.mxu0 0.0
        %2585 = vmatprep.subr.mxu0 0.0
        %2586 = vmatpush1.msra.mxu0 0.0
        %2587 = vmatprep.subr.mxu0 0.0
        %2588 = vmatpush1.msra.mxu0 0.0
        %2589 = vmatprep.subr.mxu0 0.0
        %2590 = vmatpush1.msra.mxu0 0.0
        %2591 = vmatprep.subr.mxu0 0.0
        %2592 = vmatpush1.msra.mxu0 0.0
        %2593 = vmatprep.subr.mxu0 0.0
        %2594 = vmatpush1.msra.mxu0 0.0
        %2595 = vmatprep.subr.mxu0 0.0
        %2596 = vmatpush1.msra.mxu0 0.0
        %2597 = vmatprep.subr.mxu0 0.0
        %2598 = vmatpush1.msra.mxu0 0.0
        %2599 = vmatprep.subr.mxu0 0.0
        %2600 = vmatpush1.msra.mxu0 0.0
        %2601 = vmatprep.subr.mxu0 0.0
        %2602 = vmatpush1.msra.mxu0 0.0
        %2603 = vmatprep.subr.mxu0 0.0
        %2604 = vmatpush1.msra.mxu0 0.0
        %2605 = vmatprep.subr.mxu0 0.0
        %2606 = vmatpush1.msra.mxu0 0.0
        %2607 = vmatprep.subr.mxu0 0.0
        %2608 = vmatpush1.msra.mxu0 0.0
        %2609 = vmatprep.subr.mxu0 0.0
        %2610 = vmatpush1.msra.mxu0 0.0
        %2611 = vmatprep.subr.mxu0 0.0
        %2612 = vmatpush1.msra.mxu0 0.0
        %2613 = vmatprep.subr.mxu0 0.0
        %2614 = vmatpush1.msra.mxu0 0.0
        %2615 = vmatprep.subr.mxu0 0.0
        %2616 = vmatpush1.msra.mxu0 0.0
        %2617 = vmatprep.subr.mxu0 0.0
        %2618 = vmatpush1.msra.mxu0 0.0
        %2619 = vmatprep.subr.mxu0 0.0
        %2620 = vmatpush1.msra.mxu0 0.0
        %2621 = vmatprep.subr.mxu0 0.0
        %2622 = vmatpush1.msra.mxu0 0.0
        %2623 = vmatprep.subr.mxu0 0.0
        %2624 = vmatpush1.msra.mxu0 0.0
        %2625 = vmatprep.subr.mxu0 0.0
        %2626 = vmatpush1.msra.mxu0 0.0
        %2627 = vmatprep.subr.mxu0 0.0
        %2628 = vmatpush1.msra.mxu0 0.0
        %2629 = vmatprep.subr.mxu0 0.0
        %2630 = vmatpush1.msra.mxu0 0.0
        %2631 = vmatprep.subr.mxu0 0.0
        %2632 = vmatpush1.msra.mxu0 0.0
        %2633 = vmatprep.subr.mxu0 0.0
        %2634 = vmatpush1.msra.mxu0 0.0
        %2635 = vmatprep.subr.mxu0 0.0
        %2636 = vmatpush1.msra.mxu0 0.0
        %2637 = vmatprep.subr.mxu0 0.0
        %2638 = vmatpush1.msra.mxu0 0.0
        %2639 = vmatprep.mubr.f32.mxu0 0.0
        %2640 = vmatmul.mubr.f32.gmra.mrb[0].mxu0 %v2570
        %v2641 = vpop.f32.mrb[0].mxu0
        %v2642 = vadd.f32 0.0, %v2641
        %v2643 = vpop.f32.mrb[0].mxu0
        %v2644 = vadd.f32 0.0, %v2643
        %2645 = vmatprep.mubr.f32.mxu0 0.0
        %2646 = vmatmul.mubr.f32.gmra.mrb[0].mxu0 %v2573
        %v2647 = vpop.f32.mrb[0].mxu0
        %v2648 = vadd.f32 0.0, %v2647
        %v2649 = vpop.f32.mrb[0].mxu0
        %v2650 = vadd.f32 0.0, %v2649
        %2651 = vdwg.mxu0
        %2652 = vmatprep.subr.mxu0 0.0
        %2653 = vmatpush1.msra.mxu0 %v2386
        %2654 = vmatprep.subr.mxu0 0.0
        %2655 = vmatpush1.msra.mxu0 %v2389
        %2656 = vmatprep.subr.mxu0 0.0
        %2657 = vmatpush1.msra.mxu0 %v2392
        %2658 = vmatprep.subr.mxu0 0.0
        %2659 = vmatpush1.msra.mxu0 0.0
        %2660 = vmatprep.subr.mxu0 0.0
        %2661 = vmatpush1.msra.mxu0 0.0
        %2662 = vmatprep.subr.mxu0 0.0
        %2663 = vmatpush1.msra.mxu0 0.0
        %2664 = vmatprep.subr.mxu0 0.0
        %2665 = vmatpush1.msra.mxu0 0.0
        %2666 = vmatprep.subr.mxu0 0.0
        %2667 = vmatpush1.msra.mxu0 0.0
        %2668 = vmatprep.subr.mxu0 0.0
        %2669 = vmatpush1.msra.mxu0 0.0
        %2670 = vmatprep.subr.mxu0 0.0
        %2671 = vmatpush1.msra.mxu0 0.0
        %2672 = vmatprep.subr.mxu0 0.0
        %2673 = vmatpush1.msra.mxu0 0.0
        %2674 = vmatprep.subr.mxu0 0.0
        %2675 = vmatpush1.msra.mxu0 0.0
        %2676 = vmatprep.subr.mxu0 0.0
        %2677 = vmatpush1.msra.mxu0 0.0
        %2678 = vmatprep.subr.mxu0 0.0
        %2679 = vmatpush1.msra.mxu0 0.0
        %2680 = vmatprep.subr.mxu0 0.0
        %2681 = vmatpush1.msra.mxu0 0.0
        %2682 = vmatprep.subr.mxu0 0.0
        %2683 = vmatpush1.msra.mxu0 0.0
        %2684 = vmatprep.subr.mxu0 0.0
        %2685 = vmatpush1.msra.mxu0 0.0
        %2686 = vmatprep.subr.mxu0 0.0
        %2687 = vmatpush1.msra.mxu0 0.0
        %2688 = vmatprep.subr.mxu0 0.0
        %2689 = vmatpush1.msra.mxu0 0.0
        %2690 = vmatprep.subr.mxu0 0.0
        %2691 = vmatpush1.msra.mxu0 0.0
        %2692 = vmatprep.subr.mxu0 0.0
        %2693 = vmatpush1.msra.mxu0 0.0
        %2694 = vmatprep.subr.mxu0 0.0
        %2695 = vmatpush1.msra.mxu0 0.0
        %2696 = vmatprep.subr.mxu0 0.0
        %2697 = vmatpush1.msra.mxu0 0.0
        %2698 = vmatprep.subr.mxu0 0.0
        %2699 = vmatpush1.msra.mxu0 0.0
        %2700 = vmatprep.subr.mxu0 0.0
        %2701 = vmatpush1.msra.mxu0 0.0
        %2702 = vmatprep.subr.mxu0 0.0
        %2703 = vmatpush1.msra.mxu0 0.0
        %2704 = vmatprep.subr.mxu0 0.0
        %2705 = vmatpush1.msra.mxu0 0.0
        %2706 = vmatprep.subr.mxu0 0.0
        %2707 = vmatpush1.msra.mxu0 0.0
        %2708 = vmatprep.subr.mxu0 0.0
        %2709 = vmatpush1.msra.mxu0 0.0
        %2710 = vmatprep.subr.mxu0 0.0
        %2711 = vmatpush1.msra.mxu0 0.0
        %2712 = vmatprep.subr.mxu0 0.0
        %2713 = vmatpush1.msra.mxu0 0.0
        %2714 = vmatprep.subr.mxu0 0.0
        %2715 = vmatpush1.msra.mxu0 0.0
        %2716 = vmatprep.mubr.f32.mxu0 0.0
        %2717 = vmatmul.mubr.f32.gmra.mrb[0].mxu0 %v2570
        %v2718 = vpop.f32.mrb[0].mxu0
        %v2719 = vadd.f32 0.0, %v2718
        %v2720 = vpop.f32.mrb[0].mxu0
        %2721 = vmatprep.mubr.f32.mxu0 0.0
        %2722 = vmatmul.mubr.f32.gmra.mrb[0].mxu0 %v2573
        %v2723 = vpop.f32.mrb[0].mxu0
        %v2724 = vadd.f32 0.0, %v2723
        %v2725 = vpop.f32.mrb[0].mxu0
        %2726 = vdwg.mxu0
        %v2727 = vmax.f32 %v2478, %v2642
        %v2728 = vmax.f32 %v2480, %v2644
        %v2729 = vmax.f32 %v2555, %v2719
        %v2730 = vmax.f32 %v2484, %v2648
        %v2731 = vmax.f32 %v2486, %v2650
        %v2732 = vmax.f32 %v2560, %v2724
        %v2733 = vld [vmem:[#allocation2] sm:$0x7]
        %v2735 = vlaneseq
        %v2736 = vshrl.u32 %v2735, 7
        %v2737 = vsub.s32 0, %v2736
        %v2738 = vrot.slane %v2733, %v2737
        %v2739 = vlaneseq
        %v2740 = vshrl.u32 %v2739, 7
        %v2741 = vsub.s32 1, %v2740
        %v2742 = vrot.slane %v2733, %v2741
        %v2743 = vlaneseq
        %v2744 = vshrl.u32 %v2743, 7
        %v2745 = vsub.s32 2, %v2744
        %v2746 = vrot.slane %v2733, %v2745
        %v2750 = vadd.f32 %v2727, %v2738
        %v2751 = vadd.f32 %v2728, %v2742
        %v2752 = vadd.f32 %v2729, %v2746
        %v2753 = vadd.f32 %v2730, %v2738
        %v2754 = vadd.f32 %v2731, %v2742
        %v2755 = vadd.f32 %v2732, %v2746
        %v2756 = vmax.f32 %v2750, 0.0
        %v2757 = vmax.f32 %v2751, 0.0
        %v2758 = vmax.f32 %v2752, 0.0
        %v2759 = vmax.f32 %v2753, 0.0
        %v2760 = vmax.f32 %v2754, 0.0
        %v2761 = vmax.f32 %v2755, 0.0
        %v2762 = vld [vmem:[#allocation5] sm:$0xff]
        %v2763 = vld [vmem:[#allocation5 + $0x8] sm:$0xff]
        %v2764 = vld [vmem:[#allocation5 + $0x10] sm:$0xff]
        %v2765 = vld [vmem:[#allocation5 + $0x18] sm:$0xff]
        %v2766 = vld [vmem:[#allocation5 + $0x20] sm:$0xff]
        %v2767 = vld [vmem:[#allocation5 + $0x28] sm:$0xff]
        %v2768 = vld [vmem:[#allocation5 + $0x30] sm:$0xff]
        %v2769 = vld [vmem:[#allocation5 + $0x38] sm:$0xff]
        %v2770 = vld [vmem:[#allocation5 + $0x40] sm:$0xff]
        %v2771 = vld [vmem:[#allocation5 + $0x48] sm:$0xff]
        %v2772 = vld [vmem:[#allocation5 + $0x50] sm:$0xff]
        %v2773 = vld [vmem:[#allocation5 + $0x58] sm:$0xff]
        %v2774 = vld [vmem:[#allocation5 + $0x60] sm:$0xff]
        %v2775 = vld [vmem:[#allocation5 + $0x68] sm:$0xff]
        %v2776 = vld [vmem:[#allocation5 + $0x70] sm:$0xff]
        %v2777 = vld [vmem:[#allocation5 + $0x78] sm:$0xff]
        %v2778 = vld [vmem:[#allocation5 + $0x80] sm:$0xff]
        %v2779 = vld [vmem:[#allocation5 + $0x88] sm:$0xff]
        %v2780 = vld [vmem:[#allocation5 + $0x90] sm:$0xff]
        %v2781 = vld [vmem:[#allocation5 + $0x98] sm:$0xff]
        %v2782 = vld [vmem:[#allocation5 + $0xa0] sm:$0xff]
        %v2783 = vld [vmem:[#allocation5 + $0xa8] sm:$0xff]
        %v2784 = vld [vmem:[#allocation5 + $0xb0] sm:$0xff]
        %v2785 = vld [vmem:[#allocation5 + $0xb8] sm:$0xff]
        %v2786 = vld [vmem:[#allocation5 + $0xc0] sm:$0xff]
        %v2787 = vld [vmem:[#allocation5 + $0xc8] sm:$0xff]
        %v2788 = vld [vmem:[#allocation5 + $0xd0] sm:$0xff]
        %v2789 = vld [vmem:[#allocation5 + $0xd8] sm:$0xff]
        %v2790 = vld [vmem:[#allocation5 + $0xe0] sm:$0xff]
        %v2791 = vld [vmem:[#allocation5 + $0xe8] sm:$0xff]
        %v2792 = vld [vmem:[#allocation5 + $0xf0] sm:$0xff]
        %v2793 = vld [vmem:[#allocation5 + $0xf8] sm:$0xff]
        %v2794 = vld [vmem:[#allocation5 + $0x100] sm:$0xff]
        %v2795 = vld [vmem:[#allocation5 + $0x108] sm:$0xff]
        %v2796 = vld [vmem:[#allocation5 + $0x110] sm:$0xff]
        %v2797 = vld [vmem:[#allocation5 + $0x118] sm:$0xff]
        %v2798 = vld [vmem:[#allocation5 + $0x120] sm:$0xff]
        %v2799 = vld [vmem:[#allocation5 + $0x128] sm:$0xff]
        %v2800 = vld [vmem:[#allocation5 + $0x130] sm:$0xff]
        %v2801 = vld [vmem:[#allocation5 + $0x138] sm:$0xff]
        %v2802 = vld [vmem:[#allocation5 + $0x140] sm:$0xff]
        %v2803 = vld [vmem:[#allocation5 + $0x148] sm:$0xff]
        %v2804 = vld [vmem:[#allocation5 + $0x150] sm:$0xff]
        %v2805 = vld [vmem:[#allocation5 + $0x158] sm:$0xff]
        %v2806 = vld [vmem:[#allocation5 + $0x160] sm:$0xff]
        %v2807 = vld [vmem:[#allocation5 + $0x168] sm:$0xff]
        %v2808 = vld [vmem:[#allocation5 + $0x170] sm:$0xff]
        %v2809 = vld [vmem:[#allocation5 + $0x178] sm:$0xff]
        %v2810 = vld [vmem:[#allocation5 + $0x180] sm:$0xff]
        %v2811 = vld [vmem:[#allocation5 + $0x188] sm:$0xff]
        %v2812 = vld [vmem:[#allocation5 + $0x190] sm:$0xff]
        %v2813 = vld [vmem:[#allocation5 + $0x198] sm:$0xff]
        %v2814 = vld [vmem:[#allocation5 + $0x1a0] sm:$0xff]
        %v2815 = vld [vmem:[#allocation5 + $0x1a8] sm:$0xff]
        %v2816 = vld [vmem:[#allocation5 + $0x1b0] sm:$0xff]
        %v2817 = vld [vmem:[#allocation5 + $0x1b8] sm:$0xff]
        %v2818 = vld [vmem:[#allocation5 + $0x1c0] sm:$0xff]
        %v2819 = vld [vmem:[#allocation5 + $0x1c8] sm:$0xff]
        %v2820 = vld [vmem:[#allocation5 + $0x1d0] sm:$0xff]
        %v2821 = vld [vmem:[#allocation5 + $0x1d8] sm:$0xff]
        %v2822 = vld [vmem:[#allocation5 + $0x1e0] sm:$0xff]
        %v2823 = vld [vmem:[#allocation5 + $0x1e8] sm:$0xff]
        %v2824 = vld [vmem:[#allocation5 + $0x1f0] sm:$0xff]
        %v2825 = vld [vmem:[#allocation5 + $0x1f8] sm:$0xff]
        %v2826 = vld [vmem:[#allocation5 + $0x200] sm:$0xff]
        %v2827 = vld [vmem:[#allocation5 + $0x208] sm:$0xff]
        %v2828 = vld [vmem:[#allocation5 + $0x210] sm:$0xff]
        %v2829 = vld [vmem:[#allocation5 + $0x218] sm:$0xff]
        %v2830 = vld [vmem:[#allocation5 + $0x220] sm:$0xff]
        %v2831 = vld [vmem:[#allocation5 + $0x228] sm:$0xff]
        %v2832 = vld [vmem:[#allocation5 + $0x230] sm:$0xff]
        %v2833 = vld [vmem:[#allocation5 + $0x238] sm:$0xff]
        %v2834 = vld [vmem:[#allocation5 + $0x240] sm:$0xff]
        %v2835 = vld [vmem:[#allocation5 + $0x248] sm:$0xff]
        %v2836 = vld [vmem:[#allocation5 + $0x250] sm:$0xff]
        %v2837 = vld [vmem:[#allocation5 + $0x258] sm:$0xff]
        %v2838 = vld [vmem:[#allocation5 + $0x260] sm:$0xff]
        %v2839 = vld [vmem:[#allocation5 + $0x268] sm:$0xff]
        %v2840 = vld [vmem:[#allocation5 + $0x270] sm:$0xff]
        %v2841 = vld [vmem:[#allocation5 + $0x278] sm:$0xff]
        %v2842 = vld [vmem:[#allocation5 + $0x280] sm:$0xff]
        %v2843 = vld [vmem:[#allocation5 + $0x288] sm:$0xff]
        %v2844 = vld [vmem:[#allocation5 + $0x290] sm:$0xff]
        %v2845 = vld [vmem:[#allocation5 + $0x298] sm:$0xff]
        %v2846 = vld [vmem:[#allocation5 + $0x2a0] sm:$0xff]
        %v2847 = vld [vmem:[#allocation5 + $0x2a8] sm:$0xff]
        %v2848 = vld [vmem:[#allocation5 + $0x2b0] sm:$0xff]
        %v2849 = vld [vmem:[#allocation5 + $0x2b8] sm:$0xff]
        %v2850 = vld [vmem:[#allocation5 + $0x2c0] sm:$0xff]
        %v2851 = vld [vmem:[#allocation5 + $0x2c8] sm:$0xff]
        %v2852 = vld [vmem:[#allocation5 + $0x2d0] sm:$0xff]
        %v2853 = vld [vmem:[#allocation5 + $0x2d8] sm:$0xff]
        %v2854 = vld [vmem:[#allocation5 + $0x2e0] sm:$0xff]
        %v2855 = vld [vmem:[#allocation5 + $0x2e8] sm:$0xff]
        %v2856 = vld [vmem:[#allocation5 + $0x2f0] sm:$0xff]
        %v2857 = vld [vmem:[#allocation5 + $0x2f8] sm:$0xff]
        %s2858 = scalar_lea.vmem [#allocation5], 3840
        %v2859 = vld [vmem:[%s2858] sm:$0xff]
        %v2860 = vld [vmem:[%s2858 + $0x8] sm:$0xff]
        %v2861 = vld [vmem:[%s2858 + $0x10] sm:$0xff]
        %v2862 = vld [vmem:[%s2858 + $0x18] sm:$0xff]
        %v2863 = vld [vmem:[%s2858 + $0x20] sm:$0xff]
        %v2864 = vld [vmem:[%s2858 + $0x28] sm:$0xff]
        %v2865 = vld [vmem:[%s2858 + $0x30] sm:$0xff]
        %v2866 = vld [vmem:[%s2858 + $0x38] sm:$0xff]
        %v2867 = vld [vmem:[%s2858 + $0x40] sm:$0xff]
        %v2868 = vld [vmem:[%s2858 + $0x48] sm:$0xff]
        %v2869 = vld [vmem:[%s2858 + $0x50] sm:$0xff]
        %v2870 = vld [vmem:[%s2858 + $0x58] sm:$0xff]
        %v2871 = vld [vmem:[%s2858 + $0x60] sm:$0xff]
        %v2872 = vld [vmem:[%s2858 + $0x68] sm:$0xff]
        %v2873 = vld [vmem:[%s2858 + $0x70] sm:$0xff]
        %v2874 = vld [vmem:[%s2858 + $0x78] sm:$0xff]
        %v2875 = vld [vmem:[%s2858 + $0x80] sm:$0xff]
        %v2876 = vld [vmem:[%s2858 + $0x88] sm:$0xff]
        %v2877 = vld [vmem:[%s2858 + $0x90] sm:$0xff]
        %v2878 = vld [vmem:[%s2858 + $0x98] sm:$0xff]
        %v2879 = vld [vmem:[%s2858 + $0xa0] sm:$0xff]
        %v2880 = vld [vmem:[%s2858 + $0xa8] sm:$0xff]
        %v2881 = vld [vmem:[%s2858 + $0xb0] sm:$0xff]
        %v2882 = vld [vmem:[%s2858 + $0xb8] sm:$0xff]
        %v2883 = vld [vmem:[%s2858 + $0xc0] sm:$0xff]
        %v2884 = vld [vmem:[%s2858 + $0xc8] sm:$0xff]
        %v2885 = vld [vmem:[%s2858 + $0xd0] sm:$0xff]
        %v2886 = vld [vmem:[%s2858 + $0xd8] sm:$0xff]
        %v2887 = vld [vmem:[%s2858 + $0xe0] sm:$0xff]
        %v2888 = vld [vmem:[%s2858 + $0xe8] sm:$0xff]
        %v2889 = vld [vmem:[%s2858 + $0xf0] sm:$0xff]
        %v2890 = vld [vmem:[%s2858 + $0xf8] sm:$0xff]
        %v2891 = vld [vmem:[%s2858 + $0x100] sm:$0xff]
        %v2892 = vld [vmem:[%s2858 + $0x108] sm:$0xff]
        %v2893 = vld [vmem:[%s2858 + $0x110] sm:$0xff]
        %v2894 = vld [vmem:[%s2858 + $0x118] sm:$0xff]
        %v2895 = vld [vmem:[%s2858 + $0x120] sm:$0xff]
        %v2896 = vld [vmem:[%s2858 + $0x128] sm:$0xff]
        %v2897 = vld [vmem:[%s2858 + $0x130] sm:$0xff]
        %v2898 = vld [vmem:[%s2858 + $0x138] sm:$0xff]
        %v2899 = vld [vmem:[%s2858 + $0x140] sm:$0xff]
        %v2900 = vld [vmem:[%s2858 + $0x148] sm:$0xff]
        %v2901 = vld [vmem:[%s2858 + $0x150] sm:$0xff]
        %v2902 = vld [vmem:[%s2858 + $0x158] sm:$0xff]
        %v2903 = vld [vmem:[%s2858 + $0x160] sm:$0xff]
        %v2904 = vld [vmem:[%s2858 + $0x168] sm:$0xff]
        %v2905 = vld [vmem:[%s2858 + $0x170] sm:$0xff]
        %v2906 = vld [vmem:[%s2858 + $0x178] sm:$0xff]
        %v2907 = vld [vmem:[%s2858 + $0x180] sm:$0xff]
        %v2908 = vld [vmem:[%s2858 + $0x188] sm:$0xff]
        %v2909 = vld [vmem:[%s2858 + $0x190] sm:$0xff]
        %v2910 = vld [vmem:[%s2858 + $0x198] sm:$0xff]
        %v2911 = vld [vmem:[%s2858 + $0x1a0] sm:$0xff]
        %v2912 = vld [vmem:[%s2858 + $0x1a8] sm:$0xff]
        %v2913 = vld [vmem:[%s2858 + $0x1b0] sm:$0xff]
        %v2914 = vld [vmem:[%s2858 + $0x1b8] sm:$0xff]
        %v2915 = vld [vmem:[%s2858 + $0x1c0] sm:$0xff]
        %v2916 = vld [vmem:[%s2858 + $0x1c8] sm:$0xff]
        %v2917 = vld [vmem:[%s2858 + $0x1d0] sm:$0xff]
        %v2918 = vld [vmem:[%s2858 + $0x1d8] sm:$0xff]
        %v2919 = vld [vmem:[%s2858 + $0x1e0] sm:$0xff]
        %v2920 = vld [vmem:[%s2858 + $0x1e8] sm:$0xff]
        %v2921 = vld [vmem:[%s2858 + $0x1f0] sm:$0xff]
        %v2922 = vld [vmem:[%s2858 + $0x1f8] sm:$0xff]
        %v2923 = vld [vmem:[%s2858 + $0x200] sm:$0xff]
        %v2924 = vld [vmem:[%s2858 + $0x208] sm:$0xff]
        %v2925 = vld [vmem:[%s2858 + $0x210] sm:$0xff]
        %v2926 = vld [vmem:[%s2858 + $0x218] sm:$0xff]
        %v2927 = vld [vmem:[%s2858 + $0x220] sm:$0xff]
        %v2928 = vld [vmem:[%s2858 + $0x228] sm:$0xff]
        %v2929 = vld [vmem:[%s2858 + $0x230] sm:$0xff]
        %v2930 = vld [vmem:[%s2858 + $0x238] sm:$0xff]
        %v2931 = vld [vmem:[%s2858 + $0x240] sm:$0xff]
        %v2932 = vld [vmem:[%s2858 + $0x248] sm:$0xff]
        %v2933 = vld [vmem:[%s2858 + $0x250] sm:$0xff]
        %v2934 = vld [vmem:[%s2858 + $0x258] sm:$0xff]
        %v2935 = vld [vmem:[%s2858 + $0x260] sm:$0xff]
        %v2936 = vld [vmem:[%s2858 + $0x268] sm:$0xff]
        %v2937 = vld [vmem:[%s2858 + $0x270] sm:$0xff]
        %v2938 = vld [vmem:[%s2858 + $0x278] sm:$0xff]
        %v2939 = vld [vmem:[%s2858 + $0x280] sm:$0xff]
        %v2940 = vld [vmem:[%s2858 + $0x288] sm:$0xff]
        %v2941 = vld [vmem:[%s2858 + $0x290] sm:$0xff]
        %v2942 = vld [vmem:[%s2858 + $0x298] sm:$0xff]
        %v2943 = vld [vmem:[%s2858 + $0x2a0] sm:$0xff]
        %v2944 = vld [vmem:[%s2858 + $0x2a8] sm:$0xff]
        %v2945 = vld [vmem:[%s2858 + $0x2b0] sm:$0xff]
        %v2946 = vld [vmem:[%s2858 + $0x2b8] sm:$0xff]
        %v2947 = vld [vmem:[%s2858 + $0x2c0] sm:$0xff]
        %v2948 = vld [vmem:[%s2858 + $0x2c8] sm:$0xff]
        %v2949 = vld [vmem:[%s2858 + $0x2d0] sm:$0xff]
        %v2950 = vld [vmem:[%s2858 + $0x2d8] sm:$0xff]
        %v2951 = vld [vmem:[%s2858 + $0x2e0] sm:$0xff]
        %v2952 = vld [vmem:[%s2858 + $0x2e8] sm:$0xff]
        %v2953 = vld [vmem:[%s2858 + $0x2f0] sm:$0xff]
        %v2954 = vld [vmem:[%s2858 + $0x2f8] sm:$0xff]
        %s2955 = scalar_lea.vmem [#allocation5], 768
        %v2956 = vld [vmem:[%s2955] sm:$0xff]
        %v2957 = vld [vmem:[%s2955 + $0x8] sm:$0xff]
        %v2958 = vld [vmem:[%s2955 + $0x10] sm:$0xff]
        %v2959 = vld [vmem:[%s2955 + $0x18] sm:$0xff]
        %v2960 = vld [vmem:[%s2955 + $0x20] sm:$0xff]
        %v2961 = vld [vmem:[%s2955 + $0x28] sm:$0xff]
        %v2962 = vld [vmem:[%s2955 + $0x30] sm:$0xff]
        %v2963 = vld [vmem:[%s2955 + $0x38] sm:$0xff]
        %v2964 = vld [vmem:[%s2955 + $0x40] sm:$0xff]
        %v2965 = vld [vmem:[%s2955 + $0x48] sm:$0xff]
        %v2966 = vld [vmem:[%s2955 + $0x50] sm:$0xff]
        %v2967 = vld [vmem:[%s2955 + $0x58] sm:$0xff]
        %v2968 = vld [vmem:[%s2955 + $0x60] sm:$0xff]
        %v2969 = vld [vmem:[%s2955 + $0x68] sm:$0xff]
        %v2970 = vld [vmem:[%s2955 + $0x70] sm:$0xff]
        %v2971 = vld [vmem:[%s2955 + $0x78] sm:$0xff]
        %v2972 = vld [vmem:[%s2955 + $0x80] sm:$0xff]
        %v2973 = vld [vmem:[%s2955 + $0x88] sm:$0xff]
        %v2974 = vld [vmem:[%s2955 + $0x90] sm:$0xff]
        %v2975 = vld [vmem:[%s2955 + $0x98] sm:$0xff]
        %v2976 = vld [vmem:[%s2955 + $0xa0] sm:$0xff]
        %v2977 = vld [vmem:[%s2955 + $0xa8] sm:$0xff]
        %v2978 = vld [vmem:[%s2955 + $0xb0] sm:$0xff]
        %v2979 = vld [vmem:[%s2955 + $0xb8] sm:$0xff]
        %v2980 = vld [vmem:[%s2955 + $0xc0] sm:$0xff]
        %v2981 = vld [vmem:[%s2955 + $0xc8] sm:$0xff]
        %v2982 = vld [vmem:[%s2955 + $0xd0] sm:$0xff]
        %v2983 = vld [vmem:[%s2955 + $0xd8] sm:$0xff]
        %v2984 = vld [vmem:[%s2955 + $0xe0] sm:$0xff]
        %v2985 = vld [vmem:[%s2955 + $0xe8] sm:$0xff]
        %v2986 = vld [vmem:[%s2955 + $0xf0] sm:$0xff]
        %v2987 = vld [vmem:[%s2955 + $0xf8] sm:$0xff]
        %v2988 = vld [vmem:[%s2955 + $0x100] sm:$0xff]
        %v2989 = vld [vmem:[%s2955 + $0x108] sm:$0xff]
        %v2990 = vld [vmem:[%s2955 + $0x110] sm:$0xff]
        %v2991 = vld [vmem:[%s2955 + $0x118] sm:$0xff]
        %v2992 = vld [vmem:[%s2955 + $0x120] sm:$0xff]
        %v2993 = vld [vmem:[%s2955 + $0x128] sm:$0xff]
        %v2994 = vld [vmem:[%s2955 + $0x130] sm:$0xff]
        %v2995 = vld [vmem:[%s2955 + $0x138] sm:$0xff]
        %v2996 = vld [vmem:[%s2955 + $0x140] sm:$0xff]
        %v2997 = vld [vmem:[%s2955 + $0x148] sm:$0xff]
        %v2998 = vld [vmem:[%s2955 + $0x150] sm:$0xff]
        %v2999 = vld [vmem:[%s2955 + $0x158] sm:$0xff]
        %v3000 = vld [vmem:[%s2955 + $0x160] sm:$0xff]
        %v3001 = vld [vmem:[%s2955 + $0x168] sm:$0xff]
        %v3002 = vld [vmem:[%s2955 + $0x170] sm:$0xff]
        %v3003 = vld [vmem:[%s2955 + $0x178] sm:$0xff]
        %v3004 = vld [vmem:[%s2955 + $0x180] sm:$0xff]
        %v3005 = vld [vmem:[%s2955 + $0x188] sm:$0xff]
        %v3006 = vld [vmem:[%s2955 + $0x190] sm:$0xff]
        %v3007 = vld [vmem:[%s2955 + $0x198] sm:$0xff]
        %v3008 = vld [vmem:[%s2955 + $0x1a0] sm:$0xff]
        %v3009 = vld [vmem:[%s2955 + $0x1a8] sm:$0xff]
        %v3010 = vld [vmem:[%s2955 + $0x1b0] sm:$0xff]
        %v3011 = vld [vmem:[%s2955 + $0x1b8] sm:$0xff]
        %v3012 = vld [vmem:[%s2955 + $0x1c0] sm:$0xff]
        %v3013 = vld [vmem:[%s2955 + $0x1c8] sm:$0xff]
        %v3014 = vld [vmem:[%s2955 + $0x1d0] sm:$0xff]
        %v3015 = vld [vmem:[%s2955 + $0x1d8] sm:$0xff]
        %v3016 = vld [vmem:[%s2955 + $0x1e0] sm:$0xff]
        %v3017 = vld [vmem:[%s2955 + $0x1e8] sm:$0xff]
        %v3018 = vld [vmem:[%s2955 + $0x1f0] sm:$0xff]
        %v3019 = vld [vmem:[%s2955 + $0x1f8] sm:$0xff]
        %v3020 = vld [vmem:[%s2955 + $0x200] sm:$0xff]
        %v3021 = vld [vmem:[%s2955 + $0x208] sm:$0xff]
        %v3022 = vld [vmem:[%s2955 + $0x210] sm:$0xff]
        %v3023 = vld [vmem:[%s2955 + $0x218] sm:$0xff]
        %v3024 = vld [vmem:[%s2955 + $0x220] sm:$0xff]
        %v3025 = vld [vmem:[%s2955 + $0x228] sm:$0xff]
        %v3026 = vld [vmem:[%s2955 + $0x230] sm:$0xff]
        %v3027 = vld [vmem:[%s2955 + $0x238] sm:$0xff]
        %v3028 = vld [vmem:[%s2955 + $0x240] sm:$0xff]
        %v3029 = vld [vmem:[%s2955 + $0x248] sm:$0xff]
        %v3030 = vld [vmem:[%s2955 + $0x250] sm:$0xff]
        %v3031 = vld [vmem:[%s2955 + $0x258] sm:$0xff]
        %v3032 = vld [vmem:[%s2955 + $0x260] sm:$0xff]
        %v3033 = vld [vmem:[%s2955 + $0x268] sm:$0xff]
        %v3034 = vld [vmem:[%s2955 + $0x270] sm:$0xff]
        %v3035 = vld [vmem:[%s2955 + $0x278] sm:$0xff]
        %v3036 = vld [vmem:[%s2955 + $0x280] sm:$0xff]
        %v3037 = vld [vmem:[%s2955 + $0x288] sm:$0xff]
        %v3038 = vld [vmem:[%s2955 + $0x290] sm:$0xff]
        %v3039 = vld [vmem:[%s2955 + $0x298] sm:$0xff]
        %v3040 = vld [vmem:[%s2955 + $0x2a0] sm:$0xff]
        %v3041 = vld [vmem:[%s2955 + $0x2a8] sm:$0xff]
        %v3042 = vld [vmem:[%s2955 + $0x2b0] sm:$0xff]
        %v3043 = vld [vmem:[%s2955 + $0x2b8] sm:$0xff]
        %v3044 = vld [vmem:[%s2955 + $0x2c0] sm:$0xff]
        %v3045 = vld [vmem:[%s2955 + $0x2c8] sm:$0xff]
        %v3046 = vld [vmem:[%s2955 + $0x2d0] sm:$0xff]
        %v3047 = vld [vmem:[%s2955 + $0x2d8] sm:$0xff]
        %v3048 = vld [vmem:[%s2955 + $0x2e0] sm:$0xff]
        %v3049 = vld [vmem:[%s2955 + $0x2e8] sm:$0xff]
        %v3050 = vld [vmem:[%s2955 + $0x2f0] sm:$0xff]
        %v3051 = vld [vmem:[%s2955 + $0x2f8] sm:$0xff]
        %v3058 = vrot.slane %v2756, 1
        %v3059 = vrot.slane %v2759, 1
        %v3060 = vsel %vm456, %v3058, %v3059
        %v3061 = vrot.slane %v2757, 1
        %v3062 = vrot.slane %v2760, 1
        %v3063 = vsel %vm456, %v3061, %v3062
        %v3064 = vrot.slane %v2758, 1
        %v3065 = vrot.slane %v2761, 1
        %v3066 = vsel %vm456, %v3064, %v3065
        %3070 = vmatprep.subr.mxu0 %v2957
        %3071 = vmatpush1.msra.mxu0 %v2956
        %3072 = vmatprep.subr.mxu0 %v2959
        %3073 = vmatpush1.msra.mxu0 %v2958
        %3074 = vmatprep.subr.mxu0 %v2961
        %3075 = vmatpush1.msra.mxu0 %v2960
        %3076 = vmatprep.subr.mxu0 %v2963
        %3077 = vmatpush1.msra.mxu0 %v2962
        %3078 = vmatprep.subr.mxu0 %v2965
        %3079 = vmatpush1.msra.mxu0 %v2964
        %3080 = vmatprep.subr.mxu0 %v2967
        %3081 = vmatpush1.msra.mxu0 %v2966
        %3082 = vmatprep.subr.mxu0 %v2969
        %3083 = vmatpush1.msra.mxu0 %v2968
        %3084 = vmatprep.subr.mxu0 %v2971
        %3085 = vmatpush1.msra.mxu0 %v2970
        %3086 = vmatprep.subr.mxu0 %v2973
        %3087 = vmatpush1.msra.mxu0 %v2972
        %3088 = vmatprep.subr.mxu0 %v2975
        %3089 = vmatpush1.msra.mxu0 %v2974
        %3090 = vmatprep.subr.mxu0 %v2977
        %3091 = vmatpush1.msra.mxu0 %v2976
        %3092 = vmatprep.subr.mxu0 %v2979
        %3093 = vmatpush1.msra.mxu0 %v2978
        %3094 = vmatprep.subr.mxu0 %v2981
        %3095 = vmatpush1.msra.mxu0 %v2980
        %3096 = vmatprep.subr.mxu0 %v2983
        %3097 = vmatpush1.msra.mxu0 %v2982
        %3098 = vmatprep.subr.mxu0 %v2985
        %3099 = vmatpush1.msra.mxu0 %v2984
        %3100 = vmatprep.subr.mxu0 %v2987
        %3101 = vmatpush1.msra.mxu0 %v2986
        %3102 = vmatprep.subr.mxu0 %v2989
        %3103 = vmatpush1.msra.mxu0 %v2988
        %3104 = vmatprep.subr.mxu0 %v2991
        %3105 = vmatpush1.msra.mxu0 %v2990
        %3106 = vmatprep.subr.mxu0 %v2993
        %3107 = vmatpush1.msra.mxu0 %v2992
        %3108 = vmatprep.subr.mxu0 %v2995
        %3109 = vmatpush1.msra.mxu0 %v2994
        %3110 = vmatprep.subr.mxu0 %v2997
        %3111 = vmatpush1.msra.mxu0 %v2996
        %3112 = vmatprep.subr.mxu0 %v2999
        %3113 = vmatpush1.msra.mxu0 %v2998
        %3114 = vmatprep.subr.mxu0 %v3001
        %3115 = vmatpush1.msra.mxu0 %v3000
        %3116 = vmatprep.subr.mxu0 %v3003
        %3117 = vmatpush1.msra.mxu0 %v3002
        %3118 = vmatprep.subr.mxu0 %v3005
        %3119 = vmatpush1.msra.mxu0 %v3004
        %3120 = vmatprep.subr.mxu0 %v3007
        %3121 = vmatpush1.msra.mxu0 %v3006
        %3122 = vmatprep.subr.mxu0 %v3009
        %3123 = vmatpush1.msra.mxu0 %v3008
        %3124 = vmatprep.subr.mxu0 %v3011
        %3125 = vmatpush1.msra.mxu0 %v3010
        %3126 = vmatprep.subr.mxu0 %v3013
        %3127 = vmatpush1.msra.mxu0 %v3012
        %3128 = vmatprep.subr.mxu0 %v3015
        %3129 = vmatpush1.msra.mxu0 %v3014
        %3130 = vmatprep.subr.mxu0 %v3017
        %3131 = vmatpush1.msra.mxu0 %v3016
        %3132 = vmatprep.subr.mxu0 %v3019
        %3133 = vmatpush1.msra.mxu0 %v3018
        %3134 = vmatprep.mubr.f32.mxu0 %v3063
        %3135 = vmatmul.mubr.f32.gmra.mrb[0].mxu0 %v3060
        %v3136 = vpop.f32.mrb[0].mxu0
        %v3137 = vadd.f32 0.0, %v3136
        %v3138 = vpop.f32.mrb[0].mxu0
        %v3139 = vadd.f32 0.0, %v3138
        %3140 = vdwg.mxu0
        %3141 = vmatprep.subr.mxu0 %v3021
        %3142 = vmatpush1.msra.mxu0 %v3020
        %3143 = vmatprep.subr.mxu0 %v3023
        %3144 = vmatpush1.msra.mxu0 %v3022
        %3145 = vmatprep.subr.mxu0 %v3025
        %3146 = vmatpush1.msra.mxu0 %v3024
        %3147 = vmatprep.subr.mxu0 %v3027
        %3148 = vmatpush1.msra.mxu0 %v3026
        %3149 = vmatprep.subr.mxu0 %v3029
        %3150 = vmatpush1.msra.mxu0 %v3028
        %3151 = vmatprep.subr.mxu0 %v3031
        %3152 = vmatpush1.msra.mxu0 %v3030
        %3153 = vmatprep.subr.mxu0 %v3033
        %3154 = vmatpush1.msra.mxu0 %v3032
        %3155 = vmatprep.subr.mxu0 %v3035
        %3156 = vmatpush1.msra.mxu0 %v3034
        %3157 = vmatprep.subr.mxu0 %v3037
        %3158 = vmatpush1.msra.mxu0 %v3036
        %3159 = vmatprep.subr.mxu0 %v3039
        %3160 = vmatpush1.msra.mxu0 %v3038
        %3161 = vmatprep.subr.mxu0 %v3041
        %3162 = vmatpush1.msra.mxu0 %v3040
        %3163 = vmatprep.subr.mxu0 %v3043
        %3164 = vmatpush1.msra.mxu0 %v3042
        %3165 = vmatprep.subr.mxu0 %v3045
        %3166 = vmatpush1.msra.mxu0 %v3044
        %3167 = vmatprep.subr.mxu0 %v3047
        %3168 = vmatpush1.msra.mxu0 %v3046
        %3169 = vmatprep.subr.mxu0 %v3049
        %3170 = vmatpush1.msra.mxu0 %v3048
        %3171 = vmatprep.subr.mxu0 %v3051
        %3172 = vmatpush1.msra.mxu0 %v3050
        %3173 = vmatprep.subr.mxu0 0.0
        %3174 = vmatpush1.msra.mxu0 0.0
        %3175 = vmatprep.subr.mxu0 0.0
        %3176 = vmatpush1.msra.mxu0 0.0
        %3177 = vmatprep.subr.mxu0 0.0
        %3178 = vmatpush1.msra.mxu0 0.0
        %3179 = vmatprep.subr.mxu0 0.0
        %3180 = vmatpush1.msra.mxu0 0.0
        %3181 = vmatprep.subr.mxu0 0.0
        %3182 = vmatpush1.msra.mxu0 0.0
        %3183 = vmatprep.subr.mxu0 0.0
        %3184 = vmatpush1.msra.mxu0 0.0
        %3185 = vmatprep.subr.mxu0 0.0
        %3186 = vmatpush1.msra.mxu0 0.0
        %3187 = vmatprep.subr.mxu0 0.0
        %3188 = vmatpush1.msra.mxu0 0.0
        %3189 = vmatprep.subr.mxu0 0.0
        %3190 = vmatpush1.msra.mxu0 0.0
        %3191 = vmatprep.subr.mxu0 0.0
        %3192 = vmatpush1.msra.mxu0 0.0
        %3193 = vmatprep.subr.mxu0 0.0
        %3194 = vmatpush1.msra.mxu0 0.0
        %3195 = vmatprep.subr.mxu0 0.0
        %3196 = vmatpush1.msra.mxu0 0.0
        %3197 = vmatprep.subr.mxu0 0.0
        %3198 = vmatpush1.msra.mxu0 0.0
        %3199 = vmatprep.subr.mxu0 0.0
        %3200 = vmatpush1.msra.mxu0 0.0
        %3201 = vmatprep.subr.mxu0 0.0
        %3202 = vmatpush1.msra.mxu0 0.0
        %3203 = vmatprep.subr.mxu0 0.0
        %3204 = vmatpush1.msra.mxu0 0.0
        %3205 = vmatprep.mubr.f32.mxu0 0.0
        %3206 = vmatmul.mubr.f32.gmra.mrb[0].mxu0 %v3066
        %v3207 = vpop.f32.mrb[0].mxu0
        %v3208 = vadd.f32 %v3137, %v3207
        %v3209 = vpop.f32.mrb[0].mxu0
        %v3210 = vadd.f32 %v3139, %v3209
        %3211 = vdwg.mxu0
        %3212 = vmatprep.subr.mxu0 %v2763
        %3213 = vmatpush1.msra.mxu0 %v2762
        %3214 = vmatprep.subr.mxu0 %v2765
        %3215 = vmatpush1.msra.mxu0 %v2764
        %3216 = vmatprep.subr.mxu0 %v2767
        %3217 = vmatpush1.msra.mxu0 %v2766
        %3218 = vmatprep.subr.mxu0 %v2769
        %3219 = vmatpush1.msra.mxu0 %v2768
        %3220 = vmatprep.subr.mxu0 %v2771
        %3221 = vmatpush1.msra.mxu0 %v2770
        %3222 = vmatprep.subr.mxu0 %v2773
        %3223 = vmatpush1.msra.mxu0 %v2772
        %3224 = vmatprep.subr.mxu0 %v2775
        %3225 = vmatpush1.msra.mxu0 %v2774
        %3226 = vmatprep.subr.mxu0 %v2777
        %3227 = vmatpush1.msra.mxu0 %v2776
        %3228 = vmatprep.subr.mxu0 %v2779
        %3229 = vmatpush1.msra.mxu0 %v2778
        %3230 = vmatprep.subr.mxu0 %v2781
        %3231 = vmatpush1.msra.mxu0 %v2780
        %3232 = vmatprep.subr.mxu0 %v2783
        %3233 = vmatpush1.msra.mxu0 %v2782
        %3234 = vmatprep.subr.mxu0 %v2785
        %3235 = vmatpush1.msra.mxu0 %v2784
        %3236 = vmatprep.subr.mxu0 %v2787
        %3237 = vmatpush1.msra.mxu0 %v2786
        %3238 = vmatprep.subr.mxu0 %v2789
        %3239 = vmatpush1.msra.mxu0 %v2788
        %3240 = vmatprep.subr.mxu0 %v2791
        %3241 = vmatpush1.msra.mxu0 %v2790
        %3242 = vmatprep.subr.mxu0 %v2793
        %3243 = vmatpush1.msra.mxu0 %v2792
        %3244 = vmatprep.subr.mxu0 %v2795
        %3245 = vmatpush1.msra.mxu0 %v2794
        %3246 = vmatprep.subr.mxu0 %v2797
        %3247 = vmatpush1.msra.mxu0 %v2796
        %3248 = vmatprep.subr.mxu0 %v2799
        %3249 = vmatpush1.msra.mxu0 %v2798
        %3250 = vmatprep.subr.mxu0 %v2801
        %3251 = vmatpush1.msra.mxu0 %v2800
        %3252 = vmatprep.subr.mxu0 %v2803
        %3253 = vmatpush1.msra.mxu0 %v2802
        %3254 = vmatprep.subr.mxu0 %v2805
        %3255 = vmatpush1.msra.mxu0 %v2804
        %3256 = vmatprep.subr.mxu0 %v2807
        %3257 = vmatpush1.msra.mxu0 %v2806
        %3258 = vmatprep.subr.mxu0 %v2809
        %3259 = vmatpush1.msra.mxu0 %v2808
        %3260 = vmatprep.subr.mxu0 %v2811
        %3261 = vmatpush1.msra.mxu0 %v2810
        %3262 = vmatprep.subr.mxu0 %v2813
        %3263 = vmatpush1.msra.mxu0 %v2812
        %3264 = vmatprep.subr.mxu0 %v2815
        %3265 = vmatpush1.msra.mxu0 %v2814
        %3266 = vmatprep.subr.mxu0 %v2817
        %3267 = vmatpush1.msra.mxu0 %v2816
        %3268 = vmatprep.subr.mxu0 %v2819
        %3269 = vmatpush1.msra.mxu0 %v2818
        %3270 = vmatprep.subr.mxu0 %v2821
        %3271 = vmatpush1.msra.mxu0 %v2820
        %3272 = vmatprep.subr.mxu0 %v2823
        %3273 = vmatpush1.msra.mxu0 %v2822
        %3274 = vmatprep.subr.mxu0 %v2825
        %3275 = vmatpush1.msra.mxu0 %v2824
        %3276 = vmatprep.mubr.f32.mxu0 %v2757
        %3277 = vmatmul.mubr.f32.gmra.mrb[0].mxu0 %v2756
        %v3278 = vpop.f32.mrb[0].mxu0
        %v3279 = vadd.f32 %v3208, %v3278
        %v3280 = vpop.f32.mrb[0].mxu0
        %v3281 = vadd.f32 %v3210, %v3280
        %3282 = vdwg.mxu0
        %3283 = vmatprep.subr.mxu0 %v2827
        %3284 = vmatpush1.msra.mxu0 %v2826
        %3285 = vmatprep.subr.mxu0 %v2829
        %3286 = vmatpush1.msra.mxu0 %v2828
        %3287 = vmatprep.subr.mxu0 %v2831
        %3288 = vmatpush1.msra.mxu0 %v2830
        %3289 = vmatprep.subr.mxu0 %v2833
        %3290 = vmatpush1.msra.mxu0 %v2832
        %3291 = vmatprep.subr.mxu0 %v2835
        %3292 = vmatpush1.msra.mxu0 %v2834
        %3293 = vmatprep.subr.mxu0 %v2837
        %3294 = vmatpush1.msra.mxu0 %v2836
        %3295 = vmatprep.subr.mxu0 %v2839
        %3296 = vmatpush1.msra.mxu0 %v2838
        %3297 = vmatprep.subr.mxu0 %v2841
        %3298 = vmatpush1.msra.mxu0 %v2840
        %3299 = vmatprep.subr.mxu0 %v2843
        %3300 = vmatpush1.msra.mxu0 %v2842
        %3301 = vmatprep.subr.mxu0 %v2845
        %3302 = vmatpush1.msra.mxu0 %v2844
        %3303 = vmatprep.subr.mxu0 %v2847
        %3304 = vmatpush1.msra.mxu0 %v2846
        %3305 = vmatprep.subr.mxu0 %v2849
        %3306 = vmatpush1.msra.mxu0 %v2848
        %3307 = vmatprep.subr.mxu0 %v2851
        %3308 = vmatpush1.msra.mxu0 %v2850
        %3309 = vmatprep.subr.mxu0 %v2853
        %3310 = vmatpush1.msra.mxu0 %v2852
        %3311 = vmatprep.subr.mxu0 %v2855
        %3312 = vmatpush1.msra.mxu0 %v2854
        %3313 = vmatprep.subr.mxu0 %v2857
        %3314 = vmatpush1.msra.mxu0 %v2856
        %3315 = vmatprep.subr.mxu0 0.0
        %3316 = vmatpush1.msra.mxu0 0.0
        %3317 = vmatprep.subr.mxu0 0.0
        %3318 = vmatpush1.msra.mxu0 0.0
        %3319 = vmatprep.subr.mxu0 0.0
        %3320 = vmatpush1.msra.mxu0 0.0
        %3321 = vmatprep.subr.mxu0 0.0
        %3322 = vmatpush1.msra.mxu0 0.0
        %3323 = vmatprep.subr.mxu0 0.0
        %3324 = vmatpush1.msra.mxu0 0.0
        %3325 = vmatprep.subr.mxu0 0.0
        %3326 = vmatpush1.msra.mxu0 0.0
        %3327 = vmatprep.subr.mxu0 0.0
        %3328 = vmatpush1.msra.mxu0 0.0
        %3329 = vmatprep.subr.mxu0 0.0
        %3330 = vmatpush1.msra.mxu0 0.0
        %3331 = vmatprep.subr.mxu0 0.0
        %3332 = vmatpush1.msra.mxu0 0.0
        %3333 = vmatprep.subr.mxu0 0.0
        %3334 = vmatpush1.msra.mxu0 0.0
        %3335 = vmatprep.subr.mxu0 0.0
        %3336 = vmatpush1.msra.mxu0 0.0
        %3337 = vmatprep.subr.mxu0 0.0
        %3338 = vmatpush1.msra.mxu0 0.0
        %3339 = vmatprep.subr.mxu0 0.0
        %3340 = vmatpush1.msra.mxu0 0.0
        %3341 = vmatprep.subr.mxu0 0.0
        %3342 = vmatpush1.msra.mxu0 0.0
        %3343 = vmatprep.subr.mxu0 0.0
        %3344 = vmatpush1.msra.mxu0 0.0
        %3345 = vmatprep.subr.mxu0 0.0
        %3346 = vmatpush1.msra.mxu0 0.0
        %3347 = vmatprep.mubr.f32.mxu0 0.0
        %3348 = vmatmul.mubr.f32.gmra.mrb[0].mxu0 %v2758
        %v3349 = vpop.f32.mrb[0].mxu0
        %v3350 = vadd.f32 %v3279, %v3349
        %v3351 = vpop.f32.mrb[0].mxu0
        %v3352 = vadd.f32 %v3281, %v3351
        %3353 = vdwg.mxu0
        %s3354 = scalar_lea.vmem [#allocation5], 4608
        %v3355 = vld [vmem:[%s3354] sm:$0xff]
        %v3356 = vld [vmem:[%s3354 + $0x8] sm:$0xff]
        %v3357 = vld [vmem:[%s3354 + $0x10] sm:$0xff]
        %v3358 = vld [vmem:[%s3354 + $0x18] sm:$0xff]
        %v3359 = vld [vmem:[%s3354 + $0x20] sm:$0xff]
        %v3360 = vld [vmem:[%s3354 + $0x28] sm:$0xff]
        %v3361 = vld [vmem:[%s3354 + $0x30] sm:$0xff]
        %v3362 = vld [vmem:[%s3354 + $0x38] sm:$0xff]
        %v3363 = vld [vmem:[%s3354 + $0x40] sm:$0xff]
        %v3364 = vld [vmem:[%s3354 + $0x48] sm:$0xff]
        %v3365 = vld [vmem:[%s3354 + $0x50] sm:$0xff]
        %v3366 = vld [vmem:[%s3354 + $0x58] sm:$0xff]
        %v3367 = vld [vmem:[%s3354 + $0x60] sm:$0xff]
        %v3368 = vld [vmem:[%s3354 + $0x68] sm:$0xff]
        %v3369 = vld [vmem:[%s3354 + $0x70] sm:$0xff]
        %v3370 = vld [vmem:[%s3354 + $0x78] sm:$0xff]
        %v3371 = vld [vmem:[%s3354 + $0x80] sm:$0xff]
        %v3372 = vld [vmem:[%s3354 + $0x88] sm:$0xff]
        %v3373 = vld [vmem:[%s3354 + $0x90] sm:$0xff]
        %v3374 = vld [vmem:[%s3354 + $0x98] sm:$0xff]
        %v3375 = vld [vmem:[%s3354 + $0xa0] sm:$0xff]
        %v3376 = vld [vmem:[%s3354 + $0xa8] sm:$0xff]
        %v3377 = vld [vmem:[%s3354 + $0xb0] sm:$0xff]
        %v3378 = vld [vmem:[%s3354 + $0xb8] sm:$0xff]
        %v3379 = vld [vmem:[%s3354 + $0xc0] sm:$0xff]
        %v3380 = vld [vmem:[%s3354 + $0xc8] sm:$0xff]
        %v3381 = vld [vmem:[%s3354 + $0xd0] sm:$0xff]
        %v3382 = vld [vmem:[%s3354 + $0xd8] sm:$0xff]
        %v3383 = vld [vmem:[%s3354 + $0xe0] sm:$0xff]
        %v3384 = vld [vmem:[%s3354 + $0xe8] sm:$0xff]
        %v3385 = vld [vmem:[%s3354 + $0xf0] sm:$0xff]
        %v3386 = vld [vmem:[%s3354 + $0xf8] sm:$0xff]
        %v3387 = vld [vmem:[%s3354 + $0x100] sm:$0xff]
        %v3388 = vld [vmem:[%s3354 + $0x108] sm:$0xff]
        %v3389 = vld [vmem:[%s3354 + $0x110] sm:$0xff]
        %v3390 = vld [vmem:[%s3354 + $0x118] sm:$0xff]
        %v3391 = vld [vmem:[%s3354 + $0x120] sm:$0xff]
        %v3392 = vld [vmem:[%s3354 + $0x128] sm:$0xff]
        %v3393 = vld [vmem:[%s3354 + $0x130] sm:$0xff]
        %v3394 = vld [vmem:[%s3354 + $0x138] sm:$0xff]
        %v3395 = vld [vmem:[%s3354 + $0x140] sm:$0xff]
        %v3396 = vld [vmem:[%s3354 + $0x148] sm:$0xff]
        %v3397 = vld [vmem:[%s3354 + $0x150] sm:$0xff]
        %v3398 = vld [vmem:[%s3354 + $0x158] sm:$0xff]
        %v3399 = vld [vmem:[%s3354 + $0x160] sm:$0xff]
        %v3400 = vld [vmem:[%s3354 + $0x168] sm:$0xff]
        %v3401 = vld [vmem:[%s3354 + $0x170] sm:$0xff]
        %v3402 = vld [vmem:[%s3354 + $0x178] sm:$0xff]
        %v3403 = vld [vmem:[%s3354 + $0x180] sm:$0xff]
        %v3404 = vld [vmem:[%s3354 + $0x188] sm:$0xff]
        %v3405 = vld [vmem:[%s3354 + $0x190] sm:$0xff]
        %v3406 = vld [vmem:[%s3354 + $0x198] sm:$0xff]
        %v3407 = vld [vmem:[%s3354 + $0x1a0] sm:$0xff]
        %v3408 = vld [vmem:[%s3354 + $0x1a8] sm:$0xff]
        %v3409 = vld [vmem:[%s3354 + $0x1b0] sm:$0xff]
        %v3410 = vld [vmem:[%s3354 + $0x1b8] sm:$0xff]
        %v3411 = vld [vmem:[%s3354 + $0x1c0] sm:$0xff]
        %v3412 = vld [vmem:[%s3354 + $0x1c8] sm:$0xff]
        %v3413 = vld [vmem:[%s3354 + $0x1d0] sm:$0xff]
        %v3414 = vld [vmem:[%s3354 + $0x1d8] sm:$0xff]
        %v3415 = vld [vmem:[%s3354 + $0x1e0] sm:$0xff]
        %v3416 = vld [vmem:[%s3354 + $0x1e8] sm:$0xff]
        %v3417 = vld [vmem:[%s3354 + $0x1f0] sm:$0xff]
        %v3418 = vld [vmem:[%s3354 + $0x1f8] sm:$0xff]
        %v3419 = vld [vmem:[%s3354 + $0x200] sm:$0xff]
        %v3420 = vld [vmem:[%s3354 + $0x208] sm:$0xff]
        %v3421 = vld [vmem:[%s3354 + $0x210] sm:$0xff]
        %v3422 = vld [vmem:[%s3354 + $0x218] sm:$0xff]
        %v3423 = vld [vmem:[%s3354 + $0x220] sm:$0xff]
        %v3424 = vld [vmem:[%s3354 + $0x228] sm:$0xff]
        %v3425 = vld [vmem:[%s3354 + $0x230] sm:$0xff]
        %v3426 = vld [vmem:[%s3354 + $0x238] sm:$0xff]
        %v3427 = vld [vmem:[%s3354 + $0x240] sm:$0xff]
        %v3428 = vld [vmem:[%s3354 + $0x248] sm:$0xff]
        %v3429 = vld [vmem:[%s3354 + $0x250] sm:$0xff]
        %v3430 = vld [vmem:[%s3354 + $0x258] sm:$0xff]
        %v3431 = vld [vmem:[%s3354 + $0x260] sm:$0xff]
        %v3432 = vld [vmem:[%s3354 + $0x268] sm:$0xff]
        %v3433 = vld [vmem:[%s3354 + $0x270] sm:$0xff]
        %v3434 = vld [vmem:[%s3354 + $0x278] sm:$0xff]
        %v3435 = vld [vmem:[%s3354 + $0x280] sm:$0xff]
        %v3436 = vld [vmem:[%s3354 + $0x288] sm:$0xff]
        %v3437 = vld [vmem:[%s3354 + $0x290] sm:$0xff]
        %v3438 = vld [vmem:[%s3354 + $0x298] sm:$0xff]
        %v3439 = vld [vmem:[%s3354 + $0x2a0] sm:$0xff]
        %v3440 = vld [vmem:[%s3354 + $0x2a8] sm:$0xff]
        %v3441 = vld [vmem:[%s3354 + $0x2b0] sm:$0xff]
        %v3442 = vld [vmem:[%s3354 + $0x2b8] sm:$0xff]
        %v3443 = vld [vmem:[%s3354 + $0x2c0] sm:$0xff]
        %v3444 = vld [vmem:[%s3354 + $0x2c8] sm:$0xff]
        %v3445 = vld [vmem:[%s3354 + $0x2d0] sm:$0xff]
        %v3446 = vld [vmem:[%s3354 + $0x2d8] sm:$0xff]
        %v3447 = vld [vmem:[%s3354 + $0x2e0] sm:$0xff]
        %v3448 = vld [vmem:[%s3354 + $0x2e8] sm:$0xff]
        %v3449 = vld [vmem:[%s3354 + $0x2f0] sm:$0xff]
        %v3450 = vld [vmem:[%s3354 + $0x2f8] sm:$0xff]
        %3451 = vmatprep.subr.mxu0 %v3356
        %3452 = vmatpush1.msra.mxu0 %v3355
        %3453 = vmatprep.subr.mxu0 %v3358
        %3454 = vmatpush1.msra.mxu0 %v3357
        %3455 = vmatprep.subr.mxu0 %v3360
        %3456 = vmatpush1.msra.mxu0 %v3359
        %3457 = vmatprep.subr.mxu0 %v3362
        %3458 = vmatpush1.msra.mxu0 %v3361
        %3459 = vmatprep.subr.mxu0 %v3364
        %3460 = vmatpush1.msra.mxu0 %v3363
        %3461 = vmatprep.subr.mxu0 %v3366
        %3462 = vmatpush1.msra.mxu0 %v3365
        %3463 = vmatprep.subr.mxu0 %v3368
        %3464 = vmatpush1.msra.mxu0 %v3367
        %3465 = vmatprep.subr.mxu0 %v3370
        %3466 = vmatpush1.msra.mxu0 %v3369
        %3467 = vmatprep.subr.mxu0 %v3372
        %3468 = vmatpush1.msra.mxu0 %v3371
        %3469 = vmatprep.subr.mxu0 %v3374
        %3470 = vmatpush1.msra.mxu0 %v3373
        %3471 = vmatprep.subr.mxu0 %v3376
        %3472 = vmatpush1.msra.mxu0 %v3375
        %3473 = vmatprep.subr.mxu0 %v3378
        %3474 = vmatpush1.msra.mxu0 %v3377
        %3475 = vmatprep.subr.mxu0 %v3380
        %3476 = vmatpush1.msra.mxu0 %v3379
        %3477 = vmatprep.subr.mxu0 %v3382
        %3478 = vmatpush1.msra.mxu0 %v3381
        %3479 = vmatprep.subr.mxu0 %v3384
        %3480 = vmatpush1.msra.mxu0 %v3383
        %3481 = vmatprep.subr.mxu0 %v3386
        %3482 = vmatpush1.msra.mxu0 %v3385
        %3483 = vmatprep.subr.mxu0 %v3388
        %3484 = vmatpush1.msra.mxu0 %v3387
        %3485 = vmatprep.subr.mxu0 %v3390
        %3486 = vmatpush1.msra.mxu0 %v3389
        %3487 = vmatprep.subr.mxu0 %v3392
        %3488 = vmatpush1.msra.mxu0 %v3391
        %3489 = vmatprep.subr.mxu0 %v3394
        %3490 = vmatpush1.msra.mxu0 %v3393
        %3491 = vmatprep.subr.mxu0 %v3396
        %3492 = vmatpush1.msra.mxu0 %v3395
        %3493 = vmatprep.subr.mxu0 %v3398
        %3494 = vmatpush1.msra.mxu0 %v3397
        %3495 = vmatprep.subr.mxu0 %v3400
        %3496 = vmatpush1.msra.mxu0 %v3399
        %3497 = vmatprep.subr.mxu0 %v3402
        %3498 = vmatpush1.msra.mxu0 %v3401
        %3499 = vmatprep.subr.mxu0 %v3404
        %3500 = vmatpush1.msra.mxu0 %v3403
        %3501 = vmatprep.subr.mxu0 %v3406
        %3502 = vmatpush1.msra.mxu0 %v3405
        %3503 = vmatprep.subr.mxu0 %v3408
        %3504 = vmatpush1.msra.mxu0 %v3407
        %3505 = vmatprep.subr.mxu0 %v3410
        %3506 = vmatpush1.msra.mxu0 %v3409
        %3507 = vmatprep.subr.mxu0 %v3412
        %3508 = vmatpush1.msra.mxu0 %v3411
        %3509 = vmatprep.subr.mxu0 %v3414
        %3510 = vmatpush1.msra.mxu0 %v3413
        %3511 = vmatprep.subr.mxu0 %v3416
        %3512 = vmatpush1.msra.mxu0 %v3415
        %3513 = vmatprep.subr.mxu0 %v3418
        %3514 = vmatpush1.msra.mxu0 %v3417
        %3515 = vmatprep.mubr.f32.mxu0 %v3063
        %3516 = vmatmul.mubr.f32.gmra.mrb[0].mxu0 %v3060
        %v3517 = vpop.f32.mrb[0].mxu0
        %v3518 = vadd.f32 0.0, %v3517
        %v3519 = vpop.f32.mrb[0].mxu0
        %v3520 = vadd.f32 0.0, %v3519
        %3521 = vdwg.mxu0
        %3522 = vmatprep.subr.mxu0 %v3420
        %3523 = vmatpush1.msra.mxu0 %v3419
        %3524 = vmatprep.subr.mxu0 %v3422
        %3525 = vmatpush1.msra.mxu0 %v3421
        %3526 = vmatprep.subr.mxu0 %v3424
        %3527 = vmatpush1.msra.mxu0 %v3423
        %3528 = vmatprep.subr.mxu0 %v3426
        %3529 = vmatpush1.msra.mxu0 %v3425
        %3530 = vmatprep.subr.mxu0 %v3428
        %3531 = vmatpush1.msra.mxu0 %v3427
        %3532 = vmatprep.subr.mxu0 %v3430
        %3533 = vmatpush1.msra.mxu0 %v3429
        %3534 = vmatprep.subr.mxu0 %v3432
        %3535 = vmatpush1.msra.mxu0 %v3431
        %3536 = vmatprep.subr.mxu0 %v3434
        %3537 = vmatpush1.msra.mxu0 %v3433
        %3538 = vmatprep.subr.mxu0 %v3436
        %3539 = vmatpush1.msra.mxu0 %v3435
        %3540 = vmatprep.subr.mxu0 %v3438
        %3541 = vmatpush1.msra.mxu0 %v3437
        %3542 = vmatprep.subr.mxu0 %v3440
        %3543 = vmatpush1.msra.mxu0 %v3439
        %3544 = vmatprep.subr.mxu0 %v3442
        %3545 = vmatpush1.msra.mxu0 %v3441
        %3546 = vmatprep.subr.mxu0 %v3444
        %3547 = vmatpush1.msra.mxu0 %v3443
        %3548 = vmatprep.subr.mxu0 %v3446
        %3549 = vmatpush1.msra.mxu0 %v3445
        %3550 = vmatprep.subr.mxu0 %v3448
        %3551 = vmatpush1.msra.mxu0 %v3447
        %3552 = vmatprep.subr.mxu0 %v3450
        %3553 = vmatpush1.msra.mxu0 %v3449
        %3554 = vmatprep.subr.mxu0 0.0
        %3555 = vmatpush1.msra.mxu0 0.0
        %3556 = vmatprep.subr.mxu0 0.0
        %3557 = vmatpush1.msra.mxu0 0.0
        %3558 = vmatprep.subr.mxu0 0.0
        %3559 = vmatpush1.msra.mxu0 0.0
        %3560 = vmatprep.subr.mxu0 0.0
        %3561 = vmatpush1.msra.mxu0 0.0
        %3562 = vmatprep.subr.mxu0 0.0
        %3563 = vmatpush1.msra.mxu0 0.0
        %3564 = vmatprep.subr.mxu0 0.0
        %3565 = vmatpush1.msra.mxu0 0.0
        %3566 = vmatprep.subr.mxu0 0.0
        %3567 = vmatpush1.msra.mxu0 0.0
        %3568 = vmatprep.subr.mxu0 0.0
        %3569 = vmatpush1.msra.mxu0 0.0
        %3570 = vmatprep.subr.mxu0 0.0
        %3571 = vmatpush1.msra.mxu0 0.0
        %3572 = vmatprep.subr.mxu0 0.0
        %3573 = vmatpush1.msra.mxu0 0.0
        %3574 = vmatprep.subr.mxu0 0.0
        %3575 = vmatpush1.msra.mxu0 0.0
        %3576 = vmatprep.subr.mxu0 0.0
        %3577 = vmatpush1.msra.mxu0 0.0
        %3578 = vmatprep.subr.mxu0 0.0
        %3579 = vmatpush1.msra.mxu0 0.0
        %3580 = vmatprep.subr.mxu0 0.0
        %3581 = vmatpush1.msra.mxu0 0.0
        %3582 = vmatprep.subr.mxu0 0.0
        %3583 = vmatpush1.msra.mxu0 0.0
        %3584 = vmatprep.subr.mxu0 0.0
        %3585 = vmatpush1.msra.mxu0 0.0
        %3586 = vmatprep.mubr.f32.mxu0 0.0
        %3587 = vmatmul.mubr.f32.gmra.mrb[0].mxu0 %v3066
        %v3588 = vpop.f32.mrb[0].mxu0
        %v3589 = vadd.f32 %v3518, %v3588
        %v3590 = vpop.f32.mrb[0].mxu0
        %v3591 = vadd.f32 %v3520, %v3590
        %3592 = vdwg.mxu0
        %3593 = vmatprep.subr.mxu0 %v2860
        %3594 = vmatpush1.msra.mxu0 %v2859
        %3595 = vmatprep.subr.mxu0 %v2862
        %3596 = vmatpush1.msra.mxu0 %v2861
        %3597 = vmatprep.subr.mxu0 %v2864
        %3598 = vmatpush1.msra.mxu0 %v2863
        %3599 = vmatprep.subr.mxu0 %v2866
        %3600 = vmatpush1.msra.mxu0 %v2865
        %3601 = vmatprep.subr.mxu0 %v2868
        %3602 = vmatpush1.msra.mxu0 %v2867
        %3603 = vmatprep.subr.mxu0 %v2870
        %3604 = vmatpush1.msra.mxu0 %v2869
        %3605 = vmatprep.subr.mxu0 %v2872
        %3606 = vmatpush1.msra.mxu0 %v2871
        %3607 = vmatprep.subr.mxu0 %v2874
        %3608 = vmatpush1.msra.mxu0 %v2873
        %3609 = vmatprep.subr.mxu0 %v2876
        %3610 = vmatpush1.msra.mxu0 %v2875
        %3611 = vmatprep.subr.mxu0 %v2878
        %3612 = vmatpush1.msra.mxu0 %v2877
        %3613 = vmatprep.subr.mxu0 %v2880
        %3614 = vmatpush1.msra.mxu0 %v2879
        %3615 = vmatprep.subr.mxu0 %v2882
        %3616 = vmatpush1.msra.mxu0 %v2881
        %3617 = vmatprep.subr.mxu0 %v2884
        %3618 = vmatpush1.msra.mxu0 %v2883
        %3619 = vmatprep.subr.mxu0 %v2886
        %3620 = vmatpush1.msra.mxu0 %v2885
        %3621 = vmatprep.subr.mxu0 %v2888
        %3622 = vmatpush1.msra.mxu0 %v2887
        %3623 = vmatprep.subr.mxu0 %v2890
        %3624 = vmatpush1.msra.mxu0 %v2889
        %3625 = vmatprep.subr.mxu0 %v2892
        %3626 = vmatpush1.msra.mxu0 %v2891
        %3627 = vmatprep.subr.mxu0 %v2894
        %3628 = vmatpush1.msra.mxu0 %v2893
        %3629 = vmatprep.subr.mxu0 %v2896
        %3630 = vmatpush1.msra.mxu0 %v2895
        %3631 = vmatprep.subr.mxu0 %v2898
        %3632 = vmatpush1.msra.mxu0 %v2897
        %3633 = vmatprep.subr.mxu0 %v2900
        %3634 = vmatpush1.msra.mxu0 %v2899
        %3635 = vmatprep.subr.mxu0 %v2902
        %3636 = vmatpush1.msra.mxu0 %v2901
        %3637 = vmatprep.subr.mxu0 %v2904
        %3638 = vmatpush1.msra.mxu0 %v2903
        %3639 = vmatprep.subr.mxu0 %v2906
        %3640 = vmatpush1.msra.mxu0 %v2905
        %3641 = vmatprep.subr.mxu0 %v2908
        %3642 = vmatpush1.msra.mxu0 %v2907
        %3643 = vmatprep.subr.mxu0 %v2910
        %3644 = vmatpush1.msra.mxu0 %v2909
        %3645 = vmatprep.subr.mxu0 %v2912
        %3646 = vmatpush1.msra.mxu0 %v2911
        %3647 = vmatprep.subr.mxu0 %v2914
        %3648 = vmatpush1.msra.mxu0 %v2913
        %3649 = vmatprep.subr.mxu0 %v2916
        %3650 = vmatpush1.msra.mxu0 %v2915
        %3651 = vmatprep.subr.mxu0 %v2918
        %3652 = vmatpush1.msra.mxu0 %v2917
        %3653 = vmatprep.subr.mxu0 %v2920
        %3654 = vmatpush1.msra.mxu0 %v2919
        %3655 = vmatprep.subr.mxu0 %v2922
        %3656 = vmatpush1.msra.mxu0 %v2921
        %3657 = vmatprep.mubr.f32.mxu0 %v2757
        %3658 = vmatmul.mubr.f32.gmra.mrb[0].mxu0 %v2756
        %v3659 = vpop.f32.mrb[0].mxu0
        %v3660 = vadd.f32 %v3589, %v3659
        %v3661 = vpop.f32.mrb[0].mxu0
        %v3662 = vadd.f32 %v3591, %v3661
        %3663 = vdwg.mxu0
        %3664 = vmatprep.subr.mxu0 %v2924
        %3665 = vmatpush1.msra.mxu0 %v2923
        %3666 = vmatprep.subr.mxu0 %v2926
        %3667 = vmatpush1.msra.mxu0 %v2925
        %3668 = vmatprep.subr.mxu0 %v2928
        %3669 = vmatpush1.msra.mxu0 %v2927
        %3670 = vmatprep.subr.mxu0 %v2930
        %3671 = vmatpush1.msra.mxu0 %v2929
        %3672 = vmatprep.subr.mxu0 %v2932
        %3673 = vmatpush1.msra.mxu0 %v2931
        %3674 = vmatprep.subr.mxu0 %v2934
        %3675 = vmatpush1.msra.mxu0 %v2933
        %3676 = vmatprep.subr.mxu0 %v2936
        %3677 = vmatpush1.msra.mxu0 %v2935
        %3678 = vmatprep.subr.mxu0 %v2938
        %3679 = vmatpush1.msra.mxu0 %v2937
        %3680 = vmatprep.subr.mxu0 %v2940
        %3681 = vmatpush1.msra.mxu0 %v2939
        %3682 = vmatprep.subr.mxu0 %v2942
        %3683 = vmatpush1.msra.mxu0 %v2941
        %3684 = vmatprep.subr.mxu0 %v2944
        %3685 = vmatpush1.msra.mxu0 %v2943
        %3686 = vmatprep.subr.mxu0 %v2946
        %3687 = vmatpush1.msra.mxu0 %v2945
        %3688 = vmatprep.subr.mxu0 %v2948
        %3689 = vmatpush1.msra.mxu0 %v2947
        %3690 = vmatprep.subr.mxu0 %v2950
        %3691 = vmatpush1.msra.mxu0 %v2949
        %3692 = vmatprep.subr.mxu0 %v2952
        %3693 = vmatpush1.msra.mxu0 %v2951
        %3694 = vmatprep.subr.mxu0 %v2954
        %3695 = vmatpush1.msra.mxu0 %v2953
        %3696 = vmatprep.subr.mxu0 0.0
        %3697 = vmatpush1.msra.mxu0 0.0
        %3698 = vmatprep.subr.mxu0 0.0
        %3699 = vmatpush1.msra.mxu0 0.0
        %3700 = vmatprep.subr.mxu0 0.0
        %3701 = vmatpush1.msra.mxu0 0.0
        %3702 = vmatprep.subr.mxu0 0.0
        %3703 = vmatpush1.msra.mxu0 0.0
        %3704 = vmatprep.subr.mxu0 0.0
        %3705 = vmatpush1.msra.mxu0 0.0
        %3706 = vmatprep.subr.mxu0 0.0
        %3707 = vmatpush1.msra.mxu0 0.0
        %3708 = vmatprep.subr.mxu0 0.0
        %3709 = vmatpush1.msra.mxu0 0.0
        %3710 = vmatprep.subr.mxu0 0.0
        %3711 = vmatpush1.msra.mxu0 0.0
        %3712 = vmatprep.subr.mxu0 0.0
        %3713 = vmatpush1.msra.mxu0 0.0
        %3714 = vmatprep.subr.mxu0 0.0
        %3715 = vmatpush1.msra.mxu0 0.0
        %3716 = vmatprep.subr.mxu0 0.0
        %3717 = vmatpush1.msra.mxu0 0.0
        %3718 = vmatprep.subr.mxu0 0.0
        %3719 = vmatpush1.msra.mxu0 0.0
        %3720 = vmatprep.subr.mxu0 0.0
        %3721 = vmatpush1.msra.mxu0 0.0
        %3722 = vmatprep.subr.mxu0 0.0
        %3723 = vmatpush1.msra.mxu0 0.0
        %3724 = vmatprep.subr.mxu0 0.0
        %3725 = vmatpush1.msra.mxu0 0.0
        %3726 = vmatprep.subr.mxu0 0.0
        %3727 = vmatpush1.msra.mxu0 0.0
        %3728 = vmatprep.mubr.f32.mxu0 0.0
        %3729 = vmatmul.mubr.f32.gmra.mrb[0].mxu0 %v2758
        %v3730 = vpop.f32.mrb[0].mxu0
        %v3731 = vadd.f32 %v3660, %v3730
        %v3732 = vpop.f32.mrb[0].mxu0
        %v3733 = vadd.f32 %v3662, %v3732
        %3734 = vdwg.mxu0
        %s3735 = scalar_lea.vmem [#allocation5], 1536
        %v3736 = vld [vmem:[%s3735] sm:$0xff]
        %v3737 = vld [vmem:[%s3735 + $0x8] sm:$0xff]
        %v3738 = vld [vmem:[%s3735 + $0x10] sm:$0xff]
        %v3739 = vld [vmem:[%s3735 + $0x18] sm:$0xff]
        %v3740 = vld [vmem:[%s3735 + $0x20] sm:$0xff]
        %v3741 = vld [vmem:[%s3735 + $0x28] sm:$0xff]
        %v3742 = vld [vmem:[%s3735 + $0x30] sm:$0xff]
        %v3743 = vld [vmem:[%s3735 + $0x38] sm:$0xff]
        %v3744 = vld [vmem:[%s3735 + $0x40] sm:$0xff]
        %v3745 = vld [vmem:[%s3735 + $0x48] sm:$0xff]
        %v3746 = vld [vmem:[%s3735 + $0x50] sm:$0xff]
        %v3747 = vld [vmem:[%s3735 + $0x58] sm:$0xff]
        %v3748 = vld [vmem:[%s3735 + $0x60] sm:$0xff]
        %v3749 = vld [vmem:[%s3735 + $0x68] sm:$0xff]
        %v3750 = vld [vmem:[%s3735 + $0x70] sm:$0xff]
        %v3751 = vld [vmem:[%s3735 + $0x78] sm:$0xff]
        %v3752 = vld [vmem:[%s3735 + $0x80] sm:$0xff]
        %v3753 = vld [vmem:[%s3735 + $0x88] sm:$0xff]
        %v3754 = vld [vmem:[%s3735 + $0x90] sm:$0xff]
        %v3755 = vld [vmem:[%s3735 + $0x98] sm:$0xff]
        %v3756 = vld [vmem:[%s3735 + $0xa0] sm:$0xff]
        %v3757 = vld [vmem:[%s3735 + $0xa8] sm:$0xff]
        %v3758 = vld [vmem:[%s3735 + $0xb0] sm:$0xff]
        %v3759 = vld [vmem:[%s3735 + $0xb8] sm:$0xff]
        %v3760 = vld [vmem:[%s3735 + $0xc0] sm:$0xff]
        %v3761 = vld [vmem:[%s3735 + $0xc8] sm:$0xff]
        %v3762 = vld [vmem:[%s3735 + $0xd0] sm:$0xff]
        %v3763 = vld [vmem:[%s3735 + $0xd8] sm:$0xff]
        %v3764 = vld [vmem:[%s3735 + $0xe0] sm:$0xff]
        %v3765 = vld [vmem:[%s3735 + $0xe8] sm:$0xff]
        %v3766 = vld [vmem:[%s3735 + $0xf0] sm:$0xff]
        %v3767 = vld [vmem:[%s3735 + $0xf8] sm:$0xff]
        %v3768 = vld [vmem:[%s3735 + $0x100] sm:$0xff]
        %v3769 = vld [vmem:[%s3735 + $0x108] sm:$0xff]
        %v3770 = vld [vmem:[%s3735 + $0x110] sm:$0xff]
        %v3771 = vld [vmem:[%s3735 + $0x118] sm:$0xff]
        %v3772 = vld [vmem:[%s3735 + $0x120] sm:$0xff]
        %v3773 = vld [vmem:[%s3735 + $0x128] sm:$0xff]
        %v3774 = vld [vmem:[%s3735 + $0x130] sm:$0xff]
        %v3775 = vld [vmem:[%s3735 + $0x138] sm:$0xff]
        %v3776 = vld [vmem:[%s3735 + $0x140] sm:$0xff]
        %v3777 = vld [vmem:[%s3735 + $0x148] sm:$0xff]
        %v3778 = vld [vmem:[%s3735 + $0x150] sm:$0xff]
        %v3779 = vld [vmem:[%s3735 + $0x158] sm:$0xff]
        %v3780 = vld [vmem:[%s3735 + $0x160] sm:$0xff]
        %v3781 = vld [vmem:[%s3735 + $0x168] sm:$0xff]
        %v3782 = vld [vmem:[%s3735 + $0x170] sm:$0xff]
        %v3783 = vld [vmem:[%s3735 + $0x178] sm:$0xff]
        %v3784 = vld [vmem:[%s3735 + $0x180] sm:$0xff]
        %v3785 = vld [vmem:[%s3735 + $0x188] sm:$0xff]
        %v3786 = vld [vmem:[%s3735 + $0x190] sm:$0xff]
        %v3787 = vld [vmem:[%s3735 + $0x198] sm:$0xff]
        %v3788 = vld [vmem:[%s3735 + $0x1a0] sm:$0xff]
        %v3789 = vld [vmem:[%s3735 + $0x1a8] sm:$0xff]
        %v3790 = vld [vmem:[%s3735 + $0x1b0] sm:$0xff]
        %v3791 = vld [vmem:[%s3735 + $0x1b8] sm:$0xff]
        %v3792 = vld [vmem:[%s3735 + $0x1c0] sm:$0xff]
        %v3793 = vld [vmem:[%s3735 + $0x1c8] sm:$0xff]
        %v3794 = vld [vmem:[%s3735 + $0x1d0] sm:$0xff]
        %v3795 = vld [vmem:[%s3735 + $0x1d8] sm:$0xff]
        %v3796 = vld [vmem:[%s3735 + $0x1e0] sm:$0xff]
        %v3797 = vld [vmem:[%s3735 + $0x1e8] sm:$0xff]
        %v3798 = vld [vmem:[%s3735 + $0x1f0] sm:$0xff]
        %v3799 = vld [vmem:[%s3735 + $0x1f8] sm:$0xff]
        %v3800 = vld [vmem:[%s3735 + $0x200] sm:$0xff]
        %v3801 = vld [vmem:[%s3735 + $0x208] sm:$0xff]
        %v3802 = vld [vmem:[%s3735 + $0x210] sm:$0xff]
        %v3803 = vld [vmem:[%s3735 + $0x218] sm:$0xff]
        %v3804 = vld [vmem:[%s3735 + $0x220] sm:$0xff]
        %v3805 = vld [vmem:[%s3735 + $0x228] sm:$0xff]
        %v3806 = vld [vmem:[%s3735 + $0x230] sm:$0xff]
        %v3807 = vld [vmem:[%s3735 + $0x238] sm:$0xff]
        %v3808 = vld [vmem:[%s3735 + $0x240] sm:$0xff]
        %v3809 = vld [vmem:[%s3735 + $0x248] sm:$0xff]
        %v3810 = vld [vmem:[%s3735 + $0x250] sm:$0xff]
        %v3811 = vld [vmem:[%s3735 + $0x258] sm:$0xff]
        %v3812 = vld [vmem:[%s3735 + $0x260] sm:$0xff]
        %v3813 = vld [vmem:[%s3735 + $0x268] sm:$0xff]
        %v3814 = vld [vmem:[%s3735 + $0x270] sm:$0xff]
        %v3815 = vld [vmem:[%s3735 + $0x278] sm:$0xff]
        %v3816 = vld [vmem:[%s3735 + $0x280] sm:$0xff]
        %v3817 = vld [vmem:[%s3735 + $0x288] sm:$0xff]
        %v3818 = vld [vmem:[%s3735 + $0x290] sm:$0xff]
        %v3819 = vld [vmem:[%s3735 + $0x298] sm:$0xff]
        %v3820 = vld [vmem:[%s3735 + $0x2a0] sm:$0xff]
        %v3821 = vld [vmem:[%s3735 + $0x2a8] sm:$0xff]
        %v3822 = vld [vmem:[%s3735 + $0x2b0] sm:$0xff]
        %v3823 = vld [vmem:[%s3735 + $0x2b8] sm:$0xff]
        %v3824 = vld [vmem:[%s3735 + $0x2c0] sm:$0xff]
        %v3825 = vld [vmem:[%s3735 + $0x2c8] sm:$0xff]
        %v3826 = vld [vmem:[%s3735 + $0x2d0] sm:$0xff]
        %v3827 = vld [vmem:[%s3735 + $0x2d8] sm:$0xff]
        %v3828 = vld [vmem:[%s3735 + $0x2e0] sm:$0xff]
        %v3829 = vld [vmem:[%s3735 + $0x2e8] sm:$0xff]
        %v3830 = vld [vmem:[%s3735 + $0x2f0] sm:$0xff]
        %v3831 = vld [vmem:[%s3735 + $0x2f8] sm:$0xff]
        %v3832 = vrot.slane %v2756, 2
        %v3833 = vrot.slane %v2759, 2
        %v3834 = vsel %vm1192, %v3832, %v3833
        %v3835 = vrot.slane %v2757, 2
        %v3836 = vrot.slane %v2760, 2
        %v3837 = vsel %vm1192, %v3835, %v3836
        %v3838 = vrot.slane %v2758, 2
        %v3839 = vrot.slane %v2761, 2
        %v3840 = vsel %vm1192, %v3838, %v3839
        %3844 = vmatprep.subr.mxu0 %v3737
        %3845 = vmatpush1.msra.mxu0 %v3736
        %3846 = vmatprep.subr.mxu0 %v3739
        %3847 = vmatpush1.msra.mxu0 %v3738
        %3848 = vmatprep.subr.mxu0 %v3741
        %3849 = vmatpush1.msra.mxu0 %v3740
        %3850 = vmatprep.subr.mxu0 %v3743
        %3851 = vmatpush1.msra.mxu0 %v3742
        %3852 = vmatprep.subr.mxu0 %v3745
        %3853 = vmatpush1.msra.mxu0 %v3744
        %3854 = vmatprep.subr.mxu0 %v3747
        %3855 = vmatpush1.msra.mxu0 %v3746
        %3856 = vmatprep.subr.mxu0 %v3749
        %3857 = vmatpush1.msra.mxu0 %v3748
        %3858 = vmatprep.subr.mxu0 %v3751
        %3859 = vmatpush1.msra.mxu0 %v3750
        %3860 = vmatprep.subr.mxu0 %v3753
        %3861 = vmatpush1.msra.mxu0 %v3752
        %3862 = vmatprep.subr.mxu0 %v3755
        %3863 = vmatpush1.msra.mxu0 %v3754
        %3864 = vmatprep.subr.mxu0 %v3757
        %3865 = vmatpush1.msra.mxu0 %v3756
        %3866 = vmatprep.subr.mxu0 %v3759
        %3867 = vmatpush1.msra.mxu0 %v3758
        %3868 = vmatprep.subr.mxu0 %v3761
        %3869 = vmatpush1.msra.mxu0 %v3760
        %3870 = vmatprep.subr.mxu0 %v3763
        %3871 = vmatpush1.msra.mxu0 %v3762
        %3872 = vmatprep.subr.mxu0 %v3765
        %3873 = vmatpush1.msra.mxu0 %v3764
        %3874 = vmatprep.subr.mxu0 %v3767
        %3875 = vmatpush1.msra.mxu0 %v3766
        %3876 = vmatprep.subr.mxu0 %v3769
        %3877 = vmatpush1.msra.mxu0 %v3768
        %3878 = vmatprep.subr.mxu0 %v3771
        %3879 = vmatpush1.msra.mxu0 %v3770
        %3880 = vmatprep.subr.mxu0 %v3773
        %3881 = vmatpush1.msra.mxu0 %v3772
        %3882 = vmatprep.subr.mxu0 %v3775
        %3883 = vmatpush1.msra.mxu0 %v3774
        %3884 = vmatprep.subr.mxu0 %v3777
        %3885 = vmatpush1.msra.mxu0 %v3776
        %3886 = vmatprep.subr.mxu0 %v3779
        %3887 = vmatpush1.msra.mxu0 %v3778
        %3888 = vmatprep.subr.mxu0 %v3781
        %3889 = vmatpush1.msra.mxu0 %v3780
        %3890 = vmatprep.subr.mxu0 %v3783
        %3891 = vmatpush1.msra.mxu0 %v3782
        %3892 = vmatprep.subr.mxu0 %v3785
        %3893 = vmatpush1.msra.mxu0 %v3784
        %3894 = vmatprep.subr.mxu0 %v3787
        %3895 = vmatpush1.msra.mxu0 %v3786
        %3896 = vmatprep.subr.mxu0 %v3789
        %3897 = vmatpush1.msra.mxu0 %v3788
        %3898 = vmatprep.subr.mxu0 %v3791
        %3899 = vmatpush1.msra.mxu0 %v3790
        %3900 = vmatprep.subr.mxu0 %v3793
        %3901 = vmatpush1.msra.mxu0 %v3792
        %3902 = vmatprep.subr.mxu0 %v3795
        %3903 = vmatpush1.msra.mxu0 %v3794
        %3904 = vmatprep.subr.mxu0 %v3797
        %3905 = vmatpush1.msra.mxu0 %v3796
        %3906 = vmatprep.subr.mxu0 %v3799
        %3907 = vmatpush1.msra.mxu0 %v3798
        %3908 = vmatprep.mubr.f32.mxu0 %v3837
        %3909 = vmatmul.mubr.f32.gmra.mrb[0].mxu0 %v3834
        %v3910 = vpop.f32.mrb[0].mxu0
        %v3911 = vadd.f32 0.0, %v3910
        %v3912 = vpop.f32.mrb[0].mxu0
        %v3913 = vadd.f32 0.0, %v3912
        %3914 = vdwg.mxu0
        %3915 = vmatprep.subr.mxu0 %v3801
        %3916 = vmatpush1.msra.mxu0 %v3800
        %3917 = vmatprep.subr.mxu0 %v3803
        %3918 = vmatpush1.msra.mxu0 %v3802
        %3919 = vmatprep.subr.mxu0 %v3805
        %3920 = vmatpush1.msra.mxu0 %v3804
        %3921 = vmatprep.subr.mxu0 %v3807
        %3922 = vmatpush1.msra.mxu0 %v3806
        %3923 = vmatprep.subr.mxu0 %v3809
        %3924 = vmatpush1.msra.mxu0 %v3808
        %3925 = vmatprep.subr.mxu0 %v3811
        %3926 = vmatpush1.msra.mxu0 %v3810
        %3927 = vmatprep.subr.mxu0 %v3813
        %3928 = vmatpush1.msra.mxu0 %v3812
        %3929 = vmatprep.subr.mxu0 %v3815
        %3930 = vmatpush1.msra.mxu0 %v3814
        %3931 = vmatprep.subr.mxu0 %v3817
        %3932 = vmatpush1.msra.mxu0 %v3816
        %3933 = vmatprep.subr.mxu0 %v3819
        %3934 = vmatpush1.msra.mxu0 %v3818
        %3935 = vmatprep.subr.mxu0 %v3821
        %3936 = vmatpush1.msra.mxu0 %v3820
        %3937 = vmatprep.subr.mxu0 %v3823
        %3938 = vmatpush1.msra.mxu0 %v3822
        %3939 = vmatprep.subr.mxu0 %v3825
        %3940 = vmatpush1.msra.mxu0 %v3824
        %3941 = vmatprep.subr.mxu0 %v3827
        %3942 = vmatpush1.msra.mxu0 %v3826
        %3943 = vmatprep.subr.mxu0 %v3829
        %3944 = vmatpush1.msra.mxu0 %v3828
        %3945 = vmatprep.subr.mxu0 %v3831
        %3946 = vmatpush1.msra.mxu0 %v3830
        %3947 = vmatprep.subr.mxu0 0.0
        %3948 = vmatpush1.msra.mxu0 0.0
        %3949 = vmatprep.subr.mxu0 0.0
        %3950 = vmatpush1.msra.mxu0 0.0
        %3951 = vmatprep.subr.mxu0 0.0
        %3952 = vmatpush1.msra.mxu0 0.0
        %3953 = vmatprep.subr.mxu0 0.0
        %3954 = vmatpush1.msra.mxu0 0.0
        %3955 = vmatprep.subr.mxu0 0.0
        %3956 = vmatpush1.msra.mxu0 0.0
        %3957 = vmatprep.subr.mxu0 0.0
        %3958 = vmatpush1.msra.mxu0 0.0
        %3959 = vmatprep.subr.mxu0 0.0
        %3960 = vmatpush1.msra.mxu0 0.0
        %3961 = vmatprep.subr.mxu0 0.0
        %3962 = vmatpush1.msra.mxu0 0.0
        %3963 = vmatprep.subr.mxu0 0.0
        %3964 = vmatpush1.msra.mxu0 0.0
        %3965 = vmatprep.subr.mxu0 0.0
        %3966 = vmatpush1.msra.mxu0 0.0
        %3967 = vmatprep.subr.mxu0 0.0
        %3968 = vmatpush1.msra.mxu0 0.0
        %3969 = vmatprep.subr.mxu0 0.0
        %3970 = vmatpush1.msra.mxu0 0.0
        %3971 = vmatprep.subr.mxu0 0.0
        %3972 = vmatpush1.msra.mxu0 0.0
        %3973 = vmatprep.subr.mxu0 0.0
        %3974 = vmatpush1.msra.mxu0 0.0
        %3975 = vmatprep.subr.mxu0 0.0
        %3976 = vmatpush1.msra.mxu0 0.0
        %3977 = vmatprep.subr.mxu0 0.0
        %3978 = vmatpush1.msra.mxu0 0.0
        %3979 = vmatprep.mubr.f32.mxu0 0.0
        %3980 = vmatmul.mubr.f32.gmra.mrb[0].mxu0 %v3840
        %v3981 = vpop.f32.mrb[0].mxu0
        %v3982 = vadd.f32 %v3911, %v3981
        %v3983 = vpop.f32.mrb[0].mxu0
        %v3984 = vadd.f32 %v3913, %v3983
        %3985 = vdwg.mxu0
        %v3986 = vadd.f32 %v3350, %v3982
        %v3987 = vadd.f32 %v3352, %v3984
        %s3988 = scalar_lea.vmem [#allocation5], 5376
        %v3989 = vld [vmem:[%s3988] sm:$0xff]
        %v3990 = vld [vmem:[%s3988 + $0x8] sm:$0xff]
        %v3991 = vld [vmem:[%s3988 + $0x10] sm:$0xff]
        %v3992 = vld [vmem:[%s3988 + $0x18] sm:$0xff]
        %v3993 = vld [vmem:[%s3988 + $0x20] sm:$0xff]
        %v3994 = vld [vmem:[%s3988 + $0x28] sm:$0xff]
        %v3995 = vld [vmem:[%s3988 + $0x30] sm:$0xff]
        %v3996 = vld [vmem:[%s3988 + $0x38] sm:$0xff]
        %v3997 = vld [vmem:[%s3988 + $0x40] sm:$0xff]
        %v3998 = vld [vmem:[%s3988 + $0x48] sm:$0xff]
        %v3999 = vld [vmem:[%s3988 + $0x50] sm:$0xff]
        %v4000 = vld [vmem:[%s3988 + $0x58] sm:$0xff]
        %v4001 = vld [vmem:[%s3988 + $0x60] sm:$0xff]
        %v4002 = vld [vmem:[%s3988 + $0x68] sm:$0xff]
        %v4003 = vld [vmem:[%s3988 + $0x70] sm:$0xff]
        %v4004 = vld [vmem:[%s3988 + $0x78] sm:$0xff]
        %v4005 = vld [vmem:[%s3988 + $0x80] sm:$0xff]
        %v4006 = vld [vmem:[%s3988 + $0x88] sm:$0xff]
        %v4007 = vld [vmem:[%s3988 + $0x90] sm:$0xff]
        %v4008 = vld [vmem:[%s3988 + $0x98] sm:$0xff]
        %v4009 = vld [vmem:[%s3988 + $0xa0] sm:$0xff]
        %v4010 = vld [vmem:[%s3988 + $0xa8] sm:$0xff]
        %v4011 = vld [vmem:[%s3988 + $0xb0] sm:$0xff]
        %v4012 = vld [vmem:[%s3988 + $0xb8] sm:$0xff]
        %v4013 = vld [vmem:[%s3988 + $0xc0] sm:$0xff]
        %v4014 = vld [vmem:[%s3988 + $0xc8] sm:$0xff]
        %v4015 = vld [vmem:[%s3988 + $0xd0] sm:$0xff]
        %v4016 = vld [vmem:[%s3988 + $0xd8] sm:$0xff]
        %v4017 = vld [vmem:[%s3988 + $0xe0] sm:$0xff]
        %v4018 = vld [vmem:[%s3988 + $0xe8] sm:$0xff]
        %v4019 = vld [vmem:[%s3988 + $0xf0] sm:$0xff]
        %v4020 = vld [vmem:[%s3988 + $0xf8] sm:$0xff]
        %v4021 = vld [vmem:[%s3988 + $0x100] sm:$0xff]
        %v4022 = vld [vmem:[%s3988 + $0x108] sm:$0xff]
        %v4023 = vld [vmem:[%s3988 + $0x110] sm:$0xff]
        %v4024 = vld [vmem:[%s3988 + $0x118] sm:$0xff]
        %v4025 = vld [vmem:[%s3988 + $0x120] sm:$0xff]
        %v4026 = vld [vmem:[%s3988 + $0x128] sm:$0xff]
        %v4027 = vld [vmem:[%s3988 + $0x130] sm:$0xff]
        %v4028 = vld [vmem:[%s3988 + $0x138] sm:$0xff]
        %v4029 = vld [vmem:[%s3988 + $0x140] sm:$0xff]
        %v4030 = vld [vmem:[%s3988 + $0x148] sm:$0xff]
        %v4031 = vld [vmem:[%s3988 + $0x150] sm:$0xff]
        %v4032 = vld [vmem:[%s3988 + $0x158] sm:$0xff]
        %v4033 = vld [vmem:[%s3988 + $0x160] sm:$0xff]
        %v4034 = vld [vmem:[%s3988 + $0x168] sm:$0xff]
        %v4035 = vld [vmem:[%s3988 + $0x170] sm:$0xff]
        %v4036 = vld [vmem:[%s3988 + $0x178] sm:$0xff]
        %v4037 = vld [vmem:[%s3988 + $0x180] sm:$0xff]
        %v4038 = vld [vmem:[%s3988 + $0x188] sm:$0xff]
        %v4039 = vld [vmem:[%s3988 + $0x190] sm:$0xff]
        %v4040 = vld [vmem:[%s3988 + $0x198] sm:$0xff]
        %v4041 = vld [vmem:[%s3988 + $0x1a0] sm:$0xff]
        %v4042 = vld [vmem:[%s3988 + $0x1a8] sm:$0xff]
        %v4043 = vld [vmem:[%s3988 + $0x1b0] sm:$0xff]
        %v4044 = vld [vmem:[%s3988 + $0x1b8] sm:$0xff]
        %v4045 = vld [vmem:[%s3988 + $0x1c0] sm:$0xff]
        %v4046 = vld [vmem:[%s3988 + $0x1c8] sm:$0xff]
        %v4047 = vld [vmem:[%s3988 + $0x1d0] sm:$0xff]
        %v4048 = vld [vmem:[%s3988 + $0x1d8] sm:$0xff]
        %v4049 = vld [vmem:[%s3988 + $0x1e0] sm:$0xff]
        %v4050 = vld [vmem:[%s3988 + $0x1e8] sm:$0xff]
        %v4051 = vld [vmem:[%s3988 + $0x1f0] sm:$0xff]
        %v4052 = vld [vmem:[%s3988 + $0x1f8] sm:$0xff]
        %v4053 = vld [vmem:[%s3988 + $0x200] sm:$0xff]
        %v4054 = vld [vmem:[%s3988 + $0x208] sm:$0xff]
        %v4055 = vld [vmem:[%s3988 + $0x210] sm:$0xff]
        %v4056 = vld [vmem:[%s3988 + $0x218] sm:$0xff]
        %v4057 = vld [vmem:[%s3988 + $0x220] sm:$0xff]
        %v4058 = vld [vmem:[%s3988 + $0x228] sm:$0xff]
        %v4059 = vld [vmem:[%s3988 + $0x230] sm:$0xff]
        %v4060 = vld [vmem:[%s3988 + $0x238] sm:$0xff]
        %v4061 = vld [vmem:[%s3988 + $0x240] sm:$0xff]
        %v4062 = vld [vmem:[%s3988 + $0x248] sm:$0xff]
        %v4063 = vld [vmem:[%s3988 + $0x250] sm:$0xff]
        %v4064 = vld [vmem:[%s3988 + $0x258] sm:$0xff]
        %v4065 = vld [vmem:[%s3988 + $0x260] sm:$0xff]
        %v4066 = vld [vmem:[%s3988 + $0x268] sm:$0xff]
        %v4067 = vld [vmem:[%s3988 + $0x270] sm:$0xff]
        %v4068 = vld [vmem:[%s3988 + $0x278] sm:$0xff]
        %v4069 = vld [vmem:[%s3988 + $0x280] sm:$0xff]
        %v4070 = vld [vmem:[%s3988 + $0x288] sm:$0xff]
        %v4071 = vld [vmem:[%s3988 + $0x290] sm:$0xff]
        %v4072 = vld [vmem:[%s3988 + $0x298] sm:$0xff]
        %v4073 = vld [vmem:[%s3988 + $0x2a0] sm:$0xff]
        %v4074 = vld [vmem:[%s3988 + $0x2a8] sm:$0xff]
        %v4075 = vld [vmem:[%s3988 + $0x2b0] sm:$0xff]
        %v4076 = vld [vmem:[%s3988 + $0x2b8] sm:$0xff]
        %v4077 = vld [vmem:[%s3988 + $0x2c0] sm:$0xff]
        %v4078 = vld [vmem:[%s3988 + $0x2c8] sm:$0xff]
        %v4079 = vld [vmem:[%s3988 + $0x2d0] sm:$0xff]
        %v4080 = vld [vmem:[%s3988 + $0x2d8] sm:$0xff]
        %v4081 = vld [vmem:[%s3988 + $0x2e0] sm:$0xff]
        %v4082 = vld [vmem:[%s3988 + $0x2e8] sm:$0xff]
        %v4083 = vld [vmem:[%s3988 + $0x2f0] sm:$0xff]
        %v4084 = vld [vmem:[%s3988 + $0x2f8] sm:$0xff]
        %4085 = vmatprep.subr.mxu0 %v3990
        %4086 = vmatpush1.msra.mxu0 %v3989
        %4087 = vmatprep.subr.mxu0 %v3992
        %4088 = vmatpush1.msra.mxu0 %v3991
        %4089 = vmatprep.subr.mxu0 %v3994
        %4090 = vmatpush1.msra.mxu0 %v3993
        %4091 = vmatprep.subr.mxu0 %v3996
        %4092 = vmatpush1.msra.mxu0 %v3995
        %4093 = vmatprep.subr.mxu0 %v3998
        %4094 = vmatpush1.msra.mxu0 %v3997
        %4095 = vmatprep.subr.mxu0 %v4000
        %4096 = vmatpush1.msra.mxu0 %v3999
        %4097 = vmatprep.subr.mxu0 %v4002
        %4098 = vmatpush1.msra.mxu0 %v4001
        %4099 = vmatprep.subr.mxu0 %v4004
        %4100 = vmatpush1.msra.mxu0 %v4003
        %4101 = vmatprep.subr.mxu0 %v4006
        %4102 = vmatpush1.msra.mxu0 %v4005
        %4103 = vmatprep.subr.mxu0 %v4008
        %4104 = vmatpush1.msra.mxu0 %v4007
        %4105 = vmatprep.subr.mxu0 %v4010
        %4106 = vmatpush1.msra.mxu0 %v4009
        %4107 = vmatprep.subr.mxu0 %v4012
        %4108 = vmatpush1.msra.mxu0 %v4011
        %4109 = vmatprep.subr.mxu0 %v4014
        %4110 = vmatpush1.msra.mxu0 %v4013
        %4111 = vmatprep.subr.mxu0 %v4016
        %4112 = vmatpush1.msra.mxu0 %v4015
        %4113 = vmatprep.subr.mxu0 %v4018
        %4114 = vmatpush1.msra.mxu0 %v4017
        %4115 = vmatprep.subr.mxu0 %v4020
        %4116 = vmatpush1.msra.mxu0 %v4019
        %4117 = vmatprep.subr.mxu0 %v4022
        %4118 = vmatpush1.msra.mxu0 %v4021
        %4119 = vmatprep.subr.mxu0 %v4024
        %4120 = vmatpush1.msra.mxu0 %v4023
        %4121 = vmatprep.subr.mxu0 %v4026
        %4122 = vmatpush1.msra.mxu0 %v4025
        %4123 = vmatprep.subr.mxu0 %v4028
        %4124 = vmatpush1.msra.mxu0 %v4027
        %4125 = vmatprep.subr.mxu0 %v4030
        %4126 = vmatpush1.msra.mxu0 %v4029
        %4127 = vmatprep.subr.mxu0 %v4032
        %4128 = vmatpush1.msra.mxu0 %v4031
        %4129 = vmatprep.subr.mxu0 %v4034
        %4130 = vmatpush1.msra.mxu0 %v4033
        %4131 = vmatprep.subr.mxu0 %v4036
        %4132 = vmatpush1.msra.mxu0 %v4035
        %4133 = vmatprep.subr.mxu0 %v4038
        %4134 = vmatpush1.msra.mxu0 %v4037
        %4135 = vmatprep.subr.mxu0 %v4040
        %4136 = vmatpush1.msra.mxu0 %v4039
        %4137 = vmatprep.subr.mxu0 %v4042
        %4138 = vmatpush1.msra.mxu0 %v4041
        %4139 = vmatprep.subr.mxu0 %v4044
        %4140 = vmatpush1.msra.mxu0 %v4043
        %4141 = vmatprep.subr.mxu0 %v4046
        %4142 = vmatpush1.msra.mxu0 %v4045
        %4143 = vmatprep.subr.mxu0 %v4048
        %4144 = vmatpush1.msra.mxu0 %v4047
        %4145 = vmatprep.subr.mxu0 %v4050
        %4146 = vmatpush1.msra.mxu0 %v4049
        %4147 = vmatprep.subr.mxu0 %v4052
        %4148 = vmatpush1.msra.mxu0 %v4051
        %4149 = vmatprep.mubr.f32.mxu0 %v3837
        %4150 = vmatmul.mubr.f32.gmra.mrb[0].mxu0 %v3834
        %v4151 = vpop.f32.mrb[0].mxu0
        %v4152 = vadd.f32 0.0, %v4151
        %v4153 = vpop.f32.mrb[0].mxu0
        %v4154 = vadd.f32 0.0, %v4153
        %4155 = vdwg.mxu0
        %4156 = vmatprep.subr.mxu0 %v4054
        %4157 = vmatpush1.msra.mxu0 %v4053
        %4158 = vmatprep.subr.mxu0 %v4056
        %4159 = vmatpush1.msra.mxu0 %v4055
        %4160 = vmatprep.subr.mxu0 %v4058
        %4161 = vmatpush1.msra.mxu0 %v4057
        %4162 = vmatprep.subr.mxu0 %v4060
        %4163 = vmatpush1.msra.mxu0 %v4059
        %4164 = vmatprep.subr.mxu0 %v4062
        %4165 = vmatpush1.msra.mxu0 %v4061
        %4166 = vmatprep.subr.mxu0 %v4064
        %4167 = vmatpush1.msra.mxu0 %v4063
        %4168 = vmatprep.subr.mxu0 %v4066
        %4169 = vmatpush1.msra.mxu0 %v4065
        %4170 = vmatprep.subr.mxu0 %v4068
        %4171 = vmatpush1.msra.mxu0 %v4067
        %4172 = vmatprep.subr.mxu0 %v4070
        %4173 = vmatpush1.msra.mxu0 %v4069
        %4174 = vmatprep.subr.mxu0 %v4072
        %4175 = vmatpush1.msra.mxu0 %v4071
        %4176 = vmatprep.subr.mxu0 %v4074
        %4177 = vmatpush1.msra.mxu0 %v4073
        %4178 = vmatprep.subr.mxu0 %v4076
        %4179 = vmatpush1.msra.mxu0 %v4075
        %4180 = vmatprep.subr.mxu0 %v4078
        %4181 = vmatpush1.msra.mxu0 %v4077
        %4182 = vmatprep.subr.mxu0 %v4080
        %4183 = vmatpush1.msra.mxu0 %v4079
        %4184 = vmatprep.subr.mxu0 %v4082
        %4185 = vmatpush1.msra.mxu0 %v4081
        %4186 = vmatprep.subr.mxu0 %v4084
        %4187 = vmatpush1.msra.mxu0 %v4083
        %4188 = vmatprep.subr.mxu0 0.0
        %4189 = vmatpush1.msra.mxu0 0.0
        %4190 = vmatprep.subr.mxu0 0.0
        %4191 = vmatpush1.msra.mxu0 0.0
        %4192 = vmatprep.subr.mxu0 0.0
        %4193 = vmatpush1.msra.mxu0 0.0
        %4194 = vmatprep.subr.mxu0 0.0
        %4195 = vmatpush1.msra.mxu0 0.0
        %4196 = vmatprep.subr.mxu0 0.0
        %4197 = vmatpush1.msra.mxu0 0.0
        %4198 = vmatprep.subr.mxu0 0.0
        %4199 = vmatpush1.msra.mxu0 0.0
        %4200 = vmatprep.subr.mxu0 0.0
        %4201 = vmatpush1.msra.mxu0 0.0
        %4202 = vmatprep.subr.mxu0 0.0
        %4203 = vmatpush1.msra.mxu0 0.0
        %4204 = vmatprep.subr.mxu0 0.0
        %4205 = vmatpush1.msra.mxu0 0.0
        %4206 = vmatprep.subr.mxu0 0.0
        %4207 = vmatpush1.msra.mxu0 0.0
        %4208 = vmatprep.subr.mxu0 0.0
        %4209 = vmatpush1.msra.mxu0 0.0
        %4210 = vmatprep.subr.mxu0 0.0
        %4211 = vmatpush1.msra.mxu0 0.0
        %4212 = vmatprep.subr.mxu0 0.0
        %4213 = vmatpush1.msra.mxu0 0.0
        %4214 = vmatprep.subr.mxu0 0.0
        %4215 = vmatpush1.msra.mxu0 0.0
        %4216 = vmatprep.subr.mxu0 0.0
        %4217 = vmatpush1.msra.mxu0 0.0
        %4218 = vmatprep.subr.mxu0 0.0
        %4219 = vmatpush1.msra.mxu0 0.0
        %4220 = vmatprep.mubr.f32.mxu0 0.0
        %4221 = vmatmul.mubr.f32.gmra.mrb[0].mxu0 %v3840
        %v4222 = vpop.f32.mrb[0].mxu0
        %v4223 = vadd.f32 %v4152, %v4222
        %v4224 = vpop.f32.mrb[0].mxu0
        %v4225 = vadd.f32 %v4154, %v4224
        %4226 = vdwg.mxu0
        %v4227 = vadd.f32 %v3731, %v4223
        %v4228 = vadd.f32 %v3733, %v4225
        %s4229 = scalar_lea.vmem [#allocation5], 2304
        %v4230 = vld [vmem:[%s4229] sm:$0xff]
        %v4231 = vld [vmem:[%s4229 + $0x8] sm:$0xff]
        %v4232 = vld [vmem:[%s4229 + $0x10] sm:$0xff]
        %v4233 = vld [vmem:[%s4229 + $0x18] sm:$0xff]
        %v4234 = vld [vmem:[%s4229 + $0x20] sm:$0xff]
        %v4235 = vld [vmem:[%s4229 + $0x28] sm:$0xff]
        %v4236 = vld [vmem:[%s4229 + $0x30] sm:$0xff]
        %v4237 = vld [vmem:[%s4229 + $0x38] sm:$0xff]
        %v4238 = vld [vmem:[%s4229 + $0x40] sm:$0xff]
        %v4239 = vld [vmem:[%s4229 + $0x48] sm:$0xff]
        %v4240 = vld [vmem:[%s4229 + $0x50] sm:$0xff]
        %v4241 = vld [vmem:[%s4229 + $0x58] sm:$0xff]
        %v4242 = vld [vmem:[%s4229 + $0x60] sm:$0xff]
        %v4243 = vld [vmem:[%s4229 + $0x68] sm:$0xff]
        %v4244 = vld [vmem:[%s4229 + $0x70] sm:$0xff]
        %v4245 = vld [vmem:[%s4229 + $0x78] sm:$0xff]
        %v4246 = vld [vmem:[%s4229 + $0x80] sm:$0xff]
        %v4247 = vld [vmem:[%s4229 + $0x88] sm:$0xff]
        %v4248 = vld [vmem:[%s4229 + $0x90] sm:$0xff]
        %v4249 = vld [vmem:[%s4229 + $0x98] sm:$0xff]
        %v4250 = vld [vmem:[%s4229 + $0xa0] sm:$0xff]
        %v4251 = vld [vmem:[%s4229 + $0xa8] sm:$0xff]
        %v4252 = vld [vmem:[%s4229 + $0xb0] sm:$0xff]
        %v4253 = vld [vmem:[%s4229 + $0xb8] sm:$0xff]
        %v4254 = vld [vmem:[%s4229 + $0xc0] sm:$0xff]
        %v4255 = vld [vmem:[%s4229 + $0xc8] sm:$0xff]
        %v4256 = vld [vmem:[%s4229 + $0xd0] sm:$0xff]
        %v4257 = vld [vmem:[%s4229 + $0xd8] sm:$0xff]
        %v4258 = vld [vmem:[%s4229 + $0xe0] sm:$0xff]
        %v4259 = vld [vmem:[%s4229 + $0xe8] sm:$0xff]
        %v4260 = vld [vmem:[%s4229 + $0xf0] sm:$0xff]
        %v4261 = vld [vmem:[%s4229 + $0xf8] sm:$0xff]
        %v4262 = vld [vmem:[%s4229 + $0x100] sm:$0xff]
        %v4263 = vld [vmem:[%s4229 + $0x108] sm:$0xff]
        %v4264 = vld [vmem:[%s4229 + $0x110] sm:$0xff]
        %v4265 = vld [vmem:[%s4229 + $0x118] sm:$0xff]
        %v4266 = vld [vmem:[%s4229 + $0x120] sm:$0xff]
        %v4267 = vld [vmem:[%s4229 + $0x128] sm:$0xff]
        %v4268 = vld [vmem:[%s4229 + $0x130] sm:$0xff]
        %v4269 = vld [vmem:[%s4229 + $0x138] sm:$0xff]
        %v4270 = vld [vmem:[%s4229 + $0x140] sm:$0xff]
        %v4271 = vld [vmem:[%s4229 + $0x148] sm:$0xff]
        %v4272 = vld [vmem:[%s4229 + $0x150] sm:$0xff]
        %v4273 = vld [vmem:[%s4229 + $0x158] sm:$0xff]
        %v4274 = vld [vmem:[%s4229 + $0x160] sm:$0xff]
        %v4275 = vld [vmem:[%s4229 + $0x168] sm:$0xff]
        %v4276 = vld [vmem:[%s4229 + $0x170] sm:$0xff]
        %v4277 = vld [vmem:[%s4229 + $0x178] sm:$0xff]
        %v4278 = vld [vmem:[%s4229 + $0x180] sm:$0xff]
        %v4279 = vld [vmem:[%s4229 + $0x188] sm:$0xff]
        %v4280 = vld [vmem:[%s4229 + $0x190] sm:$0xff]
        %v4281 = vld [vmem:[%s4229 + $0x198] sm:$0xff]
        %v4282 = vld [vmem:[%s4229 + $0x1a0] sm:$0xff]
        %v4283 = vld [vmem:[%s4229 + $0x1a8] sm:$0xff]
        %v4284 = vld [vmem:[%s4229 + $0x1b0] sm:$0xff]
        %v4285 = vld [vmem:[%s4229 + $0x1b8] sm:$0xff]
        %v4286 = vld [vmem:[%s4229 + $0x1c0] sm:$0xff]
        %v4287 = vld [vmem:[%s4229 + $0x1c8] sm:$0xff]
        %v4288 = vld [vmem:[%s4229 + $0x1d0] sm:$0xff]
        %v4289 = vld [vmem:[%s4229 + $0x1d8] sm:$0xff]
        %v4290 = vld [vmem:[%s4229 + $0x1e0] sm:$0xff]
        %v4291 = vld [vmem:[%s4229 + $0x1e8] sm:$0xff]
        %v4292 = vld [vmem:[%s4229 + $0x1f0] sm:$0xff]
        %v4293 = vld [vmem:[%s4229 + $0x1f8] sm:$0xff]
        %v4294 = vld [vmem:[%s4229 + $0x200] sm:$0xff]
        %v4295 = vld [vmem:[%s4229 + $0x208] sm:$0xff]
        %v4296 = vld [vmem:[%s4229 + $0x210] sm:$0xff]
        %v4297 = vld [vmem:[%s4229 + $0x218] sm:$0xff]
        %v4298 = vld [vmem:[%s4229 + $0x220] sm:$0xff]
        %v4299 = vld [vmem:[%s4229 + $0x228] sm:$0xff]
        %v4300 = vld [vmem:[%s4229 + $0x230] sm:$0xff]
        %v4301 = vld [vmem:[%s4229 + $0x238] sm:$0xff]
        %v4302 = vld [vmem:[%s4229 + $0x240] sm:$0xff]
        %v4303 = vld [vmem:[%s4229 + $0x248] sm:$0xff]
        %v4304 = vld [vmem:[%s4229 + $0x250] sm:$0xff]
        %v4305 = vld [vmem:[%s4229 + $0x258] sm:$0xff]
        %v4306 = vld [vmem:[%s4229 + $0x260] sm:$0xff]
        %v4307 = vld [vmem:[%s4229 + $0x268] sm:$0xff]
        %v4308 = vld [vmem:[%s4229 + $0x270] sm:$0xff]
        %v4309 = vld [vmem:[%s4229 + $0x278] sm:$0xff]
        %v4310 = vld [vmem:[%s4229 + $0x280] sm:$0xff]
        %v4311 = vld [vmem:[%s4229 + $0x288] sm:$0xff]
        %v4312 = vld [vmem:[%s4229 + $0x290] sm:$0xff]
        %v4313 = vld [vmem:[%s4229 + $0x298] sm:$0xff]
        %v4314 = vld [vmem:[%s4229 + $0x2a0] sm:$0xff]
        %v4315 = vld [vmem:[%s4229 + $0x2a8] sm:$0xff]
        %v4316 = vld [vmem:[%s4229 + $0x2b0] sm:$0xff]
        %v4317 = vld [vmem:[%s4229 + $0x2b8] sm:$0xff]
        %v4318 = vld [vmem:[%s4229 + $0x2c0] sm:$0xff]
        %v4319 = vld [vmem:[%s4229 + $0x2c8] sm:$0xff]
        %v4320 = vld [vmem:[%s4229 + $0x2d0] sm:$0xff]
        %v4321 = vld [vmem:[%s4229 + $0x2d8] sm:$0xff]
        %v4322 = vld [vmem:[%s4229 + $0x2e0] sm:$0xff]
        %v4323 = vld [vmem:[%s4229 + $0x2e8] sm:$0xff]
        %v4324 = vld [vmem:[%s4229 + $0x2f0] sm:$0xff]
        %v4325 = vld [vmem:[%s4229 + $0x2f8] sm:$0xff]
        %v4326 = vrot.slane %v2756, 3
        %v4327 = vrot.slane %v2759, 3
        %v4328 = vsel %vm1594, %v4326, %v4327
        %v4329 = vrot.slane %v2757, 3
        %v4330 = vrot.slane %v2760, 3
        %v4331 = vsel %vm1594, %v4329, %v4330
        %v4332 = vrot.slane %v2758, 3
        %v4333 = vrot.slane %v2761, 3
        %v4334 = vsel %vm1594, %v4332, %v4333
        %4338 = vmatprep.subr.mxu0 %v4231
        %4339 = vmatpush1.msra.mxu0 %v4230
        %4340 = vmatprep.subr.mxu0 %v4233
        %4341 = vmatpush1.msra.mxu0 %v4232
        %4342 = vmatprep.subr.mxu0 %v4235
        %4343 = vmatpush1.msra.mxu0 %v4234
        %4344 = vmatprep.subr.mxu0 %v4237
        %4345 = vmatpush1.msra.mxu0 %v4236
        %4346 = vmatprep.subr.mxu0 %v4239
        %4347 = vmatpush1.msra.mxu0 %v4238
        %4348 = vmatprep.subr.mxu0 %v4241
        %4349 = vmatpush1.msra.mxu0 %v4240
        %4350 = vmatprep.subr.mxu0 %v4243
        %4351 = vmatpush1.msra.mxu0 %v4242
        %4352 = vmatprep.subr.mxu0 %v4245
        %4353 = vmatpush1.msra.mxu0 %v4244
        %4354 = vmatprep.subr.mxu0 %v4247
        %4355 = vmatpush1.msra.mxu0 %v4246
        %4356 = vmatprep.subr.mxu0 %v4249
        %4357 = vmatpush1.msra.mxu0 %v4248
        %4358 = vmatprep.subr.mxu0 %v4251
        %4359 = vmatpush1.msra.mxu0 %v4250
        %4360 = vmatprep.subr.mxu0 %v4253
        %4361 = vmatpush1.msra.mxu0 %v4252
        %4362 = vmatprep.subr.mxu0 %v4255
        %4363 = vmatpush1.msra.mxu0 %v4254
        %4364 = vmatprep.subr.mxu0 %v4257
        %4365 = vmatpush1.msra.mxu0 %v4256
        %4366 = vmatprep.subr.mxu0 %v4259
        %4367 = vmatpush1.msra.mxu0 %v4258
        %4368 = vmatprep.subr.mxu0 %v4261
        %4369 = vmatpush1.msra.mxu0 %v4260
        %4370 = vmatprep.subr.mxu0 %v4263
        %4371 = vmatpush1.msra.mxu0 %v4262
        %4372 = vmatprep.subr.mxu0 %v4265
        %4373 = vmatpush1.msra.mxu0 %v4264
        %4374 = vmatprep.subr.mxu0 %v4267
        %4375 = vmatpush1.msra.mxu0 %v4266
        %4376 = vmatprep.subr.mxu0 %v4269
        %4377 = vmatpush1.msra.mxu0 %v4268
        %4378 = vmatprep.subr.mxu0 %v4271
        %4379 = vmatpush1.msra.mxu0 %v4270
        %4380 = vmatprep.subr.mxu0 %v4273
        %4381 = vmatpush1.msra.mxu0 %v4272
        %4382 = vmatprep.subr.mxu0 %v4275
        %4383 = vmatpush1.msra.mxu0 %v4274
        %4384 = vmatprep.subr.mxu0 %v4277
        %4385 = vmatpush1.msra.mxu0 %v4276
        %4386 = vmatprep.subr.mxu0 %v4279
        %4387 = vmatpush1.msra.mxu0 %v4278
        %4388 = vmatprep.subr.mxu0 %v4281
        %4389 = vmatpush1.msra.mxu0 %v4280
        %4390 = vmatprep.subr.mxu0 %v4283
        %4391 = vmatpush1.msra.mxu0 %v4282
        %4392 = vmatprep.subr.mxu0 %v4285
        %4393 = vmatpush1.msra.mxu0 %v4284
        %4394 = vmatprep.subr.mxu0 %v4287
        %4395 = vmatpush1.msra.mxu0 %v4286
        %4396 = vmatprep.subr.mxu0 %v4289
        %4397 = vmatpush1.msra.mxu0 %v4288
        %4398 = vmatprep.subr.mxu0 %v4291
        %4399 = vmatpush1.msra.mxu0 %v4290
        %4400 = vmatprep.subr.mxu0 %v4293
        %4401 = vmatpush1.msra.mxu0 %v4292
        %4402 = vmatprep.mubr.f32.mxu0 %v4331
        %4403 = vmatmul.mubr.f32.gmra.mrb[0].mxu0 %v4328
        %v4404 = vpop.f32.mrb[0].mxu0
        %v4405 = vadd.f32 0.0, %v4404
        %v4406 = vpop.f32.mrb[0].mxu0
        %v4407 = vadd.f32 0.0, %v4406
        %4408 = vdwg.mxu0
        %4409 = vmatprep.subr.mxu0 %v4295
        %4410 = vmatpush1.msra.mxu0 %v4294
        %4411 = vmatprep.subr.mxu0 %v4297
        %4412 = vmatpush1.msra.mxu0 %v4296
        %4413 = vmatprep.subr.mxu0 %v4299
        %4414 = vmatpush1.msra.mxu0 %v4298
        %4415 = vmatprep.subr.mxu0 %v4301
        %4416 = vmatpush1.msra.mxu0 %v4300
        %4417 = vmatprep.subr.mxu0 %v4303
        %4418 = vmatpush1.msra.mxu0 %v4302
        %4419 = vmatprep.subr.mxu0 %v4305
        %4420 = vmatpush1.msra.mxu0 %v4304
        %4421 = vmatprep.subr.mxu0 %v4307
        %4422 = vmatpush1.msra.mxu0 %v4306
        %4423 = vmatprep.subr.mxu0 %v4309
        %4424 = vmatpush1.msra.mxu0 %v4308
        %4425 = vmatprep.subr.mxu0 %v4311
        %4426 = vmatpush1.msra.mxu0 %v4310
        %4427 = vmatprep.subr.mxu0 %v4313
        %4428 = vmatpush1.msra.mxu0 %v4312
        %4429 = vmatprep.subr.mxu0 %v4315
        %4430 = vmatpush1.msra.mxu0 %v4314
        %4431 = vmatprep.subr.mxu0 %v4317
        %4432 = vmatpush1.msra.mxu0 %v4316
        %4433 = vmatprep.subr.mxu0 %v4319
        %4434 = vmatpush1.msra.mxu0 %v4318
        %4435 = vmatprep.subr.mxu0 %v4321
        %4436 = vmatpush1.msra.mxu0 %v4320
        %4437 = vmatprep.subr.mxu0 %v4323
        %4438 = vmatpush1.msra.mxu0 %v4322
        %4439 = vmatprep.subr.mxu0 %v4325
        %4440 = vmatpush1.msra.mxu0 %v4324
        %4441 = vmatprep.subr.mxu0 0.0
        %4442 = vmatpush1.msra.mxu0 0.0
        %4443 = vmatprep.subr.mxu0 0.0
        %4444 = vmatpush1.msra.mxu0 0.0
        %4445 = vmatprep.subr.mxu0 0.0
        %4446 = vmatpush1.msra.mxu0 0.0
        %4447 = vmatprep.subr.mxu0 0.0
        %4448 = vmatpush1.msra.mxu0 0.0
        %4449 = vmatprep.subr.mxu0 0.0
        %4450 = vmatpush1.msra.mxu0 0.0
        %4451 = vmatprep.subr.mxu0 0.0
        %4452 = vmatpush1.msra.mxu0 0.0
        %4453 = vmatprep.subr.mxu0 0.0
        %4454 = vmatpush1.msra.mxu0 0.0
        %4455 = vmatprep.subr.mxu0 0.0
        %4456 = vmatpush1.msra.mxu0 0.0
        %4457 = vmatprep.subr.mxu0 0.0
        %4458 = vmatpush1.msra.mxu0 0.0
        %4459 = vmatprep.subr.mxu0 0.0
        %4460 = vmatpush1.msra.mxu0 0.0
        %4461 = vmatprep.subr.mxu0 0.0
        %4462 = vmatpush1.msra.mxu0 0.0
        %4463 = vmatprep.subr.mxu0 0.0
        %4464 = vmatpush1.msra.mxu0 0.0
        %4465 = vmatprep.subr.mxu0 0.0
        %4466 = vmatpush1.msra.mxu0 0.0
        %4467 = vmatprep.subr.mxu0 0.0
        %4468 = vmatpush1.msra.mxu0 0.0
        %4469 = vmatprep.subr.mxu0 0.0
        %4470 = vmatpush1.msra.mxu0 0.0
        %4471 = vmatprep.subr.mxu0 0.0
        %4472 = vmatpush1.msra.mxu0 0.0
        %4473 = vmatprep.mubr.f32.mxu0 0.0
        %4474 = vmatmul.mubr.f32.gmra.mrb[0].mxu0 %v4334
        %v4475 = vpop.f32.mrb[0].mxu0
        %v4476 = vadd.f32 %v4405, %v4475
        %v4477 = vpop.f32.mrb[0].mxu0
        %v4478 = vadd.f32 %v4407, %v4477
        %4479 = vdwg.mxu0
        %v4480 = vadd.f32 %v3986, %v4476
        %v4481 = vadd.f32 %v3987, %v4478
        %s4482 = scalar_lea.vmem [#allocation5], 6144
        %v4483 = vld [vmem:[%s4482] sm:$0xff]
        %v4484 = vld [vmem:[%s4482 + $0x8] sm:$0xff]
        %v4485 = vld [vmem:[%s4482 + $0x10] sm:$0xff]
        %v4486 = vld [vmem:[%s4482 + $0x18] sm:$0xff]
        %v4487 = vld [vmem:[%s4482 + $0x20] sm:$0xff]
        %v4488 = vld [vmem:[%s4482 + $0x28] sm:$0xff]
        %v4489 = vld [vmem:[%s4482 + $0x30] sm:$0xff]
        %v4490 = vld [vmem:[%s4482 + $0x38] sm:$0xff]
        %v4491 = vld [vmem:[%s4482 + $0x40] sm:$0xff]
        %v4492 = vld [vmem:[%s4482 + $0x48] sm:$0xff]
        %v4493 = vld [vmem:[%s4482 + $0x50] sm:$0xff]
        %v4494 = vld [vmem:[%s4482 + $0x58] sm:$0xff]
        %v4495 = vld [vmem:[%s4482 + $0x60] sm:$0xff]
        %v4496 = vld [vmem:[%s4482 + $0x68] sm:$0xff]
        %v4497 = vld [vmem:[%s4482 + $0x70] sm:$0xff]
        %v4498 = vld [vmem:[%s4482 + $0x78] sm:$0xff]
        %v4499 = vld [vmem:[%s4482 + $0x80] sm:$0xff]
        %v4500 = vld [vmem:[%s4482 + $0x88] sm:$0xff]
        %v4501 = vld [vmem:[%s4482 + $0x90] sm:$0xff]
        %v4502 = vld [vmem:[%s4482 + $0x98] sm:$0xff]
        %v4503 = vld [vmem:[%s4482 + $0xa0] sm:$0xff]
        %v4504 = vld [vmem:[%s4482 + $0xa8] sm:$0xff]
        %v4505 = vld [vmem:[%s4482 + $0xb0] sm:$0xff]
        %v4506 = vld [vmem:[%s4482 + $0xb8] sm:$0xff]
        %v4507 = vld [vmem:[%s4482 + $0xc0] sm:$0xff]
        %v4508 = vld [vmem:[%s4482 + $0xc8] sm:$0xff]
        %v4509 = vld [vmem:[%s4482 + $0xd0] sm:$0xff]
        %v4510 = vld [vmem:[%s4482 + $0xd8] sm:$0xff]
        %v4511 = vld [vmem:[%s4482 + $0xe0] sm:$0xff]
        %v4512 = vld [vmem:[%s4482 + $0xe8] sm:$0xff]
        %v4513 = vld [vmem:[%s4482 + $0xf0] sm:$0xff]
        %v4514 = vld [vmem:[%s4482 + $0xf8] sm:$0xff]
        %v4515 = vld [vmem:[%s4482 + $0x100] sm:$0xff]
        %v4516 = vld [vmem:[%s4482 + $0x108] sm:$0xff]
        %v4517 = vld [vmem:[%s4482 + $0x110] sm:$0xff]
        %v4518 = vld [vmem:[%s4482 + $0x118] sm:$0xff]
        %v4519 = vld [vmem:[%s4482 + $0x120] sm:$0xff]
        %v4520 = vld [vmem:[%s4482 + $0x128] sm:$0xff]
        %v4521 = vld [vmem:[%s4482 + $0x130] sm:$0xff]
        %v4522 = vld [vmem:[%s4482 + $0x138] sm:$0xff]
        %v4523 = vld [vmem:[%s4482 + $0x140] sm:$0xff]
        %v4524 = vld [vmem:[%s4482 + $0x148] sm:$0xff]
        %v4525 = vld [vmem:[%s4482 + $0x150] sm:$0xff]
        %v4526 = vld [vmem:[%s4482 + $0x158] sm:$0xff]
        %v4527 = vld [vmem:[%s4482 + $0x160] sm:$0xff]
        %v4528 = vld [vmem:[%s4482 + $0x168] sm:$0xff]
        %v4529 = vld [vmem:[%s4482 + $0x170] sm:$0xff]
        %v4530 = vld [vmem:[%s4482 + $0x178] sm:$0xff]
        %v4531 = vld [vmem:[%s4482 + $0x180] sm:$0xff]
        %v4532 = vld [vmem:[%s4482 + $0x188] sm:$0xff]
        %v4533 = vld [vmem:[%s4482 + $0x190] sm:$0xff]
        %v4534 = vld [vmem:[%s4482 + $0x198] sm:$0xff]
        %v4535 = vld [vmem:[%s4482 + $0x1a0] sm:$0xff]
        %v4536 = vld [vmem:[%s4482 + $0x1a8] sm:$0xff]
        %v4537 = vld [vmem:[%s4482 + $0x1b0] sm:$0xff]
        %v4538 = vld [vmem:[%s4482 + $0x1b8] sm:$0xff]
        %v4539 = vld [vmem:[%s4482 + $0x1c0] sm:$0xff]
        %v4540 = vld [vmem:[%s4482 + $0x1c8] sm:$0xff]
        %v4541 = vld [vmem:[%s4482 + $0x1d0] sm:$0xff]
        %v4542 = vld [vmem:[%s4482 + $0x1d8] sm:$0xff]
        %v4543 = vld [vmem:[%s4482 + $0x1e0] sm:$0xff]
        %v4544 = vld [vmem:[%s4482 + $0x1e8] sm:$0xff]
        %v4545 = vld [vmem:[%s4482 + $0x1f0] sm:$0xff]
        %v4546 = vld [vmem:[%s4482 + $0x1f8] sm:$0xff]
        %v4547 = vld [vmem:[%s4482 + $0x200] sm:$0xff]
        %v4548 = vld [vmem:[%s4482 + $0x208] sm:$0xff]
        %v4549 = vld [vmem:[%s4482 + $0x210] sm:$0xff]
        %v4550 = vld [vmem:[%s4482 + $0x218] sm:$0xff]
        %v4551 = vld [vmem:[%s4482 + $0x220] sm:$0xff]
        %v4552 = vld [vmem:[%s4482 + $0x228] sm:$0xff]
        %v4553 = vld [vmem:[%s4482 + $0x230] sm:$0xff]
        %v4554 = vld [vmem:[%s4482 + $0x238] sm:$0xff]
        %v4555 = vld [vmem:[%s4482 + $0x240] sm:$0xff]
        %v4556 = vld [vmem:[%s4482 + $0x248] sm:$0xff]
        %v4557 = vld [vmem:[%s4482 + $0x250] sm:$0xff]
        %v4558 = vld [vmem:[%s4482 + $0x258] sm:$0xff]
        %v4559 = vld [vmem:[%s4482 + $0x260] sm:$0xff]
        %v4560 = vld [vmem:[%s4482 + $0x268] sm:$0xff]
        %v4561 = vld [vmem:[%s4482 + $0x270] sm:$0xff]
        %v4562 = vld [vmem:[%s4482 + $0x278] sm:$0xff]
        %v4563 = vld [vmem:[%s4482 + $0x280] sm:$0xff]
        %v4564 = vld [vmem:[%s4482 + $0x288] sm:$0xff]
        %v4565 = vld [vmem:[%s4482 + $0x290] sm:$0xff]
        %v4566 = vld [vmem:[%s4482 + $0x298] sm:$0xff]
        %v4567 = vld [vmem:[%s4482 + $0x2a0] sm:$0xff]
        %v4568 = vld [vmem:[%s4482 + $0x2a8] sm:$0xff]
        %v4569 = vld [vmem:[%s4482 + $0x2b0] sm:$0xff]
        %v4570 = vld [vmem:[%s4482 + $0x2b8] sm:$0xff]
        %v4571 = vld [vmem:[%s4482 + $0x2c0] sm:$0xff]
        %v4572 = vld [vmem:[%s4482 + $0x2c8] sm:$0xff]
        %v4573 = vld [vmem:[%s4482 + $0x2d0] sm:$0xff]
        %v4574 = vld [vmem:[%s4482 + $0x2d8] sm:$0xff]
        %v4575 = vld [vmem:[%s4482 + $0x2e0] sm:$0xff]
        %v4576 = vld [vmem:[%s4482 + $0x2e8] sm:$0xff]
        %v4577 = vld [vmem:[%s4482 + $0x2f0] sm:$0xff]
        %v4578 = vld [vmem:[%s4482 + $0x2f8] sm:$0xff]
        %4579 = vmatprep.subr.mxu0 %v4484
        %4580 = vmatpush1.msra.mxu0 %v4483
        %4581 = vmatprep.subr.mxu0 %v4486
        %4582 = vmatpush1.msra.mxu0 %v4485
        %4583 = vmatprep.subr.mxu0 %v4488
        %4584 = vmatpush1.msra.mxu0 %v4487
        %4585 = vmatprep.subr.mxu0 %v4490
        %4586 = vmatpush1.msra.mxu0 %v4489
        %4587 = vmatprep.subr.mxu0 %v4492
        %4588 = vmatpush1.msra.mxu0 %v4491
        %4589 = vmatprep.subr.mxu0 %v4494
        %4590 = vmatpush1.msra.mxu0 %v4493
        %4591 = vmatprep.subr.mxu0 %v4496
        %4592 = vmatpush1.msra.mxu0 %v4495
        %4593 = vmatprep.subr.mxu0 %v4498
        %4594 = vmatpush1.msra.mxu0 %v4497
        %4595 = vmatprep.subr.mxu0 %v4500
        %4596 = vmatpush1.msra.mxu0 %v4499
        %4597 = vmatprep.subr.mxu0 %v4502
        %4598 = vmatpush1.msra.mxu0 %v4501
        %4599 = vmatprep.subr.mxu0 %v4504
        %4600 = vmatpush1.msra.mxu0 %v4503
        %4601 = vmatprep.subr.mxu0 %v4506
        %4602 = vmatpush1.msra.mxu0 %v4505
        %4603 = vmatprep.subr.mxu0 %v4508
        %4604 = vmatpush1.msra.mxu0 %v4507
        %4605 = vmatprep.subr.mxu0 %v4510
        %4606 = vmatpush1.msra.mxu0 %v4509
        %4607 = vmatprep.subr.mxu0 %v4512
        %4608 = vmatpush1.msra.mxu0 %v4511
        %4609 = vmatprep.subr.mxu0 %v4514
        %4610 = vmatpush1.msra.mxu0 %v4513
        %4611 = vmatprep.subr.mxu0 %v4516
        %4612 = vmatpush1.msra.mxu0 %v4515
        %4613 = vmatprep.subr.mxu0 %v4518
        %4614 = vmatpush1.msra.mxu0 %v4517
        %4615 = vmatprep.subr.mxu0 %v4520
        %4616 = vmatpush1.msra.mxu0 %v4519
        %4617 = vmatprep.subr.mxu0 %v4522
        %4618 = vmatpush1.msra.mxu0 %v4521
        %4619 = vmatprep.subr.mxu0 %v4524
        %4620 = vmatpush1.msra.mxu0 %v4523
        %4621 = vmatprep.subr.mxu0 %v4526
        %4622 = vmatpush1.msra.mxu0 %v4525
        %4623 = vmatprep.subr.mxu0 %v4528
        %4624 = vmatpush1.msra.mxu0 %v4527
        %4625 = vmatprep.subr.mxu0 %v4530
        %4626 = vmatpush1.msra.mxu0 %v4529
        %4627 = vmatprep.subr.mxu0 %v4532
        %4628 = vmatpush1.msra.mxu0 %v4531
        %4629 = vmatprep.subr.mxu0 %v4534
        %4630 = vmatpush1.msra.mxu0 %v4533
        %4631 = vmatprep.subr.mxu0 %v4536
        %4632 = vmatpush1.msra.mxu0 %v4535
        %4633 = vmatprep.subr.mxu0 %v4538
        %4634 = vmatpush1.msra.mxu0 %v4537
        %4635 = vmatprep.subr.mxu0 %v4540
        %4636 = vmatpush1.msra.mxu0 %v4539
        %4637 = vmatprep.subr.mxu0 %v4542
        %4638 = vmatpush1.msra.mxu0 %v4541
        %4639 = vmatprep.subr.mxu0 %v4544
        %4640 = vmatpush1.msra.mxu0 %v4543
        %4641 = vmatprep.subr.mxu0 %v4546
        %4642 = vmatpush1.msra.mxu0 %v4545
        %4643 = vmatprep.mubr.f32.mxu0 %v4331
        %4644 = vmatmul.mubr.f32.gmra.mrb[0].mxu0 %v4328
        %v4645 = vpop.f32.mrb[0].mxu0
        %v4646 = vadd.f32 0.0, %v4645
        %v4647 = vpop.f32.mrb[0].mxu0
        %v4648 = vadd.f32 0.0, %v4647
        %4649 = vdwg.mxu0
        %4650 = vmatprep.subr.mxu0 %v4548
        %4651 = vmatpush1.msra.mxu0 %v4547
        %4652 = vmatprep.subr.mxu0 %v4550
        %4653 = vmatpush1.msra.mxu0 %v4549
        %4654 = vmatprep.subr.mxu0 %v4552
        %4655 = vmatpush1.msra.mxu0 %v4551
        %4656 = vmatprep.subr.mxu0 %v4554
        %4657 = vmatpush1.msra.mxu0 %v4553
        %4658 = vmatprep.subr.mxu0 %v4556
        %4659 = vmatpush1.msra.mxu0 %v4555
        %4660 = vmatprep.subr.mxu0 %v4558
        %4661 = vmatpush1.msra.mxu0 %v4557
        %4662 = vmatprep.subr.mxu0 %v4560
        %4663 = vmatpush1.msra.mxu0 %v4559
        %4664 = vmatprep.subr.mxu0 %v4562
        %4665 = vmatpush1.msra.mxu0 %v4561
        %4666 = vmatprep.subr.mxu0 %v4564
        %4667 = vmatpush1.msra.mxu0 %v4563
        %4668 = vmatprep.subr.mxu0 %v4566
        %4669 = vmatpush1.msra.mxu0 %v4565
        %4670 = vmatprep.subr.mxu0 %v4568
        %4671 = vmatpush1.msra.mxu0 %v4567
        %4672 = vmatprep.subr.mxu0 %v4570
        %4673 = vmatpush1.msra.mxu0 %v4569
        %4674 = vmatprep.subr.mxu0 %v4572
        %4675 = vmatpush1.msra.mxu0 %v4571
        %4676 = vmatprep.subr.mxu0 %v4574
        %4677 = vmatpush1.msra.mxu0 %v4573
        %4678 = vmatprep.subr.mxu0 %v4576
        %4679 = vmatpush1.msra.mxu0 %v4575
        %4680 = vmatprep.subr.mxu0 %v4578
        %4681 = vmatpush1.msra.mxu0 %v4577
        %4682 = vmatprep.subr.mxu0 0.0
        %4683 = vmatpush1.msra.mxu0 0.0
        %4684 = vmatprep.subr.mxu0 0.0
        %4685 = vmatpush1.msra.mxu0 0.0
        %4686 = vmatprep.subr.mxu0 0.0
        %4687 = vmatpush1.msra.mxu0 0.0
        %4688 = vmatprep.subr.mxu0 0.0
        %4689 = vmatpush1.msra.mxu0 0.0
        %4690 = vmatprep.subr.mxu0 0.0
        %4691 = vmatpush1.msra.mxu0 0.0
        %4692 = vmatprep.subr.mxu0 0.0
        %4693 = vmatpush1.msra.mxu0 0.0
        %4694 = vmatprep.subr.mxu0 0.0
        %4695 = vmatpush1.msra.mxu0 0.0
        %4696 = vmatprep.subr.mxu0 0.0
        %4697 = vmatpush1.msra.mxu0 0.0
        %4698 = vmatprep.subr.mxu0 0.0
        %4699 = vmatpush1.msra.mxu0 0.0
        %4700 = vmatprep.subr.mxu0 0.0
        %4701 = vmatpush1.msra.mxu0 0.0
        %4702 = vmatprep.subr.mxu0 0.0
        %4703 = vmatpush1.msra.mxu0 0.0
        %4704 = vmatprep.subr.mxu0 0.0
        %4705 = vmatpush1.msra.mxu0 0.0
        %4706 = vmatprep.subr.mxu0 0.0
        %4707 = vmatpush1.msra.mxu0 0.0
        %4708 = vmatprep.subr.mxu0 0.0
        %4709 = vmatpush1.msra.mxu0 0.0
        %4710 = vmatprep.subr.mxu0 0.0
        %4711 = vmatpush1.msra.mxu0 0.0
        %4712 = vmatprep.subr.mxu0 0.0
        %4713 = vmatpush1.msra.mxu0 0.0
        %4714 = vmatprep.mubr.f32.mxu0 0.0
        %4715 = vmatmul.mubr.f32.gmra.mrb[0].mxu0 %v4334
        %v4716 = vpop.f32.mrb[0].mxu0
        %v4717 = vadd.f32 %v4646, %v4716
        %v4718 = vpop.f32.mrb[0].mxu0
        %v4719 = vadd.f32 %v4648, %v4718
        %4720 = vdwg.mxu0
        %v4721 = vadd.f32 %v4227, %v4717
        %v4722 = vadd.f32 %v4228, %v4719
        %s4723 = scalar_lea.vmem [#allocation5], 3072
        %v4724 = vld [vmem:[%s4723] sm:$0xff]
        %v4725 = vld [vmem:[%s4723 + $0x8] sm:$0xff]
        %v4726 = vld [vmem:[%s4723 + $0x10] sm:$0xff]
        %v4727 = vld [vmem:[%s4723 + $0x18] sm:$0xff]
        %v4728 = vld [vmem:[%s4723 + $0x20] sm:$0xff]
        %v4729 = vld [vmem:[%s4723 + $0x28] sm:$0xff]
        %v4730 = vld [vmem:[%s4723 + $0x30] sm:$0xff]
        %v4731 = vld [vmem:[%s4723 + $0x38] sm:$0xff]
        %v4732 = vld [vmem:[%s4723 + $0x40] sm:$0xff]
        %v4733 = vld [vmem:[%s4723 + $0x48] sm:$0xff]
        %v4734 = vld [vmem:[%s4723 + $0x50] sm:$0xff]
        %v4735 = vld [vmem:[%s4723 + $0x58] sm:$0xff]
        %v4736 = vld [vmem:[%s4723 + $0x60] sm:$0xff]
        %v4737 = vld [vmem:[%s4723 + $0x68] sm:$0xff]
        %v4738 = vld [vmem:[%s4723 + $0x70] sm:$0xff]
        %v4739 = vld [vmem:[%s4723 + $0x78] sm:$0xff]
        %v4740 = vld [vmem:[%s4723 + $0x80] sm:$0xff]
        %v4741 = vld [vmem:[%s4723 + $0x88] sm:$0xff]
        %v4742 = vld [vmem:[%s4723 + $0x90] sm:$0xff]
        %v4743 = vld [vmem:[%s4723 + $0x98] sm:$0xff]
        %v4744 = vld [vmem:[%s4723 + $0xa0] sm:$0xff]
        %v4745 = vld [vmem:[%s4723 + $0xa8] sm:$0xff]
        %v4746 = vld [vmem:[%s4723 + $0xb0] sm:$0xff]
        %v4747 = vld [vmem:[%s4723 + $0xb8] sm:$0xff]
        %v4748 = vld [vmem:[%s4723 + $0xc0] sm:$0xff]
        %v4749 = vld [vmem:[%s4723 + $0xc8] sm:$0xff]
        %v4750 = vld [vmem:[%s4723 + $0xd0] sm:$0xff]
        %v4751 = vld [vmem:[%s4723 + $0xd8] sm:$0xff]
        %v4752 = vld [vmem:[%s4723 + $0xe0] sm:$0xff]
        %v4753 = vld [vmem:[%s4723 + $0xe8] sm:$0xff]
        %v4754 = vld [vmem:[%s4723 + $0xf0] sm:$0xff]
        %v4755 = vld [vmem:[%s4723 + $0xf8] sm:$0xff]
        %v4756 = vld [vmem:[%s4723 + $0x100] sm:$0xff]
        %v4757 = vld [vmem:[%s4723 + $0x108] sm:$0xff]
        %v4758 = vld [vmem:[%s4723 + $0x110] sm:$0xff]
        %v4759 = vld [vmem:[%s4723 + $0x118] sm:$0xff]
        %v4760 = vld [vmem:[%s4723 + $0x120] sm:$0xff]
        %v4761 = vld [vmem:[%s4723 + $0x128] sm:$0xff]
        %v4762 = vld [vmem:[%s4723 + $0x130] sm:$0xff]
        %v4763 = vld [vmem:[%s4723 + $0x138] sm:$0xff]
        %v4764 = vld [vmem:[%s4723 + $0x140] sm:$0xff]
        %v4765 = vld [vmem:[%s4723 + $0x148] sm:$0xff]
        %v4766 = vld [vmem:[%s4723 + $0x150] sm:$0xff]
        %v4767 = vld [vmem:[%s4723 + $0x158] sm:$0xff]
        %v4768 = vld [vmem:[%s4723 + $0x160] sm:$0xff]
        %v4769 = vld [vmem:[%s4723 + $0x168] sm:$0xff]
        %v4770 = vld [vmem:[%s4723 + $0x170] sm:$0xff]
        %v4771 = vld [vmem:[%s4723 + $0x178] sm:$0xff]
        %v4772 = vld [vmem:[%s4723 + $0x180] sm:$0xff]
        %v4773 = vld [vmem:[%s4723 + $0x188] sm:$0xff]
        %v4774 = vld [vmem:[%s4723 + $0x190] sm:$0xff]
        %v4775 = vld [vmem:[%s4723 + $0x198] sm:$0xff]
        %v4776 = vld [vmem:[%s4723 + $0x1a0] sm:$0xff]
        %v4777 = vld [vmem:[%s4723 + $0x1a8] sm:$0xff]
        %v4778 = vld [vmem:[%s4723 + $0x1b0] sm:$0xff]
        %v4779 = vld [vmem:[%s4723 + $0x1b8] sm:$0xff]
        %v4780 = vld [vmem:[%s4723 + $0x1c0] sm:$0xff]
        %v4781 = vld [vmem:[%s4723 + $0x1c8] sm:$0xff]
        %v4782 = vld [vmem:[%s4723 + $0x1d0] sm:$0xff]
        %v4783 = vld [vmem:[%s4723 + $0x1d8] sm:$0xff]
        %v4784 = vld [vmem:[%s4723 + $0x1e0] sm:$0xff]
        %v4785 = vld [vmem:[%s4723 + $0x1e8] sm:$0xff]
        %v4786 = vld [vmem:[%s4723 + $0x1f0] sm:$0xff]
        %v4787 = vld [vmem:[%s4723 + $0x1f8] sm:$0xff]
        %v4788 = vld [vmem:[%s4723 + $0x200] sm:$0xff]
        %v4789 = vld [vmem:[%s4723 + $0x208] sm:$0xff]
        %v4790 = vld [vmem:[%s4723 + $0x210] sm:$0xff]
        %v4791 = vld [vmem:[%s4723 + $0x218] sm:$0xff]
        %v4792 = vld [vmem:[%s4723 + $0x220] sm:$0xff]
        %v4793 = vld [vmem:[%s4723 + $0x228] sm:$0xff]
        %v4794 = vld [vmem:[%s4723 + $0x230] sm:$0xff]
        %v4795 = vld [vmem:[%s4723 + $0x238] sm:$0xff]
        %v4796 = vld [vmem:[%s4723 + $0x240] sm:$0xff]
        %v4797 = vld [vmem:[%s4723 + $0x248] sm:$0xff]
        %v4798 = vld [vmem:[%s4723 + $0x250] sm:$0xff]
        %v4799 = vld [vmem:[%s4723 + $0x258] sm:$0xff]
        %v4800 = vld [vmem:[%s4723 + $0x260] sm:$0xff]
        %v4801 = vld [vmem:[%s4723 + $0x268] sm:$0xff]
        %v4802 = vld [vmem:[%s4723 + $0x270] sm:$0xff]
        %v4803 = vld [vmem:[%s4723 + $0x278] sm:$0xff]
        %v4804 = vld [vmem:[%s4723 + $0x280] sm:$0xff]
        %v4805 = vld [vmem:[%s4723 + $0x288] sm:$0xff]
        %v4806 = vld [vmem:[%s4723 + $0x290] sm:$0xff]
        %v4807 = vld [vmem:[%s4723 + $0x298] sm:$0xff]
        %v4808 = vld [vmem:[%s4723 + $0x2a0] sm:$0xff]
        %v4809 = vld [vmem:[%s4723 + $0x2a8] sm:$0xff]
        %v4810 = vld [vmem:[%s4723 + $0x2b0] sm:$0xff]
        %v4811 = vld [vmem:[%s4723 + $0x2b8] sm:$0xff]
        %v4812 = vld [vmem:[%s4723 + $0x2c0] sm:$0xff]
        %v4813 = vld [vmem:[%s4723 + $0x2c8] sm:$0xff]
        %v4814 = vld [vmem:[%s4723 + $0x2d0] sm:$0xff]
        %v4815 = vld [vmem:[%s4723 + $0x2d8] sm:$0xff]
        %v4816 = vld [vmem:[%s4723 + $0x2e0] sm:$0xff]
        %v4817 = vld [vmem:[%s4723 + $0x2e8] sm:$0xff]
        %v4818 = vld [vmem:[%s4723 + $0x2f0] sm:$0xff]
        %v4819 = vld [vmem:[%s4723 + $0x2f8] sm:$0xff]
        %v4820 = vrot.slane %v2756, 4
        %v4821 = vrot.slane %v2759, 4
        %v4822 = vsel %vm471, %v4820, %v4821
        %v4823 = vrot.slane %v2757, 4
        %v4824 = vrot.slane %v2760, 4
        %v4825 = vsel %vm471, %v4823, %v4824
        %v4826 = vrot.slane %v2758, 4
        %v4827 = vrot.slane %v2761, 4
        %v4828 = vsel %vm471, %v4826, %v4827
        %4832 = vmatprep.subr.mxu0 %v4725
        %4833 = vmatpush1.msra.mxu0 %v4724
        %4834 = vmatprep.subr.mxu0 %v4727
        %4835 = vmatpush1.msra.mxu0 %v4726
        %4836 = vmatprep.subr.mxu0 %v4729
        %4837 = vmatpush1.msra.mxu0 %v4728
        %4838 = vmatprep.subr.mxu0 %v4731
        %4839 = vmatpush1.msra.mxu0 %v4730
        %4840 = vmatprep.subr.mxu0 %v4733
        %4841 = vmatpush1.msra.mxu0 %v4732
        %4842 = vmatprep.subr.mxu0 %v4735
        %4843 = vmatpush1.msra.mxu0 %v4734
        %4844 = vmatprep.subr.mxu0 %v4737
        %4845 = vmatpush1.msra.mxu0 %v4736
        %4846 = vmatprep.subr.mxu0 %v4739
        %4847 = vmatpush1.msra.mxu0 %v4738
        %4848 = vmatprep.subr.mxu0 %v4741
        %4849 = vmatpush1.msra.mxu0 %v4740
        %4850 = vmatprep.subr.mxu0 %v4743
        %4851 = vmatpush1.msra.mxu0 %v4742
        %4852 = vmatprep.subr.mxu0 %v4745
        %4853 = vmatpush1.msra.mxu0 %v4744
        %4854 = vmatprep.subr.mxu0 %v4747
        %4855 = vmatpush1.msra.mxu0 %v4746
        %4856 = vmatprep.subr.mxu0 %v4749
        %4857 = vmatpush1.msra.mxu0 %v4748
        %4858 = vmatprep.subr.mxu0 %v4751
        %4859 = vmatpush1.msra.mxu0 %v4750
        %4860 = vmatprep.subr.mxu0 %v4753
        %4861 = vmatpush1.msra.mxu0 %v4752
        %4862 = vmatprep.subr.mxu0 %v4755
        %4863 = vmatpush1.msra.mxu0 %v4754
        %4864 = vmatprep.subr.mxu0 %v4757
        %4865 = vmatpush1.msra.mxu0 %v4756
        %4866 = vmatprep.subr.mxu0 %v4759
        %4867 = vmatpush1.msra.mxu0 %v4758
        %4868 = vmatprep.subr.mxu0 %v4761
        %4869 = vmatpush1.msra.mxu0 %v4760
        %4870 = vmatprep.subr.mxu0 %v4763
        %4871 = vmatpush1.msra.mxu0 %v4762
        %4872 = vmatprep.subr.mxu0 %v4765
        %4873 = vmatpush1.msra.mxu0 %v4764
        %4874 = vmatprep.subr.mxu0 %v4767
        %4875 = vmatpush1.msra.mxu0 %v4766
        %4876 = vmatprep.subr.mxu0 %v4769
        %4877 = vmatpush1.msra.mxu0 %v4768
        %4878 = vmatprep.subr.mxu0 %v4771
        %4879 = vmatpush1.msra.mxu0 %v4770
        %4880 = vmatprep.subr.mxu0 %v4773
        %4881 = vmatpush1.msra.mxu0 %v4772
        %4882 = vmatprep.subr.mxu0 %v4775
        %4883 = vmatpush1.msra.mxu0 %v4774
        %4884 = vmatprep.subr.mxu0 %v4777
        %4885 = vmatpush1.msra.mxu0 %v4776
        %4886 = vmatprep.subr.mxu0 %v4779
        %4887 = vmatpush1.msra.mxu0 %v4778
        %4888 = vmatprep.subr.mxu0 %v4781
        %4889 = vmatpush1.msra.mxu0 %v4780
        %4890 = vmatprep.subr.mxu0 %v4783
        %4891 = vmatpush1.msra.mxu0 %v4782
        %4892 = vmatprep.subr.mxu0 %v4785
        %4893 = vmatpush1.msra.mxu0 %v4784
        %4894 = vmatprep.subr.mxu0 %v4787
        %4895 = vmatpush1.msra.mxu0 %v4786
        %4896 = vmatprep.mubr.f32.mxu0 %v4825
        %4897 = vmatmul.mubr.f32.gmra.mrb[0].mxu0 %v4822
        %v4898 = vpop.f32.mrb[0].mxu0
        %v4899 = vadd.f32 0.0, %v4898
        %v4900 = vpop.f32.mrb[0].mxu0
        %v4901 = vadd.f32 0.0, %v4900
        %4902 = vdwg.mxu0
        %4903 = vmatprep.subr.mxu0 %v4789
        %4904 = vmatpush1.msra.mxu0 %v4788
        %4905 = vmatprep.subr.mxu0 %v4791
        %4906 = vmatpush1.msra.mxu0 %v4790
        %4907 = vmatprep.subr.mxu0 %v4793
        %4908 = vmatpush1.msra.mxu0 %v4792
        %4909 = vmatprep.subr.mxu0 %v4795
        %4910 = vmatpush1.msra.mxu0 %v4794
        %4911 = vmatprep.subr.mxu0 %v4797
        %4912 = vmatpush1.msra.mxu0 %v4796
        %4913 = vmatprep.subr.mxu0 %v4799
        %4914 = vmatpush1.msra.mxu0 %v4798
        %4915 = vmatprep.subr.mxu0 %v4801
        %4916 = vmatpush1.msra.mxu0 %v4800
        %4917 = vmatprep.subr.mxu0 %v4803
        %4918 = vmatpush1.msra.mxu0 %v4802
        %4919 = vmatprep.subr.mxu0 %v4805
        %4920 = vmatpush1.msra.mxu0 %v4804
        %4921 = vmatprep.subr.mxu0 %v4807
        %4922 = vmatpush1.msra.mxu0 %v4806
        %4923 = vmatprep.subr.mxu0 %v4809
        %4924 = vmatpush1.msra.mxu0 %v4808
        %4925 = vmatprep.subr.mxu0 %v4811
        %4926 = vmatpush1.msra.mxu0 %v4810
        %4927 = vmatprep.subr.mxu0 %v4813
        %4928 = vmatpush1.msra.mxu0 %v4812
        %4929 = vmatprep.subr.mxu0 %v4815
        %4930 = vmatpush1.msra.mxu0 %v4814
        %4931 = vmatprep.subr.mxu0 %v4817
        %4932 = vmatpush1.msra.mxu0 %v4816
        %4933 = vmatprep.subr.mxu0 %v4819
        %4934 = vmatpush1.msra.mxu0 %v4818
        %4935 = vmatprep.subr.mxu0 0.0
        %4936 = vmatpush1.msra.mxu0 0.0
        %4937 = vmatprep.subr.mxu0 0.0
        %4938 = vmatpush1.msra.mxu0 0.0
        %4939 = vmatprep.subr.mxu0 0.0
        %4940 = vmatpush1.msra.mxu0 0.0
        %4941 = vmatprep.subr.mxu0 0.0
        %4942 = vmatpush1.msra.mxu0 0.0
        %4943 = vmatprep.subr.mxu0 0.0
        %4944 = vmatpush1.msra.mxu0 0.0
        %4945 = vmatprep.subr.mxu0 0.0
        %4946 = vmatpush1.msra.mxu0 0.0
        %4947 = vmatprep.subr.mxu0 0.0
        %4948 = vmatpush1.msra.mxu0 0.0
        %4949 = vmatprep.subr.mxu0 0.0
        %4950 = vmatpush1.msra.mxu0 0.0
        %4951 = vmatprep.subr.mxu0 0.0
        %4952 = vmatpush1.msra.mxu0 0.0
        %4953 = vmatprep.subr.mxu0 0.0
        %4954 = vmatpush1.msra.mxu0 0.0
        %4955 = vmatprep.subr.mxu0 0.0
        %4956 = vmatpush1.msra.mxu0 0.0
        %4957 = vmatprep.subr.mxu0 0.0
        %4958 = vmatpush1.msra.mxu0 0.0
        %4959 = vmatprep.subr.mxu0 0.0
        %4960 = vmatpush1.msra.mxu0 0.0
        %4961 = vmatprep.subr.mxu0 0.0
        %4962 = vmatpush1.msra.mxu0 0.0
        %4963 = vmatprep.subr.mxu0 0.0
        %4964 = vmatpush1.msra.mxu0 0.0
        %4965 = vmatprep.subr.mxu0 0.0
        %4966 = vmatpush1.msra.mxu0 0.0
        %4967 = vmatprep.mubr.f32.mxu0 0.0
        %4968 = vmatmul.mubr.f32.gmra.mrb[0].mxu0 %v4828
        %v4969 = vpop.f32.mrb[0].mxu0
        %v4970 = vadd.f32 %v4899, %v4969
        %v4971 = vpop.f32.mrb[0].mxu0
        %v4972 = vadd.f32 %v4901, %v4971
        %4973 = vdwg.mxu0
        %v4974 = vadd.f32 %v4480, %v4970
        %v4975 = vadd.f32 %v4481, %v4972
        %s4976 = scalar_lea.vmem [#allocation5], 6912
        %v4977 = vld [vmem:[%s4976] sm:$0xff]
        %v4978 = vld [vmem:[%s4976 + $0x8] sm:$0xff]
        %v4979 = vld [vmem:[%s4976 + $0x10] sm:$0xff]
        %v4980 = vld [vmem:[%s4976 + $0x18] sm:$0xff]
        %v4981 = vld [vmem:[%s4976 + $0x20] sm:$0xff]
        %v4982 = vld [vmem:[%s4976 + $0x28] sm:$0xff]
        %v4983 = vld [vmem:[%s4976 + $0x30] sm:$0xff]
        %v4984 = vld [vmem:[%s4976 + $0x38] sm:$0xff]
        %v4985 = vld [vmem:[%s4976 + $0x40] sm:$0xff]
        %v4986 = vld [vmem:[%s4976 + $0x48] sm:$0xff]
        %v4987 = vld [vmem:[%s4976 + $0x50] sm:$0xff]
        %v4988 = vld [vmem:[%s4976 + $0x58] sm:$0xff]
        %v4989 = vld [vmem:[%s4976 + $0x60] sm:$0xff]
        %v4990 = vld [vmem:[%s4976 + $0x68] sm:$0xff]
        %v4991 = vld [vmem:[%s4976 + $0x70] sm:$0xff]
        %v4992 = vld [vmem:[%s4976 + $0x78] sm:$0xff]
        %v4993 = vld [vmem:[%s4976 + $0x80] sm:$0xff]
        %v4994 = vld [vmem:[%s4976 + $0x88] sm:$0xff]
        %v4995 = vld [vmem:[%s4976 + $0x90] sm:$0xff]
        %v4996 = vld [vmem:[%s4976 + $0x98] sm:$0xff]
        %v4997 = vld [vmem:[%s4976 + $0xa0] sm:$0xff]
        %v4998 = vld [vmem:[%s4976 + $0xa8] sm:$0xff]
        %v4999 = vld [vmem:[%s4976 + $0xb0] sm:$0xff]
        %v5000 = vld [vmem:[%s4976 + $0xb8] sm:$0xff]
        %v5001 = vld [vmem:[%s4976 + $0xc0] sm:$0xff]
        %v5002 = vld [vmem:[%s4976 + $0xc8] sm:$0xff]
        %v5003 = vld [vmem:[%s4976 + $0xd0] sm:$0xff]
        %v5004 = vld [vmem:[%s4976 + $0xd8] sm:$0xff]
        %v5005 = vld [vmem:[%s4976 + $0xe0] sm:$0xff]
        %v5006 = vld [vmem:[%s4976 + $0xe8] sm:$0xff]
        %v5007 = vld [vmem:[%s4976 + $0xf0] sm:$0xff]
        %v5008 = vld [vmem:[%s4976 + $0xf8] sm:$0xff]
        %v5009 = vld [vmem:[%s4976 + $0x100] sm:$0xff]
        %v5010 = vld [vmem:[%s4976 + $0x108] sm:$0xff]
        %v5011 = vld [vmem:[%s4976 + $0x110] sm:$0xff]
        %v5012 = vld [vmem:[%s4976 + $0x118] sm:$0xff]
        %v5013 = vld [vmem:[%s4976 + $0x120] sm:$0xff]
        %v5014 = vld [vmem:[%s4976 + $0x128] sm:$0xff]
        %v5015 = vld [vmem:[%s4976 + $0x130] sm:$0xff]
        %v5016 = vld [vmem:[%s4976 + $0x138] sm:$0xff]
        %v5017 = vld [vmem:[%s4976 + $0x140] sm:$0xff]
        %v5018 = vld [vmem:[%s4976 + $0x148] sm:$0xff]
        %v5019 = vld [vmem:[%s4976 + $0x150] sm:$0xff]
        %v5020 = vld [vmem:[%s4976 + $0x158] sm:$0xff]
        %v5021 = vld [vmem:[%s4976 + $0x160] sm:$0xff]
        %v5022 = vld [vmem:[%s4976 + $0x168] sm:$0xff]
        %v5023 = vld [vmem:[%s4976 + $0x170] sm:$0xff]
        %v5024 = vld [vmem:[%s4976 + $0x178] sm:$0xff]
        %v5025 = vld [vmem:[%s4976 + $0x180] sm:$0xff]
        %v5026 = vld [vmem:[%s4976 + $0x188] sm:$0xff]
        %v5027 = vld [vmem:[%s4976 + $0x190] sm:$0xff]
        %v5028 = vld [vmem:[%s4976 + $0x198] sm:$0xff]
        %v5029 = vld [vmem:[%s4976 + $0x1a0] sm:$0xff]
        %v5030 = vld [vmem:[%s4976 + $0x1a8] sm:$0xff]
        %v5031 = vld [vmem:[%s4976 + $0x1b0] sm:$0xff]
        %v5032 = vld [vmem:[%s4976 + $0x1b8] sm:$0xff]
        %v5033 = vld [vmem:[%s4976 + $0x1c0] sm:$0xff]
        %v5034 = vld [vmem:[%s4976 + $0x1c8] sm:$0xff]
        %v5035 = vld [vmem:[%s4976 + $0x1d0] sm:$0xff]
        %v5036 = vld [vmem:[%s4976 + $0x1d8] sm:$0xff]
        %v5037 = vld [vmem:[%s4976 + $0x1e0] sm:$0xff]
        %v5038 = vld [vmem:[%s4976 + $0x1e8] sm:$0xff]
        %v5039 = vld [vmem:[%s4976 + $0x1f0] sm:$0xff]
        %v5040 = vld [vmem:[%s4976 + $0x1f8] sm:$0xff]
        %v5041 = vld [vmem:[%s4976 + $0x200] sm:$0xff]
        %v5042 = vld [vmem:[%s4976 + $0x208] sm:$0xff]
        %v5043 = vld [vmem:[%s4976 + $0x210] sm:$0xff]
        %v5044 = vld [vmem:[%s4976 + $0x218] sm:$0xff]
        %v5045 = vld [vmem:[%s4976 + $0x220] sm:$0xff]
        %v5046 = vld [vmem:[%s4976 + $0x228] sm:$0xff]
        %v5047 = vld [vmem:[%s4976 + $0x230] sm:$0xff]
        %v5048 = vld [vmem:[%s4976 + $0x238] sm:$0xff]
        %v5049 = vld [vmem:[%s4976 + $0x240] sm:$0xff]
        %v5050 = vld [vmem:[%s4976 + $0x248] sm:$0xff]
        %v5051 = vld [vmem:[%s4976 + $0x250] sm:$0xff]
        %v5052 = vld [vmem:[%s4976 + $0x258] sm:$0xff]
        %v5053 = vld [vmem:[%s4976 + $0x260] sm:$0xff]
        %v5054 = vld [vmem:[%s4976 + $0x268] sm:$0xff]
        %v5055 = vld [vmem:[%s4976 + $0x270] sm:$0xff]
        %v5056 = vld [vmem:[%s4976 + $0x278] sm:$0xff]
        %v5057 = vld [vmem:[%s4976 + $0x280] sm:$0xff]
        %v5058 = vld [vmem:[%s4976 + $0x288] sm:$0xff]
        %v5059 = vld [vmem:[%s4976 + $0x290] sm:$0xff]
        %v5060 = vld [vmem:[%s4976 + $0x298] sm:$0xff]
        %v5061 = vld [vmem:[%s4976 + $0x2a0] sm:$0xff]
        %v5062 = vld [vmem:[%s4976 + $0x2a8] sm:$0xff]
        %v5063 = vld [vmem:[%s4976 + $0x2b0] sm:$0xff]
        %v5064 = vld [vmem:[%s4976 + $0x2b8] sm:$0xff]
        %v5065 = vld [vmem:[%s4976 + $0x2c0] sm:$0xff]
        %v5066 = vld [vmem:[%s4976 + $0x2c8] sm:$0xff]
        %v5067 = vld [vmem:[%s4976 + $0x2d0] sm:$0xff]
        %v5068 = vld [vmem:[%s4976 + $0x2d8] sm:$0xff]
        %v5069 = vld [vmem:[%s4976 + $0x2e0] sm:$0xff]
        %v5070 = vld [vmem:[%s4976 + $0x2e8] sm:$0xff]
        %v5071 = vld [vmem:[%s4976 + $0x2f0] sm:$0xff]
        %v5072 = vld [vmem:[%s4976 + $0x2f8] sm:$0xff]
        %5073 = vmatprep.subr.mxu0 %v4978
        %5074 = vmatpush1.msra.mxu0 %v4977
        %5075 = vmatprep.subr.mxu0 %v4980
        %5076 = vmatpush1.msra.mxu0 %v4979
        %5077 = vmatprep.subr.mxu0 %v4982
        %5078 = vmatpush1.msra.mxu0 %v4981
        %5079 = vmatprep.subr.mxu0 %v4984
        %5080 = vmatpush1.msra.mxu0 %v4983
        %5081 = vmatprep.subr.mxu0 %v4986
        %5082 = vmatpush1.msra.mxu0 %v4985
        %5083 = vmatprep.subr.mxu0 %v4988
        %5084 = vmatpush1.msra.mxu0 %v4987
        %5085 = vmatprep.subr.mxu0 %v4990
        %5086 = vmatpush1.msra.mxu0 %v4989
        %5087 = vmatprep.subr.mxu0 %v4992
        %5088 = vmatpush1.msra.mxu0 %v4991
        %5089 = vmatprep.subr.mxu0 %v4994
        %5090 = vmatpush1.msra.mxu0 %v4993
        %5091 = vmatprep.subr.mxu0 %v4996
        %5092 = vmatpush1.msra.mxu0 %v4995
        %5093 = vmatprep.subr.mxu0 %v4998
        %5094 = vmatpush1.msra.mxu0 %v4997
        %5095 = vmatprep.subr.mxu0 %v5000
        %5096 = vmatpush1.msra.mxu0 %v4999
        %5097 = vmatprep.subr.mxu0 %v5002
        %5098 = vmatpush1.msra.mxu0 %v5001
        %5099 = vmatprep.subr.mxu0 %v5004
        %5100 = vmatpush1.msra.mxu0 %v5003
        %5101 = vmatprep.subr.mxu0 %v5006
        %5102 = vmatpush1.msra.mxu0 %v5005
        %5103 = vmatprep.subr.mxu0 %v5008
        %5104 = vmatpush1.msra.mxu0 %v5007
        %5105 = vmatprep.subr.mxu0 %v5010
        %5106 = vmatpush1.msra.mxu0 %v5009
        %5107 = vmatprep.subr.mxu0 %v5012
        %5108 = vmatpush1.msra.mxu0 %v5011
        %5109 = vmatprep.subr.mxu0 %v5014
        %5110 = vmatpush1.msra.mxu0 %v5013
        %5111 = vmatprep.subr.mxu0 %v5016
        %5112 = vmatpush1.msra.mxu0 %v5015
        %5113 = vmatprep.subr.mxu0 %v5018
        %5114 = vmatpush1.msra.mxu0 %v5017
        %5115 = vmatprep.subr.mxu0 %v5020
        %5116 = vmatpush1.msra.mxu0 %v5019
        %5117 = vmatprep.subr.mxu0 %v5022
        %5118 = vmatpush1.msra.mxu0 %v5021
        %5119 = vmatprep.subr.mxu0 %v5024
        %5120 = vmatpush1.msra.mxu0 %v5023
        %5121 = vmatprep.subr.mxu0 %v5026
        %5122 = vmatpush1.msra.mxu0 %v5025
        %5123 = vmatprep.subr.mxu0 %v5028
        %5124 = vmatpush1.msra.mxu0 %v5027
        %5125 = vmatprep.subr.mxu0 %v5030
        %5126 = vmatpush1.msra.mxu0 %v5029
        %5127 = vmatprep.subr.mxu0 %v5032
        %5128 = vmatpush1.msra.mxu0 %v5031
        %5129 = vmatprep.subr.mxu0 %v5034
        %5130 = vmatpush1.msra.mxu0 %v5033
        %5131 = vmatprep.subr.mxu0 %v5036
        %5132 = vmatpush1.msra.mxu0 %v5035
        %5133 = vmatprep.subr.mxu0 %v5038
        %5134 = vmatpush1.msra.mxu0 %v5037
        %5135 = vmatprep.subr.mxu0 %v5040
        %5136 = vmatpush1.msra.mxu0 %v5039
        %5137 = vmatprep.mubr.f32.mxu0 %v4825
        %5138 = vmatmul.mubr.f32.gmra.mrb[0].mxu0 %v4822
        %v5139 = vpop.f32.mrb[0].mxu0
        %v5140 = vadd.f32 0.0, %v5139
        %v5141 = vpop.f32.mrb[0].mxu0
        %v5142 = vadd.f32 0.0, %v5141
        %5143 = vdwg.mxu0
        %5144 = vmatprep.subr.mxu0 %v5042
        %5145 = vmatpush1.msra.mxu0 %v5041
        %5146 = vmatprep.subr.mxu0 %v5044
        %5147 = vmatpush1.msra.mxu0 %v5043
        %5148 = vmatprep.subr.mxu0 %v5046
        %5149 = vmatpush1.msra.mxu0 %v5045
        %5150 = vmatprep.subr.mxu0 %v5048
        %5151 = vmatpush1.msra.mxu0 %v5047
        %5152 = vmatprep.subr.mxu0 %v5050
        %5153 = vmatpush1.msra.mxu0 %v5049
        %5154 = vmatprep.subr.mxu0 %v5052
        %5155 = vmatpush1.msra.mxu0 %v5051
        %5156 = vmatprep.subr.mxu0 %v5054
        %5157 = vmatpush1.msra.mxu0 %v5053
        %5158 = vmatprep.subr.mxu0 %v5056
        %5159 = vmatpush1.msra.mxu0 %v5055
        %5160 = vmatprep.subr.mxu0 %v5058
        %5161 = vmatpush1.msra.mxu0 %v5057
        %5162 = vmatprep.subr.mxu0 %v5060
        %5163 = vmatpush1.msra.mxu0 %v5059
        %5164 = vmatprep.subr.mxu0 %v5062
        %5165 = vmatpush1.msra.mxu0 %v5061
        %5166 = vmatprep.subr.mxu0 %v5064
        %5167 = vmatpush1.msra.mxu0 %v5063
        %5168 = vmatprep.subr.mxu0 %v5066
        %5169 = vmatpush1.msra.mxu0 %v5065
        %5170 = vmatprep.subr.mxu0 %v5068
        %5171 = vmatpush1.msra.mxu0 %v5067
        %5172 = vmatprep.subr.mxu0 %v5070
        %5173 = vmatpush1.msra.mxu0 %v5069
        %5174 = vmatprep.subr.mxu0 %v5072
        %5175 = vmatpush1.msra.mxu0 %v5071
        %5176 = vmatprep.subr.mxu0 0.0
        %5177 = vmatpush1.msra.mxu0 0.0
        %5178 = vmatprep.subr.mxu0 0.0
        %5179 = vmatpush1.msra.mxu0 0.0
        %5180 = vmatprep.subr.mxu0 0.0
        %5181 = vmatpush1.msra.mxu0 0.0
        %5182 = vmatprep.subr.mxu0 0.0
        %5183 = vmatpush1.msra.mxu0 0.0
        %5184 = vmatprep.subr.mxu0 0.0
        %5185 = vmatpush1.msra.mxu0 0.0
        %5186 = vmatprep.subr.mxu0 0.0
        %5187 = vmatpush1.msra.mxu0 0.0
        %5188 = vmatprep.subr.mxu0 0.0
        %5189 = vmatpush1.msra.mxu0 0.0
        %5190 = vmatprep.subr.mxu0 0.0
        %5191 = vmatpush1.msra.mxu0 0.0
        %5192 = vmatprep.subr.mxu0 0.0
        %5193 = vmatpush1.msra.mxu0 0.0
        %5194 = vmatprep.subr.mxu0 0.0
        %5195 = vmatpush1.msra.mxu0 0.0
        %5196 = vmatprep.subr.mxu0 0.0
        %5197 = vmatpush1.msra.mxu0 0.0
        %5198 = vmatprep.subr.mxu0 0.0
        %5199 = vmatpush1.msra.mxu0 0.0
        %5200 = vmatprep.subr.mxu0 0.0
        %5201 = vmatpush1.msra.mxu0 0.0
        %5202 = vmatprep.subr.mxu0 0.0
        %5203 = vmatpush1.msra.mxu0 0.0
        %5204 = vmatprep.subr.mxu0 0.0
        %5205 = vmatpush1.msra.mxu0 0.0
        %5206 = vmatprep.subr.mxu0 0.0
        %5207 = vmatpush1.msra.mxu0 0.0
        %5208 = vmatprep.mubr.f32.mxu0 0.0
        %5209 = vmatmul.mubr.f32.gmra.mrb[0].mxu0 %v4828
        %v5210 = vpop.f32.mrb[0].mxu0
        %v5211 = vadd.f32 %v5140, %v5210
        %v5212 = vpop.f32.mrb[0].mxu0
        %v5213 = vadd.f32 %v5142, %v5212
        %5214 = vdwg.mxu0
        %v5215 = vadd.f32 %v4721, %v5211
        %v5216 = vadd.f32 %v4722, %v5213
        %v5217 = vmax.f32 %v4974, %v5215
        %v5218 = vmax.f32 %v4975, %v5216
        %vm5219 = vcmask 64512
        %v5220 = vsel %vm5219, %v2402, 0
        %5222 = vmatprep.subr.mxu0 %v5218
        %5223 = vmatpush1.msra.mxu0 %v5217
        %5224 = vmatprep.subr.mxu0 0.0
        %5225 = vmatpush1.msra.mxu0 0.0
        %5226 = vmatprep.subr.mxu0 0.0
        %5227 = vmatpush1.msra.mxu0 0.0
        %5228 = vmatprep.subr.mxu0 0.0
        %5229 = vmatpush1.msra.mxu0 0.0
        %5230 = vmatprep.subr.mxu0 0.0
        %5231 = vmatpush1.msra.mxu0 0.0
        %5232 = vmatprep.subr.mxu0 0.0
        %5233 = vmatpush1.msra.mxu0 0.0
        %5234 = vmatprep.subr.mxu0 0.0
        %5235 = vmatpush1.msra.mxu0 0.0
        %5236 = vmatprep.subr.mxu0 0.0
        %5237 = vmatpush1.msra.mxu0 0.0
        %5238 = vmatprep.subr.mxu0 0.0
        %5239 = vmatpush1.msra.mxu0 0.0
        %5240 = vmatprep.subr.mxu0 0.0
        %5241 = vmatpush1.msra.mxu0 0.0
        %5242 = vmatprep.subr.mxu0 0.0
        %5243 = vmatpush1.msra.mxu0 0.0
        %5244 = vmatprep.subr.mxu0 0.0
        %5245 = vmatpush1.msra.mxu0 0.0
        %5246 = vmatprep.subr.mxu0 0.0
        %5247 = vmatpush1.msra.mxu0 0.0
        %5248 = vmatprep.subr.mxu0 0.0
        %5249 = vmatpush1.msra.mxu0 0.0
        %5250 = vmatprep.subr.mxu0 0.0
        %5251 = vmatpush1.msra.mxu0 0.0
        %5252 = vmatprep.subr.mxu0 0.0
        %5253 = vmatpush1.msra.mxu0 0.0
        %5254 = vmatprep.subr.mxu0 0.0
        %5255 = vmatpush1.msra.mxu0 0.0
        %5256 = vmatprep.subr.mxu0 0.0
        %5257 = vmatpush1.msra.mxu0 0.0
        %5258 = vmatprep.subr.mxu0 0.0
        %5259 = vmatpush1.msra.mxu0 0.0
        %5260 = vmatprep.subr.mxu0 0.0
        %5261 = vmatpush1.msra.mxu0 0.0
        %5262 = vmatprep.subr.mxu0 0.0
        %5263 = vmatpush1.msra.mxu0 0.0
        %5264 = vmatprep.subr.mxu0 0.0
        %5265 = vmatpush1.msra.mxu0 0.0
        %5266 = vmatprep.subr.mxu0 0.0
        %5267 = vmatpush1.msra.mxu0 0.0
        %5268 = vmatprep.subr.mxu0 0.0
        %5269 = vmatpush1.msra.mxu0 0.0
        %5270 = vmatprep.subr.mxu0 0.0
        %5271 = vmatpush1.msra.mxu0 0.0
        %5272 = vmatprep.subr.mxu0 0.0
        %5273 = vmatpush1.msra.mxu0 0.0
        %5274 = vmatprep.subr.mxu0 0.0
        %5275 = vmatpush1.msra.mxu0 0.0
        %5276 = vmatprep.subr.mxu0 0.0
        %5277 = vmatpush1.msra.mxu0 0.0
        %5278 = vmatprep.subr.mxu0 0.0
        %5279 = vmatpush1.msra.mxu0 0.0
        %5280 = vmatprep.subr.mxu0 0.0
        %5281 = vmatpush1.msra.mxu0 0.0
        %5282 = vmatprep.subr.mxu0 0.0
        %5283 = vmatpush1.msra.mxu0 0.0
        %5284 = vmatprep.subr.mxu0 0.0
        %5285 = vmatpush1.msra.mxu0 0.0
        %5286 = vmatprep.mubr.f32.mxu0 0.0
        %5287 = vmatmul.mubr.f32.gmra.mrb[0].mxu0 %v5220
        %v5288 = vpop.f32.mrb[0].mxu0
        %v5289 = vadd.f32 0.0, %v5288
        %v5290 = vpop.f32.mrb[0].mxu0
        %v5291 = vadd.f32 0.0, %v5290
        %5292 = vdwg.mxu0
        %v5293 = vsel %vm5219, %v2567, 0
        %5295 = vmatprep.subr.mxu0 %v5218
        %5296 = vmatpush1.msra.mxu0 %v5217
        %5297 = vmatprep.subr.mxu0 0.0
        %5298 = vmatpush1.msra.mxu0 0.0
        %5299 = vmatprep.subr.mxu0 0.0
        %5300 = vmatpush1.msra.mxu0 0.0
        %5301 = vmatprep.subr.mxu0 0.0
        %5302 = vmatpush1.msra.mxu0 0.0
        %5303 = vmatprep.subr.mxu0 0.0
        %5304 = vmatpush1.msra.mxu0 0.0
        %5305 = vmatprep.subr.mxu0 0.0
        %5306 = vmatpush1.msra.mxu0 0.0
        %5307 = vmatprep.subr.mxu0 0.0
        %5308 = vmatpush1.msra.mxu0 0.0
        %5309 = vmatprep.subr.mxu0 0.0
        %5310 = vmatpush1.msra.mxu0 0.0
        %5311 = vmatprep.subr.mxu0 0.0
        %5312 = vmatpush1.msra.mxu0 0.0
        %5313 = vmatprep.subr.mxu0 0.0
        %5314 = vmatpush1.msra.mxu0 0.0
        %5315 = vmatprep.subr.mxu0 0.0
        %5316 = vmatpush1.msra.mxu0 0.0
        %5317 = vmatprep.subr.mxu0 0.0
        %5318 = vmatpush1.msra.mxu0 0.0
        %5319 = vmatprep.subr.mxu0 0.0
        %5320 = vmatpush1.msra.mxu0 0.0
        %5321 = vmatprep.subr.mxu0 0.0
        %5322 = vmatpush1.msra.mxu0 0.0
        %5323 = vmatprep.subr.mxu0 0.0
        %5324 = vmatpush1.msra.mxu0 0.0
        %5325 = vmatprep.subr.mxu0 0.0
        %5326 = vmatpush1.msra.mxu0 0.0
        %5327 = vmatprep.subr.mxu0 0.0
        %5328 = vmatpush1.msra.mxu0 0.0
        %5329 = vmatprep.subr.mxu0 0.0
        %5330 = vmatpush1.msra.mxu0 0.0
        %5331 = vmatprep.subr.mxu0 0.0
        %5332 = vmatpush1.msra.mxu0 0.0
        %5333 = vmatprep.subr.mxu0 0.0
        %5334 = vmatpush1.msra.mxu0 0.0
        %5335 = vmatprep.subr.mxu0 0.0
        %5336 = vmatpush1.msra.mxu0 0.0
        %5337 = vmatprep.subr.mxu0 0.0
        %5338 = vmatpush1.msra.mxu0 0.0
        %5339 = vmatprep.subr.mxu0 0.0
        %5340 = vmatpush1.msra.mxu0 0.0
        %5341 = vmatprep.subr.mxu0 0.0
        %5342 = vmatpush1.msra.mxu0 0.0
        %5343 = vmatprep.subr.mxu0 0.0
        %5344 = vmatpush1.msra.mxu0 0.0
        %5345 = vmatprep.subr.mxu0 0.0
        %5346 = vmatpush1.msra.mxu0 0.0
        %5347 = vmatprep.subr.mxu0 0.0
        %5348 = vmatpush1.msra.mxu0 0.0
        %5349 = vmatprep.subr.mxu0 0.0
        %5350 = vmatpush1.msra.mxu0 0.0
        %5351 = vmatprep.subr.mxu0 0.0
        %5352 = vmatpush1.msra.mxu0 0.0
        %5353 = vmatprep.subr.mxu0 0.0
        %5354 = vmatpush1.msra.mxu0 0.0
        %5355 = vmatprep.subr.mxu0 0.0
        %5356 = vmatpush1.msra.mxu0 0.0
        %5357 = vmatprep.subr.mxu0 0.0
        %5358 = vmatpush1.msra.mxu0 0.0
        %5359 = vmatprep.mubr.f32.mxu0 0.0
        %5360 = vmatmul.mubr.f32.gmra.mrb[0].mxu0 %v5293
        %v5361 = vpop.f32.mrb[0].mxu0
        %v5362 = vadd.f32 0.0, %v5361
        %v5363 = vpop.f32.mrb[0].mxu0
        %v5364 = vadd.f32 0.0, %v5363
        %5365 = vdwg.mxu0
        %v5366 = vmax.f32 %v5289, %v5362
        %v5367 = vmax.f32 %v5291, %v5364
        %v5368 = vld [vmem:[#allocation7] sm:$0x3]
        %v5370 = vlaneseq
        %v5371 = vshrl.u32 %v5370, 7
        %v5372 = vsub.s32 0, %v5371
        %v5373 = vrot.slane %v5368, %v5372
        %v5374 = vlaneseq
        %v5375 = vshrl.u32 %v5374, 7
        %v5376 = vsub.s32 1, %v5375
        %v5377 = vrot.slane %v5368, %v5376
        %v5380 = vadd.f32 %v5366, %v5373
        %v5381 = vadd.f32 %v5367, %v5377
        %v5382 = vmax.f32 %v5380, 0.0
        %v5383 = vmax.f32 %v5381, 0.0
        %v5384 = vld [vmem:[#allocation8] sm:$0x1]
        %v5385 = vld [vmem:[%s5] sm:$0xff]
        %v5386 = vld [vmem:[%s5 + $0x8] sm:$0xff]
        %v5387 = vld [vmem:[%s5 + $0x10] sm:$0xff]
        %v5388 = vld [vmem:[%s5 + $0x18] sm:$0xff]
        %v5389 = vld [vmem:[%s5 + $0x20] sm:$0xff]
        %v5390 = vld [vmem:[%s5 + $0x28] sm:$0xff]
        %v5391 = vld [vmem:[%s5 + $0x30] sm:$0xff]
        %v5392 = vld [vmem:[%s5 + $0x38] sm:$0xff]
        %v5393 = vld [vmem:[%s5 + $0x40] sm:$0xff]
        %v5394 = vld [vmem:[%s5 + $0x48] sm:$0xff]
        %v5395 = vld [vmem:[%s5 + $0x50] sm:$0xff]
        %v5396 = vld [vmem:[%s5 + $0x58] sm:$0xff]
        %v5397 = vld [vmem:[%s5 + $0x60] sm:$0xff]
        %v5398 = vld [vmem:[%s5 + $0x68] sm:$0xff]
        %v5399 = vld [vmem:[%s5 + $0x70] sm:$0xff]
        %v5400 = vld [vmem:[%s5 + $0x78] sm:$0xff]
        %v5401 = vld [vmem:[%s5 + $0x80] sm:$0xff]
        %v5402 = vld [vmem:[%s5 + $0x88] sm:$0xff]
        %v5403 = vld [vmem:[%s5 + $0x90] sm:$0xff]
        %v5404 = vld [vmem:[%s5 + $0x98] sm:$0xff]
        %v5405 = vld [vmem:[%s5 + $0xa0] sm:$0xff]
        %v5406 = vld [vmem:[%s5 + $0xa8] sm:$0xff]
        %v5407 = vld [vmem:[%s5 + $0xb0] sm:$0xff]
        %v5408 = vld [vmem:[%s5 + $0xb8] sm:$0xff]
        %v5409 = vld [vmem:[%s5 + $0xc0] sm:$0xff]
        %v5410 = vld [vmem:[%s5 + $0xc8] sm:$0xff]
        %v5411 = vld [vmem:[%s5 + $0xd0] sm:$0xff]
        %v5412 = vld [vmem:[%s5 + $0xd8] sm:$0xff]
        %v5413 = vld [vmem:[%s5 + $0xe0] sm:$0xff]
        %v5414 = vld [vmem:[%s5 + $0xe8] sm:$0xff]
        %v5415 = vld [vmem:[%s5 + $0xf0] sm:$0xff]
        %v5416 = vld [vmem:[%s5 + $0xf8] sm:$0xff]
        %5417 = vmatprep.subr.mxu0 0.0
        %5418 = vmatpush1.msra.mxu0 %v5385
        %5419 = vmatprep.subr.mxu0 0.0
        %5420 = vmatpush1.msra.mxu0 %v5386
        %5421 = vmatprep.subr.mxu0 0.0
        %5422 = vmatpush1.msra.mxu0 %v5387
        %5423 = vmatprep.subr.mxu0 0.0
        %5424 = vmatpush1.msra.mxu0 %v5388
        %5425 = vmatprep.subr.mxu0 0.0
        %5426 = vmatpush1.msra.mxu0 %v5389
        %5427 = vmatprep.subr.mxu0 0.0
        %5428 = vmatpush1.msra.mxu0 %v5390
        %5429 = vmatprep.subr.mxu0 0.0
        %5430 = vmatpush1.msra.mxu0 %v5391
        %5431 = vmatprep.subr.mxu0 0.0
        %5432 = vmatpush1.msra.mxu0 %v5392
        %5433 = vmatprep.subr.mxu0 0.0
        %5434 = vmatpush1.msra.mxu0 %v5393
        %5435 = vmatprep.subr.mxu0 0.0
        %5436 = vmatpush1.msra.mxu0 %v5394
        %5437 = vmatprep.subr.mxu0 0.0
        %5438 = vmatpush1.msra.mxu0 %v5395
        %5439 = vmatprep.subr.mxu0 0.0
        %5440 = vmatpush1.msra.mxu0 %v5396
        %5441 = vmatprep.subr.mxu0 0.0
        %5442 = vmatpush1.msra.mxu0 %v5397
        %5443 = vmatprep.subr.mxu0 0.0
        %5444 = vmatpush1.msra.mxu0 %v5398
        %5445 = vmatprep.subr.mxu0 0.0
        %5446 = vmatpush1.msra.mxu0 %v5399
        %5447 = vmatprep.subr.mxu0 0.0
        %5448 = vmatpush1.msra.mxu0 %v5400
        %5449 = vmatprep.subr.mxu0 0.0
        %5450 = vmatpush1.msra.mxu0 %v5401
        %5451 = vmatprep.subr.mxu0 0.0
        %5452 = vmatpush1.msra.mxu0 %v5402
        %5453 = vmatprep.subr.mxu0 0.0
        %5454 = vmatpush1.msra.mxu0 %v5403
        %5455 = vmatprep.subr.mxu0 0.0
        %5456 = vmatpush1.msra.mxu0 %v5404
        %5457 = vmatprep.subr.mxu0 0.0
        %5458 = vmatpush1.msra.mxu0 %v5405
        %5459 = vmatprep.subr.mxu0 0.0
        %5460 = vmatpush1.msra.mxu0 %v5406
        %5461 = vmatprep.subr.mxu0 0.0
        %5462 = vmatpush1.msra.mxu0 %v5407
        %5463 = vmatprep.subr.mxu0 0.0
        %5464 = vmatpush1.msra.mxu0 %v5408
        %5465 = vmatprep.subr.mxu0 0.0
        %5466 = vmatpush1.msra.mxu0 %v5409
        %5467 = vmatprep.subr.mxu0 0.0
        %5468 = vmatpush1.msra.mxu0 %v5410
        %5469 = vmatprep.subr.mxu0 0.0
        %5470 = vmatpush1.msra.mxu0 %v5411
        %5471 = vmatprep.subr.mxu0 0.0
        %5472 = vmatpush1.msra.mxu0 %v5412
        %5473 = vmatprep.subr.mxu0 0.0
        %5474 = vmatpush1.msra.mxu0 %v5413
        %5475 = vmatprep.subr.mxu0 0.0
        %5476 = vmatpush1.msra.mxu0 %v5414
        %5477 = vmatprep.subr.mxu0 0.0
        %5478 = vmatpush1.msra.mxu0 %v5415
        %5479 = vmatprep.subr.mxu0 0.0
        %5480 = vmatpush1.msra.mxu0 %v5416
        %5481 = vmatprep.mubr.f32.mxu0 %v5383
        %5482 = vmatmul.mubr.f32.gmra.mrb[0].mxu0 %v5382
        %v5483 = vpop.f32.mrb[0].mxu0
        %v5484 = vadd.f32 0.0, %v5483
        %v5485 = vpop.f32.mrb[0].mxu0
        %5486 = vdwg.mxu0
        %v5487 = vadd.f32 %v5384, %v5484
        %s5488 = scalar_lea.vmem %s5, 256
        %v5489 = vld [vmem:[%s5488] sm:$0xff]
        %v5490 = vld [vmem:[%s5488 + $0x8] sm:$0xff]
        %v5491 = vld [vmem:[%s5488 + $0x10] sm:$0xff]
        %v5492 = vld [vmem:[%s5488 + $0x18] sm:$0xff]
        %v5493 = vld [vmem:[%s5488 + $0x20] sm:$0xff]
        %v5494 = vld [vmem:[%s5488 + $0x28] sm:$0xff]
        %v5495 = vld [vmem:[%s5488 + $0x30] sm:$0xff]
        %v5496 = vld [vmem:[%s5488 + $0x38] sm:$0xff]
        %v5497 = vld [vmem:[%s5488 + $0x40] sm:$0xff]
        %v5498 = vld [vmem:[%s5488 + $0x48] sm:$0xff]
        %v5499 = vld [vmem:[%s5488 + $0x50] sm:$0xff]
        %v5500 = vld [vmem:[%s5488 + $0x58] sm:$0xff]
        %v5501 = vld [vmem:[%s5488 + $0x60] sm:$0xff]
        %v5502 = vld [vmem:[%s5488 + $0x68] sm:$0xff]
        %v5503 = vld [vmem:[%s5488 + $0x70] sm:$0xff]
        %v5504 = vld [vmem:[%s5488 + $0x78] sm:$0xff]
        %v5505 = vld [vmem:[%s5488 + $0x80] sm:$0xff]
        %v5506 = vld [vmem:[%s5488 + $0x88] sm:$0xff]
        %v5507 = vld [vmem:[%s5488 + $0x90] sm:$0xff]
        %v5508 = vld [vmem:[%s5488 + $0x98] sm:$0xff]
        %v5509 = vld [vmem:[%s5488 + $0xa0] sm:$0xff]
        %v5510 = vld [vmem:[%s5488 + $0xa8] sm:$0xff]
        %v5511 = vld [vmem:[%s5488 + $0xb0] sm:$0xff]
        %v5512 = vld [vmem:[%s5488 + $0xb8] sm:$0xff]
        %v5513 = vld [vmem:[%s5488 + $0xc0] sm:$0xff]
        %v5514 = vld [vmem:[%s5488 + $0xc8] sm:$0xff]
        %v5515 = vld [vmem:[%s5488 + $0xd0] sm:$0xff]
        %v5516 = vld [vmem:[%s5488 + $0xd8] sm:$0xff]
        %v5517 = vld [vmem:[%s5488 + $0xe0] sm:$0xff]
        %v5518 = vld [vmem:[%s5488 + $0xe8] sm:$0xff]
        %v5519 = vld [vmem:[%s5488 + $0xf0] sm:$0xff]
        %v5520 = vld [vmem:[%s5488 + $0xf8] sm:$0xff]
        %v5523 = vrot.slane %v5382, 1
        %v5524 = vrot.slane %v5383, 1
        %5527 = vmatprep.subr.mxu0 0.0
        %5528 = vmatpush1.msra.mxu0 %v5489
        %5529 = vmatprep.subr.mxu0 0.0
        %5530 = vmatpush1.msra.mxu0 %v5490
        %5531 = vmatprep.subr.mxu0 0.0
        %5532 = vmatpush1.msra.mxu0 %v5491
        %5533 = vmatprep.subr.mxu0 0.0
        %5534 = vmatpush1.msra.mxu0 %v5492
        %5535 = vmatprep.subr.mxu0 0.0
        %5536 = vmatpush1.msra.mxu0 %v5493
        %5537 = vmatprep.subr.mxu0 0.0
        %5538 = vmatpush1.msra.mxu0 %v5494
        %5539 = vmatprep.subr.mxu0 0.0
        %5540 = vmatpush1.msra.mxu0 %v5495
        %5541 = vmatprep.subr.mxu0 0.0
        %5542 = vmatpush1.msra.mxu0 %v5496
        %5543 = vmatprep.subr.mxu0 0.0
        %5544 = vmatpush1.msra.mxu0 %v5497
        %5545 = vmatprep.subr.mxu0 0.0
        %5546 = vmatpush1.msra.mxu0 %v5498
        %5547 = vmatprep.subr.mxu0 0.0
        %5548 = vmatpush1.msra.mxu0 %v5499
        %5549 = vmatprep.subr.mxu0 0.0
        %5550 = vmatpush1.msra.mxu0 %v5500
        %5551 = vmatprep.subr.mxu0 0.0
        %5552 = vmatpush1.msra.mxu0 %v5501
        %5553 = vmatprep.subr.mxu0 0.0
        %5554 = vmatpush1.msra.mxu0 %v5502
        %5555 = vmatprep.subr.mxu0 0.0
        %5556 = vmatpush1.msra.mxu0 %v5503
        %5557 = vmatprep.subr.mxu0 0.0
        %5558 = vmatpush1.msra.mxu0 %v5504
        %5559 = vmatprep.subr.mxu0 0.0
        %5560 = vmatpush1.msra.mxu0 %v5505
        %5561 = vmatprep.subr.mxu0 0.0
        %5562 = vmatpush1.msra.mxu0 %v5506
        %5563 = vmatprep.subr.mxu0 0.0
        %5564 = vmatpush1.msra.mxu0 %v5507
        %5565 = vmatprep.subr.mxu0 0.0
        %5566 = vmatpush1.msra.mxu0 %v5508
        %5567 = vmatprep.subr.mxu0 0.0
        %5568 = vmatpush1.msra.mxu0 %v5509
        %5569 = vmatprep.subr.mxu0 0.0
        %5570 = vmatpush1.msra.mxu0 %v5510
        %5571 = vmatprep.subr.mxu0 0.0
        %5572 = vmatpush1.msra.mxu0 %v5511
        %5573 = vmatprep.subr.mxu0 0.0
        %5574 = vmatpush1.msra.mxu0 %v5512
        %5575 = vmatprep.subr.mxu0 0.0
        %5576 = vmatpush1.msra.mxu0 %v5513
        %5577 = vmatprep.subr.mxu0 0.0
        %5578 = vmatpush1.msra.mxu0 %v5514
        %5579 = vmatprep.subr.mxu0 0.0
        %5580 = vmatpush1.msra.mxu0 %v5515
        %5581 = vmatprep.subr.mxu0 0.0
        %5582 = vmatpush1.msra.mxu0 %v5516
        %5583 = vmatprep.subr.mxu0 0.0
        %5584 = vmatpush1.msra.mxu0 %v5517
        %5585 = vmatprep.subr.mxu0 0.0
        %5586 = vmatpush1.msra.mxu0 %v5518
        %5587 = vmatprep.subr.mxu0 0.0
        %5588 = vmatpush1.msra.mxu0 %v5519
        %5589 = vmatprep.subr.mxu0 0.0
        %5590 = vmatpush1.msra.mxu0 %v5520
        %5591 = vmatprep.mubr.f32.mxu0 %v5524
        %5592 = vmatmul.mubr.f32.gmra.mrb[0].mxu0 %v5523
        %v5593 = vpop.f32.mrb[0].mxu0
        %v5594 = vadd.f32 0.0, %v5593
        %v5595 = vpop.f32.mrb[0].mxu0
        %5596 = vdwg.mxu0
        %v5597 = vadd.f32 %v5487, %v5594
        %s5598 = scalar_lea.vmem %s5, 512
        %v5599 = vld [vmem:[%s5598] sm:$0xff]
        %v5600 = vld [vmem:[%s5598 + $0x8] sm:$0xff]
        %v5601 = vld [vmem:[%s5598 + $0x10] sm:$0xff]
        %v5602 = vld [vmem:[%s5598 + $0x18] sm:$0xff]
        %v5603 = vld [vmem:[%s5598 + $0x20] sm:$0xff]
        %v5604 = vld [vmem:[%s5598 + $0x28] sm:$0xff]
        %v5605 = vld [vmem:[%s5598 + $0x30] sm:$0xff]
        %v5606 = vld [vmem:[%s5598 + $0x38] sm:$0xff]
        %v5607 = vld [vmem:[%s5598 + $0x40] sm:$0xff]
        %v5608 = vld [vmem:[%s5598 + $0x48] sm:$0xff]
        %v5609 = vld [vmem:[%s5598 + $0x50] sm:$0xff]
        %v5610 = vld [vmem:[%s5598 + $0x58] sm:$0xff]
        %v5611 = vld [vmem:[%s5598 + $0x60] sm:$0xff]
        %v5612 = vld [vmem:[%s5598 + $0x68] sm:$0xff]
        %v5613 = vld [vmem:[%s5598 + $0x70] sm:$0xff]
        %v5614 = vld [vmem:[%s5598 + $0x78] sm:$0xff]
        %v5615 = vld [vmem:[%s5598 + $0x80] sm:$0xff]
        %v5616 = vld [vmem:[%s5598 + $0x88] sm:$0xff]
        %v5617 = vld [vmem:[%s5598 + $0x90] sm:$0xff]
        %v5618 = vld [vmem:[%s5598 + $0x98] sm:$0xff]
        %v5619 = vld [vmem:[%s5598 + $0xa0] sm:$0xff]
        %v5620 = vld [vmem:[%s5598 + $0xa8] sm:$0xff]
        %v5621 = vld [vmem:[%s5598 + $0xb0] sm:$0xff]
        %v5622 = vld [vmem:[%s5598 + $0xb8] sm:$0xff]
        %v5623 = vld [vmem:[%s5598 + $0xc0] sm:$0xff]
        %v5624 = vld [vmem:[%s5598 + $0xc8] sm:$0xff]
        %v5625 = vld [vmem:[%s5598 + $0xd0] sm:$0xff]
        %v5626 = vld [vmem:[%s5598 + $0xd8] sm:$0xff]
        %v5627 = vld [vmem:[%s5598 + $0xe0] sm:$0xff]
        %v5628 = vld [vmem:[%s5598 + $0xe8] sm:$0xff]
        %v5629 = vld [vmem:[%s5598 + $0xf0] sm:$0xff]
        %v5630 = vld [vmem:[%s5598 + $0xf8] sm:$0xff]
        %v5631 = vrot.slane %v5382, 2
        %v5632 = vrot.slane %v5383, 2
        %5635 = vmatprep.subr.mxu0 0.0
        %5636 = vmatpush1.msra.mxu0 %v5599
        %5637 = vmatprep.subr.mxu0 0.0
        %5638 = vmatpush1.msra.mxu0 %v5600
        %5639 = vmatprep.subr.mxu0 0.0
        %5640 = vmatpush1.msra.mxu0 %v5601
        %5641 = vmatprep.subr.mxu0 0.0
        %5642 = vmatpush1.msra.mxu0 %v5602
        %5643 = vmatprep.subr.mxu0 0.0
        %5644 = vmatpush1.msra.mxu0 %v5603
        %5645 = vmatprep.subr.mxu0 0.0
        %5646 = vmatpush1.msra.mxu0 %v5604
        %5647 = vmatprep.subr.mxu0 0.0
        %5648 = vmatpush1.msra.mxu0 %v5605
        %5649 = vmatprep.subr.mxu0 0.0
        %5650 = vmatpush1.msra.mxu0 %v5606
        %5651 = vmatprep.subr.mxu0 0.0
        %5652 = vmatpush1.msra.mxu0 %v5607
        %5653 = vmatprep.subr.mxu0 0.0
        %5654 = vmatpush1.msra.mxu0 %v5608
        %5655 = vmatprep.subr.mxu0 0.0
        %5656 = vmatpush1.msra.mxu0 %v5609
        %5657 = vmatprep.subr.mxu0 0.0
        %5658 = vmatpush1.msra.mxu0 %v5610
        %5659 = vmatprep.subr.mxu0 0.0
        %5660 = vmatpush1.msra.mxu0 %v5611
        %5661 = vmatprep.subr.mxu0 0.0
        %5662 = vmatpush1.msra.mxu0 %v5612
        %5663 = vmatprep.subr.mxu0 0.0
        %5664 = vmatpush1.msra.mxu0 %v5613
        %5665 = vmatprep.subr.mxu0 0.0
        %5666 = vmatpush1.msra.mxu0 %v5614
        %5667 = vmatprep.subr.mxu0 0.0
        %5668 = vmatpush1.msra.mxu0 %v5615
        %5669 = vmatprep.subr.mxu0 0.0
        %5670 = vmatpush1.msra.mxu0 %v5616
        %5671 = vmatprep.subr.mxu0 0.0
        %5672 = vmatpush1.msra.mxu0 %v5617
        %5673 = vmatprep.subr.mxu0 0.0
        %5674 = vmatpush1.msra.mxu0 %v5618
        %5675 = vmatprep.subr.mxu0 0.0
        %5676 = vmatpush1.msra.mxu0 %v5619
        %5677 = vmatprep.subr.mxu0 0.0
        %5678 = vmatpush1.msra.mxu0 %v5620
        %5679 = vmatprep.subr.mxu0 0.0
        %5680 = vmatpush1.msra.mxu0 %v5621
        %5681 = vmatprep.subr.mxu0 0.0
        %5682 = vmatpush1.msra.mxu0 %v5622
        %5683 = vmatprep.subr.mxu0 0.0
        %5684 = vmatpush1.msra.mxu0 %v5623
        %5685 = vmatprep.subr.mxu0 0.0
        %5686 = vmatpush1.msra.mxu0 %v5624
        %5687 = vmatprep.subr.mxu0 0.0
        %5688 = vmatpush1.msra.mxu0 %v5625
        %5689 = vmatprep.subr.mxu0 0.0
        %5690 = vmatpush1.msra.mxu0 %v5626
        %5691 = vmatprep.subr.mxu0 0.0
        %5692 = vmatpush1.msra.mxu0 %v5627
        %5693 = vmatprep.subr.mxu0 0.0
        %5694 = vmatpush1.msra.mxu0 %v5628
        %5695 = vmatprep.subr.mxu0 0.0
        %5696 = vmatpush1.msra.mxu0 %v5629
        %5697 = vmatprep.subr.mxu0 0.0
        %5698 = vmatpush1.msra.mxu0 %v5630
        %5699 = vmatprep.mubr.f32.mxu0 %v5632
        %5700 = vmatmul.mubr.f32.gmra.mrb[0].mxu0 %v5631
        %v5701 = vpop.f32.mrb[0].mxu0
        %v5702 = vadd.f32 0.0, %v5701
        %v5703 = vpop.f32.mrb[0].mxu0
        %5704 = vdwg.mxu0
        %v5705 = vadd.f32 %v5597, %v5702
        %s5706 = scalar_lea.vmem %s5, 768
        %v5707 = vld [vmem:[%s5706] sm:$0xff]
        %v5708 = vld [vmem:[%s5706 + $0x8] sm:$0xff]
        %v5709 = vld [vmem:[%s5706 + $0x10] sm:$0xff]
        %v5710 = vld [vmem:[%s5706 + $0x18] sm:$0xff]
        %v5711 = vld [vmem:[%s5706 + $0x20] sm:$0xff]
        %v5712 = vld [vmem:[%s5706 + $0x28] sm:$0xff]
        %v5713 = vld [vmem:[%s5706 + $0x30] sm:$0xff]
        %v5714 = vld [vmem:[%s5706 + $0x38] sm:$0xff]
        %v5715 = vld [vmem:[%s5706 + $0x40] sm:$0xff]
        %v5716 = vld [vmem:[%s5706 + $0x48] sm:$0xff]
        %v5717 = vld [vmem:[%s5706 + $0x50] sm:$0xff]
        %v5718 = vld [vmem:[%s5706 + $0x58] sm:$0xff]
        %v5719 = vld [vmem:[%s5706 + $0x60] sm:$0xff]
        %v5720 = vld [vmem:[%s5706 + $0x68] sm:$0xff]
        %v5721 = vld [vmem:[%s5706 + $0x70] sm:$0xff]
        %v5722 = vld [vmem:[%s5706 + $0x78] sm:$0xff]
        %v5723 = vld [vmem:[%s5706 + $0x80] sm:$0xff]
        %v5724 = vld [vmem:[%s5706 + $0x88] sm:$0xff]
        %v5725 = vld [vmem:[%s5706 + $0x90] sm:$0xff]
        %v5726 = vld [vmem:[%s5706 + $0x98] sm:$0xff]
        %v5727 = vld [vmem:[%s5706 + $0xa0] sm:$0xff]
        %v5728 = vld [vmem:[%s5706 + $0xa8] sm:$0xff]
        %v5729 = vld [vmem:[%s5706 + $0xb0] sm:$0xff]
        %v5730 = vld [vmem:[%s5706 + $0xb8] sm:$0xff]
        %v5731 = vld [vmem:[%s5706 + $0xc0] sm:$0xff]
        %v5732 = vld [vmem:[%s5706 + $0xc8] sm:$0xff]
        %v5733 = vld [vmem:[%s5706 + $0xd0] sm:$0xff]
        %v5734 = vld [vmem:[%s5706 + $0xd8] sm:$0xff]
        %v5735 = vld [vmem:[%s5706 + $0xe0] sm:$0xff]
        %v5736 = vld [vmem:[%s5706 + $0xe8] sm:$0xff]
        %v5737 = vld [vmem:[%s5706 + $0xf0] sm:$0xff]
        %v5738 = vld [vmem:[%s5706 + $0xf8] sm:$0xff]
        %v5739 = vrot.slane %v5382, 3
        %v5740 = vrot.slane %v5383, 3
        %5743 = vmatprep.subr.mxu0 0.0
        %5744 = vmatpush1.msra.mxu0 %v5707
        %5745 = vmatprep.subr.mxu0 0.0
        %5746 = vmatpush1.msra.mxu0 %v5708
        %5747 = vmatprep.subr.mxu0 0.0
        %5748 = vmatpush1.msra.mxu0 %v5709
        %5749 = vmatprep.subr.mxu0 0.0
        %5750 = vmatpush1.msra.mxu0 %v5710
        %5751 = vmatprep.subr.mxu0 0.0
        %5752 = vmatpush1.msra.mxu0 %v5711
        %5753 = vmatprep.subr.mxu0 0.0
        %5754 = vmatpush1.msra.mxu0 %v5712
        %5755 = vmatprep.subr.mxu0 0.0
        %5756 = vmatpush1.msra.mxu0 %v5713
        %5757 = vmatprep.subr.mxu0 0.0
        %5758 = vmatpush1.msra.mxu0 %v5714
        %5759 = vmatprep.subr.mxu0 0.0
        %5760 = vmatpush1.msra.mxu0 %v5715
        %5761 = vmatprep.subr.mxu0 0.0
        %5762 = vmatpush1.msra.mxu0 %v5716
        %5763 = vmatprep.subr.mxu0 0.0
        %5764 = vmatpush1.msra.mxu0 %v5717
        %5765 = vmatprep.subr.mxu0 0.0
        %5766 = vmatpush1.msra.mxu0 %v5718
        %5767 = vmatprep.subr.mxu0 0.0
        %5768 = vmatpush1.msra.mxu0 %v5719
        %5769 = vmatprep.subr.mxu0 0.0
        %5770 = vmatpush1.msra.mxu0 %v5720
        %5771 = vmatprep.subr.mxu0 0.0
        %5772 = vmatpush1.msra.mxu0 %v5721
        %5773 = vmatprep.subr.mxu0 0.0
        %5774 = vmatpush1.msra.mxu0 %v5722
        %5775 = vmatprep.subr.mxu0 0.0
        %5776 = vmatpush1.msra.mxu0 %v5723
        %5777 = vmatprep.subr.mxu0 0.0
        %5778 = vmatpush1.msra.mxu0 %v5724
        %5779 = vmatprep.subr.mxu0 0.0
        %5780 = vmatpush1.msra.mxu0 %v5725
        %5781 = vmatprep.subr.mxu0 0.0
        %5782 = vmatpush1.msra.mxu0 %v5726
        %5783 = vmatprep.subr.mxu0 0.0
        %5784 = vmatpush1.msra.mxu0 %v5727
        %5785 = vmatprep.subr.mxu0 0.0
        %5786 = vmatpush1.msra.mxu0 %v5728
        %5787 = vmatprep.subr.mxu0 0.0
        %5788 = vmatpush1.msra.mxu0 %v5729
        %5789 = vmatprep.subr.mxu0 0.0
        %5790 = vmatpush1.msra.mxu0 %v5730
        %5791 = vmatprep.subr.mxu0 0.0
        %5792 = vmatpush1.msra.mxu0 %v5731
        %5793 = vmatprep.subr.mxu0 0.0
        %5794 = vmatpush1.msra.mxu0 %v5732
        %5795 = vmatprep.subr.mxu0 0.0
        %5796 = vmatpush1.msra.mxu0 %v5733
        %5797 = vmatprep.subr.mxu0 0.0
        %5798 = vmatpush1.msra.mxu0 %v5734
        %5799 = vmatprep.subr.mxu0 0.0
        %5800 = vmatpush1.msra.mxu0 %v5735
        %5801 = vmatprep.subr.mxu0 0.0
        %5802 = vmatpush1.msra.mxu0 %v5736
        %5803 = vmatprep.subr.mxu0 0.0
        %5804 = vmatpush1.msra.mxu0 %v5737
        %5805 = vmatprep.subr.mxu0 0.0
        %5806 = vmatpush1.msra.mxu0 %v5738
        %5807 = vmatprep.mubr.f32.mxu0 %v5740
        %5808 = vmatmul.mubr.f32.gmra.mrb[0].mxu0 %v5739
        %v5809 = vpop.f32.mrb[0].mxu0
        %v5810 = vadd.f32 0.0, %v5809
        %v5811 = vpop.f32.mrb[0].mxu0
        %5812 = vdwg.mxu0
        %v5813 = vadd.f32 %v5705, %v5810
        %v5814 = vmax.f32 %v5813, 0.0
        %v5815 = vld [vmem:[#allocation10] sm:$0xff]
        %v5816 = vld [vmem:[#allocation10 + $0x8] sm:$0xff]
        %v5817 = vld [vmem:[#allocation10 + $0x10] sm:$0xf]
        %v5818 = vld [vmem:[#allocation11] sm:$0x1]
        %vm5819 = vcmask 162816
        %v5821 = vsel %vm5819, %v5814, 0
        %v5824 = vsel %vm471, %v5817, 0
        %5826 = vmatprep.subr.mxu0 0.0
        %5827 = vmatpush1.msra.mxu0 %v5815
        %5828 = vmatprep.subr.mxu0 0.0
        %5829 = vmatpush1.msra.mxu0 %v5816
        %5830 = vmatprep.subr.mxu0 0.0
        %5831 = vmatpush1.msra.mxu0 %v5824
        %5832 = vmatprep.subr.mxu0 0.0
        %5833 = vmatpush1.msra.mxu0 0.0
        %5834 = vmatprep.subr.mxu0 0.0
        %5835 = vmatpush1.msra.mxu0 0.0
        %5836 = vmatprep.subr.mxu0 0.0
        %5837 = vmatpush1.msra.mxu0 0.0
        %5838 = vmatprep.subr.mxu0 0.0
        %5839 = vmatpush1.msra.mxu0 0.0
        %5840 = vmatprep.subr.mxu0 0.0
        %5841 = vmatpush1.msra.mxu0 0.0
        %5842 = vmatprep.subr.mxu0 0.0
        %5843 = vmatpush1.msra.mxu0 0.0
        %5844 = vmatprep.subr.mxu0 0.0
        %5845 = vmatpush1.msra.mxu0 0.0
        %5846 = vmatprep.subr.mxu0 0.0
        %5847 = vmatpush1.msra.mxu0 0.0
        %5848 = vmatprep.subr.mxu0 0.0
        %5849 = vmatpush1.msra.mxu0 0.0
        %5850 = vmatprep.subr.mxu0 0.0
        %5851 = vmatpush1.msra.mxu0 0.0
        %5852 = vmatprep.subr.mxu0 0.0
        %5853 = vmatpush1.msra.mxu0 0.0
        %5854 = vmatprep.subr.mxu0 0.0
        %5855 = vmatpush1.msra.mxu0 0.0
        %5856 = vmatprep.subr.mxu0 0.0
        %5857 = vmatpush1.msra.mxu0 0.0
        %5858 = vmatprep.subr.mxu0 0.0
        %5859 = vmatpush1.msra.mxu0 0.0
        %5860 = vmatprep.subr.mxu0 0.0
        %5861 = vmatpush1.msra.mxu0 0.0
        %5862 = vmatprep.subr.mxu0 0.0
        %5863 = vmatpush1.msra.mxu0 0.0
        %5864 = vmatprep.subr.mxu0 0.0
        %5865 = vmatpush1.msra.mxu0 0.0
        %5866 = vmatprep.subr.mxu0 0.0
        %5867 = vmatpush1.msra.mxu0 0.0
        %5868 = vmatprep.subr.mxu0 0.0
        %5869 = vmatpush1.msra.mxu0 0.0
        %5870 = vmatprep.subr.mxu0 0.0
        %5871 = vmatpush1.msra.mxu0 0.0
        %5872 = vmatprep.subr.mxu0 0.0
        %5873 = vmatpush1.msra.mxu0 0.0
        %5874 = vmatprep.subr.mxu0 0.0
        %5875 = vmatpush1.msra.mxu0 0.0
        %5876 = vmatprep.subr.mxu0 0.0
        %5877 = vmatpush1.msra.mxu0 0.0
        %5878 = vmatprep.subr.mxu0 0.0
        %5879 = vmatpush1.msra.mxu0 0.0
        %5880 = vmatprep.subr.mxu0 0.0
        %5881 = vmatpush1.msra.mxu0 0.0
        %5882 = vmatprep.subr.mxu0 0.0
        %5883 = vmatpush1.msra.mxu0 0.0
        %5884 = vmatprep.subr.mxu0 0.0
        %5885 = vmatpush1.msra.mxu0 0.0
        %5886 = vmatprep.subr.mxu0 0.0
        %5887 = vmatpush1.msra.mxu0 0.0
        %5888 = vmatprep.subr.mxu0 0.0
        %5889 = vmatpush1.msra.mxu0 0.0
        %5890 = vmatprep.mubr.f32.mxu0 0.0
        %5891 = vmatmul.mubr.f32.gmra.mrb[0].mxu0 %v5821
        %v5892 = vpop.f32.mrb[0].mxu0
        %v5893 = vadd.f32 %v5818, %v5892
        %v5894 = vpop.f32.mrb[0].mxu0
        %5895 = vdwg.mxu0
        %5896 = vst [vmem:[%s404] sm:$0x1] %v5893
        %s5897 = sand.u32 %s229, 1
        %s5898 = scalar_lea.sflag [#allocation4], %s5897
        %s5899 = sand.u32 %s229, 1
        %s5900 = scalar_lea.vmem [#allocation13], %s5899
        // Predicated region
        $region81: #{fl_model_forward.1} parent=55 // pred_check
          %p5901 = pneg %p239
        $region82: #{fl_model_forward.1} parent=55 // pred_check_branch
          %5903 = sbr.rel (%p5901) target = $region84
        $region83: #{fl_model_forward.1} parent=55 // pred_region
          %s5905 = ssub.s32 16, 16
          %5906 = vsyncadd %s5898, %s5905
          %s5907 = smul.addr %s27, 16
          %s5908 = scalar_lea.hbm %s9, %s5907
          %s5910 = sshll.u32 %s5900, 4
          %s5911 = int_to_ptr.vmem [resolvable:$true] %s5910
          %5913 = dma.vmem_to_hbm [thread:$0]  %s5911, 16, %s5908, %s5898
        $region84: #{fl_model_forward.1} parent=55 // pred_fallthru
          _
      $region56: #{fl_model_forward.1} parent=5 // pred_fallthru
        _
      %p5914 = scmp.le.s32.totalorder 2, %s22
      // Predicated region
      $region85: #{fl_model_forward.1} parent=5 // pred_check
        %p5915 = pneg %p5914
      $region86: #{fl_model_forward.1} parent=5 // pred_check_branch
        %5917 = sbr.rel (%p5915) target = $region88
      $region87: #{fl_model_forward.1} parent=5 // pred_region
        %s5918 = ssub.s32 %s22, 2
        // Predicated region
        $region89: #{fl_model_forward.1} parent=87 // pred_check
          %p5919 = pneg %p245
        $region90: #{fl_model_forward.1} parent=87 // pred_check_branch
          %5921 = sbr.rel (%p5919) target = $region92
        $region91: #{fl_model_forward.1} parent=87 // pred_region
          %s5922 = sand.u32 %s230, 1
          %s5923 = scalar_lea.sflag [#allocation4], %s5922
          %s5924 = sand.u32 %s230, 1
          %s5925 = scalar_lea.vmem [#allocation13], %s5924
          %5926 = dma.done %s5923, 16
        $region92: #{fl_model_forward.1} parent=87 // pred_fallthru
          _
      $region88: #{fl_model_forward.1} parent=5 // pred_fallthru
        _
    $region6: #{fl_model_forward.1} parent=1 // loop_footer
      %s26 = sadd.s32 1, %s22
    $region7: #{fl_model_forward.1} parent=1 // loop_footer_branch
      %21 = sbr.rel target = $region3
    $region8: #{fl_model_forward.1} parent=1 // loop_exit
      _
    %5927 = vsyncpa [#allocation3], 1
    %s5928 = scalar_lea.sflag [#allocation3], 1
    %5929 = vsyncpa %s5928, 1
    %5930 = vsyncpa [#allocation6], 1
    %5931 = vsyncpa [#allocation9], 1
    %5932 = vsyncpa [#allocation12], 1
    %5933 = vsyncpa [#allocation4], 1
    %s5934 = scalar_lea.sflag [#allocation4], 1
    %5935 = vsyncpa %s5934, 1

</llo_original>
